<compile_context>
chip_gen: v7x
topology: tpu7x:2x2x1
jax: 0.10.0
libtpu: 0.0.40
codegen_flags: <defaults>
</compile_context>

<pallas_src>
import functools
import math

import jax
import jax.numpy as jnp
from jax.experimental import pallas as pl
from jax.experimental.pallas import tpu as pltpu


# ---------------------------------------------------------------------------
# Tile choosers
# ---------------------------------------------------------------------------

def _pick_tile(dim, preferred, align):
    """Largest t <= preferred with t % align == 0 and dim % t == 0, else full dim."""
    top = min(preferred, dim)
    top -= top % align
    for c in range(top, 0, -align):
        if dim % c == 0:
            return c
    return dim


_ATTN_CP = pltpu.CompilerParams(dimension_semantics=("parallel",),
                                vmem_limit_bytes=48 * 1024 * 1024)


# ---------------------------------------------------------------------------
# In-kernel GELU (exact erf form via Abramowitz-Stegun approx, max abs err ~1.5e-7)
# ---------------------------------------------------------------------------

def _gelu_erf(x):
    z = x * 0.7071067811865476
    a = jnp.abs(z)
    t = 1.0 / (1.0 + 0.3275911 * a)
    poly = t * (0.254829592 + t * (-0.284496736 + t * (1.421413741
                + t * (-1.453152027 + t * 1.061405429))))
    erf_a = 1.0 - poly * jnp.exp(-a * a)
    erf_z = jnp.where(z >= 0, erf_a, -erf_a)
    return 0.5 * x * (1.0 + erf_z)


# ---------------------------------------------------------------------------
# Tiled matmul kernel: optional bias, optional per-row additive, fused activation,
# caller-chosen output dtype (default bf16 so consumers never need a wrapper cast).
# ---------------------------------------------------------------------------

def _linear_kernel(x_ref, w_ref, *rest, has_bias, has_add, activation):
    o_ref, acc_ref = rest[-2], rest[-1]
    extras = list(rest[:-2])
    b_ref = extras.pop(0) if has_bias else None
    add_ref = extras.pop(0) if has_add else None

    @pl.when(pl.program_id(2) == 0)
    def _():
        acc_ref[...] = jnp.zeros_like(acc_ref)

    acc_ref[...] += jnp.dot(x_ref[...].astype(jnp.bfloat16),
                            w_ref[...].astype(jnp.bfloat16),
                            preferred_element_type=jnp.float32)

    @pl.when(pl.program_id(2) == pl.num_programs(2) - 1)
    def _():
        y = acc_ref[...]
        if has_bias:
            y = y + b_ref[...]
        if has_add:
            y = y + add_ref[...].astype(jnp.float32)
        if activation == 'gelu':
            y = _gelu_erf(y)
        elif activation == 'elu':
            y = jnp.where(y > 0, y, jnp.exp(y) - 1.0)      # ELU(alpha=1)
        o_ref[...] = y.astype(o_ref.dtype)


def pallas_linear(x, w, b=None, add=None, activation=None, out_dtype=jnp.bfloat16):
    """y = act(x @ w + b [+ add]).  x: (M, K) (bf16 or f32), w: (K, N) bf16.
    bf16 MXU, f32 accumulation; output written directly in the consumer's dtype."""
    M, K = x.shape
    N = w.shape[1]
    tm = _pick_tile(M, 512, 16)       # multiple of 16 for bf16 sublane packing
    tn = _pick_tile(N, 512, 128)
    tk = _pick_tile(K, 512, 128)
    # v7x has 2 TensorCores: avoid a fully collapsed grid for large problems.
    if M // tm == 1 and N // tn == 1 and M >= 512:
        tm = _pick_tile(M, M // 2, 16)
    grid = (M // tm, N // tn, K // tk)

    in_specs = [pl.BlockSpec((tm, tk), lambda i, j, k: (i, k)),
                pl.BlockSpec((tk, tn), lambda i, j, k: (k, j))]
    args = [x, w]
    has_bias = b is not None
    has_add = add is not None
    if has_bias:
        in_specs.append(pl.BlockSpec((1, tn), lambda i, j, k: (0, j)))
        args.append(b.reshape(1, N).astype(jnp.float32))
    if has_add:
        in_specs.append(pl.BlockSpec((tm, tn), lambda i, j, k: (i, j)))
        args.append(add)

    return pl.pallas_call(
        functools.partial(_linear_kernel, has_bias=has_bias, has_add=has_add,
                          activation=activation),
        out_shape=jax.ShapeDtypeStruct((M, N), out_dtype),
        grid=grid,
        in_specs=in_specs,
        out_specs=pl.BlockSpec((tm, tn), lambda i, j, k: (i, j)),
        scratch_shapes=[pltpu.VMEM((tm, tn), jnp.float32)],
        compiler_params=pltpu.CompilerParams(
            dimension_semantics=("parallel", "parallel", "arbitrary")),
    )(*args)


# ---------------------------------------------------------------------------
# LayerNorm kernels (optionally fused with the residual add); bf16 output by default
# ---------------------------------------------------------------------------

def _ln_kernel(x_ref, g_ref, b_ref, o_ref, *, eps):
    x = x_ref[...].astype(jnp.float32)
    mu = jnp.mean(x, axis=-1, keepdims=True)
    var = jnp.mean(jnp.square(x - mu), axis=-1, keepdims=True)
    y = (x - mu) * jax.lax.rsqrt(var + eps) * g_ref[...] + b_ref[...]
    o_ref[...] = y.astype(o_ref.dtype)


def _add_ln_kernel(x_ref, r_ref, g_ref, b_ref, o_ref, *, eps):
    x = x_ref[...].astype(jnp.float32) + r_ref[...].astype(jnp.float32)
    mu = jnp.mean(x, axis=-1, keepdims=True)
    var = jnp.mean(jnp.square(x - mu), axis=-1, keepdims=True)
    y = (x - mu) * jax.lax.rsqrt(var + eps) * g_ref[...] + b_ref[...]
    o_ref[...] = y.astype(o_ref.dtype)


def pallas_layernorm(x, g, b, residual=None, eps=1e-5, out_dtype=jnp.bfloat16):
    """LayerNorm(x [+ residual]) over the last dim, tiled over rows; f32 stats in-kernel."""
    shape = x.shape
    D = shape[-1]
    x2 = x.reshape(-1, D)
    M = x2.shape[0]
    tm = _pick_tile(M, 1024, 8)
    grid = (M // tm,)
    row_spec = pl.BlockSpec((tm, D), lambda i: (i, 0))
    vec_spec = pl.BlockSpec((1, D), lambda i: (0, 0))
    g2 = g.reshape(1, D).astype(jnp.float32)
    b2 = b.reshape(1, D).astype(jnp.float32)
    cp = pltpu.CompilerParams(dimension_semantics=("parallel",))
    if residual is None:
        out = pl.pallas_call(
            functools.partial(_ln_kernel, eps=eps),
            out_shape=jax.ShapeDtypeStruct((M, D), out_dtype),
            grid=grid, in_specs=[row_spec, vec_spec, vec_spec],
            out_specs=row_spec, compiler_params=cp,
        )(x2, g2, b2)
    else:
        r2 = residual.reshape(-1, D)
        out = pl.pallas_call(
            functools.partial(_add_ln_kernel, eps=eps),
            out_shape=jax.ShapeDtypeStruct((M, D), out_dtype),
            grid=grid, in_specs=[row_spec, row_spec, vec_spec, vec_spec],
            out_specs=row_spec, compiler_params=cp,
        )(x2, r2, g2, b2)
    return out.reshape(shape)


# ---------------------------------------------------------------------------
# Attention kernels: head-contiguous layout, grid over B, heads sliced in-kernel,
# lane-dense (L, d_model) output stores, EUP reciprocal for the softmax denom.
# ---------------------------------------------------------------------------

def _head_attention(qh, kh, vh, scale, mask_pos=None):
    """Single-head attention on VMEM tiles.  qh:(Lq,dk), kh/vh:(Lk,dk) bf16 -> (Lq,dk) f32."""
    s = jax.lax.dot_general(qh, kh, (((1,), (1,)), ((), ())),
                            preferred_element_type=jnp.float32) * scale
    if mask_pos is not None:
        col = jax.lax.broadcasted_iota(jnp.int32, s.shape, 1)
        s = jnp.where(col <= mask_pos, s, -1e30)           # in-kernel ProbMask (causal)
    p = jnp.exp(s - jnp.max(s, axis=-1, keepdims=True))
    p = p * pl.reciprocal(jnp.sum(p, axis=-1, keepdims=True), approx=True)
    return jnp.dot(p.astype(vh.dtype), vh, preferred_element_type=jnp.float32)


def _cross_attn_kernel(q_ref, kv_ref, o_ref, *, n_heads, scale):
    dm = q_ref.shape[-1]
    dk = dm // n_heads
    for h in range(n_heads):
        qh = q_ref[0, :, h * dk:(h + 1) * dk]
        kh = kv_ref[0, :, h * dk:(h + 1) * dk]
        vh = kv_ref[0, :, dm + h * dk:dm + (h + 1) * dk]
        oh = _head_attention(qh, kh, vh, scale)
        o_ref[0, :, h * dk:(h + 1) * dk] = oh.astype(o_ref.dtype)


def _prob_attn_kernel(qtop_ref, qkv_ref, o_ref, *, n_heads, scale):
    dm = qtop_ref.shape[-1]
    dk = dm // n_heads
    for h in range(n_heads):
        qh = qtop_ref[0, :, h * dk:(h + 1) * dk]
        kh = qkv_ref[0, :, dm + h * dk:dm + (h + 1) * dk]
        vh = qkv_ref[0, :, 2 * dm + h * dk:2 * dm + (h + 1) * dk]
        oh = _head_attention(qh, kh, vh, scale)
        o_ref[0, :, h * dk:(h + 1) * dk] = oh.astype(o_ref.dtype)


def _prob_attn_masked_kernel(pos_ref, qtop_ref, qkv_ref, o_ref, *, n_heads, scale):
    dm = qtop_ref.shape[-1]
    dk = dm // n_heads
    for h in range(n_heads):
        qh = qtop_ref[0, :, h * dk:(h + 1) * dk]
        kh = qkv_ref[0, :, dm + h * dk:dm + (h + 1) * dk]
        vh = qkv_ref[0, :, 2 * dm + h * dk:2 * dm + (h + 1) * dk]
        pos = pos_ref[0, :, h:h + 1]                       # (u, 1) original query positions
        oh = _head_attention(qh, kh, vh, scale, mask_pos=pos)
        o_ref[0, :, h * dk:(h + 1) * dk] = oh.astype(o_ref.dtype)


def _prob_measure_kernel(qkv_ref, m_ref, *, n_heads, inv_lk):
    dm = qkv_ref.shape[-1] // 3
    dk = dm // n_heads
    for h in range(n_heads):
        qh = qkv_ref[0, :, h * dk:(h + 1) * dk]
        kh = qkv_ref[0, :, dm + h * dk:dm + (h + 1) * dk]
        s = jax.lax.dot_general(qh, kh, (((1,), (1,)), ((), ())),
                                preferred_element_type=jnp.float32)
        m_ref[0, :, h:h + 1] = (jnp.max(s, axis=-1, keepdims=True)
                                - jnp.sum(s, axis=-1, keepdims=True) * inv_lk)


def _prob_measure_sampled_kernel(qkv_ref, ks_ref, m_ref, *, n_heads, inv_lk):
    dm = ks_ref.shape[-1]
    dk = dm // n_heads
    for h in range(n_heads):
        qh = qkv_ref[0, :, h * dk:(h + 1) * dk]
        kh = ks_ref[0, :, h * dk:(h + 1) * dk]
        s = jax.lax.dot_general(qh, kh, (((1,), (1,)), ((), ())),
                                preferred_element_type=jnp.float32)
        m_ref[0, :, h:h + 1] = (jnp.max(s, axis=-1, keepdims=True)
                                - jnp.sum(s, axis=-1, keepdims=True) * inv_lk)


def pallas_cross_attention(q, kv, *, n_heads):
    """FullAttention (no mask) on head-contiguous layout.  q: (B,Lq,dm), kv: (B,Lk,2*dm)."""
    B, Lq, dm = q.shape
    Lk = kv.shape[1]
    scale = 1.0 / math.sqrt(dm // n_heads)
    return pl.pallas_call(
        functools.partial(_cross_attn_kernel, n_heads=n_heads, scale=scale),
        out_shape=jax.ShapeDtypeStruct((B, Lq, dm), jnp.bfloat16),
        grid=(B,),
        in_specs=[pl.BlockSpec((1, Lq, dm), lambda b: (b, 0, 0)),
                  pl.BlockSpec((1, Lk, 2 * dm), lambda b: (b, 0, 0))],
        out_specs=pl.BlockSpec((1, Lq, dm), lambda b: (b, 0, 0)),
        compiler_params=_ATTN_CP,
    )(q, kv)


def prob_attention(qkv, *, n_heads, factor, mask_flag):
    """ProbAttention on the fused head-contiguous qkv tensor (B, L, 3*dm) -> (B, L, dm) bf16."""
    B, L, three_dm = qkv.shape
    dm = three_dm // 3
    H = n_heads
    dk = dm // H
    u = min(factor * int(math.ceil(math.log(L))), L)          # n_top queries
    sample_k = min(factor * int(math.ceil(math.log(L))), L)    # sampled keys for the measure
    scale = 1.0 / math.sqrt(dk)

    qkv_spec = pl.BlockSpec((1, L, 3 * dm), lambda b: (b, 0, 0))
    m_spec = pl.BlockSpec((1, L, H), lambda b: (b, 0, 0))

    # Sparsity measure M = rowmax(QK_sample^T) - rowsum(QK_sample^T)/L_K, fused in-kernel.
    if sample_k >= L:
        m = pl.pallas_call(
            functools.partial(_prob_measure_kernel, n_heads=H, inv_lk=1.0 / L),
            out_shape=jax.ShapeDtypeStruct((B, L, H), jnp.float32),
            grid=(B,), in_specs=[qkv_spec], out_specs=m_spec,
            compiler_params=_ATTN_CP,
        )(qkv)
    else:
        # TODO(synk): the reference samples a fresh random key subset per query
        # (torch.randint); a fixed evenly-strided key subset shared by all queries is
        # used here so the measure stays a dense matmul.
        key_idx = (jnp.arange(sample_k) * L) // sample_k
        ks = jnp.take(qkv[:, :, dm:2 * dm], key_idx, axis=1)          # (B, S, dm)
        m = pl.pallas_call(
            functools.partial(_prob_measure_sampled_kernel, n_heads=H, inv_lk=1.0 / L),
            out_shape=jax.ShapeDtypeStruct((B, L, H), jnp.float32),
            grid=(B,),
            in_specs=[qkv_spec, pl.BlockSpec((1, sample_k, dm), lambda b: (b, 0, 0))],
            out_specs=m_spec, compiler_params=_ATTN_CP,
        )(qkv, ks)

    _, idx = jax.lax.top_k(jnp.transpose(m, (0, 2, 1)), u)            # (B, H, u)
    idx_t = jnp.transpose(idx, (0, 2, 1)).astype(jnp.int32)           # (B, u, H)

    q4 = qkv[:, :, :dm].reshape(B, L, H, dk)
    q_top = jnp.take_along_axis(q4, idx_t[..., None], axis=1).reshape(B, u, dm)

    qtop_spec = pl.BlockSpec((1, u, dm), lambda b: (b, 0, 0))
    out_spec = pl.BlockSpec((1, u, dm), lambda b: (b, 0, 0))
    v = qkv[:, :, 2 * dm:]
    if mask_flag:
        upd = pl.pallas_call(
            functools.partial(_prob_attn_masked_kernel, n_heads=H, scale=scale),
            out_shape=jax.ShapeDtypeStruct((B, u, dm), jnp.bfloat16),
            grid=(B,),
            in_specs=[pl.BlockSpec((1, u, H), lambda b: (b, 0, 0)), qtop_spec, qkv_spec],
            out_specs=out_spec, compiler_params=_ATTN_CP,
        )(idx_t, q_top, qkv)
        ctx = jnp.cumsum(v.astype(jnp.float32), axis=1).astype(jnp.bfloat16)   # masked init
    else:
        upd = pl.pallas_call(
            functools.partial(_prob_attn_kernel, n_heads=H, scale=scale),
            out_shape=jax.ShapeDtypeStruct((B, u, dm), jnp.bfloat16),
            grid=(B,),
            in_specs=[qtop_spec, qkv_spec],
            out_specs=out_spec, compiler_params=_ATTN_CP,
        )(q_top, qkv)
        ctx = jnp.broadcast_to(
            jnp.mean(v.astype(jnp.float32), axis=1, keepdims=True).astype(jnp.bfloat16),
            (B, L, dm))

    # Scatter the attended top-u rows back into the per-head context.
    ctx4 = ctx.reshape(B, L, H, dk)
    upd4 = upd.reshape(B, u, H, dk)
    b_ix = jnp.arange(B)[:, None, None]
    h_ix = jnp.arange(H)[None, None, :]
    ctx4 = ctx4.at[b_ix, idx_t, h_ix].set(upd4)
    return ctx4.reshape(B, L, dm)


# ---------------------------------------------------------------------------
# Circular Conv1d (k=3, padding=1) as a single K=3*Cin matmul with fused epilogue
# ---------------------------------------------------------------------------

def circular_conv3(x, w, b=None, add=None, activation=None, out_dtype=jnp.bfloat16):
    """Conv1d(kernel=3, padding=1, padding_mode='circular') on channels-last x as ONE matmul.
    x: (B, L, Cin); w: (3*Cin, Cout) with row index k*Cin + ci <=> torch W[co, ci, k]."""
    B, L, Cin = x.shape
    xcat = jnp.concatenate([jnp.roll(x, 1, axis=1), x, jnp.roll(x, -1, axis=1)], axis=-1)
    y = pallas_linear(xcat.reshape(B * L, 3 * Cin), w, b=b, add=add,
                      activation=activation, out_dtype=out_dtype)
    return y.reshape(B, L, -1)


# ---------------------------------------------------------------------------
# Embeddings
# ---------------------------------------------------------------------------

def sinusoid_table(n_pos, d):
    pos = jnp.arange(n_pos, dtype=jnp.float32)[:, None]
    div = jnp.exp(jnp.arange(0, d, 2, dtype=jnp.float32) * (-math.log(10000.0) / d))
    tab = jnp.zeros((n_pos, d), jnp.float32)
    tab = tab.at[:, 0::2].set(jnp.sin(pos * div))
    tab = tab.at[:, 1::2].set(jnp.cos(pos * div))
    return tab


def data_embedding(p, x, x_mark):
    """DataEmbedding = TokenEmbedding(conv1d k=3 circular, no bias) + PositionalEmbedding
    + TemporalEmbedding(embed='fixed', freq='h'); additive terms fused into the conv epilogue."""
    B, L, _ = x.shape
    mk = x_mark.astype(jnp.int32)                                    # x_mark.long()
    extra = (p['pos_table'][:L][None, :, :]
             + p['hour_tab'][mk[..., 3]] + p['weekday_tab'][mk[..., 2]]
             + p['day_tab'][mk[..., 1]] + p['month_tab'][mk[..., 0]])
    return circular_conv3(x, p['token_w'], add=extra.reshape(B * L, -1))   # dropout p=0.0


# ---------------------------------------------------------------------------
# Attention layers
# ---------------------------------------------------------------------------

def attention_layer_self(p, x, *, mask_flag, mix, n_heads, factor):
    """Self-attention AttentionLayer (ProbAttention) with the Q/K/V projection fused."""
    B, L, dm = x.shape
    qkv = pallas_linear(x.reshape(B * L, dm), p['wqkv'], p['bqkv']).reshape(B, L, 3 * dm)
    ctx = prob_attention(qkv, n_heads=n_heads, factor=factor, mask_flag=mask_flag)
    if mix:    # AttentionLayer(mix=True): transpose(2,1) of (B,L,H,D) then view(B,L,-1)
        dk = dm // n_heads
        ctx = jnp.transpose(ctx.reshape(B, L, n_heads, dk), (0, 2, 1, 3)).reshape(B, L, dm)
    out = pallas_linear(ctx.reshape(B * L, dm), p['wo'], p['bo'], out_dtype=jnp.float32)
    return out.reshape(B, L, dm)


def attention_layer_cross(p, x, cross, *, n_heads):
    """Cross-attention AttentionLayer (FullAttention, mix=False) with fused K/V projection."""
    B, Lq, dm = x.shape
    Lk = cross.shape[1]
    q = pallas_linear(x.reshape(B * Lq, dm), p['wq'], p['bq']).reshape(B, Lq, dm)
    kv = pallas_linear(cross.reshape(B * Lk, dm), p['wkv'], p['bkv']).reshape(B, Lk, 2 * dm)
    out = pallas_cross_attention(q, kv, n_heads=n_heads)
    out = pallas_linear(out.reshape(B * Lq, dm), p['wo'], p['bo'], out_dtype=jnp.float32)
    return out.reshape(B, Lq, dm)


# ---------------------------------------------------------------------------
# Encoder / Decoder layers
# ---------------------------------------------------------------------------

def encoder_layer(p, x, *, n_heads, factor):
    B, L, dm = x.shape
    new_x = attention_layer_self(p['attn'], x, mask_flag=False, mix=False,
                                 n_heads=n_heads, factor=factor)
    x = pallas_layernorm(x, p['ln1_g'], p['ln1_b'], residual=new_x)       # LN(x + attn)
    y = pallas_linear(x.reshape(B * L, dm), p['w1'], p['b1'], activation='gelu')
    y = pallas_linear(y, p['w2'], p['b2'], out_dtype=jnp.float32).reshape(B, L, dm)
    return pallas_layernorm(x, p['ln2_g'], p['ln2_b'], residual=y)        # LN(x + ffn)


def conv_distil_layer(p, x):
    """ConvLayer: circular conv(k=3) -> BatchNorm1d (eval mode, running stats folded into
    the conv) -> ELU (fused epilogue) -> MaxPool1d(3,2,1)."""
    scale = p['bn_g'] * jax.lax.rsqrt(p['bn_var'] + 1e-5)
    w_eff = (p['w'].astype(jnp.float32) * scale[None, :]).astype(jnp.bfloat16)
    b_eff = (p['b'] - p['bn_mean']) * scale + p['bn_b']
    y = circular_conv3(x, w_eff, b=b_eff, activation='elu')
    return jax.lax.reduce_window(y, jnp.asarray(-jnp.inf, y.dtype), jax.lax.max,
                                 window_dimensions=(1, 3, 1),
                                 window_strides=(1, 2, 1),
                                 padding=((0, 0), (1, 1), (0, 0)))


def decoder_layer(p, x, cross, *, n_heads, factor):
    B, L, dm = x.shape
    sa = attention_layer_self(p['self_attn'], x, mask_flag=True, mix=True,
                              n_heads=n_heads, factor=factor)
    x = pallas_layernorm(x, p['ln1_g'], p['ln1_b'], residual=sa)
    ca = attention_layer_cross(p['cross_attn'], x, cross, n_heads=n_heads)
    x = pallas_layernorm(x, p['ln2_g'], p['ln2_b'], residual=ca)
    y = pallas_linear(x.reshape(B * L, dm), p['w1'], p['b1'], activation='gelu')
    y = pallas_linear(y, p['w2'], p['b2'], out_dtype=jnp.float32).reshape(B, L, dm)
    return pallas_layernorm(x, p['ln3_g'], p['ln3_b'], residual=y)


# ---------------------------------------------------------------------------
# Full TEInformer forward
# ---------------------------------------------------------------------------

@functools.partial(jax.jit, static_argnames=('pred_len', 'n_heads', 'factor'))
def teinformer_forward(params, x_enc, x_mark_enc, x_dec, x_mark_dec, *,
                       pred_len, n_heads, factor):
    # TODO(synk): self.time(x_enc) (TrigonometricEncoding) result is immediately discarded
    # by the reference forward; it is skipped here.
    enc = data_embedding(params['enc_emb'], x_enc, x_mark_enc)
    n_enc = len(params['enc_layers'])
    for i in range(n_enc - 1):                                 # distil=True: conv between layers
        enc = encoder_layer(params['enc_layers'][i], enc, n_heads=n_heads, factor=factor)
        enc = conv_distil_layer(params['enc_convs'][i], enc)
    enc = encoder_layer(params['enc_layers'][-1], enc, n_heads=n_heads, factor=factor)
    enc = pallas_layernorm(enc, params['enc_norm_g'], params['enc_norm_b'])

    dec = data_embedding(params['dec_emb'], x_dec, x_mark_dec)
    for lp in params['dec_layers']:
        dec = decoder_layer(lp, dec, enc, n_heads=n_heads, factor=factor)
    dec = pallas_layernorm(dec, params['dec_norm_g'], params['dec_norm_b'])

    B, L, dm = dec.shape
    out = pallas_linear(dec.reshape(B * L, dm), params['proj_w'], params['proj_b'],
                        out_dtype=jnp.float32)
    out = out.reshape(B, L, -1)
    return out[:, -pred_len:, :]


# ---------------------------------------------------------------------------
# Deterministic parameter init (synthetic weights; matmul weights stored in bf16,
# QKV / KV projections stored fused)
# ---------------------------------------------------------------------------

def init_params(key, *, enc_in, dec_in, c_out, d_model, n_heads, e_layers, d_layers, d_ff):
    keys = iter(jax.random.split(key, 256))

    def nrm(shape, scale=0.1, dtype=jnp.bfloat16):
        return (scale * jax.random.normal(next(keys), shape, dtype=jnp.float32)).astype(dtype)

    def self_attn_params():
        return {'wqkv': nrm((d_model, 3 * d_model)), 'bqkv': nrm((3 * d_model,), 0.02, jnp.float32),
                'wo': nrm((d_model, d_model)), 'bo': nrm((d_model,), 0.02, jnp.float32)}

    def cross_attn_params():
        return {'wq': nrm((d_model, d_model)), 'bq': nrm((d_model,), 0.02, jnp.float32),
                'wkv': nrm((d_model, 2 * d_model)), 'bkv': nrm((2 * d_model,), 0.02, jnp.float32),
                'wo': nrm((d_model, d_model)), 'bo': nrm((d_model,), 0.02, jnp.float32)}

    def emb_params(c_in):
        return {'token_w': nrm((3 * c_in, d_model)),
                'pos_table': sinusoid_table(5000, d_model),
                'hour_tab': sinusoid_table(24, d_model),
                'weekday_tab': sinusoid_table(7, d_model),
                'day_tab': sinusoid_table(32, d_model),
                'month_tab': sinusoid_table(13, d_model)}

    def enc_layer_params():
        return {'attn': self_attn_params(),
                'w1': nrm((d_model, d_ff)), 'b1': nrm((d_ff,), 0.02, jnp.float32),
                'w2': nrm((d_ff, d_model)), 'b2': nrm((d_model,), 0.02, jnp.float32),
                'ln1_g': jnp.ones((d_model,), jnp.float32), 'ln1_b': jnp.zeros((d_model,), jnp.float32),
                'ln2_g': jnp.ones((d_model,), jnp.float32), 'ln2_b': jnp.zeros((d_model,), jnp.float32)}

    def dec_layer_params():
        return {'self_attn': self_attn_params(), 'cross_attn': cross_attn_params(),
                'w1': nrm((d_model, d_ff)), 'b1': nrm((d_ff,), 0.02, jnp.float32),
                'w2': nrm((d_ff, d_model)), 'b2': nrm((d_model,), 0.02, jnp.float32),
                'ln1_g': jnp.ones((d_model,), jnp.float32), 'ln1_b': jnp.zeros((d_model,), jnp.float32),
                'ln2_g': jnp.ones((d_model,), jnp.float32), 'ln2_b': jnp.zeros((d_model,), jnp.float32),
                'ln3_g': jnp.ones((d_model,), jnp.float32), 'ln3_b': jnp.zeros((d_model,), jnp.float32)}

    def conv_layer_params():
        return {'w': nrm((3 * d_model, d_model)), 'b': nrm((d_model,), 0.02, jnp.float32),
                'bn_g': jnp.ones((d_model,), jnp.float32), 'bn_b': jnp.zeros((d_model,), jnp.float32),
                'bn_mean': jnp.zeros((d_model,), jnp.float32), 'bn_var': jnp.ones((d_model,), jnp.float32)}

    return {
        'enc_emb': emb_params(enc_in),
        'dec_emb': emb_params(dec_in),
        'enc_layers': [enc_layer_params() for _ in range(e_layers)],
        'enc_convs': [conv_layer_params() for _ in range(e_layers - 1)],
        'enc_norm_g': jnp.ones((d_model,), jnp.float32),
        'enc_norm_b': jnp.zeros((d_model,), jnp.float32),
        'dec_layers': [dec_layer_params() for _ in range(d_layers)],
        'dec_norm_g': jnp.ones((d_model,), jnp.float32),
        'dec_norm_b': jnp.zeros((d_model,), jnp.float32),
        'proj_w': nrm((d_model, c_out)), 'proj_b': nrm((c_out,), 0.02, jnp.float32),
    }


# ---------------------------------------------------------------------------
# Main
# ---------------------------------------------------------------------------

if __name__ == "__main__":
    B = 2
    enc_in = dec_in = c_out = 4
    seq_len = 16
    label_len = 8
    pred_len = 8                 # out_len
    dec_len = label_len + pred_len
    d_model = 32
    n_heads = 4
    e_layers = 2
    d_layers = 1
    d_ff = 32
    factor = 5

    root = jax.random.PRNGKey(0)
    kp, k1, k2, k3, k4 = jax.random.split(root, 5)
    params = init_params(kp, enc_in=enc_in, dec_in=dec_in, c_out=c_out, d_model=d_model,
                         n_heads=n_heads, e_layers=e_layers, d_layers=d_layers, d_ff=d_ff)

    x_enc = jax.random.normal(k1, (B, seq_len, enc_in), dtype=jnp.float32)
    x_dec = jax.random.normal(k2, (B, dec_len, dec_in), dtype=jnp.float32)

    def make_marks(key, L):
        km, kd, kw, kh = jax.random.split(key, 4)
        month = jax.random.randint(km, (B, L, 1), 0, 13)
        day = jax.random.randint(kd, (B, L, 1), 0, 32)
        weekday = jax.random.randint(kw, (B, L, 1), 0, 7)
        hour = jax.random.randint(kh, (B, L, 1), 0, 24)
        return jnp.concatenate([month, day, weekday, hour], axis=-1).astype(jnp.float32)

    x_mark_enc = make_marks(k3, seq_len)
    x_mark_dec = make_marks(k4, dec_len)

    out = teinformer_forward(params, x_enc, x_mark_enc, x_dec, x_mark_dec,
                             pred_len=pred_len, n_heads=n_heads, factor=factor)
    out = jax.block_until_ready(out)

    assert out.shape == (B, pred_len, c_out), out.shape
    assert bool(jnp.all(jnp.isfinite(out)))
    print("KERNEL_OK")
</pallas_src>

<mosaic_0001>
module attributes {stable_mosaic.version = 11 : i64} {
  func.func @_linear_kernel(%arg0: i32, %arg1: i32, %arg2: i32, %arg3: memref<32x12xf32, #tpu.memory_space<vmem>>, %arg4: memref<12x32xbf16, #tpu.memory_space<vmem>>, %arg5: memref<32x32xf32, #tpu.memory_space<vmem>>, %arg6: memref<32x32xbf16, #tpu.memory_space<vmem>>, %arg7: memref<32x32xf32, #tpu.memory_space<vmem>>) attributes {dimension_semantics = [#tpu.dimension_semantics<parallel>, #tpu.dimension_semantics<parallel>, #tpu.dimension_semantics<arbitrary>], iteration_bounds = array<i64: 1, 1, 1>, scalar_prefetch = 0 : i64, scratch_operands = 1 : i64, tpu.core_type = #tpu.core_type<tc>, window_params = [{transform_indices = @transform_0, window_bounds = array<i64: 32, 12>}, {transform_indices = @transform_1, window_bounds = array<i64: 12, 32>}, {transform_indices = @transform_2, window_bounds = array<i64: 32, 32>}, {transform_indices = @transform_3, window_bounds = array<i64: 32, 32>}]} {
    %c0_i32 = arith.constant 0 : i32
    %0 = arith.cmpi eq, %arg2, %c0_i32 : i32
    %1 = arith.extui %0 : i1 to i32
    %c0_i32_0 = arith.constant 0 : i32
    %2 = arith.cmpi ne, %1, %c0_i32_0 : i32
    scf.if %2 {
      %cst_10 = arith.constant 0.000000e+00 : f32
      %13 = vector.broadcast %cst_10 : f32 to vector<32x32xf32>
      %c0_11 = arith.constant 0 : index
      %c0_12 = arith.constant 0 : index
      %14 = vector.load %arg7[%c0_11, %c0_12] : memref<32x32xf32, #tpu.memory_space<vmem>>, vector<32x32xf32>
      tpu.vector_store %arg7[%c0_11, %c0_12], %13 {strides = array<i32>} : memref<32x32xf32, #tpu.memory_space<vmem>>, vector<32x32xf32>,
    } else {
    }
    %c0 = arith.constant 0 : index
    %c0_1 = arith.constant 0 : index
    %3 = vector.load %arg7[%c0, %c0_1] : memref<32x32xf32, #tpu.memory_space<vmem>>, vector<32x32xf32>
    %c0_2 = arith.constant 0 : index
    %c0_3 = arith.constant 0 : index
    %4 = vector.load %arg3[%c0_2, %c0_3] : memref<32x12xf32, #tpu.memory_space<vmem>>, vector<32x12xf32>
    %5 = arith.truncf %4 : vector<32x12xf32> to vector<32x12xbf16>
    %c0_4 = arith.constant 0 : index
    %c0_5 = arith.constant 0 : index
    %6 = vector.load %arg4[%c0_4, %c0_5] : memref<12x32xbf16, #tpu.memory_space<vmem>>, vector<12x32xbf16>
    %cst = arith.constant dense<0.000000e+00> : vector<32x32xf32>
    %7 = tpu.matmul %5, %6, %cst {dimension_numbers = #tpu.dot_dimension_numbers<[1], [0], [0], [1], [0, 0, 1, 1], [], []>} : vector<32x12xbf16>, vector<12x32xbf16>, vector<32x32xf32> -> vector<32x32xf32>
    %8 = arith.addf %3, %7 : vector<32x32xf32>
    %c0_6 = arith.constant 0 : index
    %c0_7 = arith.constant 0 : index
    %9 = vector.load %arg7[%c0_6, %c0_7] : memref<32x32xf32, #tpu.memory_space<vmem>>, vector<32x32xf32>
    tpu.vector_store %arg7[%c0_6, %c0_7], %8 {strides = array<i32>} : memref<32x32xf32, #tpu.memory_space<vmem>>, vector<32x32xf32>,
    %c0_i32_8 = arith.constant 0 : i32
    %10 = arith.cmpi eq, %arg2, %c0_i32_8 : i32
    %11 = arith.extui %10 : i1 to i32
    %c0_i32_9 = arith.constant 0 : i32
    %12 = arith.cmpi ne, %11, %c0_i32_9 : i32
    scf.if %12 {
      %c0_10 = arith.constant 0 : index
      %c0_11 = arith.constant 0 : index
      %13 = vector.load %arg7[%c0_10, %c0_11] : memref<32x32xf32, #tpu.memory_space<vmem>>, vector<32x32xf32>
      %c0_12 = arith.constant 0 : index
      %c0_13 = arith.constant 0 : index
      %14 = vector.load %arg5[%c0_12, %c0_13] : memref<32x32xf32, #tpu.memory_space<vmem>>, vector<32x32xf32>
      %15 = arith.addf %13, %14 : vector<32x32xf32>
      %16 = arith.truncf %15 : vector<32x32xf32> to vector<32x32xbf16>
      %c0_14 = arith.constant 0 : index
      %c0_15 = arith.constant 0 : index
      %17 = vector.load %arg6[%c0_14, %c0_15] : memref<32x32xbf16, #tpu.memory_space<vmem>>, vector<32x32xbf16>
      tpu.vector_store %arg6[%c0_14, %c0_15], %16 {strides = array<i32>} : memref<32x32xbf16, #tpu.memory_space<vmem>>, vector<32x32xbf16>,
    } else {
    }
    return
  }
  func.func @transform_0(%arg0: i32, %arg1: i32, %arg2: i32) -> (i32, i32) {
    %c0_i32 = arith.constant 0 : i32
    return %arg0, %arg2 : i32, i32
  }
  func.func @transform_1(%arg0: i32, %arg1: i32, %arg2: i32) -> (i32, i32) {
    %c0_i32 = arith.constant 0 : i32
    return %arg2, %arg1 : i32, i32
  }
  func.func @transform_2(%arg0: i32, %arg1: i32, %arg2: i32) -> (i32, i32) {
    %c0_i32 = arith.constant 0 : i32
    return %arg0, %arg1 : i32, i32
  }
  func.func @transform_3(%arg0: i32, %arg1: i32, %arg2: i32) -> (i32, i32) {
    %c0_i32 = arith.constant 0 : i32
    return %arg0, %arg1 : i32, i32
  }
}

module attributes {stable_mosaic.version = 11 : i64} {
  func.func @_linear_kernel(%arg0: i32, %arg1: i32, %arg2: i32, %arg3: memref<32x32xbf16, #tpu.memory_space<vmem>>, %arg4: memref<32x96xbf16, #tpu.memory_space<vmem>>, %arg5: memref<1x96xf32, #tpu.memory_space<vmem>>, %arg6: memref<32x96xbf16, #tpu.memory_space<vmem>>, %arg7: memref<32x96xf32, #tpu.memory_space<vmem>>) attributes {dimension_semantics = [#tpu.dimension_semantics<parallel>, #tpu.dimension_semantics<parallel>, #tpu.dimension_semantics<arbitrary>], iteration_bounds = array<i64: 1, 1, 1>, scalar_prefetch = 0 : i64, scratch_operands = 1 : i64, tpu.core_type = #tpu.core_type<tc>, window_params = [{transform_indices = @transform_0, window_bounds = array<i64: 32, 32>}, {transform_indices = @transform_1, window_bounds = array<i64: 32, 96>}, {transform_indices = @transform_2, window_bounds = array<i64: 1, 96>}, {transform_indices = @transform_3, window_bounds = array<i64: 32, 96>}]} {
    %c0_i32 = arith.constant 0 : i32
    %0 = arith.cmpi eq, %arg2, %c0_i32 : i32
    %1 = arith.extui %0 : i1 to i32
    %c0_i32_0 = arith.constant 0 : i32
    %2 = arith.cmpi ne, %1, %c0_i32_0 : i32
    scf.if %2 {
      %cst_10 = arith.constant 0.000000e+00 : f32
      %12 = vector.broadcast %cst_10 : f32 to vector<32x96xf32>
      %c0_11 = arith.constant 0 : index
      %c0_12 = arith.constant 0 : index
      %13 = vector.load %arg7[%c0_11, %c0_12] : memref<32x96xf32, #tpu.memory_space<vmem>>, vector<32x96xf32>
      tpu.vector_store %arg7[%c0_11, %c0_12], %12 {strides = array<i32>} : memref<32x96xf32, #tpu.memory_space<vmem>>, vector<32x96xf32>,
    } else {
    }
    %c0 = arith.constant 0 : index
    %c0_1 = arith.constant 0 : index
    %3 = vector.load %arg7[%c0, %c0_1] : memref<32x96xf32, #tpu.memory_space<vmem>>, vector<32x96xf32>
    %c0_2 = arith.constant 0 : index
    %c0_3 = arith.constant 0 : index
    %4 = vector.load %arg3[%c0_2, %c0_3] : memref<32x32xbf16, #tpu.memory_space<vmem>>, vector<32x32xbf16>
    %c0_4 = arith.constant 0 : index
    %c0_5 = arith.constant 0 : index
    %5 = vector.load %arg4[%c0_4, %c0_5] : memref<32x96xbf16, #tpu.memory_space<vmem>>, vector<32x96xbf16>
    %cst = arith.constant dense<0.000000e+00> : vector<32x96xf32>
    %6 = tpu.matmul %4, %5, %cst {dimension_numbers = #tpu.dot_dimension_numbers<[1], [0], [0], [1], [0, 0, 1, 1], [], []>} : vector<32x32xbf16>, vector<32x96xbf16>, vector<32x96xf32> -> vector<32x96xf32>
    %7 = arith.addf %3, %6 : vector<32x96xf32>
    %c0_6 = arith.constant 0 : index
    %c0_7 = arith.constant 0 : index
    %8 = vector.load %arg7[%c0_6, %c0_7] : memref<32x96xf32, #tpu.memory_space<vmem>>, vector<32x96xf32>
    tpu.vector_store %arg7[%c0_6, %c0_7], %7 {strides = array<i32>} : memref<32x96xf32, #tpu.memory_space<vmem>>, vector<32x96xf32>,
    %c0_i32_8 = arith.constant 0 : i32
    %9 = arith.cmpi eq, %arg2, %c0_i32_8 : i32
    %10 = arith.extui %9 : i1 to i32
    %c0_i32_9 = arith.constant 0 : i32
    %11 = arith.cmpi ne, %10, %c0_i32_9 : i32
    scf.if %11 {
      %c0_10 = arith.constant 0 : index
      %c0_11 = arith.constant 0 : index
      %12 = vector.load %arg7[%c0_10, %c0_11] : memref<32x96xf32, #tpu.memory_space<vmem>>, vector<32x96xf32>
      %c0_12 = arith.constant 0 : index
      %c0_13 = arith.constant 0 : index
      %13 = vector.load %arg5[%c0_12, %c0_13] : memref<1x96xf32, #tpu.memory_space<vmem>>, vector<1x96xf32>
      %14 = vector.broadcast %13 : vector<1x96xf32> to vector<32x96xf32>
      %15 = arith.addf %12, %14 : vector<32x96xf32>
      %16 = arith.truncf %15 : vector<32x96xf32> to vector<32x96xbf16>
      %c0_14 = arith.constant 0 : index
      %c0_15 = arith.constant 0 : index
      %17 = vector.load %arg6[%c0_14, %c0_15] : memref<32x96xbf16, #tpu.memory_space<vmem>>, vector<32x96xbf16>
      tpu.vector_store %arg6[%c0_14, %c0_15], %16 {strides = array<i32>} : memref<32x96xbf16, #tpu.memory_space<vmem>>, vector<32x96xbf16>,
    } else {
    }
    return
  }
  func.func @transform_0(%arg0: i32, %arg1: i32, %arg2: i32) -> (i32, i32) {
    %c0_i32 = arith.constant 0 : i32
    return %arg0, %arg2 : i32, i32
  }
  func.func @transform_1(%arg0: i32, %arg1: i32, %arg2: i32) -> (i32, i32) {
    %c0_i32 = arith.constant 0 : i32
    return %arg2, %arg1 : i32, i32
  }
  func.func @transform_2(%arg0: i32, %arg1: i32, %arg2: i32) -> (i32, i32) {
    %c0_i32 = arith.constant 0 : i32
    %c0_i32_0 = arith.constant 0 : i32
    return %c0_i32, %arg1 : i32, i32
  }
  func.func @transform_3(%arg0: i32, %arg1: i32, %arg2: i32) -> (i32, i32) {
    %c0_i32 = arith.constant 0 : i32
    return %arg0, %arg1 : i32, i32
  }
}

module attributes {stable_mosaic.version = 11 : i64} {
  func.func @_prob_measure_sampled_kernel(%arg0: i32, %arg1: memref<1x16x96xbf16, #tpu.memory_space<vmem>>, %arg2: memref<1x15x32xbf16, #tpu.memory_space<vmem>>, %arg3: memref<1x16x4xf32, #tpu.memory_space<vmem>>) attributes {dimension_semantics = [#tpu.dimension_semantics<parallel>], iteration_bounds = array<i64: 2>, scalar_prefetch = 0 : i64, scratch_operands = 0 : i64, tpu.core_type = #tpu.core_type<tc>, window_params = [{transform_indices = @transform_0, window_bounds = array<i64: 1, 16, 96>}, {transform_indices = @transform_1, window_bounds = array<i64: 1, 15, 32>}, {transform_indices = @transform_2, window_bounds = array<i64: 1, 16, 4>}]} {
    %c0 = arith.constant 0 : index
    %c0_0 = arith.constant 0 : index
    %c0_1 = arith.constant 0 : index
    %0 = vector.load %arg1[%c0, %c0_0, %c0_1] : memref<1x16x96xbf16, #tpu.memory_space<vmem>>, vector<1x16x8xbf16>
    %1 = vector.shape_cast %0 : vector<1x16x8xbf16> to vector<16x8xbf16>
    %c0_2 = arith.constant 0 : index
    %c0_3 = arith.constant 0 : index
    %c0_4 = arith.constant 0 : index
    %2 = vector.load %arg2[%c0_2, %c0_3, %c0_4] : memref<1x15x32xbf16, #tpu.memory_space<vmem>>, vector<1x15x8xbf16>
    %3 = vector.shape_cast %2 : vector<1x15x8xbf16> to vector<15x8xbf16>
    %cst = arith.constant dense<0.000000e+00> : vector<16x15xf32>
    %4 = tpu.matmul %1, %3, %cst {dimension_numbers = #tpu.dot_dimension_numbers<[1], [1], [0], [0], [0, 0, 1, 0], [], []>} : vector<16x8xbf16>, vector<15x8xbf16>, vector<16x15xf32> -> vector<16x15xf32>
    %cst_5 = arith.constant dense<0xFF800000> : vector<16xf32>
    %5 = vector.multi_reduction <maximumf>, %4, %cst_5 [1] : vector<16x15xf32> to vector<16xf32>
    %6 = vector.shape_cast %5 : vector<16xf32> to vector<16x1xf32>
    %cst_6 = arith.constant dense<0.000000e+00> : vector<16xf32>
    %7 = vector.multi_reduction <add>, %4, %cst_6 [1] : vector<16x15xf32> to vector<16xf32>
    %8 = vector.shape_cast %7 : vector<16xf32> to vector<16x1xf32>
    %cst_7 = arith.constant 6.250000e-02 : f32
    %9 = vector.broadcast %cst_7 : f32 to vector<16x1xf32>
    %10 = arith.mulf %8, %9 : vector<16x1xf32>
    %11 = arith.subf %6, %10 : vector<16x1xf32>
    %c0_8 = arith.constant 0 : index
    %c0_9 = arith.constant 0 : index
    %c0_10 = arith.constant 0 : index
    %12 = vector.load %arg3[%c0_8, %c0_9, %c0_10] : memref<1x16x4xf32, #tpu.memory_space<vmem>>, vector<1x16x1xf32>
    %13 = vector.shape_cast %12 : vector<1x16x1xf32> to vector<16x1xf32>
    %14 = vector.shape_cast %11 : vector<16x1xf32> to vector<1x16x1xf32>
    tpu.vector_store %arg3[%c0_8, %c0_9, %c0_10], %14 {strides = array<i32>} : memref<1x16x4xf32, #tpu.memory_space<vmem>>, vector<1x16x1xf32>,
    %c0_11 = arith.constant 0 : index
    %c0_12 = arith.constant 0 : index
    %c8 = arith.constant 8 : index
    %15 = vector.load %arg1[%c0_11, %c0_12, %c8] : memref<1x16x96xbf16, #tpu.memory_space<vmem>>, vector<1x16x8xbf16>
    %16 = vector.shape_cast %15 : vector<1x16x8xbf16> to vector<16x8xbf16>
    %c0_13 = arith.constant 0 : index
    %c0_14 = arith.constant 0 : index
    %c8_15 = arith.constant 8 : index
    %17 = vector.load %arg2[%c0_13, %c0_14, %c8_15] : memref<1x15x32xbf16, #tpu.memory_space<vmem>>, vector<1x15x8xbf16>
    %18 = vector.shape_cast %17 : vector<1x15x8xbf16> to vector<15x8xbf16>
    %cst_16 = arith.constant dense<0.000000e+00> : vector<16x15xf32>
    %19 = tpu.matmul %16, %18, %cst_16 {dimension_numbers = #tpu.dot_dimension_numbers<[1], [1], [0], [0], [0, 0, 1, 0], [], []>} : vector<16x8xbf16>, vector<15x8xbf16>, vector<16x15xf32> -> vector<16x15xf32>
    %cst_17 = arith.constant dense<0xFF800000> : vector<16xf32>
    %20 = vector.multi_reduction <maximumf>, %19, %cst_17 [1] : vector<16x15xf32> to vector<16xf32>
    %21 = vector.shape_cast %20 : vector<16xf32> to vector<16x1xf32>
    %cst_18 = arith.constant dense<0.000000e+00> : vector<16xf32>
    %22 = vector.multi_reduction <add>, %19, %cst_18 [1] : vector<16x15xf32> to vector<16xf32>
    %23 = vector.shape_cast %22 : vector<16xf32> to vector<16x1xf32>
    %cst_19 = arith.constant 6.250000e-02 : f32
    %24 = vector.broadcast %cst_19 : f32 to vector<16x1xf32>
    %25 = arith.mulf %23, %24 : vector<16x1xf32>
    %26 = arith.subf %21, %25 : vector<16x1xf32>
    %c0_20 = arith.constant 0 : index
    %c0_21 = arith.constant 0 : index
    %c1 = arith.constant 1 : index
    %27 = vector.load %arg3[%c0_20, %c0_21, %c1] : memref<1x16x4xf32, #tpu.memory_space<vmem>>, vector<1x16x1xf32>
    %28 = vector.shape_cast %27 : vector<1x16x1xf32> to vector<16x1xf32>
    %29 = vector.shape_cast %26 : vector<16x1xf32> to vector<1x16x1xf32>
    tpu.vector_store %arg3[%c0_20, %c0_21, %c1], %29 {strides = array<i32>} : memref<1x16x4xf32, #tpu.memory_space<vmem>>, vector<1x16x1xf32>,
    %c0_22 = arith.constant 0 : index
    %c0_23 = arith.constant 0 : index
    %c16 = arith.constant 16 : index
    %30 = vector.load %arg1[%c0_22, %c0_23, %c16] : memref<1x16x96xbf16, #tpu.memory_space<vmem>>, vector<1x16x8xbf16>
    %31 = vector.shape_cast %30 : vector<1x16x8xbf16> to vector<16x8xbf16>
    %c0_24 = arith.constant 0 : index
    %c0_25 = arith.constant 0 : index
    %c16_26 = arith.constant 16 : index
    %32 = vector.load %arg2[%c0_24, %c0_25, %c16_26] : memref<1x15x32xbf16, #tpu.memory_space<vmem>>, vector<1x15x8xbf16>
    %33 = vector.shape_cast %32 : vector<1x15x8xbf16> to vector<15x8xbf16>
    %cst_27 = arith.constant dense<0.000000e+00> : vector<16x15xf32>
    %34 = tpu.matmul %31, %33, %cst_27 {dimension_numbers = #tpu.dot_dimension_numbers<[1], [1], [0], [0], [0, 0, 1, 0], [], []>} : vector<16x8xbf16>, vector<15x8xbf16>, vector<16x15xf32> -> vector<16x15xf32>
    %cst_28 = arith.constant dense<0xFF800000> : vector<16xf32>
    %35 = vector.multi_reduction <maximumf>, %34, %cst_28 [1] : vector<16x15xf32> to vector<16xf32>
    %36 = vector.shape_cast %35 : vector<16xf32> to vector<16x1xf32>
    %cst_29 = arith.constant dense<0.000000e+00> : vector<16xf32>
    %37 = vector.multi_reduction <add>, %34, %cst_29 [1] : vector<16x15xf32> to vector<16xf32>
    %38 = vector.shape_cast %37 : vector<16xf32> to vector<16x1xf32>
    %cst_30 = arith.constant 6.250000e-02 : f32
    %39 = vector.broadcast %cst_30 : f32 to vector<16x1xf32>
    %40 = arith.mulf %38, %39 : vector<16x1xf32>
    %41 = arith.subf %36, %40 : vector<16x1xf32>
    %c0_31 = arith.constant 0 : index
    %c0_32 = arith.constant 0 : index
    %c2 = arith.constant 2 : index
    %42 = vector.load %arg3[%c0_31, %c0_32, %c2] : memref<1x16x4xf32, #tpu.memory_space<vmem>>, vector<1x16x1xf32>
    %43 = vector.shape_cast %42 : vector<1x16x1xf32> to vector<16x1xf32>
    %44 = vector.shape_cast %41 : vector<16x1xf32> to vector<1x16x1xf32>
    tpu.vector_store %arg3[%c0_31, %c0_32, %c2], %44 {strides = array<i32>} : memref<1x16x4xf32, #tpu.memory_space<vmem>>, vector<1x16x1xf32>,
    %c0_33 = arith.constant 0 : index
    %c0_34 = arith.constant 0 : index
    %c24 = arith.constant 24 : index
    %45 = vector.load %arg1[%c0_33, %c0_34, %c24] : memref<1x16x96xbf16, #tpu.memory_space<vmem>>, vector<1x16x8xbf16>
    %46 = vector.shape_cast %45 : vector<1x16x8xbf16> to vector<16x8xbf16>
    %c0_35 = arith.constant 0 : index
    %c0_36 = arith.constant 0 : index
    %c24_37 = arith.constant 24 : index
    %47 = vector.load %arg2[%c0_35, %c0_36, %c24_37] : memref<1x15x32xbf16, #tpu.memory_space<vmem>>, vector<1x15x8xbf16>
    %48 = vector.shape_cast %47 : vector<1x15x8xbf16> to vector<15x8xbf16>
    %cst_38 = arith.constant dense<0.000000e+00> : vector<16x15xf32>
    %49 = tpu.matmul %46, %48, %cst_38 {dimension_numbers = #tpu.dot_dimension_numbers<[1], [1], [0], [0], [0, 0, 1, 0], [], []>} : vector<16x8xbf16>, vector<15x8xbf16>, vector<16x15xf32> -> vector<16x15xf32>
    %cst_39 = arith.constant dense<0xFF800000> : vector<16xf32>
    %50 = vector.multi_reduction <maximumf>, %49, %cst_39 [1] : vector<16x15xf32> to vector<16xf32>
    %51 = vector.shape_cast %50 : vector<16xf32> to vector<16x1xf32>
    %cst_40 = arith.constant dense<0.000000e+00> : vector<16xf32>
    %52 = vector.multi_reduction <add>, %49, %cst_40 [1] : vector<16x15xf32> to vector<16xf32>
    %53 = vector.shape_cast %52 : vector<16xf32> to vector<16x1xf32>
    %cst_41 = arith.constant 6.250000e-02 : f32
    %54 = vector.broadcast %cst_41 : f32 to vector<16x1xf32>
    %55 = arith.mulf %53, %54 : vector<16x1xf32>
    %56 = arith.subf %51, %55 : vector<16x1xf32>
    %c0_42 = arith.constant 0 : index
    %c0_43 = arith.constant 0 : index
    %c3 = arith.constant 3 : index
    %57 = vector.load %arg3[%c0_42, %c0_43, %c3] : memref<1x16x4xf32, #tpu.memory_space<vmem>>, vector<1x16x1xf32>
    %58 = vector.shape_cast %57 : vector<1x16x1xf32> to vector<16x1xf32>
    %59 = vector.shape_cast %56 : vector<16x1xf32> to vector<1x16x1xf32>
    tpu.vector_store %arg3[%c0_42, %c0_43, %c3], %59 {strides = array<i32>} : memref<1x16x4xf32, #tpu.memory_space<vmem>>, vector<1x16x1xf32>,
    return
  }
  func.func @transform_0(%arg0: i32) -> (i32, i32, i32) {
    %c0_i32 = arith.constant 0 : i32
    %c0_i32_0 = arith.constant 0 : i32
    %c0_i32_1 = arith.constant 0 : i32
    return %arg0, %c0_i32, %c0_i32_0 : i32, i32, i32
  }
  func.func @transform_1(%arg0: i32) -> (i32, i32, i32) {
    %c0_i32 = arith.constant 0 : i32
    %c0_i32_0 = arith.constant 0 : i32
    %c0_i32_1 = arith.constant 0 : i32
    return %arg0, %c0_i32, %c0_i32_0 : i32, i32, i32
  }
  func.func @transform_2(%arg0: i32) -> (i32, i32, i32) {
    %c0_i32 = arith.constant 0 : i32
    %c0_i32_0 = arith.constant 0 : i32
    %c0_i32_1 = arith.constant 0 : i32
    return %arg0, %c0_i32, %c0_i32_0 : i32, i32, i32
  }
}

module attributes {stable_mosaic.version = 11 : i64} {
  func.func @_prob_attn_kernel(%arg0: i32, %arg1: memref<1x15x32xbf16, #tpu.memory_space<vmem>>, %arg2: memref<1x16x96xbf16, #tpu.memory_space<vmem>>, %arg3: memref<1x15x32xbf16, #tpu.memory_space<vmem>>) attributes {dimension_semantics = [#tpu.dimension_semantics<parallel>], iteration_bounds = array<i64: 2>, scalar_prefetch = 0 : i64, scratch_operands = 0 : i64, tpu.core_type = #tpu.core_type<tc>, window_params = [{transform_indices = @transform_0, window_bounds = array<i64: 1, 15, 32>}, {transform_indices = @transform_1, window_bounds = array<i64: 1, 16, 96>}, {transform_indices = @transform_2, window_bounds = array<i64: 1, 15, 32>}]} {
    %c0 = arith.constant 0 : index
    %c0_0 = arith.constant 0 : index
    %c0_1 = arith.constant 0 : index
    %0 = vector.load %arg1[%c0, %c0_0, %c0_1] : memref<1x15x32xbf16, #tpu.memory_space<vmem>>, vector<1x15x8xbf16>
    %1 = vector.shape_cast %0 : vector<1x15x8xbf16> to vector<15x8xbf16>
    %c0_2 = arith.constant 0 : index
    %c0_3 = arith.constant 0 : index
    %c32 = arith.constant 32 : index
    %2 = vector.load %arg2[%c0_2, %c0_3, %c32] : memref<1x16x96xbf16, #tpu.memory_space<vmem>>, vector<1x16x8xbf16>
    %3 = vector.shape_cast %2 : vector<1x16x8xbf16> to vector<16x8xbf16>
    %c0_4 = arith.constant 0 : index
    %c0_5 = arith.constant 0 : index
    %c64 = arith.constant 64 : index
    %4 = vector.load %arg2[%c0_4, %c0_5, %c64] : memref<1x16x96xbf16, #tpu.memory_space<vmem>>, vector<1x16x8xbf16>
    %5 = vector.shape_cast %4 : vector<1x16x8xbf16> to vector<16x8xbf16>
    %cst = arith.constant dense<0.000000e+00> : vector<15x16xf32>
    %6 = tpu.matmul %1, %3, %cst {dimension_numbers = #tpu.dot_dimension_numbers<[1], [1], [0], [0], [0, 0, 1, 0], [], []>} : vector<15x8xbf16>, vector<16x8xbf16>, vector<15x16xf32> -> vector<15x16xf32>
    %cst_6 = arith.constant 0.353553385 : f32
    %7 = vector.broadcast %cst_6 : f32 to vector<15x16xf32>
    %8 = arith.mulf %6, %7 : vector<15x16xf32>
    %cst_7 = arith.constant dense<0xFF800000> : vector<15xf32>
    %9 = vector.multi_reduction <maximumf>, %8, %cst_7 [1] : vector<15x16xf32> to vector<15xf32>
    %10 = vector.shape_cast %9 : vector<15xf32> to vector<15x1xf32>
    %11 = vector.broadcast %10 : vector<15x1xf32> to vector<15x16xf32>
    %12 = arith.subf %8, %11 : vector<15x16xf32>
    %13 = math.exp %12 : vector<15x16xf32>
    %cst_8 = arith.constant dense<0.000000e+00> : vector<15xf32>
    %14 = vector.multi_reduction <add>, %13, %cst_8 [1] : vector<15x16xf32> to vector<15xf32>
    %15 = vector.shape_cast %14 : vector<15xf32> to vector<15x1xf32>
    %16 = tpu.reciprocal %15 {approx = true} : vector<15x1xf32> -> vector<15x1xf32>
    %17 = vector.broadcast %16 : vector<15x1xf32> to vector<15x16xf32>
    %18 = arith.mulf %13, %17 : vector<15x16xf32>
    %19 = arith.truncf %18 : vector<15x16xf32> to vector<15x16xbf16>
    %cst_9 = arith.constant dense<0.000000e+00> : vector<15x8xf32>
    %20 = tpu.matmul %19, %5, %cst_9 {dimension_numbers = #tpu.dot_dimension_numbers<[1], [0], [0], [1], [0, 0, 1, 1], [], []>} : vector<15x16xbf16>, vector<16x8xbf16>, vector<15x8xf32> -> vector<15x8xf32>
    %21 = arith.truncf %20 : vector<15x8xf32> to vector<15x8xbf16>
    %c0_10 = arith.constant 0 : index
    %c0_11 = arith.constant 0 : index
    %c0_12 = arith.constant 0 : index
    %22 = vector.load %arg3[%c0_10, %c0_11, %c0_12] : memref<1x15x32xbf16, #tpu.memory_space<vmem>>, vector<1x15x8xbf16>
    %23 = vector.shape_cast %22 : vector<1x15x8xbf16> to vector<15x8xbf16>
    %24 = vector.shape_cast %21 : vector<15x8xbf16> to vector<1x15x8xbf16>
    tpu.vector_store %arg3[%c0_10, %c0_11, %c0_12], %24 {strides = array<i32>} : memref<1x15x32xbf16, #tpu.memory_space<vmem>>, vector<1x15x8xbf16>,
    %c0_13 = arith.constant 0 : index
    %c0_14 = arith.constant 0 : index
    %c8 = arith.constant 8 : index
    %25 = vector.load %arg1[%c0_13, %c0_14, %c8] : memref<1x15x32xbf16, #tpu.memory_space<vmem>>, vector<1x15x8xbf16>
    %26 = vector.shape_cast %25 : vector<1x15x8xbf16> to vector<15x8xbf16>
    %c0_15 = arith.constant 0 : index
    %c0_16 = arith.constant 0 : index
    %c40 = arith.constant 40 : index
    %27 = vector.load %arg2[%c0_15, %c0_16, %c40] : memref<1x16x96xbf16, #tpu.memory_space<vmem>>, vector<1x16x8xbf16>
    %28 = vector.shape_cast %27 : vector<1x16x8xbf16> to vector<16x8xbf16>
    %c0_17 = arith.constant 0 : index
    %c0_18 = arith.constant 0 : index
    %c72 = arith.constant 72 : index
    %29 = vector.load %arg2[%c0_17, %c0_18, %c72] : memref<1x16x96xbf16, #tpu.memory_space<vmem>>, vector<1x16x8xbf16>
    %30 = vector.shape_cast %29 : vector<1x16x8xbf16> to vector<16x8xbf16>
    %cst_19 = arith.constant dense<0.000000e+00> : vector<15x16xf32>
    %31 = tpu.matmul %26, %28, %cst_19 {dimension_numbers = #tpu.dot_dimension_numbers<[1], [1], [0], [0], [0, 0, 1, 0], [], []>} : vector<15x8xbf16>, vector<16x8xbf16>, vector<15x16xf32> -> vector<15x16xf32>
    %cst_20 = arith.constant 0.353553385 : f32
    %32 = vector.broadcast %cst_20 : f32 to vector<15x16xf32>
    %33 = arith.mulf %31, %32 : vector<15x16xf32>
    %cst_21 = arith.constant dense<0xFF800000> : vector<15xf32>
    %34 = vector.multi_reduction <maximumf>, %33, %cst_21 [1] : vector<15x16xf32> to vector<15xf32>
    %35 = vector.shape_cast %34 : vector<15xf32> to vector<15x1xf32>
    %36 = vector.broadcast %35 : vector<15x1xf32> to vector<15x16xf32>
    %37 = arith.subf %33, %36 : vector<15x16xf32>
    %38 = math.exp %37 : vector<15x16xf32>
    %cst_22 = arith.constant dense<0.000000e+00> : vector<15xf32>
    %39 = vector.multi_reduction <add>, %38, %cst_22 [1] : vector<15x16xf32> to vector<15xf32>
    %40 = vector.shape_cast %39 : vector<15xf32> to vector<15x1xf32>
    %41 = tpu.reciprocal %40 {approx = true} : vector<15x1xf32> -> vector<15x1xf32>
    %42 = vector.broadcast %41 : vector<15x1xf32> to vector<15x16xf32>
    %43 = arith.mulf %38, %42 : vector<15x16xf32>
    %44 = arith.truncf %43 : vector<15x16xf32> to vector<15x16xbf16>
    %cst_23 = arith.constant dense<0.000000e+00> : vector<15x8xf32>
    %45 = tpu.matmul %44, %30, %cst_23 {dimension_numbers = #tpu.dot_dimension_numbers<[1], [0], [0], [1], [0, 0, 1, 1], [], []>} : vector<15x16xbf16>, vector<16x8xbf16>, vector<15x8xf32> -> vector<15x8xf32>
    %46 = arith.truncf %45 : vector<15x8xf32> to vector<15x8xbf16>
    %c0_24 = arith.constant 0 : index
    %c0_25 = arith.constant 0 : index
    %c8_26 = arith.constant 8 : index
    %47 = vector.load %arg3[%c0_24, %c0_25, %c8_26] : memref<1x15x32xbf16, #tpu.memory_space<vmem>>, vector<1x15x8xbf16>
    %48 = vector.shape_cast %47 : vector<1x15x8xbf16> to vector<15x8xbf16>
    %49 = vector.shape_cast %46 : vector<15x8xbf16> to vector<1x15x8xbf16>
    tpu.vector_store %arg3[%c0_24, %c0_25, %c8_26], %49 {strides = array<i32>} : memref<1x15x32xbf16, #tpu.memory_space<vmem>>, vector<1x15x8xbf16>,
    %c0_27 = arith.constant 0 : index
    %c0_28 = arith.constant 0 : index
    %c16 = arith.constant 16 : index
    %50 = vector.load %arg1[%c0_27, %c0_28, %c16] : memref<1x15x32xbf16, #tpu.memory_space<vmem>>, vector<1x15x8xbf16>
    %51 = vector.shape_cast %50 : vector<1x15x8xbf16> to vector<15x8xbf16>
    %c0_29 = arith.constant 0 : index
    %c0_30 = arith.constant 0 : index
    %c48 = arith.constant 48 : index
    %52 = vector.load %arg2[%c0_29, %c0_30, %c48] : memref<1x16x96xbf16, #tpu.memory_space<vmem>>, vector<1x16x8xbf16>
    %53 = vector.shape_cast %52 : vector<1x16x8xbf16> to vector<16x8xbf16>
    %c0_31 = arith.constant 0 : index
    %c0_32 = arith.constant 0 : index
    %c80 = arith.constant 80 : index
    %54 = vector.load %arg2[%c0_31, %c0_32, %c80] : memref<1x16x96xbf16, #tpu.memory_space<vmem>>, vector<1x16x8xbf16>
    %55 = vector.shape_cast %54 : vector<1x16x8xbf16> to vector<16x8xbf16>
    %cst_33 = arith.constant dense<0.000000e+00> : vector<15x16xf32>
    %56 = tpu.matmul %51, %53, %cst_33 {dimension_numbers = #tpu.dot_dimension_numbers<[1], [1], [0], [0], [0, 0, 1, 0], [], []>} : vector<15x8xbf16>, vector<16x8xbf16>, vector<15x16xf32> -> vector<15x16xf32>
    %cst_34 = arith.constant 0.353553385 : f32
    %57 = vector.broadcast %cst_34 : f32 to vector<15x16xf32>
    %58 = arith.mulf %56, %57 : vector<15x16xf32>
    %cst_35 = arith.constant dense<0xFF800000> : vector<15xf32>
    %59 = vector.multi_reduction <maximumf>, %58, %cst_35 [1] : vector<15x16xf32> to vector<15xf32>
    %60 = vector.shape_cast %59 : vector<15xf32> to vector<15x1xf32>
    %61 = vector.broadcast %60 : vector<15x1xf32> to vector<15x16xf32>
    %62 = arith.subf %58, %61 : vector<15x16xf32>
    %63 = math.exp %62 : vector<15x16xf32>
    %cst_36 = arith.constant dense<0.000000e+00> : vector<15xf32>
    %64 = vector.multi_reduction <add>, %63, %cst_36 [1] : vector<15x16xf32> to vector<15xf32>
    %65 = vector.shape_cast %64 : vector<15xf32> to vector<15x1xf32>
    %66 = tpu.reciprocal %65 {approx = true} : vector<15x1xf32> -> vector<15x1xf32>
    %67 = vector.broadcast %66 : vector<15x1xf32> to vector<15x16xf32>
    %68 = arith.mulf %63, %67 : vector<15x16xf32>
    %69 = arith.truncf %68 : vector<15x16xf32> to vector<15x16xbf16>
    %cst_37 = arith.constant dense<0.000000e+00> : vector<15x8xf32>
    %70 = tpu.matmul %69, %55, %cst_37 {dimension_numbers = #tpu.dot_dimension_numbers<[1], [0], [0], [1], [0, 0, 1, 1], [], []>} : vector<15x16xbf16>, vector<16x8xbf16>, vector<15x8xf32> -> vector<15x8xf32>
    %71 = arith.truncf %70 : vector<15x8xf32> to vector<15x8xbf16>
    %c0_38 = arith.constant 0 : index
    %c0_39 = arith.constant 0 : index
    %c16_40 = arith.constant 16 : index
    %72 = vector.load %arg3[%c0_38, %c0_39, %c16_40] : memref<1x15x32xbf16, #tpu.memory_space<vmem>>, vector<1x15x8xbf16>
    %73 = vector.shape_cast %72 : vector<1x15x8xbf16> to vector<15x8xbf16>
    %74 = vector.shape_cast %71 : vector<15x8xbf16> to vector<1x15x8xbf16>
    tpu.vector_store %arg3[%c0_38, %c0_39, %c16_40], %74 {strides = array<i32>} : memref<1x15x32xbf16, #tpu.memory_space<vmem>>, vector<1x15x8xbf16>,
    %c0_41 = arith.constant 0 : index
    %c0_42 = arith.constant 0 : index
    %c24 = arith.constant 24 : index
    %75 = vector.load %arg1[%c0_41, %c0_42, %c24] : memref<1x15x32xbf16, #tpu.memory_space<vmem>>, vector<1x15x8xbf16>
    %76 = vector.shape_cast %75 : vector<1x15x8xbf16> to vector<15x8xbf16>
    %c0_43 = arith.constant 0 : index
    %c0_44 = arith.constant 0 : index
    %c56 = arith.constant 56 : index
    %77 = vector.load %arg2[%c0_43, %c0_44, %c56] : memref<1x16x96xbf16, #tpu.memory_space<vmem>>, vector<1x16x8xbf16>
    %78 = vector.shape_cast %77 : vector<1x16x8xbf16> to vector<16x8xbf16>
    %c0_45 = arith.constant 0 : index
    %c0_46 = arith.constant 0 : index
    %c88 = arith.constant 88 : index
    %79 = vector.load %arg2[%c0_45, %c0_46, %c88] : memref<1x16x96xbf16, #tpu.memory_space<vmem>>, vector<1x16x8xbf16>
    %80 = vector.shape_cast %79 : vector<1x16x8xbf16> to vector<16x8xbf16>
    %cst_47 = arith.constant dense<0.000000e+00> : vector<15x16xf32>
    %81 = tpu.matmul %76, %78, %cst_47 {dimension_numbers = #tpu.dot_dimension_numbers<[1], [1], [0], [0], [0, 0, 1, 0], [], []>} : vector<15x8xbf16>, vector<16x8xbf16>, vector<15x16xf32> -> vector<15x16xf32>
    %cst_48 = arith.constant 0.353553385 : f32
    %82 = vector.broadcast %cst_48 : f32 to vector<15x16xf32>
    %83 = arith.mulf %81, %82 : vector<15x16xf32>
    %cst_49 = arith.constant dense<0xFF800000> : vector<15xf32>
    %84 = vector.multi_reduction <maximumf>, %83, %cst_49 [1] : vector<15x16xf32> to vector<15xf32>
    %85 = vector.shape_cast %84 : vector<15xf32> to vector<15x1xf32>
    %86 = vector.broadcast %85 : vector<15x1xf32> to vector<15x16xf32>
    %87 = arith.subf %83, %86 : vector<15x16xf32>
    %88 = math.exp %87 : vector<15x16xf32>
    %cst_50 = arith.constant dense<0.000000e+00> : vector<15xf32>
    %89 = vector.multi_reduction <add>, %88, %cst_50 [1] : vector<15x16xf32> to vector<15xf32>
    %90 = vector.shape_cast %89 : vector<15xf32> to vector<15x1xf32>
    %91 = tpu.reciprocal %90 {approx = true} : vector<15x1xf32> -> vector<15x1xf32>
    %92 = vector.broadcast %91 : vector<15x1xf32> to vector<15x16xf32>
    %93 = arith.mulf %88, %92 : vector<15x16xf32>
    %94 = arith.truncf %93 : vector<15x16xf32> to vector<15x16xbf16>
    %cst_51 = arith.constant dense<0.000000e+00> : vector<15x8xf32>
    %95 = tpu.matmul %94, %80, %cst_51 {dimension_numbers = #tpu.dot_dimension_numbers<[1], [0], [0], [1], [0, 0, 1, 1], [], []>} : vector<15x16xbf16>, vector<16x8xbf16>, vector<15x8xf32> -> vector<15x8xf32>
    %96 = arith.truncf %95 : vector<15x8xf32> to vector<15x8xbf16>
    %c0_52 = arith.constant 0 : index
    %c0_53 = arith.constant 0 : index
    %c24_54 = arith.constant 24 : index
    %97 = vector.load %arg3[%c0_52, %c0_53, %c24_54] : memref<1x15x32xbf16, #tpu.memory_space<vmem>>, vector<1x15x8xbf16>
    %98 = vector.shape_cast %97 : vector<1x15x8xbf16> to vector<15x8xbf16>
    %99 = vector.shape_cast %96 : vector<15x8xbf16> to vector<1x15x8xbf16>
    tpu.vector_store %arg3[%c0_52, %c0_53, %c24_54], %99 {strides = array<i32>} : memref<1x15x32xbf16, #tpu.memory_space<vmem>>, vector<1x15x8xbf16>,
    return
  }
  func.func @transform_0(%arg0: i32) -> (i32, i32, i32) {
    %c0_i32 = arith.constant 0 : i32
    %c0_i32_0 = arith.constant 0 : i32
    %c0_i32_1 = arith.constant 0 : i32
    return %arg0, %c0_i32, %c0_i32_0 : i32, i32, i32
  }
  func.func @transform_1(%arg0: i32) -> (i32, i32, i32) {
    %c0_i32 = arith.constant 0 : i32
    %c0_i32_0 = arith.constant 0 : i32
    %c0_i32_1 = arith.constant 0 : i32
    return %arg0, %c0_i32, %c0_i32_0 : i32, i32, i32
  }
  func.func @transform_2(%arg0: i32) -> (i32, i32, i32) {
    %c0_i32 = arith.constant 0 : i32
    %c0_i32_0 = arith.constant 0 : i32
    %c0_i32_1 = arith.constant 0 : i32
    return %arg0, %c0_i32, %c0_i32_0 : i32, i32, i32
  }
}

module attributes {stable_mosaic.version = 11 : i64} {
  func.func @_linear_kernel(%arg0: i32, %arg1: i32, %arg2: i32, %arg3: memref<32x32xbf16, #tpu.memory_space<vmem>>, %arg4: memref<32x32xbf16, #tpu.memory_space<vmem>>, %arg5: memref<1x32xf32, #tpu.memory_space<vmem>>, %arg6: memref<32x32xf32, #tpu.memory_space<vmem>>, %arg7: memref<32x32xf32, #tpu.memory_space<vmem>>) attributes {dimension_semantics = [#tpu.dimension_semantics<parallel>, #tpu.dimension_semantics<parallel>, #tpu.dimension_semantics<arbitrary>], iteration_bounds = array<i64: 1, 1, 1>, scalar_prefetch = 0 : i64, scratch_operands = 1 : i64, tpu.core_type = #tpu.core_type<tc>, window_params = [{transform_indices = @transform_0, window_bounds = array<i64: 32, 32>}, {transform_indices = @transform_1, window_bounds = array<i64: 32, 32>}, {transform_indices = @transform_2, window_bounds = array<i64: 1, 32>}, {transform_indices = @transform_3, window_bounds = array<i64: 32, 32>}]} {
    %c0_i32 = arith.constant 0 : i32
    %0 = arith.cmpi eq, %arg2, %c0_i32 : i32
    %1 = arith.extui %0 : i1 to i32
    %c0_i32_0 = arith.constant 0 : i32
    %2 = arith.cmpi ne, %1, %c0_i32_0 : i32
    scf.if %2 {
      %cst_10 = arith.constant 0.000000e+00 : f32
      %12 = vector.broadcast %cst_10 : f32 to vector<32x32xf32>
      %c0_11 = arith.constant 0 : index
      %c0_12 = arith.constant 0 : index
      %13 = vector.load %arg7[%c0_11, %c0_12] : memref<32x32xf32, #tpu.memory_space<vmem>>, vector<32x32xf32>
      tpu.vector_store %arg7[%c0_11, %c0_12], %12 {strides = array<i32>} : memref<32x32xf32, #tpu.memory_space<vmem>>, vector<32x32xf32>,
    } else {
    }
    %c0 = arith.constant 0 : index
    %c0_1 = arith.constant 0 : index
    %3 = vector.load %arg7[%c0, %c0_1] : memref<32x32xf32, #tpu.memory_space<vmem>>, vector<32x32xf32>
    %c0_2 = arith.constant 0 : index
    %c0_3 = arith.constant 0 : index
    %4 = vector.load %arg3[%c0_2, %c0_3] : memref<32x32xbf16, #tpu.memory_space<vmem>>, vector<32x32xbf16>
    %c0_4 = arith.constant 0 : index
    %c0_5 = arith.constant 0 : index
    %5 = vector.load %arg4[%c0_4, %c0_5] : memref<32x32xbf16, #tpu.memory_space<vmem>>, vector<32x32xbf16>
    %cst = arith.constant dense<0.000000e+00> : vector<32x32xf32>
    %6 = tpu.matmul %4, %5, %cst {dimension_numbers = #tpu.dot_dimension_numbers<[1], [0], [0], [1], [0, 0, 1, 1], [], []>} : vector<32x32xbf16>, vector<32x32xbf16>, vector<32x32xf32> -> vector<32x32xf32>
    %7 = arith.addf %3, %6 : vector<32x32xf32>
    %c0_6 = arith.constant 0 : index
    %c0_7 = arith.constant 0 : index
    %8 = vector.load %arg7[%c0_6, %c0_7] : memref<32x32xf32, #tpu.memory_space<vmem>>, vector<32x32xf32>
    tpu.vector_store %arg7[%c0_6, %c0_7], %7 {strides = array<i32>} : memref<32x32xf32, #tpu.memory_space<vmem>>, vector<32x32xf32>,
    %c0_i32_8 = arith.constant 0 : i32
    %9 = arith.cmpi eq, %arg2, %c0_i32_8 : i32
    %10 = arith.extui %9 : i1 to i32
    %c0_i32_9 = arith.constant 0 : i32
    %11 = arith.cmpi ne, %10, %c0_i32_9 : i32
    scf.if %11 {
      %c0_10 = arith.constant 0 : index
      %c0_11 = arith.constant 0 : index
      %12 = vector.load %arg7[%c0_10, %c0_11] : memref<32x32xf32, #tpu.memory_space<vmem>>, vector<32x32xf32>
      %c0_12 = arith.constant 0 : index
      %c0_13 = arith.constant 0 : index
      %13 = vector.load %arg5[%c0_12, %c0_13] : memref<1x32xf32, #tpu.memory_space<vmem>>, vector<1x32xf32>
      %14 = vector.broadcast %13 : vector<1x32xf32> to vector<32x32xf32>
      %15 = arith.addf %12, %14 : vector<32x32xf32>
      %c0_14 = arith.constant 0 : index
      %c0_15 = arith.constant 0 : index
      %16 = vector.load %arg6[%c0_14, %c0_15] : memref<32x32xf32, #tpu.memory_space<vmem>>, vector<32x32xf32>
      tpu.vector_store %arg6[%c0_14, %c0_15], %15 {strides = array<i32>} : memref<32x32xf32, #tpu.memory_space<vmem>>, vector<32x32xf32>,
    } else {
    }
    return
  }
  func.func @transform_0(%arg0: i32, %arg1: i32, %arg2: i32) -> (i32, i32) {
    %c0_i32 = arith.constant 0 : i32
    return %arg0, %arg2 : i32, i32
  }
  func.func @transform_1(%arg0: i32, %arg1: i32, %arg2: i32) -> (i32, i32) {
    %c0_i32 = arith.constant 0 : i32
    return %arg2, %arg1 : i32, i32
  }
  func.func @transform_2(%arg0: i32, %arg1: i32, %arg2: i32) -> (i32, i32) {
    %c0_i32 = arith.constant 0 : i32
    %c0_i32_0 = arith.constant 0 : i32
    return %c0_i32, %arg1 : i32, i32
  }
  func.func @transform_3(%arg0: i32, %arg1: i32, %arg2: i32) -> (i32, i32) {
    %c0_i32 = arith.constant 0 : i32
    return %arg0, %arg1 : i32, i32
  }
}

module attributes {stable_mosaic.version = 11 : i64} {
  func.func @_add_ln_kernel(%arg0: i32, %arg1: memref<32x32xbf16, #tpu.memory_space<vmem>>, %arg2: memref<32x32xf32, #tpu.memory_space<vmem>>, %arg3: memref<1x32xf32, #tpu.memory_space<vmem>>, %arg4: memref<1x32xf32, #tpu.memory_space<vmem>>, %arg5: memref<32x32xbf16, #tpu.memory_space<vmem>>) attributes {dimension_semantics = [#tpu.dimension_semantics<parallel>], iteration_bounds = array<i64: 1>, scalar_prefetch = 0 : i64, scratch_operands = 0 : i64, tpu.core_type = #tpu.core_type<tc>, window_params = [{transform_indices = @transform_0, window_bounds = array<i64: 32, 32>}, {transform_indices = @transform_1, window_bounds = array<i64: 32, 32>}, {pipeline_mode = #tpu.pipeline_mode<synchronous>, transform_indices = @transform_2, window_bounds = array<i64: 1, 32>}, {pipeline_mode = #tpu.pipeline_mode<synchronous>, transform_indices = @transform_3, window_bounds = array<i64: 1, 32>}, {transform_indices = @transform_4, window_bounds = array<i64: 32, 32>}]} {
    %c0 = arith.constant 0 : index
    %c0_0 = arith.constant 0 : index
    %0 = vector.load %arg1[%c0, %c0_0] : memref<32x32xbf16, #tpu.memory_space<vmem>>, vector<32x32xbf16>
    %1 = arith.extf %0 : vector<32x32xbf16> to vector<32x32xf32>
    %c0_1 = arith.constant 0 : index
    %c0_2 = arith.constant 0 : index
    %2 = vector.load %arg2[%c0_1, %c0_2] : memref<32x32xf32, #tpu.memory_space<vmem>>, vector<32x32xf32>
    %3 = arith.addf %1, %2 : vector<32x32xf32>
    %cst = arith.constant dense<0.000000e+00> : vector<32xf32>
    %4 = vector.multi_reduction <add>, %3, %cst [1] : vector<32x32xf32> to vector<32xf32>
    %5 = vector.shape_cast %4 : vector<32xf32> to vector<32x1xf32>
    %cst_3 = arith.constant 3.200000e+01 : f32
    %6 = vector.broadcast %cst_3 : f32 to vector<32x1xf32>
    %7 = arith.divf %5, %6 : vector<32x1xf32>
    %8 = vector.broadcast %7 : vector<32x1xf32> to vector<32x32xf32>
    %9 = arith.subf %3, %8 : vector<32x32xf32>
    %10 = arith.mulf %9, %9 : vector<32x32xf32>
    %cst_4 = arith.constant dense<0.000000e+00> : vector<32xf32>
    %11 = vector.multi_reduction <add>, %10, %cst_4 [1] : vector<32x32xf32> to vector<32xf32>
    %12 = vector.shape_cast %11 : vector<32xf32> to vector<32x1xf32>
    %cst_5 = arith.constant 3.200000e+01 : f32
    %13 = vector.broadcast %cst_5 : f32 to vector<32x1xf32>
    %14 = arith.divf %12, %13 : vector<32x1xf32>
    %15 = vector.broadcast %7 : vector<32x1xf32> to vector<32x32xf32>
    %16 = arith.subf %3, %15 : vector<32x32xf32>
    %cst_6 = arith.constant 9.99999974E-6 : f32
    %17 = vector.broadcast %cst_6 : f32 to vector<32x1xf32>
    %18 = arith.addf %14, %17 : vector<32x1xf32>
    %19 = math.rsqrt %18 : vector<32x1xf32>
    %20 = vector.broadcast %19 : vector<32x1xf32> to vector<32x32xf32>
    %21 = arith.mulf %16, %20 : vector<32x32xf32>
    %c0_7 = arith.constant 0 : index
    %c0_8 = arith.constant 0 : index
    %22 = vector.load %arg3[%c0_7, %c0_8] : memref<1x32xf32, #tpu.memory_space<vmem>>, vector<1x32xf32>
    %23 = vector.broadcast %22 : vector<1x32xf32> to vector<32x32xf32>
    %24 = arith.mulf %21, %23 : vector<32x32xf32>
    %c0_9 = arith.constant 0 : index
    %c0_10 = arith.constant 0 : index
    %25 = vector.load %arg4[%c0_9, %c0_10] : memref<1x32xf32, #tpu.memory_space<vmem>>, vector<1x32xf32>
    %26 = vector.broadcast %25 : vector<1x32xf32> to vector<32x32xf32>
    %27 = arith.addf %24, %26 : vector<32x32xf32>
    %28 = arith.truncf %27 : vector<32x32xf32> to vector<32x32xbf16>
    %c0_11 = arith.constant 0 : index
    %c0_12 = arith.constant 0 : index
    %29 = vector.load %arg5[%c0_11, %c0_12] : memref<32x32xbf16, #tpu.memory_space<vmem>>, vector<32x32xbf16>
    tpu.vector_store %arg5[%c0_11, %c0_12], %28 {strides = array<i32>} : memref<32x32xbf16, #tpu.memory_space<vmem>>, vector<32x32xbf16>,
    return
  }
  func.func @transform_0(%arg0: i32) -> (i32, i32) {
    %c0_i32 = arith.constant 0 : i32
    %c0_i32_0 = arith.constant 0 : i32
    return %arg0, %c0_i32 : i32, i32
  }
  func.func @transform_1(%arg0: i32) -> (i32, i32) {
    %c0_i32 = arith.constant 0 : i32
    %c0_i32_0 = arith.constant 0 : i32
    return %arg0, %c0_i32 : i32, i32
  }
  func.func @transform_2(%arg0: i32) -> (i32, i32) {
    %c0_i32 = arith.constant 0 : i32
    %c0_i32_0 = arith.constant 0 : i32
    %c0_i32_1 = arith.constant 0 : i32
    return %c0_i32, %c0_i32_0 : i32, i32
  }
  func.func @transform_3(%arg0: i32) -> (i32, i32) {
    %c0_i32 = arith.constant 0 : i32
    %c0_i32_0 = arith.constant 0 : i32
    %c0_i32_1 = arith.constant 0 : i32
    return %c0_i32, %c0_i32_0 : i32, i32
  }
  func.func @transform_4(%arg0: i32) -> (i32, i32) {
    %c0_i32 = arith.constant 0 : i32
    %c0_i32_0 = arith.constant 0 : i32
    return %arg0, %c0_i32 : i32, i32
  }
}

module attributes {stable_mosaic.version = 11 : i64} {
  func.func @_linear_kernel(%arg0: i32, %arg1: i32, %arg2: i32, %arg3: memref<32x32xbf16, #tpu.memory_space<vmem>>, %arg4: memref<32x32xbf16, #tpu.memory_space<vmem>>, %arg5: memref<1x32xf32, #tpu.memory_space<vmem>>, %arg6: memref<32x32xbf16, #tpu.memory_space<vmem>>, %arg7: memref<32x32xf32, #tpu.memory_space<vmem>>) attributes {dimension_semantics = [#tpu.dimension_semantics<parallel>, #tpu.dimension_semantics<parallel>, #tpu.dimension_semantics<arbitrary>], iteration_bounds = array<i64: 1, 1, 1>, scalar_prefetch = 0 : i64, scratch_operands = 1 : i64, tpu.core_type = #tpu.core_type<tc>, window_params = [{transform_indices = @transform_0, window_bounds = array<i64: 32, 32>}, {transform_indices = @transform_1, window_bounds = array<i64: 32, 32>}, {transform_indices = @transform_2, window_bounds = array<i64: 1, 32>}, {transform_indices = @transform_3, window_bounds = array<i64: 32, 32>}]} {
    %c0_i32 = arith.constant 0 : i32
    %0 = arith.cmpi eq, %arg2, %c0_i32 : i32
    %1 = arith.extui %0 : i1 to i32
    %c0_i32_0 = arith.constant 0 : i32
    %2 = arith.cmpi ne, %1, %c0_i32_0 : i32
    scf.if %2 {
      %cst_10 = arith.constant 0.000000e+00 : f32
      %12 = vector.broadcast %cst_10 : f32 to vector<32x32xf32>
      %c0_11 = arith.constant 0 : index
      %c0_12 = arith.constant 0 : index
      %13 = vector.load %arg7[%c0_11, %c0_12] : memref<32x32xf32, #tpu.memory_space<vmem>>, vector<32x32xf32>
      tpu.vector_store %arg7[%c0_11, %c0_12], %12 {strides = array<i32>} : memref<32x32xf32, #tpu.memory_space<vmem>>, vector<32x32xf32>,
    } else {
    }
    %c0 = arith.constant 0 : index
    %c0_1 = arith.constant 0 : index
    %3 = vector.load %arg7[%c0, %c0_1] : memref<32x32xf32, #tpu.memory_space<vmem>>, vector<32x32xf32>
    %c0_2 = arith.constant 0 : index
    %c0_3 = arith.constant 0 : index
    %4 = vector.load %arg3[%c0_2, %c0_3] : memref<32x32xbf16, #tpu.memory_space<vmem>>, vector<32x32xbf16>
    %c0_4 = arith.constant 0 : index
    %c0_5 = arith.constant 0 : index
    %5 = vector.load %arg4[%c0_4, %c0_5] : memref<32x32xbf16, #tpu.memory_space<vmem>>, vector<32x32xbf16>
    %cst = arith.constant dense<0.000000e+00> : vector<32x32xf32>
    %6 = tpu.matmul %4, %5, %cst {dimension_numbers = #tpu.dot_dimension_numbers<[1], [0], [0], [1], [0, 0, 1, 1], [], []>} : vector<32x32xbf16>, vector<32x32xbf16>, vector<32x32xf32> -> vector<32x32xf32>
    %7 = arith.addf %3, %6 : vector<32x32xf32>
    %c0_6 = arith.constant 0 : index
    %c0_7 = arith.constant 0 : index
    %8 = vector.load %arg7[%c0_6, %c0_7] : memref<32x32xf32, #tpu.memory_space<vmem>>, vector<32x32xf32>
    tpu.vector_store %arg7[%c0_6, %c0_7], %7 {strides = array<i32>} : memref<32x32xf32, #tpu.memory_space<vmem>>, vector<32x32xf32>,
    %c0_i32_8 = arith.constant 0 : i32
    %9 = arith.cmpi eq, %arg2, %c0_i32_8 : i32
    %10 = arith.extui %9 : i1 to i32
    %c0_i32_9 = arith.constant 0 : i32
    %11 = arith.cmpi ne, %10, %c0_i32_9 : i32
    scf.if %11 {
      %c0_10 = arith.constant 0 : index
      %c0_11 = arith.constant 0 : index
      %12 = vector.load %arg7[%c0_10, %c0_11] : memref<32x32xf32, #tpu.memory_space<vmem>>, vector<32x32xf32>
      %c0_12 = arith.constant 0 : index
      %c0_13 = arith.constant 0 : index
      %13 = vector.load %arg5[%c0_12, %c0_13] : memref<1x32xf32, #tpu.memory_space<vmem>>, vector<1x32xf32>
      %14 = vector.broadcast %13 : vector<1x32xf32> to vector<32x32xf32>
      %15 = arith.addf %12, %14 : vector<32x32xf32>
      %cst_14 = arith.constant 0.707106769 : f32
      %16 = vector.broadcast %cst_14 : f32 to vector<32x32xf32>
      %17 = arith.mulf %15, %16 : vector<32x32xf32>
      %18 = math.absf %17 : vector<32x32xf32>
      %cst_15 = arith.constant 0.327591091 : f32
      %19 = vector.broadcast %cst_15 : f32 to vector<32x32xf32>
      %20 = arith.mulf %19, %18 : vector<32x32xf32>
      %cst_16 = arith.constant 1.000000e+00 : f32
      %21 = vector.broadcast %cst_16 : f32 to vector<32x32xf32>
      %22 = arith.addf %21, %20 : vector<32x32xf32>
      %cst_17 = arith.constant 1.000000e+00 : f32
      %23 = vector.broadcast %cst_17 : f32 to vector<32x32xf32>
      %24 = arith.divf %23, %22 : vector<32x32xf32>
      %cst_18 = arith.constant 1.06140542 : f32
      %25 = vector.broadcast %cst_18 : f32 to vector<32x32xf32>
      %26 = arith.mulf %24, %25 : vector<32x32xf32>
      %cst_19 = arith.constant -1.45315206 : f32
      %27 = vector.broadcast %cst_19 : f32 to vector<32x32xf32>
      %28 = arith.addf %27, %26 : vector<32x32xf32>
      %29 = arith.mulf %24, %28 : vector<32x32xf32>
      %cst_20 = arith.constant 1.42141378 : f32
      %30 = vector.broadcast %cst_20 : f32 to vector<32x32xf32>
      %31 = arith.addf %30, %29 : vector<32x32xf32>
      %32 = arith.mulf %24, %31 : vector<32x32xf32>
      %cst_21 = arith.constant -0.284496725 : f32
      %33 = vector.broadcast %cst_21 : f32 to vector<32x32xf32>
      %34 = arith.addf %33, %32 : vector<32x32xf32>
      %35 = arith.mulf %24, %34 : vector<32x32xf32>
      %cst_22 = arith.constant 0.254829586 : f32
      %36 = vector.broadcast %cst_22 : f32 to vector<32x32xf32>
      %37 = arith.addf %36, %35 : vector<32x32xf32>
      %38 = arith.mulf %24, %37 : vector<32x32xf32>
      %cst_23 = arith.constant 0.000000e+00 : f32
      %39 = vector.broadcast %cst_23 : f32 to vector<32x32xf32>
      %40 = arith.subf %39, %18 : vector<32x32xf32>
      %41 = arith.mulf %40, %18 : vector<32x32xf32>
      %42 = math.exp %41 : vector<32x32xf32>
      %43 = arith.mulf %38, %42 : vector<32x32xf32>
      %cst_24 = arith.constant 1.000000e+00 : f32
      %44 = vector.broadcast %cst_24 : f32 to vector<32x32xf32>
      %45 = arith.subf %44, %43 : vector<32x32xf32>
      %cst_25 = arith.constant 0.000000e+00 : f32
      %46 = vector.broadcast %cst_25 : f32 to vector<32x32xf32>
      %47 = arith.cmpf oge, %17, %46 : vector<32x32xf32>
      %cst_26 = arith.constant 0.000000e+00 : f32
      %48 = vector.broadcast %cst_26 : f32 to vector<32x32xf32>
      %49 = arith.subf %48, %45 : vector<32x32xf32>
      %50 = arith.select %47, %45, %49 : vector<32x32xi1>, vector<32x32xf32>
      %cst_27 = arith.constant 5.000000e-01 : f32
      %51 = vector.broadcast %cst_27 : f32 to vector<32x32xf32>
      %52 = arith.mulf %51, %15 : vector<32x32xf32>
      %cst_28 = arith.constant 1.000000e+00 : f32
      %53 = vector.broadcast %cst_28 : f32 to vector<32x32xf32>
      %54 = arith.addf %53, %50 : vector<32x32xf32>
      %55 = arith.mulf %52, %54 : vector<32x32xf32>
      %56 = arith.truncf %55 : vector<32x32xf32> to vector<32x32xbf16>
      %c0_29 = arith.constant 0 : index
      %c0_30 = arith.constant 0 : index
      %57 = vector.load %arg6[%c0_29, %c0_30] : memref<32x32xbf16, #tpu.memory_space<vmem>>, vector<32x32xbf16>
      tpu.vector_store %arg6[%c0_29, %c0_30], %56 {strides = array<i32>} : memref<32x32xbf16, #tpu.memory_space<vmem>>, vector<32x32xbf16>,
    } else {
    }
    return
  }
  func.func @transform_0(%arg0: i32, %arg1: i32, %arg2: i32) -> (i32, i32) {
    %c0_i32 = arith.constant 0 : i32
    return %arg0, %arg2 : i32, i32
  }
  func.func @transform_1(%arg0: i32, %arg1: i32, %arg2: i32) -> (i32, i32) {
    %c0_i32 = arith.constant 0 : i32
    return %arg2, %arg1 : i32, i32
  }
  func.func @transform_2(%arg0: i32, %arg1: i32, %arg2: i32) -> (i32, i32) {
    %c0_i32 = arith.constant 0 : i32
    %c0_i32_0 = arith.constant 0 : i32
    return %c0_i32, %arg1 : i32, i32
  }
  func.func @transform_3(%arg0: i32, %arg1: i32, %arg2: i32) -> (i32, i32) {
    %c0_i32 = arith.constant 0 : i32
    return %arg0, %arg1 : i32, i32
  }
}

module attributes {stable_mosaic.version = 11 : i64} {
  func.func @_linear_kernel(%arg0: i32, %arg1: i32, %arg2: i32, %arg3: memref<32x96xbf16, #tpu.memory_space<vmem>>, %arg4: memref<96x32xbf16, #tpu.memory_space<vmem>>, %arg5: memref<1x32xf32, #tpu.memory_space<vmem>>, %arg6: memref<32x32xbf16, #tpu.memory_space<vmem>>, %arg7: memref<32x32xf32, #tpu.memory_space<vmem>>) attributes {dimension_semantics = [#tpu.dimension_semantics<parallel>, #tpu.dimension_semantics<parallel>, #tpu.dimension_semantics<arbitrary>], iteration_bounds = array<i64: 1, 1, 1>, scalar_prefetch = 0 : i64, scratch_operands = 1 : i64, tpu.core_type = #tpu.core_type<tc>, window_params = [{transform_indices = @transform_0, window_bounds = array<i64: 32, 96>}, {transform_indices = @transform_1, window_bounds = array<i64: 96, 32>}, {transform_indices = @transform_2, window_bounds = array<i64: 1, 32>}, {transform_indices = @transform_3, window_bounds = array<i64: 32, 32>}]} {
    %c0_i32 = arith.constant 0 : i32
    %0 = arith.cmpi eq, %arg2, %c0_i32 : i32
    %1 = arith.extui %0 : i1 to i32
    %c0_i32_0 = arith.constant 0 : i32
    %2 = arith.cmpi ne, %1, %c0_i32_0 : i32
    scf.if %2 {
      %cst_10 = arith.constant 0.000000e+00 : f32
      %12 = vector.broadcast %cst_10 : f32 to vector<32x32xf32>
      %c0_11 = arith.constant 0 : index
      %c0_12 = arith.constant 0 : index
      %13 = vector.load %arg7[%c0_11, %c0_12] : memref<32x32xf32, #tpu.memory_space<vmem>>, vector<32x32xf32>
      tpu.vector_store %arg7[%c0_11, %c0_12], %12 {strides = array<i32>} : memref<32x32xf32, #tpu.memory_space<vmem>>, vector<32x32xf32>,
    } else {
    }
    %c0 = arith.constant 0 : index
    %c0_1 = arith.constant 0 : index
    %3 = vector.load %arg7[%c0, %c0_1] : memref<32x32xf32, #tpu.memory_space<vmem>>, vector<32x32xf32>
    %c0_2 = arith.constant 0 : index
    %c0_3 = arith.constant 0 : index
    %4 = vector.load %arg3[%c0_2, %c0_3] : memref<32x96xbf16, #tpu.memory_space<vmem>>, vector<32x96xbf16>
    %c0_4 = arith.constant 0 : index
    %c0_5 = arith.constant 0 : index
    %5 = vector.load %arg4[%c0_4, %c0_5] : memref<96x32xbf16, #tpu.memory_space<vmem>>, vector<96x32xbf16>
    %cst = arith.constant dense<0.000000e+00> : vector<32x32xf32>
    %6 = tpu.matmul %4, %5, %cst {dimension_numbers = #tpu.dot_dimension_numbers<[1], [0], [0], [1], [0, 0, 1, 1], [], []>} : vector<32x96xbf16>, vector<96x32xbf16>, vector<32x32xf32> -> vector<32x32xf32>
    %7 = arith.addf %3, %6 : vector<32x32xf32>
    %c0_6 = arith.constant 0 : index
    %c0_7 = arith.constant 0 : index
    %8 = vector.load %arg7[%c0_6, %c0_7] : memref<32x32xf32, #tpu.memory_space<vmem>>, vector<32x32xf32>
    tpu.vector_store %arg7[%c0_6, %c0_7], %7 {strides = array<i32>} : memref<32x32xf32, #tpu.memory_space<vmem>>, vector<32x32xf32>,
    %c0_i32_8 = arith.constant 0 : i32
    %9 = arith.cmpi eq, %arg2, %c0_i32_8 : i32
    %10 = arith.extui %9 : i1 to i32
    %c0_i32_9 = arith.constant 0 : i32
    %11 = arith.cmpi ne, %10, %c0_i32_9 : i32
    scf.if %11 {
      %c0_10 = arith.constant 0 : index
      %c0_11 = arith.constant 0 : index
      %12 = vector.load %arg7[%c0_10, %c0_11] : memref<32x32xf32, #tpu.memory_space<vmem>>, vector<32x32xf32>
      %c0_12 = arith.constant 0 : index
      %c0_13 = arith.constant 0 : index
      %13 = vector.load %arg5[%c0_12, %c0_13] : memref<1x32xf32, #tpu.memory_space<vmem>>, vector<1x32xf32>
      %14 = vector.broadcast %13 : vector<1x32xf32> to vector<32x32xf32>
      %15 = arith.addf %12, %14 : vector<32x32xf32>
      %cst_14 = arith.constant 0.000000e+00 : f32
      %16 = vector.broadcast %cst_14 : f32 to vector<32x32xf32>
      %17 = arith.cmpf ogt, %15, %16 : vector<32x32xf32>
      %18 = math.exp %15 : vector<32x32xf32>
      %cst_15 = arith.constant 1.000000e+00 : f32
      %19 = vector.broadcast %cst_15 : f32 to vector<32x32xf32>
      %20 = arith.subf %18, %19 : vector<32x32xf32>
      %21 = arith.select %17, %15, %20 : vector<32x32xi1>, vector<32x32xf32>
      %22 = arith.truncf %21 : vector<32x32xf32> to vector<32x32xbf16>
      %c0_16 = arith.constant 0 : index
      %c0_17 = arith.constant 0 : index
      %23 = vector.load %arg6[%c0_16, %c0_17] : memref<32x32xbf16, #tpu.memory_space<vmem>>, vector<32x32xbf16>
      tpu.vector_store %arg6[%c0_16, %c0_17], %22 {strides = array<i32>} : memref<32x32xbf16, #tpu.memory_space<vmem>>, vector<32x32xbf16>,
    } else {
    }
    return
  }
  func.func @transform_0(%arg0: i32, %arg1: i32, %arg2: i32) -> (i32, i32) {
    %c0_i32 = arith.constant 0 : i32
    return %arg0, %arg2 : i32, i32
  }
  func.func @transform_1(%arg0: i32, %arg1: i32, %arg2: i32) -> (i32, i32) {
    %c0_i32 = arith.constant 0 : i32
    return %arg2, %arg1 : i32, i32
  }
  func.func @transform_2(%arg0: i32, %arg1: i32, %arg2: i32) -> (i32, i32) {
    %c0_i32 = arith.constant 0 : i32
    %c0_i32_0 = arith.constant 0 : i32
    return %c0_i32, %arg1 : i32, i32
  }
  func.func @transform_3(%arg0: i32, %arg1: i32, %arg2: i32) -> (i32, i32) {
    %c0_i32 = arith.constant 0 : i32
    return %arg0, %arg1 : i32, i32
  }
}

module attributes {stable_mosaic.version = 11 : i64} {
  func.func @_linear_kernel(%arg0: i32, %arg1: i32, %arg2: i32, %arg3: memref<16x32xbf16, #tpu.memory_space<vmem>>, %arg4: memref<32x96xbf16, #tpu.memory_space<vmem>>, %arg5: memref<1x96xf32, #tpu.memory_space<vmem>>, %arg6: memref<16x96xbf16, #tpu.memory_space<vmem>>, %arg7: memref<16x96xf32, #tpu.memory_space<vmem>>) attributes {dimension_semantics = [#tpu.dimension_semantics<parallel>, #tpu.dimension_semantics<parallel>, #tpu.dimension_semantics<arbitrary>], iteration_bounds = array<i64: 1, 1, 1>, scalar_prefetch = 0 : i64, scratch_operands = 1 : i64, tpu.core_type = #tpu.core_type<tc>, window_params = [{transform_indices = @transform_0, window_bounds = array<i64: 16, 32>}, {transform_indices = @transform_1, window_bounds = array<i64: 32, 96>}, {transform_indices = @transform_2, window_bounds = array<i64: 1, 96>}, {transform_indices = @transform_3, window_bounds = array<i64: 16, 96>}]} {
    %c0_i32 = arith.constant 0 : i32
    %0 = arith.cmpi eq, %arg2, %c0_i32 : i32
    %1 = arith.extui %0 : i1 to i32
    %c0_i32_0 = arith.constant 0 : i32
    %2 = arith.cmpi ne, %1, %c0_i32_0 : i32
    scf.if %2 {
      %cst_10 = arith.constant 0.000000e+00 : f32
      %12 = vector.broadcast %cst_10 : f32 to vector<16x96xf32>
      %c0_11 = arith.constant 0 : index
      %c0_12 = arith.constant 0 : index
      %13 = vector.load %arg7[%c0_11, %c0_12] : memref<16x96xf32, #tpu.memory_space<vmem>>, vector<16x96xf32>
      tpu.vector_store %arg7[%c0_11, %c0_12], %12 {strides = array<i32>} : memref<16x96xf32, #tpu.memory_space<vmem>>, vector<16x96xf32>,
    } else {
    }
    %c0 = arith.constant 0 : index
    %c0_1 = arith.constant 0 : index
    %3 = vector.load %arg7[%c0, %c0_1] : memref<16x96xf32, #tpu.memory_space<vmem>>, vector<16x96xf32>
    %c0_2 = arith.constant 0 : index
    %c0_3 = arith.constant 0 : index
    %4 = vector.load %arg3[%c0_2, %c0_3] : memref<16x32xbf16, #tpu.memory_space<vmem>>, vector<16x32xbf16>
    %c0_4 = arith.constant 0 : index
    %c0_5 = arith.constant 0 : index
    %5 = vector.load %arg4[%c0_4, %c0_5] : memref<32x96xbf16, #tpu.memory_space<vmem>>, vector<32x96xbf16>
    %cst = arith.constant dense<0.000000e+00> : vector<16x96xf32>
    %6 = tpu.matmul %4, %5, %cst {dimension_numbers = #tpu.dot_dimension_numbers<[1], [0], [0], [1], [0, 0, 1, 1], [], []>} : vector<16x32xbf16>, vector<32x96xbf16>, vector<16x96xf32> -> vector<16x96xf32>
    %7 = arith.addf %3, %6 : vector<16x96xf32>
    %c0_6 = arith.constant 0 : index
    %c0_7 = arith.constant 0 : index
    %8 = vector.load %arg7[%c0_6, %c0_7] : memref<16x96xf32, #tpu.memory_space<vmem>>, vector<16x96xf32>
    tpu.vector_store %arg7[%c0_6, %c0_7], %7 {strides = array<i32>} : memref<16x96xf32, #tpu.memory_space<vmem>>, vector<16x96xf32>,
    %c0_i32_8 = arith.constant 0 : i32
    %9 = arith.cmpi eq, %arg2, %c0_i32_8 : i32
    %10 = arith.extui %9 : i1 to i32
    %c0_i32_9 = arith.constant 0 : i32
    %11 = arith.cmpi ne, %10, %c0_i32_9 : i32
    scf.if %11 {
      %c0_10 = arith.constant 0 : index
      %c0_11 = arith.constant 0 : index
      %12 = vector.load %arg7[%c0_10, %c0_11] : memref<16x96xf32, #tpu.memory_space<vmem>>, vector<16x96xf32>
      %c0_12 = arith.constant 0 : index
      %c0_13 = arith.constant 0 : index
      %13 = vector.load %arg5[%c0_12, %c0_13] : memref<1x96xf32, #tpu.memory_space<vmem>>, vector<1x96xf32>
      %14 = vector.broadcast %13 : vector<1x96xf32> to vector<16x96xf32>
      %15 = arith.addf %12, %14 : vector<16x96xf32>
      %16 = arith.truncf %15 : vector<16x96xf32> to vector<16x96xbf16>
      %c0_14 = arith.constant 0 : index
      %c0_15 = arith.constant 0 : index
      %17 = vector.load %arg6[%c0_14, %c0_15] : memref<16x96xbf16, #tpu.memory_space<vmem>>, vector<16x96xbf16>
      tpu.vector_store %arg6[%c0_14, %c0_15], %16 {strides = array<i32>} : memref<16x96xbf16, #tpu.memory_space<vmem>>, vector<16x96xbf16>,
    } else {
    }
    return
  }
  func.func @transform_0(%arg0: i32, %arg1: i32, %arg2: i32) -> (i32, i32) {
    %c0_i32 = arith.constant 0 : i32
    return %arg0, %arg2 : i32, i32
  }
  func.func @transform_1(%arg0: i32, %arg1: i32, %arg2: i32) -> (i32, i32) {
    %c0_i32 = arith.constant 0 : i32
    return %arg2, %arg1 : i32, i32
  }
  func.func @transform_2(%arg0: i32, %arg1: i32, %arg2: i32) -> (i32, i32) {
    %c0_i32 = arith.constant 0 : i32
    %c0_i32_0 = arith.constant 0 : i32
    return %c0_i32, %arg1 : i32, i32
  }
  func.func @transform_3(%arg0: i32, %arg1: i32, %arg2: i32) -> (i32, i32) {
    %c0_i32 = arith.constant 0 : i32
    return %arg0, %arg1 : i32, i32
  }
}

module attributes {stable_mosaic.version = 11 : i64} {
  func.func @_prob_measure_kernel(%arg0: i32, %arg1: memref<1x8x96xbf16, #tpu.memory_space<vmem>>, %arg2: memref<1x8x4xf32, #tpu.memory_space<vmem>>) attributes {dimension_semantics = [#tpu.dimension_semantics<parallel>], iteration_bounds = array<i64: 2>, scalar_prefetch = 0 : i64, scratch_operands = 0 : i64, tpu.core_type = #tpu.core_type<tc>, window_params = [{transform_indices = @transform_0, window_bounds = array<i64: 1, 8, 96>}, {transform_indices = @transform_1, window_bounds = array<i64: 1, 8, 4>}]} {
    %c0 = arith.constant 0 : index
    %c0_0 = arith.constant 0 : index
    %c0_1 = arith.constant 0 : index
    %0 = vector.load %arg1[%c0, %c0_0, %c0_1] : memref<1x8x96xbf16, #tpu.memory_space<vmem>>, vector<1x8x8xbf16>
    %1 = vector.shape_cast %0 : vector<1x8x8xbf16> to vector<8x8xbf16>
    %c0_2 = arith.constant 0 : index
    %c0_3 = arith.constant 0 : index
    %c32 = arith.constant 32 : index
    %2 = vector.load %arg1[%c0_2, %c0_3, %c32] : memref<1x8x96xbf16, #tpu.memory_space<vmem>>, vector<1x8x8xbf16>
    %3 = vector.shape_cast %2 : vector<1x8x8xbf16> to vector<8x8xbf16>
    %cst = arith.constant dense<0.000000e+00> : vector<8x8xf32>
    %4 = tpu.matmul %1, %3, %cst {dimension_numbers = #tpu.dot_dimension_numbers<[1], [1], [0], [0], [0, 0, 1, 0], [], []>} : vector<8x8xbf16>, vector<8x8xbf16>, vector<8x8xf32> -> vector<8x8xf32>
    %cst_4 = arith.constant dense<0xFF800000> : vector<8xf32>
    %5 = vector.multi_reduction <maximumf>, %4, %cst_4 [1] : vector<8x8xf32> to vector<8xf32>
    %6 = vector.shape_cast %5 : vector<8xf32> to vector<8x1xf32>
    %cst_5 = arith.constant dense<0.000000e+00> : vector<8xf32>
    %7 = vector.multi_reduction <add>, %4, %cst_5 [1] : vector<8x8xf32> to vector<8xf32>
    %8 = vector.shape_cast %7 : vector<8xf32> to vector<8x1xf32>
    %cst_6 = arith.constant 1.250000e-01 : f32
    %9 = vector.broadcast %cst_6 : f32 to vector<8x1xf32>
    %10 = arith.mulf %8, %9 : vector<8x1xf32>
    %11 = arith.subf %6, %10 : vector<8x1xf32>
    %c0_7 = arith.constant 0 : index
    %c0_8 = arith.constant 0 : index
    %c0_9 = arith.constant 0 : index
    %12 = vector.load %arg2[%c0_7, %c0_8, %c0_9] : memref<1x8x4xf32, #tpu.memory_space<vmem>>, vector<1x8x1xf32>
    %13 = vector.shape_cast %12 : vector<1x8x1xf32> to vector<8x1xf32>
    %14 = vector.shape_cast %11 : vector<8x1xf32> to vector<1x8x1xf32>
    tpu.vector_store %arg2[%c0_7, %c0_8, %c0_9], %14 {strides = array<i32>} : memref<1x8x4xf32, #tpu.memory_space<vmem>>, vector<1x8x1xf32>,
    %c0_10 = arith.constant 0 : index
    %c0_11 = arith.constant 0 : index
    %c8 = arith.constant 8 : index
    %15 = vector.load %arg1[%c0_10, %c0_11, %c8] : memref<1x8x96xbf16, #tpu.memory_space<vmem>>, vector<1x8x8xbf16>
    %16 = vector.shape_cast %15 : vector<1x8x8xbf16> to vector<8x8xbf16>
    %c0_12 = arith.constant 0 : index
    %c0_13 = arith.constant 0 : index
    %c40 = arith.constant 40 : index
    %17 = vector.load %arg1[%c0_12, %c0_13, %c40] : memref<1x8x96xbf16, #tpu.memory_space<vmem>>, vector<1x8x8xbf16>
    %18 = vector.shape_cast %17 : vector<1x8x8xbf16> to vector<8x8xbf16>
    %cst_14 = arith.constant dense<0.000000e+00> : vector<8x8xf32>
    %19 = tpu.matmul %16, %18, %cst_14 {dimension_numbers = #tpu.dot_dimension_numbers<[1], [1], [0], [0], [0, 0, 1, 0], [], []>} : vector<8x8xbf16>, vector<8x8xbf16>, vector<8x8xf32> -> vector<8x8xf32>
    %cst_15 = arith.constant dense<0xFF800000> : vector<8xf32>
    %20 = vector.multi_reduction <maximumf>, %19, %cst_15 [1] : vector<8x8xf32> to vector<8xf32>
    %21 = vector.shape_cast %20 : vector<8xf32> to vector<8x1xf32>
    %cst_16 = arith.constant dense<0.000000e+00> : vector<8xf32>
    %22 = vector.multi_reduction <add>, %19, %cst_16 [1] : vector<8x8xf32> to vector<8xf32>
    %23 = vector.shape_cast %22 : vector<8xf32> to vector<8x1xf32>
    %cst_17 = arith.constant 1.250000e-01 : f32
    %24 = vector.broadcast %cst_17 : f32 to vector<8x1xf32>
    %25 = arith.mulf %23, %24 : vector<8x1xf32>
    %26 = arith.subf %21, %25 : vector<8x1xf32>
    %c0_18 = arith.constant 0 : index
    %c0_19 = arith.constant 0 : index
    %c1 = arith.constant 1 : index
    %27 = vector.load %arg2[%c0_18, %c0_19, %c1] : memref<1x8x4xf32, #tpu.memory_space<vmem>>, vector<1x8x1xf32>
    %28 = vector.shape_cast %27 : vector<1x8x1xf32> to vector<8x1xf32>
    %29 = vector.shape_cast %26 : vector<8x1xf32> to vector<1x8x1xf32>
    tpu.vector_store %arg2[%c0_18, %c0_19, %c1], %29 {strides = array<i32>} : memref<1x8x4xf32, #tpu.memory_space<vmem>>, vector<1x8x1xf32>,
    %c0_20 = arith.constant 0 : index
    %c0_21 = arith.constant 0 : index
    %c16 = arith.constant 16 : index
    %30 = vector.load %arg1[%c0_20, %c0_21, %c16] : memref<1x8x96xbf16, #tpu.memory_space<vmem>>, vector<1x8x8xbf16>
    %31 = vector.shape_cast %30 : vector<1x8x8xbf16> to vector<8x8xbf16>
    %c0_22 = arith.constant 0 : index
    %c0_23 = arith.constant 0 : index
    %c48 = arith.constant 48 : index
    %32 = vector.load %arg1[%c0_22, %c0_23, %c48] : memref<1x8x96xbf16, #tpu.memory_space<vmem>>, vector<1x8x8xbf16>
    %33 = vector.shape_cast %32 : vector<1x8x8xbf16> to vector<8x8xbf16>
    %cst_24 = arith.constant dense<0.000000e+00> : vector<8x8xf32>
    %34 = tpu.matmul %31, %33, %cst_24 {dimension_numbers = #tpu.dot_dimension_numbers<[1], [1], [0], [0], [0, 0, 1, 0], [], []>} : vector<8x8xbf16>, vector<8x8xbf16>, vector<8x8xf32> -> vector<8x8xf32>
    %cst_25 = arith.constant dense<0xFF800000> : vector<8xf32>
    %35 = vector.multi_reduction <maximumf>, %34, %cst_25 [1] : vector<8x8xf32> to vector<8xf32>
    %36 = vector.shape_cast %35 : vector<8xf32> to vector<8x1xf32>
    %cst_26 = arith.constant dense<0.000000e+00> : vector<8xf32>
    %37 = vector.multi_reduction <add>, %34, %cst_26 [1] : vector<8x8xf32> to vector<8xf32>
    %38 = vector.shape_cast %37 : vector<8xf32> to vector<8x1xf32>
    %cst_27 = arith.constant 1.250000e-01 : f32
    %39 = vector.broadcast %cst_27 : f32 to vector<8x1xf32>
    %40 = arith.mulf %38, %39 : vector<8x1xf32>
    %41 = arith.subf %36, %40 : vector<8x1xf32>
    %c0_28 = arith.constant 0 : index
    %c0_29 = arith.constant 0 : index
    %c2 = arith.constant 2 : index
    %42 = vector.load %arg2[%c0_28, %c0_29, %c2] : memref<1x8x4xf32, #tpu.memory_space<vmem>>, vector<1x8x1xf32>
    %43 = vector.shape_cast %42 : vector<1x8x1xf32> to vector<8x1xf32>
    %44 = vector.shape_cast %41 : vector<8x1xf32> to vector<1x8x1xf32>
    tpu.vector_store %arg2[%c0_28, %c0_29, %c2], %44 {strides = array<i32>} : memref<1x8x4xf32, #tpu.memory_space<vmem>>, vector<1x8x1xf32>,
    %c0_30 = arith.constant 0 : index
    %c0_31 = arith.constant 0 : index
    %c24 = arith.constant 24 : index
    %45 = vector.load %arg1[%c0_30, %c0_31, %c24] : memref<1x8x96xbf16, #tpu.memory_space<vmem>>, vector<1x8x8xbf16>
    %46 = vector.shape_cast %45 : vector<1x8x8xbf16> to vector<8x8xbf16>
    %c0_32 = arith.constant 0 : index
    %c0_33 = arith.constant 0 : index
    %c56 = arith.constant 56 : index
    %47 = vector.load %arg1[%c0_32, %c0_33, %c56] : memref<1x8x96xbf16, #tpu.memory_space<vmem>>, vector<1x8x8xbf16>
    %48 = vector.shape_cast %47 : vector<1x8x8xbf16> to vector<8x8xbf16>
    %cst_34 = arith.constant dense<0.000000e+00> : vector<8x8xf32>
    %49 = tpu.matmul %46, %48, %cst_34 {dimension_numbers = #tpu.dot_dimension_numbers<[1], [1], [0], [0], [0, 0, 1, 0], [], []>} : vector<8x8xbf16>, vector<8x8xbf16>, vector<8x8xf32> -> vector<8x8xf32>
    %cst_35 = arith.constant dense<0xFF800000> : vector<8xf32>
    %50 = vector.multi_reduction <maximumf>, %49, %cst_35 [1] : vector<8x8xf32> to vector<8xf32>
    %51 = vector.shape_cast %50 : vector<8xf32> to vector<8x1xf32>
    %cst_36 = arith.constant dense<0.000000e+00> : vector<8xf32>
    %52 = vector.multi_reduction <add>, %49, %cst_36 [1] : vector<8x8xf32> to vector<8xf32>
    %53 = vector.shape_cast %52 : vector<8xf32> to vector<8x1xf32>
    %cst_37 = arith.constant 1.250000e-01 : f32
    %54 = vector.broadcast %cst_37 : f32 to vector<8x1xf32>
    %55 = arith.mulf %53, %54 : vector<8x1xf32>
    %56 = arith.subf %51, %55 : vector<8x1xf32>
    %c0_38 = arith.constant 0 : index
    %c0_39 = arith.constant 0 : index
    %c3 = arith.constant 3 : index
    %57 = vector.load %arg2[%c0_38, %c0_39, %c3] : memref<1x8x4xf32, #tpu.memory_space<vmem>>, vector<1x8x1xf32>
    %58 = vector.shape_cast %57 : vector<1x8x1xf32> to vector<8x1xf32>
    %59 = vector.shape_cast %56 : vector<8x1xf32> to vector<1x8x1xf32>
    tpu.vector_store %arg2[%c0_38, %c0_39, %c3], %59 {strides = array<i32>} : memref<1x8x4xf32, #tpu.memory_space<vmem>>, vector<1x8x1xf32>,
    return
  }
  func.func @transform_0(%arg0: i32) -> (i32, i32, i32) {
    %c0_i32 = arith.constant 0 : i32
    %c0_i32_0 = arith.constant 0 : i32
    %c0_i32_1 = arith.constant 0 : i32
    return %arg0, %c0_i32, %c0_i32_0 : i32, i32, i32
  }
  func.func @transform_1(%arg0: i32) -> (i32, i32, i32) {
    %c0_i32 = arith.constant 0 : i32
    %c0_i32_0 = arith.constant 0 : i32
    %c0_i32_1 = arith.constant 0 : i32
    return %arg0, %c0_i32, %c0_i32_0 : i32, i32, i32
  }
}

module attributes {stable_mosaic.version = 11 : i64} {
  func.func @_prob_attn_kernel(%arg0: i32, %arg1: memref<1x8x32xbf16, #tpu.memory_space<vmem>>, %arg2: memref<1x8x96xbf16, #tpu.memory_space<vmem>>, %arg3: memref<1x8x32xbf16, #tpu.memory_space<vmem>>) attributes {dimension_semantics = [#tpu.dimension_semantics<parallel>], iteration_bounds = array<i64: 2>, scalar_prefetch = 0 : i64, scratch_operands = 0 : i64, tpu.core_type = #tpu.core_type<tc>, window_params = [{transform_indices = @transform_0, window_bounds = array<i64: 1, 8, 32>}, {transform_indices = @transform_1, window_bounds = array<i64: 1, 8, 96>}, {transform_indices = @transform_2, window_bounds = array<i64: 1, 8, 32>}]} {
    %c0 = arith.constant 0 : index
    %c0_0 = arith.constant 0 : index
    %c0_1 = arith.constant 0 : index
    %0 = vector.load %arg1[%c0, %c0_0, %c0_1] : memref<1x8x32xbf16, #tpu.memory_space<vmem>>, vector<1x8x8xbf16>
    %1 = vector.shape_cast %0 : vector<1x8x8xbf16> to vector<8x8xbf16>
    %c0_2 = arith.constant 0 : index
    %c0_3 = arith.constant 0 : index
    %c32 = arith.constant 32 : index
    %2 = vector.load %arg2[%c0_2, %c0_3, %c32] : memref<1x8x96xbf16, #tpu.memory_space<vmem>>, vector<1x8x8xbf16>
    %3 = vector.shape_cast %2 : vector<1x8x8xbf16> to vector<8x8xbf16>
    %c0_4 = arith.constant 0 : index
    %c0_5 = arith.constant 0 : index
    %c64 = arith.constant 64 : index
    %4 = vector.load %arg2[%c0_4, %c0_5, %c64] : memref<1x8x96xbf16, #tpu.memory_space<vmem>>, vector<1x8x8xbf16>
    %5 = vector.shape_cast %4 : vector<1x8x8xbf16> to vector<8x8xbf16>
    %cst = arith.constant dense<0.000000e+00> : vector<8x8xf32>
    %6 = tpu.matmul %1, %3, %cst {dimension_numbers = #tpu.dot_dimension_numbers<[1], [1], [0], [0], [0, 0, 1, 0], [], []>} : vector<8x8xbf16>, vector<8x8xbf16>, vector<8x8xf32> -> vector<8x8xf32>
    %cst_6 = arith.constant 0.353553385 : f32
    %7 = vector.broadcast %cst_6 : f32 to vector<8x8xf32>
    %8 = arith.mulf %6, %7 : vector<8x8xf32>
    %cst_7 = arith.constant dense<0xFF800000> : vector<8xf32>
    %9 = vector.multi_reduction <maximumf>, %8, %cst_7 [1] : vector<8x8xf32> to vector<8xf32>
    %10 = vector.shape_cast %9 : vector<8xf32> to vector<8x1xf32>
    %11 = vector.broadcast %10 : vector<8x1xf32> to vector<8x8xf32>
    %12 = arith.subf %8, %11 : vector<8x8xf32>
    %13 = math.exp %12 : vector<8x8xf32>
    %cst_8 = arith.constant dense<0.000000e+00> : vector<8xf32>
    %14 = vector.multi_reduction <add>, %13, %cst_8 [1] : vector<8x8xf32> to vector<8xf32>
    %15 = vector.shape_cast %14 : vector<8xf32> to vector<8x1xf32>
    %16 = tpu.reciprocal %15 {approx = true} : vector<8x1xf32> -> vector<8x1xf32>
    %17 = vector.broadcast %16 : vector<8x1xf32> to vector<8x8xf32>
    %18 = arith.mulf %13, %17 : vector<8x8xf32>
    %19 = arith.truncf %18 : vector<8x8xf32> to vector<8x8xbf16>
    %cst_9 = arith.constant dense<0.000000e+00> : vector<8x8xf32>
    %20 = tpu.matmul %19, %5, %cst_9 {dimension_numbers = #tpu.dot_dimension_numbers<[1], [0], [0], [1], [0, 0, 1, 1], [], []>} : vector<8x8xbf16>, vector<8x8xbf16>, vector<8x8xf32> -> vector<8x8xf32>
    %21 = arith.truncf %20 : vector<8x8xf32> to vector<8x8xbf16>
    %c0_10 = arith.constant 0 : index
    %c0_11 = arith.constant 0 : index
    %c0_12 = arith.constant 0 : index
    %22 = vector.load %arg3[%c0_10, %c0_11, %c0_12] : memref<1x8x32xbf16, #tpu.memory_space<vmem>>, vector<1x8x8xbf16>
    %23 = vector.shape_cast %22 : vector<1x8x8xbf16> to vector<8x8xbf16>
    %24 = vector.shape_cast %21 : vector<8x8xbf16> to vector<1x8x8xbf16>
    tpu.vector_store %arg3[%c0_10, %c0_11, %c0_12], %24 {strides = array<i32>} : memref<1x8x32xbf16, #tpu.memory_space<vmem>>, vector<1x8x8xbf16>,
    %c0_13 = arith.constant 0 : index
    %c0_14 = arith.constant 0 : index
    %c8 = arith.constant 8 : index
    %25 = vector.load %arg1[%c0_13, %c0_14, %c8] : memref<1x8x32xbf16, #tpu.memory_space<vmem>>, vector<1x8x8xbf16>
    %26 = vector.shape_cast %25 : vector<1x8x8xbf16> to vector<8x8xbf16>
    %c0_15 = arith.constant 0 : index
    %c0_16 = arith.constant 0 : index
    %c40 = arith.constant 40 : index
    %27 = vector.load %arg2[%c0_15, %c0_16, %c40] : memref<1x8x96xbf16, #tpu.memory_space<vmem>>, vector<1x8x8xbf16>
    %28 = vector.shape_cast %27 : vector<1x8x8xbf16> to vector<8x8xbf16>
    %c0_17 = arith.constant 0 : index
    %c0_18 = arith.constant 0 : index
    %c72 = arith.constant 72 : index
    %29 = vector.load %arg2[%c0_17, %c0_18, %c72] : memref<1x8x96xbf16, #tpu.memory_space<vmem>>, vector<1x8x8xbf16>
    %30 = vector.shape_cast %29 : vector<1x8x8xbf16> to vector<8x8xbf16>
    %cst_19 = arith.constant dense<0.000000e+00> : vector<8x8xf32>
    %31 = tpu.matmul %26, %28, %cst_19 {dimension_numbers = #tpu.dot_dimension_numbers<[1], [1], [0], [0], [0, 0, 1, 0], [], []>} : vector<8x8xbf16>, vector<8x8xbf16>, vector<8x8xf32> -> vector<8x8xf32>
    %cst_20 = arith.constant 0.353553385 : f32
    %32 = vector.broadcast %cst_20 : f32 to vector<8x8xf32>
    %33 = arith.mulf %31, %32 : vector<8x8xf32>
    %cst_21 = arith.constant dense<0xFF800000> : vector<8xf32>
    %34 = vector.multi_reduction <maximumf>, %33, %cst_21 [1] : vector<8x8xf32> to vector<8xf32>
    %35 = vector.shape_cast %34 : vector<8xf32> to vector<8x1xf32>
    %36 = vector.broadcast %35 : vector<8x1xf32> to vector<8x8xf32>
    %37 = arith.subf %33, %36 : vector<8x8xf32>
    %38 = math.exp %37 : vector<8x8xf32>
    %cst_22 = arith.constant dense<0.000000e+00> : vector<8xf32>
    %39 = vector.multi_reduction <add>, %38, %cst_22 [1] : vector<8x8xf32> to vector<8xf32>
    %40 = vector.shape_cast %39 : vector<8xf32> to vector<8x1xf32>
    %41 = tpu.reciprocal %40 {approx = true} : vector<8x1xf32> -> vector<8x1xf32>
    %42 = vector.broadcast %41 : vector<8x1xf32> to vector<8x8xf32>
    %43 = arith.mulf %38, %42 : vector<8x8xf32>
    %44 = arith.truncf %43 : vector<8x8xf32> to vector<8x8xbf16>
    %cst_23 = arith.constant dense<0.000000e+00> : vector<8x8xf32>
    %45 = tpu.matmul %44, %30, %cst_23 {dimension_numbers = #tpu.dot_dimension_numbers<[1], [0], [0], [1], [0, 0, 1, 1], [], []>} : vector<8x8xbf16>, vector<8x8xbf16>, vector<8x8xf32> -> vector<8x8xf32>
    %46 = arith.truncf %45 : vector<8x8xf32> to vector<8x8xbf16>
    %c0_24 = arith.constant 0 : index
    %c0_25 = arith.constant 0 : index
    %c8_26 = arith.constant 8 : index
    %47 = vector.load %arg3[%c0_24, %c0_25, %c8_26] : memref<1x8x32xbf16, #tpu.memory_space<vmem>>, vector<1x8x8xbf16>
    %48 = vector.shape_cast %47 : vector<1x8x8xbf16> to vector<8x8xbf16>
    %49 = vector.shape_cast %46 : vector<8x8xbf16> to vector<1x8x8xbf16>
    tpu.vector_store %arg3[%c0_24, %c0_25, %c8_26], %49 {strides = array<i32>} : memref<1x8x32xbf16, #tpu.memory_space<vmem>>, vector<1x8x8xbf16>,
    %c0_27 = arith.constant 0 : index
    %c0_28 = arith.constant 0 : index
    %c16 = arith.constant 16 : index
    %50 = vector.load %arg1[%c0_27, %c0_28, %c16] : memref<1x8x32xbf16, #tpu.memory_space<vmem>>, vector<1x8x8xbf16>
    %51 = vector.shape_cast %50 : vector<1x8x8xbf16> to vector<8x8xbf16>
    %c0_29 = arith.constant 0 : index
    %c0_30 = arith.constant 0 : index
    %c48 = arith.constant 48 : index
    %52 = vector.load %arg2[%c0_29, %c0_30, %c48] : memref<1x8x96xbf16, #tpu.memory_space<vmem>>, vector<1x8x8xbf16>
    %53 = vector.shape_cast %52 : vector<1x8x8xbf16> to vector<8x8xbf16>
    %c0_31 = arith.constant 0 : index
    %c0_32 = arith.constant 0 : index
    %c80 = arith.constant 80 : index
    %54 = vector.load %arg2[%c0_31, %c0_32, %c80] : memref<1x8x96xbf16, #tpu.memory_space<vmem>>, vector<1x8x8xbf16>
    %55 = vector.shape_cast %54 : vector<1x8x8xbf16> to vector<8x8xbf16>
    %cst_33 = arith.constant dense<0.000000e+00> : vector<8x8xf32>
    %56 = tpu.matmul %51, %53, %cst_33 {dimension_numbers = #tpu.dot_dimension_numbers<[1], [1], [0], [0], [0, 0, 1, 0], [], []>} : vector<8x8xbf16>, vector<8x8xbf16>, vector<8x8xf32> -> vector<8x8xf32>
    %cst_34 = arith.constant 0.353553385 : f32
    %57 = vector.broadcast %cst_34 : f32 to vector<8x8xf32>
    %58 = arith.mulf %56, %57 : vector<8x8xf32>
    %cst_35 = arith.constant dense<0xFF800000> : vector<8xf32>
    %59 = vector.multi_reduction <maximumf>, %58, %cst_35 [1] : vector<8x8xf32> to vector<8xf32>
    %60 = vector.shape_cast %59 : vector<8xf32> to vector<8x1xf32>
    %61 = vector.broadcast %60 : vector<8x1xf32> to vector<8x8xf32>
    %62 = arith.subf %58, %61 : vector<8x8xf32>
    %63 = math.exp %62 : vector<8x8xf32>
    %cst_36 = arith.constant dense<0.000000e+00> : vector<8xf32>
    %64 = vector.multi_reduction <add>, %63, %cst_36 [1] : vector<8x8xf32> to vector<8xf32>
    %65 = vector.shape_cast %64 : vector<8xf32> to vector<8x1xf32>
    %66 = tpu.reciprocal %65 {approx = true} : vector<8x1xf32> -> vector<8x1xf32>
    %67 = vector.broadcast %66 : vector<8x1xf32> to vector<8x8xf32>
    %68 = arith.mulf %63, %67 : vector<8x8xf32>
    %69 = arith.truncf %68 : vector<8x8xf32> to vector<8x8xbf16>
    %cst_37 = arith.constant dense<0.000000e+00> : vector<8x8xf32>
    %70 = tpu.matmul %69, %55, %cst_37 {dimension_numbers = #tpu.dot_dimension_numbers<[1], [0], [0], [1], [0, 0, 1, 1], [], []>} : vector<8x8xbf16>, vector<8x8xbf16>, vector<8x8xf32> -> vector<8x8xf32>
    %71 = arith.truncf %70 : vector<8x8xf32> to vector<8x8xbf16>
    %c0_38 = arith.constant 0 : index
    %c0_39 = arith.constant 0 : index
    %c16_40 = arith.constant 16 : index
    %72 = vector.load %arg3[%c0_38, %c0_39, %c16_40] : memref<1x8x32xbf16, #tpu.memory_space<vmem>>, vector<1x8x8xbf16>
    %73 = vector.shape_cast %72 : vector<1x8x8xbf16> to vector<8x8xbf16>
    %74 = vector.shape_cast %71 : vector<8x8xbf16> to vector<1x8x8xbf16>
    tpu.vector_store %arg3[%c0_38, %c0_39, %c16_40], %74 {strides = array<i32>} : memref<1x8x32xbf16, #tpu.memory_space<vmem>>, vector<1x8x8xbf16>,
    %c0_41 = arith.constant 0 : index
    %c0_42 = arith.constant 0 : index
    %c24 = arith.constant 24 : index
    %75 = vector.load %arg1[%c0_41, %c0_42, %c24] : memref<1x8x32xbf16, #tpu.memory_space<vmem>>, vector<1x8x8xbf16>
    %76 = vector.shape_cast %75 : vector<1x8x8xbf16> to vector<8x8xbf16>
    %c0_43 = arith.constant 0 : index
    %c0_44 = arith.constant 0 : index
    %c56 = arith.constant 56 : index
    %77 = vector.load %arg2[%c0_43, %c0_44, %c56] : memref<1x8x96xbf16, #tpu.memory_space<vmem>>, vector<1x8x8xbf16>
    %78 = vector.shape_cast %77 : vector<1x8x8xbf16> to vector<8x8xbf16>
    %c0_45 = arith.constant 0 : index
    %c0_46 = arith.constant 0 : index
    %c88 = arith.constant 88 : index
    %79 = vector.load %arg2[%c0_45, %c0_46, %c88] : memref<1x8x96xbf16, #tpu.memory_space<vmem>>, vector<1x8x8xbf16>
    %80 = vector.shape_cast %79 : vector<1x8x8xbf16> to vector<8x8xbf16>
    %cst_47 = arith.constant dense<0.000000e+00> : vector<8x8xf32>
    %81 = tpu.matmul %76, %78, %cst_47 {dimension_numbers = #tpu.dot_dimension_numbers<[1], [1], [0], [0], [0, 0, 1, 0], [], []>} : vector<8x8xbf16>, vector<8x8xbf16>, vector<8x8xf32> -> vector<8x8xf32>
    %cst_48 = arith.constant 0.353553385 : f32
    %82 = vector.broadcast %cst_48 : f32 to vector<8x8xf32>
    %83 = arith.mulf %81, %82 : vector<8x8xf32>
    %cst_49 = arith.constant dense<0xFF800000> : vector<8xf32>
    %84 = vector.multi_reduction <maximumf>, %83, %cst_49 [1] : vector<8x8xf32> to vector<8xf32>
    %85 = vector.shape_cast %84 : vector<8xf32> to vector<8x1xf32>
    %86 = vector.broadcast %85 : vector<8x1xf32> to vector<8x8xf32>
    %87 = arith.subf %83, %86 : vector<8x8xf32>
    %88 = math.exp %87 : vector<8x8xf32>
    %cst_50 = arith.constant dense<0.000000e+00> : vector<8xf32>
    %89 = vector.multi_reduction <add>, %88, %cst_50 [1] : vector<8x8xf32> to vector<8xf32>
    %90 = vector.shape_cast %89 : vector<8xf32> to vector<8x1xf32>
    %91 = tpu.reciprocal %90 {approx = true} : vector<8x1xf32> -> vector<8x1xf32>
    %92 = vector.broadcast %91 : vector<8x1xf32> to vector<8x8xf32>
    %93 = arith.mulf %88, %92 : vector<8x8xf32>
    %94 = arith.truncf %93 : vector<8x8xf32> to vector<8x8xbf16>
    %cst_51 = arith.constant dense<0.000000e+00> : vector<8x8xf32>
    %95 = tpu.matmul %94, %80, %cst_51 {dimension_numbers = #tpu.dot_dimension_numbers<[1], [0], [0], [1], [0, 0, 1, 1], [], []>} : vector<8x8xbf16>, vector<8x8xbf16>, vector<8x8xf32> -> vector<8x8xf32>
    %96 = arith.truncf %95 : vector<8x8xf32> to vector<8x8xbf16>
    %c0_52 = arith.constant 0 : index
    %c0_53 = arith.constant 0 : index
    %c24_54 = arith.constant 24 : index
    %97 = vector.load %arg3[%c0_52, %c0_53, %c24_54] : memref<1x8x32xbf16, #tpu.memory_space<vmem>>, vector<1x8x8xbf16>
    %98 = vector.shape_cast %97 : vector<1x8x8xbf16> to vector<8x8xbf16>
    %99 = vector.shape_cast %96 : vector<8x8xbf16> to vector<1x8x8xbf16>
    tpu.vector_store %arg3[%c0_52, %c0_53, %c24_54], %99 {strides = array<i32>} : memref<1x8x32xbf16, #tpu.memory_space<vmem>>, vector<1x8x8xbf16>,
    return
  }
  func.func @transform_0(%arg0: i32) -> (i32, i32, i32) {
    %c0_i32 = arith.constant 0 : i32
    %c0_i32_0 = arith.constant 0 : i32
    %c0_i32_1 = arith.constant 0 : i32
    return %arg0, %c0_i32, %c0_i32_0 : i32, i32, i32
  }
  func.func @transform_1(%arg0: i32) -> (i32, i32, i32) {
    %c0_i32 = arith.constant 0 : i32
    %c0_i32_0 = arith.constant 0 : i32
    %c0_i32_1 = arith.constant 0 : i32
    return %arg0, %c0_i32, %c0_i32_0 : i32, i32, i32
  }
  func.func @transform_2(%arg0: i32) -> (i32, i32, i32) {
    %c0_i32 = arith.constant 0 : i32
    %c0_i32_0 = arith.constant 0 : i32
    %c0_i32_1 = arith.constant 0 : i32
    return %arg0, %c0_i32, %c0_i32_0 : i32, i32, i32
  }
}

module attributes {stable_mosaic.version = 11 : i64} {
  func.func @_linear_kernel(%arg0: i32, %arg1: i32, %arg2: i32, %arg3: memref<16x32xbf16, #tpu.memory_space<vmem>>, %arg4: memref<32x32xbf16, #tpu.memory_space<vmem>>, %arg5: memref<1x32xf32, #tpu.memory_space<vmem>>, %arg6: memref<16x32xf32, #tpu.memory_space<vmem>>, %arg7: memref<16x32xf32, #tpu.memory_space<vmem>>) attributes {dimension_semantics = [#tpu.dimension_semantics<parallel>, #tpu.dimension_semantics<parallel>, #tpu.dimension_semantics<arbitrary>], iteration_bounds = array<i64: 1, 1, 1>, scalar_prefetch = 0 : i64, scratch_operands = 1 : i64, tpu.core_type = #tpu.core_type<tc>, window_params = [{transform_indices = @transform_0, window_bounds = array<i64: 16, 32>}, {transform_indices = @transform_1, window_bounds = array<i64: 32, 32>}, {transform_indices = @transform_2, window_bounds = array<i64: 1, 32>}, {transform_indices = @transform_3, window_bounds = array<i64: 16, 32>}]} {
    %c0_i32 = arith.constant 0 : i32
    %0 = arith.cmpi eq, %arg2, %c0_i32 : i32
    %1 = arith.extui %0 : i1 to i32
    %c0_i32_0 = arith.constant 0 : i32
    %2 = arith.cmpi ne, %1, %c0_i32_0 : i32
    scf.if %2 {
      %cst_10 = arith.constant 0.000000e+00 : f32
      %12 = vector.broadcast %cst_10 : f32 to vector<16x32xf32>
      %c0_11 = arith.constant 0 : index
      %c0_12 = arith.constant 0 : index
      %13 = vector.load %arg7[%c0_11, %c0_12] : memref<16x32xf32, #tpu.memory_space<vmem>>, vector<16x32xf32>
      tpu.vector_store %arg7[%c0_11, %c0_12], %12 {strides = array<i32>} : memref<16x32xf32, #tpu.memory_space<vmem>>, vector<16x32xf32>,
    } else {
    }
    %c0 = arith.constant 0 : index
    %c0_1 = arith.constant 0 : index
    %3 = vector.load %arg7[%c0, %c0_1] : memref<16x32xf32, #tpu.memory_space<vmem>>, vector<16x32xf32>
    %c0_2 = arith.constant 0 : index
    %c0_3 = arith.constant 0 : index
    %4 = vector.load %arg3[%c0_2, %c0_3] : memref<16x32xbf16, #tpu.memory_space<vmem>>, vector<16x32xbf16>
    %c0_4 = arith.constant 0 : index
    %c0_5 = arith.constant 0 : index
    %5 = vector.load %arg4[%c0_4, %c0_5] : memref<32x32xbf16, #tpu.memory_space<vmem>>, vector<32x32xbf16>
    %cst = arith.constant dense<0.000000e+00> : vector<16x32xf32>
    %6 = tpu.matmul %4, %5, %cst {dimension_numbers = #tpu.dot_dimension_numbers<[1], [0], [0], [1], [0, 0, 1, 1], [], []>} : vector<16x32xbf16>, vector<32x32xbf16>, vector<16x32xf32> -> vector<16x32xf32>
    %7 = arith.addf %3, %6 : vector<16x32xf32>
    %c0_6 = arith.constant 0 : index
    %c0_7 = arith.constant 0 : index
    %8 = vector.load %arg7[%c0_6, %c0_7] : memref<16x32xf32, #tpu.memory_space<vmem>>, vector<16x32xf32>
    tpu.vector_store %arg7[%c0_6, %c0_7], %7 {strides = array<i32>} : memref<16x32xf32, #tpu.memory_space<vmem>>, vector<16x32xf32>,
    %c0_i32_8 = arith.constant 0 : i32
    %9 = arith.cmpi eq, %arg2, %c0_i32_8 : i32
    %10 = arith.extui %9 : i1 to i32
    %c0_i32_9 = arith.constant 0 : i32
    %11 = arith.cmpi ne, %10, %c0_i32_9 : i32
    scf.if %11 {
      %c0_10 = arith.constant 0 : index
      %c0_11 = arith.constant 0 : index
      %12 = vector.load %arg7[%c0_10, %c0_11] : memref<16x32xf32, #tpu.memory_space<vmem>>, vector<16x32xf32>
      %c0_12 = arith.constant 0 : index
      %c0_13 = arith.constant 0 : index
      %13 = vector.load %arg5[%c0_12, %c0_13] : memref<1x32xf32, #tpu.memory_space<vmem>>, vector<1x32xf32>
      %14 = vector.broadcast %13 : vector<1x32xf32> to vector<16x32xf32>
      %15 = arith.addf %12, %14 : vector<16x32xf32>
      %c0_14 = arith.constant 0 : index
      %c0_15 = arith.constant 0 : index
      %16 = vector.load %arg6[%c0_14, %c0_15] : memref<16x32xf32, #tpu.memory_space<vmem>>, vector<16x32xf32>
      tpu.vector_store %arg6[%c0_14, %c0_15], %15 {strides = array<i32>} : memref<16x32xf32, #tpu.memory_space<vmem>>, vector<16x32xf32>,
    } else {
    }
    return
  }
  func.func @transform_0(%arg0: i32, %arg1: i32, %arg2: i32) -> (i32, i32) {
    %c0_i32 = arith.constant 0 : i32
    return %arg0, %arg2 : i32, i32
  }
  func.func @transform_1(%arg0: i32, %arg1: i32, %arg2: i32) -> (i32, i32) {
    %c0_i32 = arith.constant 0 : i32
    return %arg2, %arg1 : i32, i32
  }
  func.func @transform_2(%arg0: i32, %arg1: i32, %arg2: i32) -> (i32, i32) {
    %c0_i32 = arith.constant 0 : i32
    %c0_i32_0 = arith.constant 0 : i32
    return %c0_i32, %arg1 : i32, i32
  }
  func.func @transform_3(%arg0: i32, %arg1: i32, %arg2: i32) -> (i32, i32) {
    %c0_i32 = arith.constant 0 : i32
    return %arg0, %arg1 : i32, i32
  }
}

module attributes {stable_mosaic.version = 11 : i64} {
  func.func @_add_ln_kernel(%arg0: i32, %arg1: memref<16x32xbf16, #tpu.memory_space<vmem>>, %arg2: memref<16x32xf32, #tpu.memory_space<vmem>>, %arg3: memref<1x32xf32, #tpu.memory_space<vmem>>, %arg4: memref<1x32xf32, #tpu.memory_space<vmem>>, %arg5: memref<16x32xbf16, #tpu.memory_space<vmem>>) attributes {dimension_semantics = [#tpu.dimension_semantics<parallel>], iteration_bounds = array<i64: 1>, scalar_prefetch = 0 : i64, scratch_operands = 0 : i64, tpu.core_type = #tpu.core_type<tc>, window_params = [{transform_indices = @transform_0, window_bounds = array<i64: 16, 32>}, {transform_indices = @transform_1, window_bounds = array<i64: 16, 32>}, {pipeline_mode = #tpu.pipeline_mode<synchronous>, transform_indices = @transform_2, window_bounds = array<i64: 1, 32>}, {pipeline_mode = #tpu.pipeline_mode<synchronous>, transform_indices = @transform_3, window_bounds = array<i64: 1, 32>}, {transform_indices = @transform_4, window_bounds = array<i64: 16, 32>}]} {
    %c0 = arith.constant 0 : index
    %c0_0 = arith.constant 0 : index
    %0 = vector.load %arg1[%c0, %c0_0] : memref<16x32xbf16, #tpu.memory_space<vmem>>, vector<16x32xbf16>
    %1 = arith.extf %0 : vector<16x32xbf16> to vector<16x32xf32>
    %c0_1 = arith.constant 0 : index
    %c0_2 = arith.constant 0 : index
    %2 = vector.load %arg2[%c0_1, %c0_2] : memref<16x32xf32, #tpu.memory_space<vmem>>, vector<16x32xf32>
    %3 = arith.addf %1, %2 : vector<16x32xf32>
    %cst = arith.constant dense<0.000000e+00> : vector<16xf32>
    %4 = vector.multi_reduction <add>, %3, %cst [1] : vector<16x32xf32> to vector<16xf32>
    %5 = vector.shape_cast %4 : vector<16xf32> to vector<16x1xf32>
    %cst_3 = arith.constant 3.200000e+01 : f32
    %6 = vector.broadcast %cst_3 : f32 to vector<16x1xf32>
    %7 = arith.divf %5, %6 : vector<16x1xf32>
    %8 = vector.broadcast %7 : vector<16x1xf32> to vector<16x32xf32>
    %9 = arith.subf %3, %8 : vector<16x32xf32>
    %10 = arith.mulf %9, %9 : vector<16x32xf32>
    %cst_4 = arith.constant dense<0.000000e+00> : vector<16xf32>
    %11 = vector.multi_reduction <add>, %10, %cst_4 [1] : vector<16x32xf32> to vector<16xf32>
    %12 = vector.shape_cast %11 : vector<16xf32> to vector<16x1xf32>
    %cst_5 = arith.constant 3.200000e+01 : f32
    %13 = vector.broadcast %cst_5 : f32 to vector<16x1xf32>
    %14 = arith.divf %12, %13 : vector<16x1xf32>
    %15 = vector.broadcast %7 : vector<16x1xf32> to vector<16x32xf32>
    %16 = arith.subf %3, %15 : vector<16x32xf32>
    %cst_6 = arith.constant 9.99999974E-6 : f32
    %17 = vector.broadcast %cst_6 : f32 to vector<16x1xf32>
    %18 = arith.addf %14, %17 : vector<16x1xf32>
    %19 = math.rsqrt %18 : vector<16x1xf32>
    %20 = vector.broadcast %19 : vector<16x1xf32> to vector<16x32xf32>
    %21 = arith.mulf %16, %20 : vector<16x32xf32>
    %c0_7 = arith.constant 0 : index
    %c0_8 = arith.constant 0 : index
    %22 = vector.load %arg3[%c0_7, %c0_8] : memref<1x32xf32, #tpu.memory_space<vmem>>, vector<1x32xf32>
    %23 = vector.broadcast %22 : vector<1x32xf32> to vector<16x32xf32>
    %24 = arith.mulf %21, %23 : vector<16x32xf32>
    %c0_9 = arith.constant 0 : index
    %c0_10 = arith.constant 0 : index
    %25 = vector.load %arg4[%c0_9, %c0_10] : memref<1x32xf32, #tpu.memory_space<vmem>>, vector<1x32xf32>
    %26 = vector.broadcast %25 : vector<1x32xf32> to vector<16x32xf32>
    %27 = arith.addf %24, %26 : vector<16x32xf32>
    %28 = arith.truncf %27 : vector<16x32xf32> to vector<16x32xbf16>
    %c0_11 = arith.constant 0 : index
    %c0_12 = arith.constant 0 : index
    %29 = vector.load %arg5[%c0_11, %c0_12] : memref<16x32xbf16, #tpu.memory_space<vmem>>, vector<16x32xbf16>
    tpu.vector_store %arg5[%c0_11, %c0_12], %28 {strides = array<i32>} : memref<16x32xbf16, #tpu.memory_space<vmem>>, vector<16x32xbf16>,
    return
  }
  func.func @transform_0(%arg0: i32) -> (i32, i32) {
    %c0_i32 = arith.constant 0 : i32
    %c0_i32_0 = arith.constant 0 : i32
    return %arg0, %c0_i32 : i32, i32
  }
  func.func @transform_1(%arg0: i32) -> (i32, i32) {
    %c0_i32 = arith.constant 0 : i32
    %c0_i32_0 = arith.constant 0 : i32
    return %arg0, %c0_i32 : i32, i32
  }
  func.func @transform_2(%arg0: i32) -> (i32, i32) {
    %c0_i32 = arith.constant 0 : i32
    %c0_i32_0 = arith.constant 0 : i32
    %c0_i32_1 = arith.constant 0 : i32
    return %c0_i32, %c0_i32_0 : i32, i32
  }
  func.func @transform_3(%arg0: i32) -> (i32, i32) {
    %c0_i32 = arith.constant 0 : i32
    %c0_i32_0 = arith.constant 0 : i32
    %c0_i32_1 = arith.constant 0 : i32
    return %c0_i32, %c0_i32_0 : i32, i32
  }
  func.func @transform_4(%arg0: i32) -> (i32, i32) {
    %c0_i32 = arith.constant 0 : i32
    %c0_i32_0 = arith.constant 0 : i32
    return %arg0, %c0_i32 : i32, i32
  }
}

module attributes {stable_mosaic.version = 11 : i64} {
  func.func @_ln_kernel(%arg0: i32, %arg1: memref<16x32xbf16, #tpu.memory_space<vmem>>, %arg2: memref<1x32xf32, #tpu.memory_space<vmem>>, %arg3: memref<1x32xf32, #tpu.memory_space<vmem>>, %arg4: memref<16x32xbf16, #tpu.memory_space<vmem>>) attributes {dimension_semantics = [#tpu.dimension_semantics<parallel>], iteration_bounds = array<i64: 1>, scalar_prefetch = 0 : i64, scratch_operands = 0 : i64, tpu.core_type = #tpu.core_type<tc>, window_params = [{transform_indices = @transform_0, window_bounds = array<i64: 16, 32>}, {pipeline_mode = #tpu.pipeline_mode<synchronous>, transform_indices = @transform_1, window_bounds = array<i64: 1, 32>}, {pipeline_mode = #tpu.pipeline_mode<synchronous>, transform_indices = @transform_2, window_bounds = array<i64: 1, 32>}, {transform_indices = @transform_3, window_bounds = array<i64: 16, 32>}]} {
    %c0 = arith.constant 0 : index
    %c0_0 = arith.constant 0 : index
    %0 = vector.load %arg1[%c0, %c0_0] : memref<16x32xbf16, #tpu.memory_space<vmem>>, vector<16x32xbf16>
    %1 = arith.extf %0 : vector<16x32xbf16> to vector<16x32xf32>
    %cst = arith.constant dense<0.000000e+00> : vector<16xf32>
    %2 = vector.multi_reduction <add>, %1, %cst [1] : vector<16x32xf32> to vector<16xf32>
    %3 = vector.shape_cast %2 : vector<16xf32> to vector<16x1xf32>
    %cst_1 = arith.constant 3.200000e+01 : f32
    %4 = vector.broadcast %cst_1 : f32 to vector<16x1xf32>
    %5 = arith.divf %3, %4 : vector<16x1xf32>
    %6 = vector.broadcast %5 : vector<16x1xf32> to vector<16x32xf32>
    %7 = arith.subf %1, %6 : vector<16x32xf32>
    %8 = arith.mulf %7, %7 : vector<16x32xf32>
    %cst_2 = arith.constant dense<0.000000e+00> : vector<16xf32>
    %9 = vector.multi_reduction <add>, %8, %cst_2 [1] : vector<16x32xf32> to vector<16xf32>
    %10 = vector.shape_cast %9 : vector<16xf32> to vector<16x1xf32>
    %cst_3 = arith.constant 3.200000e+01 : f32
    %11 = vector.broadcast %cst_3 : f32 to vector<16x1xf32>
    %12 = arith.divf %10, %11 : vector<16x1xf32>
    %13 = vector.broadcast %5 : vector<16x1xf32> to vector<16x32xf32>
    %14 = arith.subf %1, %13 : vector<16x32xf32>
    %cst_4 = arith.constant 9.99999974E-6 : f32
    %15 = vector.broadcast %cst_4 : f32 to vector<16x1xf32>
    %16 = arith.addf %12, %15 : vector<16x1xf32>
    %17 = math.rsqrt %16 : vector<16x1xf32>
    %18 = vector.broadcast %17 : vector<16x1xf32> to vector<16x32xf32>
    %19 = arith.mulf %14, %18 : vector<16x32xf32>
    %c0_5 = arith.constant 0 : index
    %c0_6 = arith.constant 0 : index
    %20 = vector.load %arg2[%c0_5, %c0_6] : memref<1x32xf32, #tpu.memory_space<vmem>>, vector<1x32xf32>
    %21 = vector.broadcast %20 : vector<1x32xf32> to vector<16x32xf32>
    %22 = arith.mulf %19, %21 : vector<16x32xf32>
    %c0_7 = arith.constant 0 : index
    %c0_8 = arith.constant 0 : index
    %23 = vector.load %arg3[%c0_7, %c0_8] : memref<1x32xf32, #tpu.memory_space<vmem>>, vector<1x32xf32>
    %24 = vector.broadcast %23 : vector<1x32xf32> to vector<16x32xf32>
    %25 = arith.addf %22, %24 : vector<16x32xf32>
    %26 = arith.truncf %25 : vector<16x32xf32> to vector<16x32xbf16>
    %c0_9 = arith.constant 0 : index
    %c0_10 = arith.constant 0 : index
    %27 = vector.load %arg4[%c0_9, %c0_10] : memref<16x32xbf16, #tpu.memory_space<vmem>>, vector<16x32xbf16>
    tpu.vector_store %arg4[%c0_9, %c0_10], %26 {strides = array<i32>} : memref<16x32xbf16, #tpu.memory_space<vmem>>, vector<16x32xbf16>,
    return
  }
  func.func @transform_0(%arg0: i32) -> (i32, i32) {
    %c0_i32 = arith.constant 0 : i32
    %c0_i32_0 = arith.constant 0 : i32
    return %arg0, %c0_i32 : i32, i32
  }
  func.func @transform_1(%arg0: i32) -> (i32, i32) {
    %c0_i32 = arith.constant 0 : i32
    %c0_i32_0 = arith.constant 0 : i32
    %c0_i32_1 = arith.constant 0 : i32
    return %c0_i32, %c0_i32_0 : i32, i32
  }
  func.func @transform_2(%arg0: i32) -> (i32, i32) {
    %c0_i32 = arith.constant 0 : i32
    %c0_i32_0 = arith.constant 0 : i32
    %c0_i32_1 = arith.constant 0 : i32
    return %c0_i32, %c0_i32_0 : i32, i32
  }
  func.func @transform_3(%arg0: i32) -> (i32, i32) {
    %c0_i32 = arith.constant 0 : i32
    %c0_i32_0 = arith.constant 0 : i32
    return %arg0, %c0_i32 : i32, i32
  }
}

module attributes {stable_mosaic.version = 11 : i64} {
  func.func @_linear_kernel(%arg0: i32, %arg1: i32, %arg2: i32, %arg3: memref<16x32xbf16, #tpu.memory_space<vmem>>, %arg4: memref<32x32xbf16, #tpu.memory_space<vmem>>, %arg5: memref<1x32xf32, #tpu.memory_space<vmem>>, %arg6: memref<16x32xbf16, #tpu.memory_space<vmem>>, %arg7: memref<16x32xf32, #tpu.memory_space<vmem>>) attributes {dimension_semantics = [#tpu.dimension_semantics<parallel>, #tpu.dimension_semantics<parallel>, #tpu.dimension_semantics<arbitrary>], iteration_bounds = array<i64: 1, 1, 1>, scalar_prefetch = 0 : i64, scratch_operands = 1 : i64, tpu.core_type = #tpu.core_type<tc>, window_params = [{transform_indices = @transform_0, window_bounds = array<i64: 16, 32>}, {transform_indices = @transform_1, window_bounds = array<i64: 32, 32>}, {transform_indices = @transform_2, window_bounds = array<i64: 1, 32>}, {transform_indices = @transform_3, window_bounds = array<i64: 16, 32>}]} {
    %c0_i32 = arith.constant 0 : i32
    %0 = arith.cmpi eq, %arg2, %c0_i32 : i32
    %1 = arith.extui %0 : i1 to i32
    %c0_i32_0 = arith.constant 0 : i32
    %2 = arith.cmpi ne, %1, %c0_i32_0 : i32
    scf.if %2 {
      %cst_10 = arith.constant 0.000000e+00 : f32
      %12 = vector.broadcast %cst_10 : f32 to vector<16x32xf32>
      %c0_11 = arith.constant 0 : index
      %c0_12 = arith.constant 0 : index
      %13 = vector.load %arg7[%c0_11, %c0_12] : memref<16x32xf32, #tpu.memory_space<vmem>>, vector<16x32xf32>
      tpu.vector_store %arg7[%c0_11, %c0_12], %12 {strides = array<i32>} : memref<16x32xf32, #tpu.memory_space<vmem>>, vector<16x32xf32>,
    } else {
    }
    %c0 = arith.constant 0 : index
    %c0_1 = arith.constant 0 : index
    %3 = vector.load %arg7[%c0, %c0_1] : memref<16x32xf32, #tpu.memory_space<vmem>>, vector<16x32xf32>
    %c0_2 = arith.constant 0 : index
    %c0_3 = arith.constant 0 : index
    %4 = vector.load %arg3[%c0_2, %c0_3] : memref<16x32xbf16, #tpu.memory_space<vmem>>, vector<16x32xbf16>
    %c0_4 = arith.constant 0 : index
    %c0_5 = arith.constant 0 : index
    %5 = vector.load %arg4[%c0_4, %c0_5] : memref<32x32xbf16, #tpu.memory_space<vmem>>, vector<32x32xbf16>
    %cst = arith.constant dense<0.000000e+00> : vector<16x32xf32>
    %6 = tpu.matmul %4, %5, %cst {dimension_numbers = #tpu.dot_dimension_numbers<[1], [0], [0], [1], [0, 0, 1, 1], [], []>} : vector<16x32xbf16>, vector<32x32xbf16>, vector<16x32xf32> -> vector<16x32xf32>
    %7 = arith.addf %3, %6 : vector<16x32xf32>
    %c0_6 = arith.constant 0 : index
    %c0_7 = arith.constant 0 : index
    %8 = vector.load %arg7[%c0_6, %c0_7] : memref<16x32xf32, #tpu.memory_space<vmem>>, vector<16x32xf32>
    tpu.vector_store %arg7[%c0_6, %c0_7], %7 {strides = array<i32>} : memref<16x32xf32, #tpu.memory_space<vmem>>, vector<16x32xf32>,
    %c0_i32_8 = arith.constant 0 : i32
    %9 = arith.cmpi eq, %arg2, %c0_i32_8 : i32
    %10 = arith.extui %9 : i1 to i32
    %c0_i32_9 = arith.constant 0 : i32
    %11 = arith.cmpi ne, %10, %c0_i32_9 : i32
    scf.if %11 {
      %c0_10 = arith.constant 0 : index
      %c0_11 = arith.constant 0 : index
      %12 = vector.load %arg7[%c0_10, %c0_11] : memref<16x32xf32, #tpu.memory_space<vmem>>, vector<16x32xf32>
      %c0_12 = arith.constant 0 : index
      %c0_13 = arith.constant 0 : index
      %13 = vector.load %arg5[%c0_12, %c0_13] : memref<1x32xf32, #tpu.memory_space<vmem>>, vector<1x32xf32>
      %14 = vector.broadcast %13 : vector<1x32xf32> to vector<16x32xf32>
      %15 = arith.addf %12, %14 : vector<16x32xf32>
      %cst_14 = arith.constant 0.707106769 : f32
      %16 = vector.broadcast %cst_14 : f32 to vector<16x32xf32>
      %17 = arith.mulf %15, %16 : vector<16x32xf32>
      %18 = math.absf %17 : vector<16x32xf32>
      %cst_15 = arith.constant 0.327591091 : f32
      %19 = vector.broadcast %cst_15 : f32 to vector<16x32xf32>
      %20 = arith.mulf %19, %18 : vector<16x32xf32>
      %cst_16 = arith.constant 1.000000e+00 : f32
      %21 = vector.broadcast %cst_16 : f32 to vector<16x32xf32>
      %22 = arith.addf %21, %20 : vector<16x32xf32>
      %cst_17 = arith.constant 1.000000e+00 : f32
      %23 = vector.broadcast %cst_17 : f32 to vector<16x32xf32>
      %24 = arith.divf %23, %22 : vector<16x32xf32>
      %cst_18 = arith.constant 1.06140542 : f32
      %25 = vector.broadcast %cst_18 : f32 to vector<16x32xf32>
      %26 = arith.mulf %24, %25 : vector<16x32xf32>
      %cst_19 = arith.constant -1.45315206 : f32
      %27 = vector.broadcast %cst_19 : f32 to vector<16x32xf32>
      %28 = arith.addf %27, %26 : vector<16x32xf32>
      %29 = arith.mulf %24, %28 : vector<16x32xf32>
      %cst_20 = arith.constant 1.42141378 : f32
      %30 = vector.broadcast %cst_20 : f32 to vector<16x32xf32>
      %31 = arith.addf %30, %29 : vector<16x32xf32>
      %32 = arith.mulf %24, %31 : vector<16x32xf32>
      %cst_21 = arith.constant -0.284496725 : f32
      %33 = vector.broadcast %cst_21 : f32 to vector<16x32xf32>
      %34 = arith.addf %33, %32 : vector<16x32xf32>
      %35 = arith.mulf %24, %34 : vector<16x32xf32>
      %cst_22 = arith.constant 0.254829586 : f32
      %36 = vector.broadcast %cst_22 : f32 to vector<16x32xf32>
      %37 = arith.addf %36, %35 : vector<16x32xf32>
      %38 = arith.mulf %24, %37 : vector<16x32xf32>
      %cst_23 = arith.constant 0.000000e+00 : f32
      %39 = vector.broadcast %cst_23 : f32 to vector<16x32xf32>
      %40 = arith.subf %39, %18 : vector<16x32xf32>
      %41 = arith.mulf %40, %18 : vector<16x32xf32>
      %42 = math.exp %41 : vector<16x32xf32>
      %43 = arith.mulf %38, %42 : vector<16x32xf32>
      %cst_24 = arith.constant 1.000000e+00 : f32
      %44 = vector.broadcast %cst_24 : f32 to vector<16x32xf32>
      %45 = arith.subf %44, %43 : vector<16x32xf32>
      %cst_25 = arith.constant 0.000000e+00 : f32
      %46 = vector.broadcast %cst_25 : f32 to vector<16x32xf32>
      %47 = arith.cmpf oge, %17, %46 : vector<16x32xf32>
      %cst_26 = arith.constant 0.000000e+00 : f32
      %48 = vector.broadcast %cst_26 : f32 to vector<16x32xf32>
      %49 = arith.subf %48, %45 : vector<16x32xf32>
      %50 = arith.select %47, %45, %49 : vector<16x32xi1>, vector<16x32xf32>
      %cst_27 = arith.constant 5.000000e-01 : f32
      %51 = vector.broadcast %cst_27 : f32 to vector<16x32xf32>
      %52 = arith.mulf %51, %15 : vector<16x32xf32>
      %cst_28 = arith.constant 1.000000e+00 : f32
      %53 = vector.broadcast %cst_28 : f32 to vector<16x32xf32>
      %54 = arith.addf %53, %50 : vector<16x32xf32>
      %55 = arith.mulf %52, %54 : vector<16x32xf32>
      %56 = arith.truncf %55 : vector<16x32xf32> to vector<16x32xbf16>
      %c0_29 = arith.constant 0 : index
      %c0_30 = arith.constant 0 : index
      %57 = vector.load %arg6[%c0_29, %c0_30] : memref<16x32xbf16, #tpu.memory_space<vmem>>, vector<16x32xbf16>
      tpu.vector_store %arg6[%c0_29, %c0_30], %56 {strides = array<i32>} : memref<16x32xbf16, #tpu.memory_space<vmem>>, vector<16x32xbf16>,
    } else {
    }
    return
  }
  func.func @transform_0(%arg0: i32, %arg1: i32, %arg2: i32) -> (i32, i32) {
    %c0_i32 = arith.constant 0 : i32
    return %arg0, %arg2 : i32, i32
  }
  func.func @transform_1(%arg0: i32, %arg1: i32, %arg2: i32) -> (i32, i32) {
    %c0_i32 = arith.constant 0 : i32
    return %arg2, %arg1 : i32, i32
  }
  func.func @transform_2(%arg0: i32, %arg1: i32, %arg2: i32) -> (i32, i32) {
    %c0_i32 = arith.constant 0 : i32
    %c0_i32_0 = arith.constant 0 : i32
    return %c0_i32, %arg1 : i32, i32
  }
  func.func @transform_3(%arg0: i32, %arg1: i32, %arg2: i32) -> (i32, i32) {
    %c0_i32 = arith.constant 0 : i32
    return %arg0, %arg1 : i32, i32
  }
}

module attributes {stable_mosaic.version = 11 : i64} {
  func.func @_linear_kernel(%arg0: i32, %arg1: i32, %arg2: i32, %arg3: memref<16x32xbf16, #tpu.memory_space<vmem>>, %arg4: memref<32x64xbf16, #tpu.memory_space<vmem>>, %arg5: memref<1x64xf32, #tpu.memory_space<vmem>>, %arg6: memref<16x64xbf16, #tpu.memory_space<vmem>>, %arg7: memref<16x64xf32, #tpu.memory_space<vmem>>) attributes {dimension_semantics = [#tpu.dimension_semantics<parallel>, #tpu.dimension_semantics<parallel>, #tpu.dimension_semantics<arbitrary>], iteration_bounds = array<i64: 1, 1, 1>, scalar_prefetch = 0 : i64, scratch_operands = 1 : i64, tpu.core_type = #tpu.core_type<tc>, window_params = [{transform_indices = @transform_0, window_bounds = array<i64: 16, 32>}, {transform_indices = @transform_1, window_bounds = array<i64: 32, 64>}, {transform_indices = @transform_2, window_bounds = array<i64: 1, 64>}, {transform_indices = @transform_3, window_bounds = array<i64: 16, 64>}]} {
    %c0_i32 = arith.constant 0 : i32
    %0 = arith.cmpi eq, %arg2, %c0_i32 : i32
    %1 = arith.extui %0 : i1 to i32
    %c0_i32_0 = arith.constant 0 : i32
    %2 = arith.cmpi ne, %1, %c0_i32_0 : i32
    scf.if %2 {
      %cst_10 = arith.constant 0.000000e+00 : f32
      %12 = vector.broadcast %cst_10 : f32 to vector<16x64xf32>
      %c0_11 = arith.constant 0 : index
      %c0_12 = arith.constant 0 : index
      %13 = vector.load %arg7[%c0_11, %c0_12] : memref<16x64xf32, #tpu.memory_space<vmem>>, vector<16x64xf32>
      tpu.vector_store %arg7[%c0_11, %c0_12], %12 {strides = array<i32>} : memref<16x64xf32, #tpu.memory_space<vmem>>, vector<16x64xf32>,
    } else {
    }
    %c0 = arith.constant 0 : index
    %c0_1 = arith.constant 0 : index
    %3 = vector.load %arg7[%c0, %c0_1] : memref<16x64xf32, #tpu.memory_space<vmem>>, vector<16x64xf32>
    %c0_2 = arith.constant 0 : index
    %c0_3 = arith.constant 0 : index
    %4 = vector.load %arg3[%c0_2, %c0_3] : memref<16x32xbf16, #tpu.memory_space<vmem>>, vector<16x32xbf16>
    %c0_4 = arith.constant 0 : index
    %c0_5 = arith.constant 0 : index
    %5 = vector.load %arg4[%c0_4, %c0_5] : memref<32x64xbf16, #tpu.memory_space<vmem>>, vector<32x64xbf16>
    %cst = arith.constant dense<0.000000e+00> : vector<16x64xf32>
    %6 = tpu.matmul %4, %5, %cst {dimension_numbers = #tpu.dot_dimension_numbers<[1], [0], [0], [1], [0, 0, 1, 1], [], []>} : vector<16x32xbf16>, vector<32x64xbf16>, vector<16x64xf32> -> vector<16x64xf32>
    %7 = arith.addf %3, %6 : vector<16x64xf32>
    %c0_6 = arith.constant 0 : index
    %c0_7 = arith.constant 0 : index
    %8 = vector.load %arg7[%c0_6, %c0_7] : memref<16x64xf32, #tpu.memory_space<vmem>>, vector<16x64xf32>
    tpu.vector_store %arg7[%c0_6, %c0_7], %7 {strides = array<i32>} : memref<16x64xf32, #tpu.memory_space<vmem>>, vector<16x64xf32>,
    %c0_i32_8 = arith.constant 0 : i32
    %9 = arith.cmpi eq, %arg2, %c0_i32_8 : i32
    %10 = arith.extui %9 : i1 to i32
    %c0_i32_9 = arith.constant 0 : i32
    %11 = arith.cmpi ne, %10, %c0_i32_9 : i32
    scf.if %11 {
      %c0_10 = arith.constant 0 : index
      %c0_11 = arith.constant 0 : index
      %12 = vector.load %arg7[%c0_10, %c0_11] : memref<16x64xf32, #tpu.memory_space<vmem>>, vector<16x64xf32>
      %c0_12 = arith.constant 0 : index
      %c0_13 = arith.constant 0 : index
      %13 = vector.load %arg5[%c0_12, %c0_13] : memref<1x64xf32, #tpu.memory_space<vmem>>, vector<1x64xf32>
      %14 = vector.broadcast %13 : vector<1x64xf32> to vector<16x64xf32>
      %15 = arith.addf %12, %14 : vector<16x64xf32>
      %16 = arith.truncf %15 : vector<16x64xf32> to vector<16x64xbf16>
      %c0_14 = arith.constant 0 : index
      %c0_15 = arith.constant 0 : index
      %17 = vector.load %arg6[%c0_14, %c0_15] : memref<16x64xbf16, #tpu.memory_space<vmem>>, vector<16x64xbf16>
      tpu.vector_store %arg6[%c0_14, %c0_15], %16 {strides = array<i32>} : memref<16x64xbf16, #tpu.memory_space<vmem>>, vector<16x64xbf16>,
    } else {
    }
    return
  }
  func.func @transform_0(%arg0: i32, %arg1: i32, %arg2: i32) -> (i32, i32) {
    %c0_i32 = arith.constant 0 : i32
    return %arg0, %arg2 : i32, i32
  }
  func.func @transform_1(%arg0: i32, %arg1: i32, %arg2: i32) -> (i32, i32) {
    %c0_i32 = arith.constant 0 : i32
    return %arg2, %arg1 : i32, i32
  }
  func.func @transform_2(%arg0: i32, %arg1: i32, %arg2: i32) -> (i32, i32) {
    %c0_i32 = arith.constant 0 : i32
    %c0_i32_0 = arith.constant 0 : i32
    return %c0_i32, %arg1 : i32, i32
  }
  func.func @transform_3(%arg0: i32, %arg1: i32, %arg2: i32) -> (i32, i32) {
    %c0_i32 = arith.constant 0 : i32
    return %arg0, %arg1 : i32, i32
  }
}

module attributes {stable_mosaic.version = 11 : i64} {
  func.func @_prob_attn_masked_kernel(%arg0: i32, %arg1: memref<1x15x4xi32, #tpu.memory_space<vmem>>, %arg2: memref<1x15x32xbf16, #tpu.memory_space<vmem>>, %arg3: memref<1x16x96xbf16, #tpu.memory_space<vmem>>, %arg4: memref<1x15x32xbf16, #tpu.memory_space<vmem>>) attributes {dimension_semantics = [#tpu.dimension_semantics<parallel>], iteration_bounds = array<i64: 2>, scalar_prefetch = 0 : i64, scratch_operands = 0 : i64, tpu.core_type = #tpu.core_type<tc>, window_params = [{transform_indices = @transform_0, window_bounds = array<i64: 1, 15, 4>}, {transform_indices = @transform_1, window_bounds = array<i64: 1, 15, 32>}, {transform_indices = @transform_2, window_bounds = array<i64: 1, 16, 96>}, {transform_indices = @transform_3, window_bounds = array<i64: 1, 15, 32>}]} {
    %c0 = arith.constant 0 : index
    %c0_0 = arith.constant 0 : index
    %c0_1 = arith.constant 0 : index
    %0 = vector.load %arg2[%c0, %c0_0, %c0_1] : memref<1x15x32xbf16, #tpu.memory_space<vmem>>, vector<1x15x8xbf16>
    %1 = vector.shape_cast %0 : vector<1x15x8xbf16> to vector<15x8xbf16>
    %c0_2 = arith.constant 0 : index
    %c0_3 = arith.constant 0 : index
    %c32 = arith.constant 32 : index
    %2 = vector.load %arg3[%c0_2, %c0_3, %c32] : memref<1x16x96xbf16, #tpu.memory_space<vmem>>, vector<1x16x8xbf16>
    %3 = vector.shape_cast %2 : vector<1x16x8xbf16> to vector<16x8xbf16>
    %c0_4 = arith.constant 0 : index
    %c0_5 = arith.constant 0 : index
    %c64 = arith.constant 64 : index
    %4 = vector.load %arg3[%c0_4, %c0_5, %c64] : memref<1x16x96xbf16, #tpu.memory_space<vmem>>, vector<1x16x8xbf16>
    %5 = vector.shape_cast %4 : vector<1x16x8xbf16> to vector<16x8xbf16>
    %c0_6 = arith.constant 0 : index
    %c0_7 = arith.constant 0 : index
    %c0_8 = arith.constant 0 : index
    %6 = vector.load %arg1[%c0_6, %c0_7, %c0_8] : memref<1x15x4xi32, #tpu.memory_space<vmem>>, vector<1x15x1xi32>
    %7 = vector.shape_cast %6 : vector<1x15x1xi32> to vector<15x1xi32>
    %cst = arith.constant dense<0.000000e+00> : vector<15x16xf32>
    %8 = tpu.matmul %1, %3, %cst {dimension_numbers = #tpu.dot_dimension_numbers<[1], [1], [0], [0], [0, 0, 1, 0], [], []>} : vector<15x8xbf16>, vector<16x8xbf16>, vector<15x16xf32> -> vector<15x16xf32>
    %cst_9 = arith.constant 0.353553385 : f32
    %9 = vector.broadcast %cst_9 : f32 to vector<15x16xf32>
    %10 = arith.mulf %8, %9 : vector<15x16xf32>
    %11 = tpu.iota {dimensions = array<i32: 1>} : vector<15x16xi32>
    %12 = vector.broadcast %7 : vector<15x1xi32> to vector<15x16xi32>
    %13 = arith.cmpi sle, %11, %12 : vector<15x16xi32>
    %cst_10 = arith.constant -1.000000e+30 : f32
    %14 = vector.broadcast %cst_10 : f32 to vector<15x16xf32>
    %15 = arith.select %13, %10, %14 : vector<15x16xi1>, vector<15x16xf32>
    %cst_11 = arith.constant dense<0xFF800000> : vector<15xf32>
    %16 = vector.multi_reduction <maximumf>, %15, %cst_11 [1] : vector<15x16xf32> to vector<15xf32>
    %17 = vector.shape_cast %16 : vector<15xf32> to vector<15x1xf32>
    %18 = vector.broadcast %17 : vector<15x1xf32> to vector<15x16xf32>
    %19 = arith.subf %15, %18 : vector<15x16xf32>
    %20 = math.exp %19 : vector<15x16xf32>
    %cst_12 = arith.constant dense<0.000000e+00> : vector<15xf32>
    %21 = vector.multi_reduction <add>, %20, %cst_12 [1] : vector<15x16xf32> to vector<15xf32>
    %22 = vector.shape_cast %21 : vector<15xf32> to vector<15x1xf32>
    %23 = tpu.reciprocal %22 {approx = true} : vector<15x1xf32> -> vector<15x1xf32>
    %24 = vector.broadcast %23 : vector<15x1xf32> to vector<15x16xf32>
    %25 = arith.mulf %20, %24 : vector<15x16xf32>
    %26 = arith.truncf %25 : vector<15x16xf32> to vector<15x16xbf16>
    %cst_13 = arith.constant dense<0.000000e+00> : vector<15x8xf32>
    %27 = tpu.matmul %26, %5, %cst_13 {dimension_numbers = #tpu.dot_dimension_numbers<[1], [0], [0], [1], [0, 0, 1, 1], [], []>} : vector<15x16xbf16>, vector<16x8xbf16>, vector<15x8xf32> -> vector<15x8xf32>
    %28 = arith.truncf %27 : vector<15x8xf32> to vector<15x8xbf16>
    %c0_14 = arith.constant 0 : index
    %c0_15 = arith.constant 0 : index
    %c0_16 = arith.constant 0 : index
    %29 = vector.load %arg4[%c0_14, %c0_15, %c0_16] : memref<1x15x32xbf16, #tpu.memory_space<vmem>>, vector<1x15x8xbf16>
    %30 = vector.shape_cast %29 : vector<1x15x8xbf16> to vector<15x8xbf16>
    %31 = vector.shape_cast %28 : vector<15x8xbf16> to vector<1x15x8xbf16>
    tpu.vector_store %arg4[%c0_14, %c0_15, %c0_16], %31 {strides = array<i32>} : memref<1x15x32xbf16, #tpu.memory_space<vmem>>, vector<1x15x8xbf16>,
    %c0_17 = arith.constant 0 : index
    %c0_18 = arith.constant 0 : index
    %c8 = arith.constant 8 : index
    %32 = vector.load %arg2[%c0_17, %c0_18, %c8] : memref<1x15x32xbf16, #tpu.memory_space<vmem>>, vector<1x15x8xbf16>
    %33 = vector.shape_cast %32 : vector<1x15x8xbf16> to vector<15x8xbf16>
    %c0_19 = arith.constant 0 : index
    %c0_20 = arith.constant 0 : index
    %c40 = arith.constant 40 : index
    %34 = vector.load %arg3[%c0_19, %c0_20, %c40] : memref<1x16x96xbf16, #tpu.memory_space<vmem>>, vector<1x16x8xbf16>
    %35 = vector.shape_cast %34 : vector<1x16x8xbf16> to vector<16x8xbf16>
    %c0_21 = arith.constant 0 : index
    %c0_22 = arith.constant 0 : index
    %c72 = arith.constant 72 : index
    %36 = vector.load %arg3[%c0_21, %c0_22, %c72] : memref<1x16x96xbf16, #tpu.memory_space<vmem>>, vector<1x16x8xbf16>
    %37 = vector.shape_cast %36 : vector<1x16x8xbf16> to vector<16x8xbf16>
    %c0_23 = arith.constant 0 : index
    %c0_24 = arith.constant 0 : index
    %c1 = arith.constant 1 : index
    %38 = vector.load %arg1[%c0_23, %c0_24, %c1] : memref<1x15x4xi32, #tpu.memory_space<vmem>>, vector<1x15x1xi32>
    %39 = vector.shape_cast %38 : vector<1x15x1xi32> to vector<15x1xi32>
    %cst_25 = arith.constant dense<0.000000e+00> : vector<15x16xf32>
    %40 = tpu.matmul %33, %35, %cst_25 {dimension_numbers = #tpu.dot_dimension_numbers<[1], [1], [0], [0], [0, 0, 1, 0], [], []>} : vector<15x8xbf16>, vector<16x8xbf16>, vector<15x16xf32> -> vector<15x16xf32>
    %cst_26 = arith.constant 0.353553385 : f32
    %41 = vector.broadcast %cst_26 : f32 to vector<15x16xf32>
    %42 = arith.mulf %40, %41 : vector<15x16xf32>
    %43 = tpu.iota {dimensions = array<i32: 1>} : vector<15x16xi32>
    %44 = vector.broadcast %39 : vector<15x1xi32> to vector<15x16xi32>
    %45 = arith.cmpi sle, %43, %44 : vector<15x16xi32>
    %cst_27 = arith.constant -1.000000e+30 : f32
    %46 = vector.broadcast %cst_27 : f32 to vector<15x16xf32>
    %47 = arith.select %45, %42, %46 : vector<15x16xi1>, vector<15x16xf32>
    %cst_28 = arith.constant dense<0xFF800000> : vector<15xf32>
    %48 = vector.multi_reduction <maximumf>, %47, %cst_28 [1] : vector<15x16xf32> to vector<15xf32>
    %49 = vector.shape_cast %48 : vector<15xf32> to vector<15x1xf32>
    %50 = vector.broadcast %49 : vector<15x1xf32> to vector<15x16xf32>
    %51 = arith.subf %47, %50 : vector<15x16xf32>
    %52 = math.exp %51 : vector<15x16xf32>
    %cst_29 = arith.constant dense<0.000000e+00> : vector<15xf32>
    %53 = vector.multi_reduction <add>, %52, %cst_29 [1] : vector<15x16xf32> to vector<15xf32>
    %54 = vector.shape_cast %53 : vector<15xf32> to vector<15x1xf32>
    %55 = tpu.reciprocal %54 {approx = true} : vector<15x1xf32> -> vector<15x1xf32>
    %56 = vector.broadcast %55 : vector<15x1xf32> to vector<15x16xf32>
    %57 = arith.mulf %52, %56 : vector<15x16xf32>
    %58 = arith.truncf %57 : vector<15x16xf32> to vector<15x16xbf16>
    %cst_30 = arith.constant dense<0.000000e+00> : vector<15x8xf32>
    %59 = tpu.matmul %58, %37, %cst_30 {dimension_numbers = #tpu.dot_dimension_numbers<[1], [0], [0], [1], [0, 0, 1, 1], [], []>} : vector<15x16xbf16>, vector<16x8xbf16>, vector<15x8xf32> -> vector<15x8xf32>
    %60 = arith.truncf %59 : vector<15x8xf32> to vector<15x8xbf16>
    %c0_31 = arith.constant 0 : index
    %c0_32 = arith.constant 0 : index
    %c8_33 = arith.constant 8 : index
    %61 = vector.load %arg4[%c0_31, %c0_32, %c8_33] : memref<1x15x32xbf16, #tpu.memory_space<vmem>>, vector<1x15x8xbf16>
    %62 = vector.shape_cast %61 : vector<1x15x8xbf16> to vector<15x8xbf16>
    %63 = vector.shape_cast %60 : vector<15x8xbf16> to vector<1x15x8xbf16>
    tpu.vector_store %arg4[%c0_31, %c0_32, %c8_33], %63 {strides = array<i32>} : memref<1x15x32xbf16, #tpu.memory_space<vmem>>, vector<1x15x8xbf16>,
    %c0_34 = arith.constant 0 : index
    %c0_35 = arith.constant 0 : index
    %c16 = arith.constant 16 : index
    %64 = vector.load %arg2[%c0_34, %c0_35, %c16] : memref<1x15x32xbf16, #tpu.memory_space<vmem>>, vector<1x15x8xbf16>
    %65 = vector.shape_cast %64 : vector<1x15x8xbf16> to vector<15x8xbf16>
    %c0_36 = arith.constant 0 : index
    %c0_37 = arith.constant 0 : index
    %c48 = arith.constant 48 : index
    %66 = vector.load %arg3[%c0_36, %c0_37, %c48] : memref<1x16x96xbf16, #tpu.memory_space<vmem>>, vector<1x16x8xbf16>
    %67 = vector.shape_cast %66 : vector<1x16x8xbf16> to vector<16x8xbf16>
    %c0_38 = arith.constant 0 : index
    %c0_39 = arith.constant 0 : index
    %c80 = arith.constant 80 : index
    %68 = vector.load %arg3[%c0_38, %c0_39, %c80] : memref<1x16x96xbf16, #tpu.memory_space<vmem>>, vector<1x16x8xbf16>
    %69 = vector.shape_cast %68 : vector<1x16x8xbf16> to vector<16x8xbf16>
    %c0_40 = arith.constant 0 : index
    %c0_41 = arith.constant 0 : index
    %c2 = arith.constant 2 : index
    %70 = vector.load %arg1[%c0_40, %c0_41, %c2] : memref<1x15x4xi32, #tpu.memory_space<vmem>>, vector<1x15x1xi32>
    %71 = vector.shape_cast %70 : vector<1x15x1xi32> to vector<15x1xi32>
    %cst_42 = arith.constant dense<0.000000e+00> : vector<15x16xf32>
    %72 = tpu.matmul %65, %67, %cst_42 {dimension_numbers = #tpu.dot_dimension_numbers<[1], [1], [0], [0], [0, 0, 1, 0], [], []>} : vector<15x8xbf16>, vector<16x8xbf16>, vector<15x16xf32> -> vector<15x16xf32>
    %cst_43 = arith.constant 0.353553385 : f32
    %73 = vector.broadcast %cst_43 : f32 to vector<15x16xf32>
    %74 = arith.mulf %72, %73 : vector<15x16xf32>
    %75 = tpu.iota {dimensions = array<i32: 1>} : vector<15x16xi32>
    %76 = vector.broadcast %71 : vector<15x1xi32> to vector<15x16xi32>
    %77 = arith.cmpi sle, %75, %76 : vector<15x16xi32>
    %cst_44 = arith.constant -1.000000e+30 : f32
    %78 = vector.broadcast %cst_44 : f32 to vector<15x16xf32>
    %79 = arith.select %77, %74, %78 : vector<15x16xi1>, vector<15x16xf32>
    %cst_45 = arith.constant dense<0xFF800000> : vector<15xf32>
    %80 = vector.multi_reduction <maximumf>, %79, %cst_45 [1] : vector<15x16xf32> to vector<15xf32>
    %81 = vector.shape_cast %80 : vector<15xf32> to vector<15x1xf32>
    %82 = vector.broadcast %81 : vector<15x1xf32> to vector<15x16xf32>
    %83 = arith.subf %79, %82 : vector<15x16xf32>
    %84 = math.exp %83 : vector<15x16xf32>
    %cst_46 = arith.constant dense<0.000000e+00> : vector<15xf32>
    %85 = vector.multi_reduction <add>, %84, %cst_46 [1] : vector<15x16xf32> to vector<15xf32>
    %86 = vector.shape_cast %85 : vector<15xf32> to vector<15x1xf32>
    %87 = tpu.reciprocal %86 {approx = true} : vector<15x1xf32> -> vector<15x1xf32>
    %88 = vector.broadcast %87 : vector<15x1xf32> to vector<15x16xf32>
    %89 = arith.mulf %84, %88 : vector<15x16xf32>
    %90 = arith.truncf %89 : vector<15x16xf32> to vector<15x16xbf16>
    %cst_47 = arith.constant dense<0.000000e+00> : vector<15x8xf32>
    %91 = tpu.matmul %90, %69, %cst_47 {dimension_numbers = #tpu.dot_dimension_numbers<[1], [0], [0], [1], [0, 0, 1, 1], [], []>} : vector<15x16xbf16>, vector<16x8xbf16>, vector<15x8xf32> -> vector<15x8xf32>
    %92 = arith.truncf %91 : vector<15x8xf32> to vector<15x8xbf16>
    %c0_48 = arith.constant 0 : index
    %c0_49 = arith.constant 0 : index
    %c16_50 = arith.constant 16 : index
    %93 = vector.load %arg4[%c0_48, %c0_49, %c16_50] : memref<1x15x32xbf16, #tpu.memory_space<vmem>>, vector<1x15x8xbf16>
    %94 = vector.shape_cast %93 : vector<1x15x8xbf16> to vector<15x8xbf16>
    %95 = vector.shape_cast %92 : vector<15x8xbf16> to vector<1x15x8xbf16>
    tpu.vector_store %arg4[%c0_48, %c0_49, %c16_50], %95 {strides = array<i32>} : memref<1x15x32xbf16, #tpu.memory_space<vmem>>, vector<1x15x8xbf16>,
    %c0_51 = arith.constant 0 : index
    %c0_52 = arith.constant 0 : index
    %c24 = arith.constant 24 : index
    %96 = vector.load %arg2[%c0_51, %c0_52, %c24] : memref<1x15x32xbf16, #tpu.memory_space<vmem>>, vector<1x15x8xbf16>
    %97 = vector.shape_cast %96 : vector<1x15x8xbf16> to vector<15x8xbf16>
    %c0_53 = arith.constant 0 : index
    %c0_54 = arith.constant 0 : index
    %c56 = arith.constant 56 : index
    %98 = vector.load %arg3[%c0_53, %c0_54, %c56] : memref<1x16x96xbf16, #tpu.memory_space<vmem>>, vector<1x16x8xbf16>
    %99 = vector.shape_cast %98 : vector<1x16x8xbf16> to vector<16x8xbf16>
    %c0_55 = arith.constant 0 : index
    %c0_56 = arith.constant 0 : index
    %c88 = arith.constant 88 : index
    %100 = vector.load %arg3[%c0_55, %c0_56, %c88] : memref<1x16x96xbf16, #tpu.memory_space<vmem>>, vector<1x16x8xbf16>
    %101 = vector.shape_cast %100 : vector<1x16x8xbf16> to vector<16x8xbf16>
    %c0_57 = arith.constant 0 : index
    %c0_58 = arith.constant 0 : index
    %c3 = arith.constant 3 : index
    %102 = vector.load %arg1[%c0_57, %c0_58, %c3] : memref<1x15x4xi32, #tpu.memory_space<vmem>>, vector<1x15x1xi32>
    %103 = vector.shape_cast %102 : vector<1x15x1xi32> to vector<15x1xi32>
    %cst_59 = arith.constant dense<0.000000e+00> : vector<15x16xf32>
    %104 = tpu.matmul %97, %99, %cst_59 {dimension_numbers = #tpu.dot_dimension_numbers<[1], [1], [0], [0], [0, 0, 1, 0], [], []>} : vector<15x8xbf16>, vector<16x8xbf16>, vector<15x16xf32> -> vector<15x16xf32>
    %cst_60 = arith.constant 0.353553385 : f32
    %105 = vector.broadcast %cst_60 : f32 to vector<15x16xf32>
    %106 = arith.mulf %104, %105 : vector<15x16xf32>
    %107 = tpu.iota {dimensions = array<i32: 1>} : vector<15x16xi32>
    %108 = vector.broadcast %103 : vector<15x1xi32> to vector<15x16xi32>
    %109 = arith.cmpi sle, %107, %108 : vector<15x16xi32>
    %cst_61 = arith.constant -1.000000e+30 : f32
    %110 = vector.broadcast %cst_61 : f32 to vector<15x16xf32>
    %111 = arith.select %109, %106, %110 : vector<15x16xi1>, vector<15x16xf32>
    %cst_62 = arith.constant dense<0xFF800000> : vector<15xf32>
    %112 = vector.multi_reduction <maximumf>, %111, %cst_62 [1] : vector<15x16xf32> to vector<15xf32>
    %113 = vector.shape_cast %112 : vector<15xf32> to vector<15x1xf32>
    %114 = vector.broadcast %113 : vector<15x1xf32> to vector<15x16xf32>
    %115 = arith.subf %111, %114 : vector<15x16xf32>
    %116 = math.exp %115 : vector<15x16xf32>
    %cst_63 = arith.constant dense<0.000000e+00> : vector<15xf32>
    %117 = vector.multi_reduction <add>, %116, %cst_63 [1] : vector<15x16xf32> to vector<15xf32>
    %118 = vector.shape_cast %117 : vector<15xf32> to vector<15x1xf32>
    %119 = tpu.reciprocal %118 {approx = true} : vector<15x1xf32> -> vector<15x1xf32>
    %120 = vector.broadcast %119 : vector<15x1xf32> to vector<15x16xf32>
    %121 = arith.mulf %116, %120 : vector<15x16xf32>
    %122 = arith.truncf %121 : vector<15x16xf32> to vector<15x16xbf16>
    %cst_64 = arith.constant dense<0.000000e+00> : vector<15x8xf32>
    %123 = tpu.matmul %122, %101, %cst_64 {dimension_numbers = #tpu.dot_dimension_numbers<[1], [0], [0], [1], [0, 0, 1, 1], [], []>} : vector<15x16xbf16>, vector<16x8xbf16>, vector<15x8xf32> -> vector<15x8xf32>
    %124 = arith.truncf %123 : vector<15x8xf32> to vector<15x8xbf16>
    %c0_65 = arith.constant 0 : index
    %c0_66 = arith.constant 0 : index
    %c24_67 = arith.constant 24 : index
    %125 = vector.load %arg4[%c0_65, %c0_66, %c24_67] : memref<1x15x32xbf16, #tpu.memory_space<vmem>>, vector<1x15x8xbf16>
    %126 = vector.shape_cast %125 : vector<1x15x8xbf16> to vector<15x8xbf16>
    %127 = vector.shape_cast %124 : vector<15x8xbf16> to vector<1x15x8xbf16>
    tpu.vector_store %arg4[%c0_65, %c0_66, %c24_67], %127 {strides = array<i32>} : memref<1x15x32xbf16, #tpu.memory_space<vmem>>, vector<1x15x8xbf16>,
    return
  }
  func.func @transform_0(%arg0: i32) -> (i32, i32, i32) {
    %c0_i32 = arith.constant 0 : i32
    %c0_i32_0 = arith.constant 0 : i32
    %c0_i32_1 = arith.constant 0 : i32
    return %arg0, %c0_i32, %c0_i32_0 : i32, i32, i32
  }
  func.func @transform_1(%arg0: i32) -> (i32, i32, i32) {
    %c0_i32 = arith.constant 0 : i32
    %c0_i32_0 = arith.constant 0 : i32
    %c0_i32_1 = arith.constant 0 : i32
    return %arg0, %c0_i32, %c0_i32_0 : i32, i32, i32
  }
  func.func @transform_2(%arg0: i32) -> (i32, i32, i32) {
    %c0_i32 = arith.constant 0 : i32
    %c0_i32_0 = arith.constant 0 : i32
    %c0_i32_1 = arith.constant 0 : i32
    return %arg0, %c0_i32, %c0_i32_0 : i32, i32, i32
  }
  func.func @transform_3(%arg0: i32) -> (i32, i32, i32) {
    %c0_i32 = arith.constant 0 : i32
    %c0_i32_0 = arith.constant 0 : i32
    %c0_i32_1 = arith.constant 0 : i32
    return %arg0, %c0_i32, %c0_i32_0 : i32, i32, i32
  }
}

module attributes {stable_mosaic.version = 11 : i64} {
  func.func @_ln_kernel(%arg0: i32, %arg1: memref<32x32xbf16, #tpu.memory_space<vmem>>, %arg2: memref<1x32xf32, #tpu.memory_space<vmem>>, %arg3: memref<1x32xf32, #tpu.memory_space<vmem>>, %arg4: memref<32x32xbf16, #tpu.memory_space<vmem>>) attributes {dimension_semantics = [#tpu.dimension_semantics<parallel>], iteration_bounds = array<i64: 1>, scalar_prefetch = 0 : i64, scratch_operands = 0 : i64, tpu.core_type = #tpu.core_type<tc>, window_params = [{transform_indices = @transform_0, window_bounds = array<i64: 32, 32>}, {pipeline_mode = #tpu.pipeline_mode<synchronous>, transform_indices = @transform_1, window_bounds = array<i64: 1, 32>}, {pipeline_mode = #tpu.pipeline_mode<synchronous>, transform_indices = @transform_2, window_bounds = array<i64: 1, 32>}, {transform_indices = @transform_3, window_bounds = array<i64: 32, 32>}]} {
    %c0 = arith.constant 0 : index
    %c0_0 = arith.constant 0 : index
    %0 = vector.load %arg1[%c0, %c0_0] : memref<32x32xbf16, #tpu.memory_space<vmem>>, vector<32x32xbf16>
    %1 = arith.extf %0 : vector<32x32xbf16> to vector<32x32xf32>
    %cst = arith.constant dense<0.000000e+00> : vector<32xf32>
    %2 = vector.multi_reduction <add>, %1, %cst [1] : vector<32x32xf32> to vector<32xf32>
    %3 = vector.shape_cast %2 : vector<32xf32> to vector<32x1xf32>
    %cst_1 = arith.constant 3.200000e+01 : f32
    %4 = vector.broadcast %cst_1 : f32 to vector<32x1xf32>
    %5 = arith.divf %3, %4 : vector<32x1xf32>
    %6 = vector.broadcast %5 : vector<32x1xf32> to vector<32x32xf32>
    %7 = arith.subf %1, %6 : vector<32x32xf32>
    %8 = arith.mulf %7, %7 : vector<32x32xf32>
    %cst_2 = arith.constant dense<0.000000e+00> : vector<32xf32>
    %9 = vector.multi_reduction <add>, %8, %cst_2 [1] : vector<32x32xf32> to vector<32xf32>
    %10 = vector.shape_cast %9 : vector<32xf32> to vector<32x1xf32>
    %cst_3 = arith.constant 3.200000e+01 : f32
    %11 = vector.broadcast %cst_3 : f32 to vector<32x1xf32>
    %12 = arith.divf %10, %11 : vector<32x1xf32>
    %13 = vector.broadcast %5 : vector<32x1xf32> to vector<32x32xf32>
    %14 = arith.subf %1, %13 : vector<32x32xf32>
    %cst_4 = arith.constant 9.99999974E-6 : f32
    %15 = vector.broadcast %cst_4 : f32 to vector<32x1xf32>
    %16 = arith.addf %12, %15 : vector<32x1xf32>
    %17 = math.rsqrt %16 : vector<32x1xf32>
    %18 = vector.broadcast %17 : vector<32x1xf32> to vector<32x32xf32>
    %19 = arith.mulf %14, %18 : vector<32x32xf32>
    %c0_5 = arith.constant 0 : index
    %c0_6 = arith.constant 0 : index
    %20 = vector.load %arg2[%c0_5, %c0_6] : memref<1x32xf32, #tpu.memory_space<vmem>>, vector<1x32xf32>
    %21 = vector.broadcast %20 : vector<1x32xf32> to vector<32x32xf32>
    %22 = arith.mulf %19, %21 : vector<32x32xf32>
    %c0_7 = arith.constant 0 : index
    %c0_8 = arith.constant 0 : index
    %23 = vector.load %arg3[%c0_7, %c0_8] : memref<1x32xf32, #tpu.memory_space<vmem>>, vector<1x32xf32>
    %24 = vector.broadcast %23 : vector<1x32xf32> to vector<32x32xf32>
    %25 = arith.addf %22, %24 : vector<32x32xf32>
    %26 = arith.truncf %25 : vector<32x32xf32> to vector<32x32xbf16>
    %c0_9 = arith.constant 0 : index
    %c0_10 = arith.constant 0 : index
    %27 = vector.load %arg4[%c0_9, %c0_10] : memref<32x32xbf16, #tpu.memory_space<vmem>>, vector<32x32xbf16>
    tpu.vector_store %arg4[%c0_9, %c0_10], %26 {strides = array<i32>} : memref<32x32xbf16, #tpu.memory_space<vmem>>, vector<32x32xbf16>,
    return
  }
  func.func @transform_0(%arg0: i32) -> (i32, i32) {
    %c0_i32 = arith.constant 0 : i32
    %c0_i32_0 = arith.constant 0 : i32
    return %arg0, %c0_i32 : i32, i32
  }
  func.func @transform_1(%arg0: i32) -> (i32, i32) {
    %c0_i32 = arith.constant 0 : i32
    %c0_i32_0 = arith.constant 0 : i32
    %c0_i32_1 = arith.constant 0 : i32
    return %c0_i32, %c0_i32_0 : i32, i32
  }
  func.func @transform_2(%arg0: i32) -> (i32, i32) {
    %c0_i32 = arith.constant 0 : i32
    %c0_i32_0 = arith.constant 0 : i32
    %c0_i32_1 = arith.constant 0 : i32
    return %c0_i32, %c0_i32_0 : i32, i32
  }
  func.func @transform_3(%arg0: i32) -> (i32, i32) {
    %c0_i32 = arith.constant 0 : i32
    %c0_i32_0 = arith.constant 0 : i32
    return %arg0, %c0_i32 : i32, i32
  }
}

module attributes {stable_mosaic.version = 11 : i64} {
  func.func @_linear_kernel(%arg0: i32, %arg1: i32, %arg2: i32, %arg3: memref<32x32xbf16, #tpu.memory_space<vmem>>, %arg4: memref<32x32xbf16, #tpu.memory_space<vmem>>, %arg5: memref<1x32xf32, #tpu.memory_space<vmem>>, %arg6: memref<32x32xbf16, #tpu.memory_space<vmem>>, %arg7: memref<32x32xf32, #tpu.memory_space<vmem>>) attributes {dimension_semantics = [#tpu.dimension_semantics<parallel>, #tpu.dimension_semantics<parallel>, #tpu.dimension_semantics<arbitrary>], iteration_bounds = array<i64: 1, 1, 1>, scalar_prefetch = 0 : i64, scratch_operands = 1 : i64, tpu.core_type = #tpu.core_type<tc>, window_params = [{transform_indices = @transform_0, window_bounds = array<i64: 32, 32>}, {transform_indices = @transform_1, window_bounds = array<i64: 32, 32>}, {transform_indices = @transform_2, window_bounds = array<i64: 1, 32>}, {transform_indices = @transform_3, window_bounds = array<i64: 32, 32>}]} {
    %c0_i32 = arith.constant 0 : i32
    %0 = arith.cmpi eq, %arg2, %c0_i32 : i32
    %1 = arith.extui %0 : i1 to i32
    %c0_i32_0 = arith.constant 0 : i32
    %2 = arith.cmpi ne, %1, %c0_i32_0 : i32
    scf.if %2 {
      %cst_10 = arith.constant 0.000000e+00 : f32
      %12 = vector.broadcast %cst_10 : f32 to vector<32x32xf32>
      %c0_11 = arith.constant 0 : index
      %c0_12 = arith.constant 0 : index
      %13 = vector.load %arg7[%c0_11, %c0_12] : memref<32x32xf32, #tpu.memory_space<vmem>>, vector<32x32xf32>
      tpu.vector_store %arg7[%c0_11, %c0_12], %12 {strides = array<i32>} : memref<32x32xf32, #tpu.memory_space<vmem>>, vector<32x32xf32>,
    } else {
    }
    %c0 = arith.constant 0 : index
    %c0_1 = arith.constant 0 : index
    %3 = vector.load %arg7[%c0, %c0_1] : memref<32x32xf32, #tpu.memory_space<vmem>>, vector<32x32xf32>
    %c0_2 = arith.constant 0 : index
    %c0_3 = arith.constant 0 : index
    %4 = vector.load %arg3[%c0_2, %c0_3] : memref<32x32xbf16, #tpu.memory_space<vmem>>, vector<32x32xbf16>
    %c0_4 = arith.constant 0 : index
    %c0_5 = arith.constant 0 : index
    %5 = vector.load %arg4[%c0_4, %c0_5] : memref<32x32xbf16, #tpu.memory_space<vmem>>, vector<32x32xbf16>
    %cst = arith.constant dense<0.000000e+00> : vector<32x32xf32>
    %6 = tpu.matmul %4, %5, %cst {dimension_numbers = #tpu.dot_dimension_numbers<[1], [0], [0], [1], [0, 0, 1, 1], [], []>} : vector<32x32xbf16>, vector<32x32xbf16>, vector<32x32xf32> -> vector<32x32xf32>
    %7 = arith.addf %3, %6 : vector<32x32xf32>
    %c0_6 = arith.constant 0 : index
    %c0_7 = arith.constant 0 : index
    %8 = vector.load %arg7[%c0_6, %c0_7] : memref<32x32xf32, #tpu.memory_space<vmem>>, vector<32x32xf32>
    tpu.vector_store %arg7[%c0_6, %c0_7], %7 {strides = array<i32>} : memref<32x32xf32, #tpu.memory_space<vmem>>, vector<32x32xf32>,
    %c0_i32_8 = arith.constant 0 : i32
    %9 = arith.cmpi eq, %arg2, %c0_i32_8 : i32
    %10 = arith.extui %9 : i1 to i32
    %c0_i32_9 = arith.constant 0 : i32
    %11 = arith.cmpi ne, %10, %c0_i32_9 : i32
    scf.if %11 {
      %c0_10 = arith.constant 0 : index
      %c0_11 = arith.constant 0 : index
      %12 = vector.load %arg7[%c0_10, %c0_11] : memref<32x32xf32, #tpu.memory_space<vmem>>, vector<32x32xf32>
      %c0_12 = arith.constant 0 : index
      %c0_13 = arith.constant 0 : index
      %13 = vector.load %arg5[%c0_12, %c0_13] : memref<1x32xf32, #tpu.memory_space<vmem>>, vector<1x32xf32>
      %14 = vector.broadcast %13 : vector<1x32xf32> to vector<32x32xf32>
      %15 = arith.addf %12, %14 : vector<32x32xf32>
      %16 = arith.truncf %15 : vector<32x32xf32> to vector<32x32xbf16>
      %c0_14 = arith.constant 0 : index
      %c0_15 = arith.constant 0 : index
      %17 = vector.load %arg6[%c0_14, %c0_15] : memref<32x32xbf16, #tpu.memory_space<vmem>>, vector<32x32xbf16>
      tpu.vector_store %arg6[%c0_14, %c0_15], %16 {strides = array<i32>} : memref<32x32xbf16, #tpu.memory_space<vmem>>, vector<32x32xbf16>,
    } else {
    }
    return
  }
  func.func @transform_0(%arg0: i32, %arg1: i32, %arg2: i32) -> (i32, i32) {
    %c0_i32 = arith.constant 0 : i32
    return %arg0, %arg2 : i32, i32
  }
  func.func @transform_1(%arg0: i32, %arg1: i32, %arg2: i32) -> (i32, i32) {
    %c0_i32 = arith.constant 0 : i32
    return %arg2, %arg1 : i32, i32
  }
  func.func @transform_2(%arg0: i32, %arg1: i32, %arg2: i32) -> (i32, i32) {
    %c0_i32 = arith.constant 0 : i32
    %c0_i32_0 = arith.constant 0 : i32
    return %c0_i32, %arg1 : i32, i32
  }
  func.func @transform_3(%arg0: i32, %arg1: i32, %arg2: i32) -> (i32, i32) {
    %c0_i32 = arith.constant 0 : i32
    return %arg0, %arg1 : i32, i32
  }
}

module attributes {stable_mosaic.version = 11 : i64} {
  func.func @_cross_attn_kernel(%arg0: i32, %arg1: memref<1x16x32xbf16, #tpu.memory_space<vmem>>, %arg2: memref<1x8x64xbf16, #tpu.memory_space<vmem>>, %arg3: memref<1x16x32xbf16, #tpu.memory_space<vmem>>) attributes {dimension_semantics = [#tpu.dimension_semantics<parallel>], iteration_bounds = array<i64: 2>, scalar_prefetch = 0 : i64, scratch_operands = 0 : i64, tpu.core_type = #tpu.core_type<tc>, window_params = [{transform_indices = @transform_0, window_bounds = array<i64: 1, 16, 32>}, {transform_indices = @transform_1, window_bounds = array<i64: 1, 8, 64>}, {transform_indices = @transform_2, window_bounds = array<i64: 1, 16, 32>}]} {
    %c0 = arith.constant 0 : index
    %c0_0 = arith.constant 0 : index
    %c0_1 = arith.constant 0 : index
    %0 = vector.load %arg1[%c0, %c0_0, %c0_1] : memref<1x16x32xbf16, #tpu.memory_space<vmem>>, vector<1x16x8xbf16>
    %1 = vector.shape_cast %0 : vector<1x16x8xbf16> to vector<16x8xbf16>
    %c0_2 = arith.constant 0 : index
    %c0_3 = arith.constant 0 : index
    %c0_4 = arith.constant 0 : index
    %2 = vector.load %arg2[%c0_2, %c0_3, %c0_4] : memref<1x8x64xbf16, #tpu.memory_space<vmem>>, vector<1x8x8xbf16>
    %3 = vector.shape_cast %2 : vector<1x8x8xbf16> to vector<8x8xbf16>
    %c0_5 = arith.constant 0 : index
    %c0_6 = arith.constant 0 : index
    %c32 = arith.constant 32 : index
    %4 = vector.load %arg2[%c0_5, %c0_6, %c32] : memref<1x8x64xbf16, #tpu.memory_space<vmem>>, vector<1x8x8xbf16>
    %5 = vector.shape_cast %4 : vector<1x8x8xbf16> to vector<8x8xbf16>
    %cst = arith.constant dense<0.000000e+00> : vector<16x8xf32>
    %6 = tpu.matmul %1, %3, %cst {dimension_numbers = #tpu.dot_dimension_numbers<[1], [1], [0], [0], [0, 0, 1, 0], [], []>} : vector<16x8xbf16>, vector<8x8xbf16>, vector<16x8xf32> -> vector<16x8xf32>
    %cst_7 = arith.constant 0.353553385 : f32
    %7 = vector.broadcast %cst_7 : f32 to vector<16x8xf32>
    %8 = arith.mulf %6, %7 : vector<16x8xf32>
    %cst_8 = arith.constant dense<0xFF800000> : vector<16xf32>
    %9 = vector.multi_reduction <maximumf>, %8, %cst_8 [1] : vector<16x8xf32> to vector<16xf32>
    %10 = vector.shape_cast %9 : vector<16xf32> to vector<16x1xf32>
    %11 = vector.broadcast %10 : vector<16x1xf32> to vector<16x8xf32>
    %12 = arith.subf %8, %11 : vector<16x8xf32>
    %13 = math.exp %12 : vector<16x8xf32>
    %cst_9 = arith.constant dense<0.000000e+00> : vector<16xf32>
    %14 = vector.multi_reduction <add>, %13, %cst_9 [1] : vector<16x8xf32> to vector<16xf32>
    %15 = vector.shape_cast %14 : vector<16xf32> to vector<16x1xf32>
    %16 = tpu.reciprocal %15 {approx = true} : vector<16x1xf32> -> vector<16x1xf32>
    %17 = vector.broadcast %16 : vector<16x1xf32> to vector<16x8xf32>
    %18 = arith.mulf %13, %17 : vector<16x8xf32>
    %19 = arith.truncf %18 : vector<16x8xf32> to vector<16x8xbf16>
    %cst_10 = arith.constant dense<0.000000e+00> : vector<16x8xf32>
    %20 = tpu.matmul %19, %5, %cst_10 {dimension_numbers = #tpu.dot_dimension_numbers<[1], [0], [0], [1], [0, 0, 1, 1], [], []>} : vector<16x8xbf16>, vector<8x8xbf16>, vector<16x8xf32> -> vector<16x8xf32>
    %21 = arith.truncf %20 : vector<16x8xf32> to vector<16x8xbf16>
    %c0_11 = arith.constant 0 : index
    %c0_12 = arith.constant 0 : index
    %c0_13 = arith.constant 0 : index
    %22 = vector.load %arg3[%c0_11, %c0_12, %c0_13] : memref<1x16x32xbf16, #tpu.memory_space<vmem>>, vector<1x16x8xbf16>
    %23 = vector.shape_cast %22 : vector<1x16x8xbf16> to vector<16x8xbf16>
    %24 = vector.shape_cast %21 : vector<16x8xbf16> to vector<1x16x8xbf16>
    tpu.vector_store %arg3[%c0_11, %c0_12, %c0_13], %24 {strides = array<i32>} : memref<1x16x32xbf16, #tpu.memory_space<vmem>>, vector<1x16x8xbf16>,
    %c0_14 = arith.constant 0 : index
    %c0_15 = arith.constant 0 : index
    %c8 = arith.constant 8 : index
    %25 = vector.load %arg1[%c0_14, %c0_15, %c8] : memref<1x16x32xbf16, #tpu.memory_space<vmem>>, vector<1x16x8xbf16>
    %26 = vector.shape_cast %25 : vector<1x16x8xbf16> to vector<16x8xbf16>
    %c0_16 = arith.constant 0 : index
    %c0_17 = arith.constant 0 : index
    %c8_18 = arith.constant 8 : index
    %27 = vector.load %arg2[%c0_16, %c0_17, %c8_18] : memref<1x8x64xbf16, #tpu.memory_space<vmem>>, vector<1x8x8xbf16>
    %28 = vector.shape_cast %27 : vector<1x8x8xbf16> to vector<8x8xbf16>
    %c0_19 = arith.constant 0 : index
    %c0_20 = arith.constant 0 : index
    %c40 = arith.constant 40 : index
    %29 = vector.load %arg2[%c0_19, %c0_20, %c40] : memref<1x8x64xbf16, #tpu.memory_space<vmem>>, vector<1x8x8xbf16>
    %30 = vector.shape_cast %29 : vector<1x8x8xbf16> to vector<8x8xbf16>
    %cst_21 = arith.constant dense<0.000000e+00> : vector<16x8xf32>
    %31 = tpu.matmul %26, %28, %cst_21 {dimension_numbers = #tpu.dot_dimension_numbers<[1], [1], [0], [0], [0, 0, 1, 0], [], []>} : vector<16x8xbf16>, vector<8x8xbf16>, vector<16x8xf32> -> vector<16x8xf32>
    %cst_22 = arith.constant 0.353553385 : f32
    %32 = vector.broadcast %cst_22 : f32 to vector<16x8xf32>
    %33 = arith.mulf %31, %32 : vector<16x8xf32>
    %cst_23 = arith.constant dense<0xFF800000> : vector<16xf32>
    %34 = vector.multi_reduction <maximumf>, %33, %cst_23 [1] : vector<16x8xf32> to vector<16xf32>
    %35 = vector.shape_cast %34 : vector<16xf32> to vector<16x1xf32>
    %36 = vector.broadcast %35 : vector<16x1xf32> to vector<16x8xf32>
    %37 = arith.subf %33, %36 : vector<16x8xf32>
    %38 = math.exp %37 : vector<16x8xf32>
    %cst_24 = arith.constant dense<0.000000e+00> : vector<16xf32>
    %39 = vector.multi_reduction <add>, %38, %cst_24 [1] : vector<16x8xf32> to vector<16xf32>
    %40 = vector.shape_cast %39 : vector<16xf32> to vector<16x1xf32>
    %41 = tpu.reciprocal %40 {approx = true} : vector<16x1xf32> -> vector<16x1xf32>
    %42 = vector.broadcast %41 : vector<16x1xf32> to vector<16x8xf32>
    %43 = arith.mulf %38, %42 : vector<16x8xf32>
    %44 = arith.truncf %43 : vector<16x8xf32> to vector<16x8xbf16>
    %cst_25 = arith.constant dense<0.000000e+00> : vector<16x8xf32>
    %45 = tpu.matmul %44, %30, %cst_25 {dimension_numbers = #tpu.dot_dimension_numbers<[1], [0], [0], [1], [0, 0, 1, 1], [], []>} : vector<16x8xbf16>, vector<8x8xbf16>, vector<16x8xf32> -> vector<16x8xf32>
    %46 = arith.truncf %45 : vector<16x8xf32> to vector<16x8xbf16>
    %c0_26 = arith.constant 0 : index
    %c0_27 = arith.constant 0 : index
    %c8_28 = arith.constant 8 : index
    %47 = vector.load %arg3[%c0_26, %c0_27, %c8_28] : memref<1x16x32xbf16, #tpu.memory_space<vmem>>, vector<1x16x8xbf16>
    %48 = vector.shape_cast %47 : vector<1x16x8xbf16> to vector<16x8xbf16>
    %49 = vector.shape_cast %46 : vector<16x8xbf16> to vector<1x16x8xbf16>
    tpu.vector_store %arg3[%c0_26, %c0_27, %c8_28], %49 {strides = array<i32>} : memref<1x16x32xbf16, #tpu.memory_space<vmem>>, vector<1x16x8xbf16>,
    %c0_29 = arith.constant 0 : index
    %c0_30 = arith.constant 0 : index
    %c16 = arith.constant 16 : index
    %50 = vector.load %arg1[%c0_29, %c0_30, %c16] : memref<1x16x32xbf16, #tpu.memory_space<vmem>>, vector<1x16x8xbf16>
    %51 = vector.shape_cast %50 : vector<1x16x8xbf16> to vector<16x8xbf16>
    %c0_31 = arith.constant 0 : index
    %c0_32 = arith.constant 0 : index
    %c16_33 = arith.constant 16 : index
    %52 = vector.load %arg2[%c0_31, %c0_32, %c16_33] : memref<1x8x64xbf16, #tpu.memory_space<vmem>>, vector<1x8x8xbf16>
    %53 = vector.shape_cast %52 : vector<1x8x8xbf16> to vector<8x8xbf16>
    %c0_34 = arith.constant 0 : index
    %c0_35 = arith.constant 0 : index
    %c48 = arith.constant 48 : index
    %54 = vector.load %arg2[%c0_34, %c0_35, %c48] : memref<1x8x64xbf16, #tpu.memory_space<vmem>>, vector<1x8x8xbf16>
    %55 = vector.shape_cast %54 : vector<1x8x8xbf16> to vector<8x8xbf16>
    %cst_36 = arith.constant dense<0.000000e+00> : vector<16x8xf32>
    %56 = tpu.matmul %51, %53, %cst_36 {dimension_numbers = #tpu.dot_dimension_numbers<[1], [1], [0], [0], [0, 0, 1, 0], [], []>} : vector<16x8xbf16>, vector<8x8xbf16>, vector<16x8xf32> -> vector<16x8xf32>
    %cst_37 = arith.constant 0.353553385 : f32
    %57 = vector.broadcast %cst_37 : f32 to vector<16x8xf32>
    %58 = arith.mulf %56, %57 : vector<16x8xf32>
    %cst_38 = arith.constant dense<0xFF800000> : vector<16xf32>
    %59 = vector.multi_reduction <maximumf>, %58, %cst_38 [1] : vector<16x8xf32> to vector<16xf32>
    %60 = vector.shape_cast %59 : vector<16xf32> to vector<16x1xf32>
    %61 = vector.broadcast %60 : vector<16x1xf32> to vector<16x8xf32>
    %62 = arith.subf %58, %61 : vector<16x8xf32>
    %63 = math.exp %62 : vector<16x8xf32>
    %cst_39 = arith.constant dense<0.000000e+00> : vector<16xf32>
    %64 = vector.multi_reduction <add>, %63, %cst_39 [1] : vector<16x8xf32> to vector<16xf32>
    %65 = vector.shape_cast %64 : vector<16xf32> to vector<16x1xf32>
    %66 = tpu.reciprocal %65 {approx = true} : vector<16x1xf32> -> vector<16x1xf32>
    %67 = vector.broadcast %66 : vector<16x1xf32> to vector<16x8xf32>
    %68 = arith.mulf %63, %67 : vector<16x8xf32>
    %69 = arith.truncf %68 : vector<16x8xf32> to vector<16x8xbf16>
    %cst_40 = arith.constant dense<0.000000e+00> : vector<16x8xf32>
    %70 = tpu.matmul %69, %55, %cst_40 {dimension_numbers = #tpu.dot_dimension_numbers<[1], [0], [0], [1], [0, 0, 1, 1], [], []>} : vector<16x8xbf16>, vector<8x8xbf16>, vector<16x8xf32> -> vector<16x8xf32>
    %71 = arith.truncf %70 : vector<16x8xf32> to vector<16x8xbf16>
    %c0_41 = arith.constant 0 : index
    %c0_42 = arith.constant 0 : index
    %c16_43 = arith.constant 16 : index
    %72 = vector.load %arg3[%c0_41, %c0_42, %c16_43] : memref<1x16x32xbf16, #tpu.memory_space<vmem>>, vector<1x16x8xbf16>
    %73 = vector.shape_cast %72 : vector<1x16x8xbf16> to vector<16x8xbf16>
    %74 = vector.shape_cast %71 : vector<16x8xbf16> to vector<1x16x8xbf16>
    tpu.vector_store %arg3[%c0_41, %c0_42, %c16_43], %74 {strides = array<i32>} : memref<1x16x32xbf16, #tpu.memory_space<vmem>>, vector<1x16x8xbf16>,
    %c0_44 = arith.constant 0 : index
    %c0_45 = arith.constant 0 : index
    %c24 = arith.constant 24 : index
    %75 = vector.load %arg1[%c0_44, %c0_45, %c24] : memref<1x16x32xbf16, #tpu.memory_space<vmem>>, vector<1x16x8xbf16>
    %76 = vector.shape_cast %75 : vector<1x16x8xbf16> to vector<16x8xbf16>
    %c0_46 = arith.constant 0 : index
    %c0_47 = arith.constant 0 : index
    %c24_48 = arith.constant 24 : index
    %77 = vector.load %arg2[%c0_46, %c0_47, %c24_48] : memref<1x8x64xbf16, #tpu.memory_space<vmem>>, vector<1x8x8xbf16>
    %78 = vector.shape_cast %77 : vector<1x8x8xbf16> to vector<8x8xbf16>
    %c0_49 = arith.constant 0 : index
    %c0_50 = arith.constant 0 : index
    %c56 = arith.constant 56 : index
    %79 = vector.load %arg2[%c0_49, %c0_50, %c56] : memref<1x8x64xbf16, #tpu.memory_space<vmem>>, vector<1x8x8xbf16>
    %80 = vector.shape_cast %79 : vector<1x8x8xbf16> to vector<8x8xbf16>
    %cst_51 = arith.constant dense<0.000000e+00> : vector<16x8xf32>
    %81 = tpu.matmul %76, %78, %cst_51 {dimension_numbers = #tpu.dot_dimension_numbers<[1], [1], [0], [0], [0, 0, 1, 0], [], []>} : vector<16x8xbf16>, vector<8x8xbf16>, vector<16x8xf32> -> vector<16x8xf32>
    %cst_52 = arith.constant 0.353553385 : f32
    %82 = vector.broadcast %cst_52 : f32 to vector<16x8xf32>
    %83 = arith.mulf %81, %82 : vector<16x8xf32>
    %cst_53 = arith.constant dense<0xFF800000> : vector<16xf32>
    %84 = vector.multi_reduction <maximumf>, %83, %cst_53 [1] : vector<16x8xf32> to vector<16xf32>
    %85 = vector.shape_cast %84 : vector<16xf32> to vector<16x1xf32>
    %86 = vector.broadcast %85 : vector<16x1xf32> to vector<16x8xf32>
    %87 = arith.subf %83, %86 : vector<16x8xf32>
    %88 = math.exp %87 : vector<16x8xf32>
    %cst_54 = arith.constant dense<0.000000e+00> : vector<16xf32>
    %89 = vector.multi_reduction <add>, %88, %cst_54 [1] : vector<16x8xf32> to vector<16xf32>
    %90 = vector.shape_cast %89 : vector<16xf32> to vector<16x1xf32>
    %91 = tpu.reciprocal %90 {approx = true} : vector<16x1xf32> -> vector<16x1xf32>
    %92 = vector.broadcast %91 : vector<16x1xf32> to vector<16x8xf32>
    %93 = arith.mulf %88, %92 : vector<16x8xf32>
    %94 = arith.truncf %93 : vector<16x8xf32> to vector<16x8xbf16>
    %cst_55 = arith.constant dense<0.000000e+00> : vector<16x8xf32>
    %95 = tpu.matmul %94, %80, %cst_55 {dimension_numbers = #tpu.dot_dimension_numbers<[1], [0], [0], [1], [0, 0, 1, 1], [], []>} : vector<16x8xbf16>, vector<8x8xbf16>, vector<16x8xf32> -> vector<16x8xf32>
    %96 = arith.truncf %95 : vector<16x8xf32> to vector<16x8xbf16>
    %c0_56 = arith.constant 0 : index
    %c0_57 = arith.constant 0 : index
    %c24_58 = arith.constant 24 : index
    %97 = vector.load %arg3[%c0_56, %c0_57, %c24_58] : memref<1x16x32xbf16, #tpu.memory_space<vmem>>, vector<1x16x8xbf16>
    %98 = vector.shape_cast %97 : vector<1x16x8xbf16> to vector<16x8xbf16>
    %99 = vector.shape_cast %96 : vector<16x8xbf16> to vector<1x16x8xbf16>
    tpu.vector_store %arg3[%c0_56, %c0_57, %c24_58], %99 {strides = array<i32>} : memref<1x16x32xbf16, #tpu.memory_space<vmem>>, vector<1x16x8xbf16>,
    return
  }
  func.func @transform_0(%arg0: i32) -> (i32, i32, i32) {
    %c0_i32 = arith.constant 0 : i32
    %c0_i32_0 = arith.constant 0 : i32
    %c0_i32_1 = arith.constant 0 : i32
    return %arg0, %c0_i32, %c0_i32_0 : i32, i32, i32
  }
  func.func @transform_1(%arg0: i32) -> (i32, i32, i32) {
    %c0_i32 = arith.constant 0 : i32
    %c0_i32_0 = arith.constant 0 : i32
    %c0_i32_1 = arith.constant 0 : i32
    return %arg0, %c0_i32, %c0_i32_0 : i32, i32, i32
  }
  func.func @transform_2(%arg0: i32) -> (i32, i32, i32) {
    %c0_i32 = arith.constant 0 : i32
    %c0_i32_0 = arith.constant 0 : i32
    %c0_i32_1 = arith.constant 0 : i32
    return %arg0, %c0_i32, %c0_i32_0 : i32, i32, i32
  }
}

module attributes {stable_mosaic.version = 11 : i64} {
  func.func @_linear_kernel(%arg0: i32, %arg1: i32, %arg2: i32, %arg3: memref<32x32xbf16, #tpu.memory_space<vmem>>, %arg4: memref<32x4xbf16, #tpu.memory_space<vmem>>, %arg5: memref<1x4xf32, #tpu.memory_space<vmem>>, %arg6: memref<32x4xf32, #tpu.memory_space<vmem>>, %arg7: memref<32x4xf32, #tpu.memory_space<vmem>>) attributes {dimension_semantics = [#tpu.dimension_semantics<parallel>, #tpu.dimension_semantics<parallel>, #tpu.dimension_semantics<arbitrary>], iteration_bounds = array<i64: 1, 1, 1>, scalar_prefetch = 0 : i64, scratch_operands = 1 : i64, tpu.core_type = #tpu.core_type<tc>, window_params = [{transform_indices = @transform_0, window_bounds = array<i64: 32, 32>}, {transform_indices = @transform_1, window_bounds = array<i64: 32, 4>}, {transform_indices = @transform_2, window_bounds = array<i64: 1, 4>}, {transform_indices = @transform_3, window_bounds = array<i64: 32, 4>}]} {
    %c0_i32 = arith.constant 0 : i32
    %0 = arith.cmpi eq, %arg2, %c0_i32 : i32
    %1 = arith.extui %0 : i1 to i32
    %c0_i32_0 = arith.constant 0 : i32
    %2 = arith.cmpi ne, %1, %c0_i32_0 : i32
    scf.if %2 {
      %cst_10 = arith.constant 0.000000e+00 : f32
      %12 = vector.broadcast %cst_10 : f32 to vector<32x4xf32>
      %c0_11 = arith.constant 0 : index
      %c0_12 = arith.constant 0 : index
      %13 = vector.load %arg7[%c0_11, %c0_12] : memref<32x4xf32, #tpu.memory_space<vmem>>, vector<32x4xf32>
      tpu.vector_store %arg7[%c0_11, %c0_12], %12 {strides = array<i32>} : memref<32x4xf32, #tpu.memory_space<vmem>>, vector<32x4xf32>,
    } else {
    }
    %c0 = arith.constant 0 : index
    %c0_1 = arith.constant 0 : index
    %3 = vector.load %arg7[%c0, %c0_1] : memref<32x4xf32, #tpu.memory_space<vmem>>, vector<32x4xf32>
    %c0_2 = arith.constant 0 : index
    %c0_3 = arith.constant 0 : index
    %4 = vector.load %arg3[%c0_2, %c0_3] : memref<32x32xbf16, #tpu.memory_space<vmem>>, vector<32x32xbf16>
    %c0_4 = arith.constant 0 : index
    %c0_5 = arith.constant 0 : index
    %5 = vector.load %arg4[%c0_4, %c0_5] : memref<32x4xbf16, #tpu.memory_space<vmem>>, vector<32x4xbf16>
    %cst = arith.constant dense<0.000000e+00> : vector<32x4xf32>
    %6 = tpu.matmul %4, %5, %cst {dimension_numbers = #tpu.dot_dimension_numbers<[1], [0], [0], [1], [0, 0, 1, 1], [], []>} : vector<32x32xbf16>, vector<32x4xbf16>, vector<32x4xf32> -> vector<32x4xf32>
    %7 = arith.addf %3, %6 : vector<32x4xf32>
    %c0_6 = arith.constant 0 : index
    %c0_7 = arith.constant 0 : index
    %8 = vector.load %arg7[%c0_6, %c0_7] : memref<32x4xf32, #tpu.memory_space<vmem>>, vector<32x4xf32>
    tpu.vector_store %arg7[%c0_6, %c0_7], %7 {strides = array<i32>} : memref<32x4xf32, #tpu.memory_space<vmem>>, vector<32x4xf32>,
    %c0_i32_8 = arith.constant 0 : i32
    %9 = arith.cmpi eq, %arg2, %c0_i32_8 : i32
    %10 = arith.extui %9 : i1 to i32
    %c0_i32_9 = arith.constant 0 : i32
    %11 = arith.cmpi ne, %10, %c0_i32_9 : i32
    scf.if %11 {
      %c0_10 = arith.constant 0 : index
      %c0_11 = arith.constant 0 : index
      %12 = vector.load %arg7[%c0_10, %c0_11] : memref<32x4xf32, #tpu.memory_space<vmem>>, vector<32x4xf32>
      %c0_12 = arith.constant 0 : index
      %c0_13 = arith.constant 0 : index
      %13 = vector.load %arg5[%c0_12, %c0_13] : memref<1x4xf32, #tpu.memory_space<vmem>>, vector<1x4xf32>
      %14 = vector.broadcast %13 : vector<1x4xf32> to vector<32x4xf32>
      %15 = arith.addf %12, %14 : vector<32x4xf32>
      %c0_14 = arith.constant 0 : index
      %c0_15 = arith.constant 0 : index
      %16 = vector.load %arg6[%c0_14, %c0_15] : memref<32x4xf32, #tpu.memory_space<vmem>>, vector<32x4xf32>
      tpu.vector_store %arg6[%c0_14, %c0_15], %15 {strides = array<i32>} : memref<32x4xf32, #tpu.memory_space<vmem>>, vector<32x4xf32>,
    } else {
    }
    return
  }
  func.func @transform_0(%arg0: i32, %arg1: i32, %arg2: i32) -> (i32, i32) {
    %c0_i32 = arith.constant 0 : i32
    return %arg0, %arg2 : i32, i32
  }
  func.func @transform_1(%arg0: i32, %arg1: i32, %arg2: i32) -> (i32, i32) {
    %c0_i32 = arith.constant 0 : i32
    return %arg2, %arg1 : i32, i32
  }
  func.func @transform_2(%arg0: i32, %arg1: i32, %arg2: i32) -> (i32, i32) {
    %c0_i32 = arith.constant 0 : i32
    %c0_i32_0 = arith.constant 0 : i32
    return %c0_i32, %arg1 : i32, i32
  }
  func.func @transform_3(%arg0: i32, %arg1: i32, %arg2: i32) -> (i32, i32) {
    %c0_i32 = arith.constant 0 : i32
    return %arg0, %arg1 : i32, i32
  }
}

</mosaic_0001>

<llo_original>
// kernel: teinformer_forward.35
$region0: #{teinformer_forward.35}
  #allocation0 [shape = 'u32[]', space=smem, size = 0x4, offset = 0x4, fixed_abs, tag = 'smem constant byte address 0x4 - core index']
  #allocation1 [shape = 'u32[144,128]{1,0:T(1,128)}', space=vmem, size = 0x12000, scoped, tag = 'internal scratch']
  #allocation2 [shape = 'f32[32,32]{1,0:T(8,128)}', space=vmem, size = 0x4000, scoped, tag = 'scratch operand']
  %s0 = inlined_call_operand.vmem [shape: f32[32,12], index: 0, kind: input, shape index: {}]
  %s1 = inlined_call_operand.vmem [shape: bf16[12,32], index: 1, kind: input, shape index: {}]
  %s2 = inlined_call_operand.vmem [shape: f32[32,32], index: 2, kind: input, shape index: {}]
  %s3 = inlined_call_operand.vmem [shape: bf16[32,32], index: 3, kind: output, shape index: {}]
  %s4 = sld [smem:[#allocation0]]
  $region30: #{teinformer_forward.35} parent=0
    _
  %s6 = ssub.s32 1, %s4
  %s7 = scalar_select 0, %s6, %s4
  // Predicated region
  $region2: #{teinformer_forward.35} parent=0 // pred_check
    _
  $region3: #{teinformer_forward.35} parent=0 // pred_check_branch
    %9 = sbr.rel (0) target = $region5
  $region4: #{teinformer_forward.35} parent=0 // pred_region
    _
  $region5: #{teinformer_forward.35} parent=0 // pred_fallthru
    _
  // Predicated region
  $region6: #{teinformer_forward.35} parent=0 // pred_check
    _
  $region7: #{teinformer_forward.35} parent=0 // pred_check_branch
    %11 = sbr.rel (0) target = $region9
  $region8: #{teinformer_forward.35} parent=0 // pred_region
    _
  $region9: #{teinformer_forward.35} parent=0 // pred_fallthru
    _
  // Predicated region
  $region10: #{teinformer_forward.35} parent=0 // pred_check
    _
  $region11: #{teinformer_forward.35} parent=0 // pred_check_branch
    %13 = sbr.rel (0) target = $region13
  $region12: #{teinformer_forward.35} parent=0 // pred_region
    _
  $region13: #{teinformer_forward.35} parent=0 // pred_fallthru
    _
  %p15 = scmp.eq.s32.totalorder 0, 0
  // Predicated region
  $region14: #{teinformer_forward.35} parent=0 // pred_check
    %p16 = pneg %p15
  $region15: #{teinformer_forward.35} parent=0 // pred_check_branch
    %18 = sbr.rel (%p16) target = $region17
  $region16: #{teinformer_forward.35} parent=0 // pred_region
    %vm19 = vcmask 261120
    %20 = vst.msk [vmem:[#allocation2] sm:$0xff] %vm19, 0.0
    %21 = vst.msk [vmem:[#allocation2 + $0x8] sm:$0xff] %vm19, 0.0
    %22 = vst.msk [vmem:[#allocation2 + $0x10] sm:$0xff] %vm19, 0.0
    %23 = vst.msk [vmem:[#allocation2 + $0x18] sm:$0xff] %vm19, 0.0
  $region17: #{teinformer_forward.35} parent=0 // pred_fallthru
    _
  %v24 = vld [vmem:[#allocation2] sm:$0xff]
  %v25 = vld [vmem:[#allocation2 + $0x8] sm:$0xff]
  %v26 = vld [vmem:[#allocation2 + $0x10] sm:$0xff]
  %v27 = vld [vmem:[#allocation2 + $0x18] sm:$0xff]
  %v28 = vld [vmem:[%s0] sm:$0xff]
  %v29 = vld [vmem:[%s0 + $0x8] sm:$0xff]
  %v30 = vld [vmem:[%s0 + $0x10] sm:$0xff]
  %v31 = vld [vmem:[%s0 + $0x18] sm:$0xff]
  %v32 = vpack.c.bf16 %v29, %v28
  %v33 = vpack.c.bf16 %v31, %v30
  %v34 = vld [vmem:[%s1] sm:$0xf]
  %v35 = vld [vmem:[%s1 + $0x4] sm:$0x3]
  %v38 = vunpack.c.l.b16 %v34
  %v39 = vunpack.c.l.b16 %v35
  %v40 = vpack.c.b16 %v39, %v38
  %vm41 = vcmask 97280
  %v43 = vsel %vm41, %v32, 0
  %v46 = vsel %vm41, %v33, 0
  %vm48 = vcmask 1045504
  %v50 = vsel %vm48, %v40, 0
  %52 = vmatprep.subr.bf16.mxu0 0
  %53 = vmatpush1.bf16.msra.mxu0 %v50
  %54 = vmatprep.subr.bf16.mxu0 0
  %55 = vmatpush1.bf16.msra.mxu0 0
  %56 = vmatprep.subr.bf16.mxu0 0
  %57 = vmatpush1.bf16.msra.mxu0 0
  %58 = vmatprep.subr.bf16.mxu0 0
  %59 = vmatpush1.bf16.msra.mxu0 0
  %60 = vmatprep.subr.bf16.mxu0 0
  %61 = vmatpush1.bf16.msra.mxu0 0
  %62 = vmatprep.subr.bf16.mxu0 0
  %63 = vmatpush1.bf16.msra.mxu0 0
  %64 = vmatprep.subr.bf16.mxu0 0
  %65 = vmatpush1.bf16.msra.mxu0 0
  %66 = vmatprep.subr.bf16.mxu0 0
  %67 = vmatpush1.bf16.msra.mxu0 0
  %68 = vmatprep.subr.bf16.mxu0 0
  %69 = vmatpush1.bf16.msra.mxu0 0
  %70 = vmatprep.subr.bf16.mxu0 0
  %71 = vmatpush1.bf16.msra.mxu0 0
  %72 = vmatprep.subr.bf16.mxu0 0
  %73 = vmatpush1.bf16.msra.mxu0 0
  %74 = vmatprep.subr.bf16.mxu0 0
  %75 = vmatpush1.bf16.msra.mxu0 0
  %76 = vmatprep.subr.bf16.mxu0 0
  %77 = vmatpush1.bf16.msra.mxu0 0
  %78 = vmatprep.subr.bf16.mxu0 0
  %79 = vmatpush1.bf16.msra.mxu0 0
  %80 = vmatprep.subr.bf16.mxu0 0
  %81 = vmatpush1.bf16.msra.mxu0 0
  %82 = vmatprep.subr.bf16.mxu0 0
  %83 = vmatpush1.bf16.msra.mxu0 0
  %84 = vmatprep.mubr.bf16.mxu0 0
  %85 = vmatmul.mubr.bf16.gmra.mrb[0].mxu0 %v43
  %v86 = vpop.f32.mrb[0].mxu0
  %v87 = vadd.f32 0.0, %v86
  %v88 = vpop.f32.mrb[0].mxu0
  %v89 = vpop.f32.mrb[0].mxu0
  %v90 = vadd.f32 0.0, %v89
  %v91 = vpop.f32.mrb[0].mxu0
  %92 = vmatprep.mubr.bf16.mxu0 0
  %93 = vmatmul.mubr.bf16.gmra.mrb[0].mxu0 %v46
  %v94 = vpop.f32.mrb[0].mxu0
  %v95 = vadd.f32 0.0, %v94
  %v96 = vpop.f32.mrb[0].mxu0
  %v97 = vpop.f32.mrb[0].mxu0
  %v98 = vadd.f32 0.0, %v97
  %v99 = vpop.f32.mrb[0].mxu0
  %100 = vdwg.mxu0
  %v101 = vadd.f32 %v24, %v87
  %v102 = vadd.f32 %v25, %v90
  %v103 = vadd.f32 %v26, %v95
  %v104 = vadd.f32 %v27, %v98
  %vm105 = vcmask 261120
  %106 = vst.msk [vmem:[#allocation2] sm:$0xff] %vm105, %v101
  %107 = vst.msk [vmem:[#allocation2 + $0x8] sm:$0xff] %vm105, %v102
  %108 = vst.msk [vmem:[#allocation2 + $0x10] sm:$0xff] %vm105, %v103
  %109 = vst.msk [vmem:[#allocation2 + $0x18] sm:$0xff] %vm105, %v104
  // Predicated region
  $region18: #{teinformer_forward.35} parent=0 // pred_check
    %p110 = pneg %p15
  $region19: #{teinformer_forward.35} parent=0 // pred_check_branch
    %112 = sbr.rel (%p110) target = $region21
  $region20: #{teinformer_forward.35} parent=0 // pred_region
    %v113 = vld [vmem:[#allocation2] sm:$0xff]
    %v114 = vld [vmem:[#allocation2 + $0x8] sm:$0xff]
    %v115 = vld [vmem:[#allocation2 + $0x10] sm:$0xff]
    %v116 = vld [vmem:[#allocation2 + $0x18] sm:$0xff]
    %v117 = vld [vmem:[%s2] sm:$0xff]
    %v118 = vld [vmem:[%s2 + $0x8] sm:$0xff]
    %v119 = vld [vmem:[%s2 + $0x10] sm:$0xff]
    %v120 = vld [vmem:[%s2 + $0x18] sm:$0xff]
    %v121 = vadd.f32 %v113, %v117
    %v122 = vadd.f32 %v114, %v118
    %v123 = vadd.f32 %v115, %v119
    %v124 = vadd.f32 %v116, %v120
    %v125 = vpack.c.bf16 %v122, %v121
    %v126 = vpack.c.bf16 %v124, %v123
    %v129 = vunpack.c.l.b16 %v125
    %v130 = vunpack.c.h.b16 %v125
    %v131 = vunpack.c.l.b16 %v126
    %v132 = vunpack.c.h.b16 %v126
    %v133 = vpack.c.b16 %v129, %v129
    %v134 = vpack.c.b16 %v130, %v130
    %v135 = vpack.c.b16 %v131, %v131
    %v136 = vpack.c.b16 %v132, %v132
    %vm141 = vcmask 257024
    %142 = vst.msk [vmem:[%s3] sm:$0xf] %vm141, %v133
    %143 = vst.msk [vmem:[%s3 + $0x4] sm:$0xf] %vm141, %v134
    %144 = vst.msk [vmem:[%s3 + $0x8] sm:$0xf] %vm141, %v135
    %145 = vst.msk [vmem:[%s3 + $0xc] sm:$0xf] %vm141, %v136
  $region21: #{teinformer_forward.35} parent=0 // pred_fallthru
    _
  // Predicated region
  $region22: #{teinformer_forward.35} parent=0 // pred_check
    _
  $region23: #{teinformer_forward.35} parent=0 // pred_check_branch
    %147 = sbr.rel (0) target = $region25
  $region24: #{teinformer_forward.35} parent=0 // pred_region
    _
  $region25: #{teinformer_forward.35} parent=0 // pred_fallthru
    _
  // Predicated region
  $region26: #{teinformer_forward.35} parent=0 // pred_check
    _
  $region27: #{teinformer_forward.35} parent=0 // pred_check_branch
    %149 = sbr.rel (0) target = $region29
  $region28: #{teinformer_forward.35} parent=0 // pred_region
    _
  $region29: #{teinformer_forward.35} parent=0 // pred_fallthru
    _

// kernel: teinformer_forward.36
$region0: #{teinformer_forward.36}
  #allocation0 [shape = 'u32[]', space=smem, size = 0x4, offset = 0x4, fixed_abs, tag = 'smem constant byte address 0x4 - core index']
  #allocation1 [shape = 'u32[144,128]{1,0:T(1,128)}', space=vmem, size = 0x12000, scoped, tag = 'internal scratch']
  #allocation2 [shape = 'f32[32,96]{1,0:T(8,128)}', space=vmem, size = 0x4000, scoped, tag = 'scratch operand']
  %s0 = inlined_call_operand.vmem [shape: bf16[32,32], index: 0, kind: input, shape index: {}]
  %s1 = inlined_call_operand.vmem [shape: bf16[32,96], index: 1, kind: input, shape index: {}]
  %s2 = inlined_call_operand.vmem [shape: f32[1,96], index: 2, kind: input, shape index: {}]
  %s3 = inlined_call_operand.vmem [shape: bf16[32,96], index: 3, kind: output, shape index: {}]
  %s4 = sld [smem:[#allocation0]]
  $region30: #{teinformer_forward.36} parent=0
    _
  %s6 = ssub.s32 1, %s4
  %s7 = scalar_select 0, %s6, %s4
  // Predicated region
  $region2: #{teinformer_forward.36} parent=0 // pred_check
    _
  $region3: #{teinformer_forward.36} parent=0 // pred_check_branch
    %9 = sbr.rel (0) target = $region5
  $region4: #{teinformer_forward.36} parent=0 // pred_region
    _
  $region5: #{teinformer_forward.36} parent=0 // pred_fallthru
    _
  // Predicated region
  $region6: #{teinformer_forward.36} parent=0 // pred_check
    _
  $region7: #{teinformer_forward.36} parent=0 // pred_check_branch
    %11 = sbr.rel (0) target = $region9
  $region8: #{teinformer_forward.36} parent=0 // pred_region
    _
  $region9: #{teinformer_forward.36} parent=0 // pred_fallthru
    _
  // Predicated region
  $region10: #{teinformer_forward.36} parent=0 // pred_check
    _
  $region11: #{teinformer_forward.36} parent=0 // pred_check_branch
    %13 = sbr.rel (0) target = $region13
  $region12: #{teinformer_forward.36} parent=0 // pred_region
    _
  $region13: #{teinformer_forward.36} parent=0 // pred_fallthru
    _
  %p15 = scmp.eq.s32.totalorder 0, 0
  // Predicated region
  $region14: #{teinformer_forward.36} parent=0 // pred_check
    %p16 = pneg %p15
  $region15: #{teinformer_forward.36} parent=0 // pred_check_branch
    %18 = sbr.rel (%p16) target = $region17
  $region16: #{teinformer_forward.36} parent=0 // pred_region
    %vm19 = vcmask 785408
    %20 = vst.msk [vmem:[#allocation2] sm:$0xff] %vm19, 0.0
    %21 = vst.msk [vmem:[#allocation2 + $0x8] sm:$0xff] %vm19, 0.0
    %22 = vst.msk [vmem:[#allocation2 + $0x10] sm:$0xff] %vm19, 0.0
    %23 = vst.msk [vmem:[#allocation2 + $0x18] sm:$0xff] %vm19, 0.0
  $region17: #{teinformer_forward.36} parent=0 // pred_fallthru
    _
  %v24 = vld [vmem:[#allocation2] sm:$0xff]
  %v25 = vld [vmem:[#allocation2 + $0x8] sm:$0xff]
  %v26 = vld [vmem:[#allocation2 + $0x10] sm:$0xff]
  %v27 = vld [vmem:[#allocation2 + $0x18] sm:$0xff]
  %v28 = vld [vmem:[%s0] sm:$0xf]
  %v29 = vld [vmem:[%s0 + $0x4] sm:$0xf]
  %v30 = vld [vmem:[%s0 + $0x8] sm:$0xf]
  %v31 = vld [vmem:[%s0 + $0xc] sm:$0xf]
  %v32 = vld [vmem:[%s1] sm:$0xf]
  %v33 = vld [vmem:[%s1 + $0x4] sm:$0xf]
  %v34 = vld [vmem:[%s1 + $0x8] sm:$0xf]
  %v35 = vld [vmem:[%s1 + $0xc] sm:$0xf]
  %v40 = vunpack.c.l.b16 %v28
  %v41 = vunpack.c.l.b16 %v29
  %v42 = vunpack.c.l.b16 %v30
  %v43 = vunpack.c.l.b16 %v31
  %v44 = vpack.c.b16 %v41, %v40
  %v45 = vpack.c.b16 %v43, %v42
  %v50 = vunpack.c.l.b16 %v32
  %v51 = vunpack.c.l.b16 %v33
  %v52 = vunpack.c.l.b16 %v34
  %v53 = vunpack.c.l.b16 %v35
  %v54 = vpack.c.b16 %v51, %v50
  %v55 = vpack.c.b16 %v53, %v52
  %vm58 = vcmask 261120
  %v60 = vsel %vm58, %v44, 0
  %v63 = vsel %vm58, %v45, 0
  %65 = vmatprep.subr.bf16.mxu0 0
  %66 = vmatpush1.bf16.msra.mxu0 %v54
  %67 = vmatprep.subr.bf16.mxu0 0
  %68 = vmatpush1.bf16.msra.mxu0 %v55
  %69 = vmatprep.subr.bf16.mxu0 0
  %70 = vmatpush1.bf16.msra.mxu0 0
  %71 = vmatprep.subr.bf16.mxu0 0
  %72 = vmatpush1.bf16.msra.mxu0 0
  %73 = vmatprep.subr.bf16.mxu0 0
  %74 = vmatpush1.bf16.msra.mxu0 0
  %75 = vmatprep.subr.bf16.mxu0 0
  %76 = vmatpush1.bf16.msra.mxu0 0
  %77 = vmatprep.subr.bf16.mxu0 0
  %78 = vmatpush1.bf16.msra.mxu0 0
  %79 = vmatprep.subr.bf16.mxu0 0
  %80 = vmatpush1.bf16.msra.mxu0 0
  %81 = vmatprep.subr.bf16.mxu0 0
  %82 = vmatpush1.bf16.msra.mxu0 0
  %83 = vmatprep.subr.bf16.mxu0 0
  %84 = vmatpush1.bf16.msra.mxu0 0
  %85 = vmatprep.subr.bf16.mxu0 0
  %86 = vmatpush1.bf16.msra.mxu0 0
  %87 = vmatprep.subr.bf16.mxu0 0
  %88 = vmatpush1.bf16.msra.mxu0 0
  %89 = vmatprep.subr.bf16.mxu0 0
  %90 = vmatpush1.bf16.msra.mxu0 0
  %91 = vmatprep.subr.bf16.mxu0 0
  %92 = vmatpush1.bf16.msra.mxu0 0
  %93 = vmatprep.subr.bf16.mxu0 0
  %94 = vmatpush1.bf16.msra.mxu0 0
  %95 = vmatprep.subr.bf16.mxu0 0
  %96 = vmatpush1.bf16.msra.mxu0 0
  %97 = vmatprep.mubr.bf16.mxu0 0
  %98 = vmatmul.mubr.bf16.gmra.mrb[0].mxu0 %v60
  %v99 = vpop.f32.mrb[0].mxu0
  %v100 = vadd.f32 0.0, %v99
  %v101 = vpop.f32.mrb[0].mxu0
  %v102 = vpop.f32.mrb[0].mxu0
  %v103 = vadd.f32 0.0, %v102
  %v104 = vpop.f32.mrb[0].mxu0
  %105 = vmatprep.mubr.bf16.mxu0 0
  %106 = vmatmul.mubr.bf16.gmra.mrb[0].mxu0 %v63
  %v107 = vpop.f32.mrb[0].mxu0
  %v108 = vadd.f32 0.0, %v107
  %v109 = vpop.f32.mrb[0].mxu0
  %v110 = vpop.f32.mrb[0].mxu0
  %v111 = vadd.f32 0.0, %v110
  %v112 = vpop.f32.mrb[0].mxu0
  %113 = vdwg.mxu0
  %v114 = vadd.f32 %v24, %v100
  %v115 = vadd.f32 %v25, %v103
  %v116 = vadd.f32 %v26, %v108
  %v117 = vadd.f32 %v27, %v111
  %vm118 = vcmask 785408
  %119 = vst.msk [vmem:[#allocation2] sm:$0xff] %vm118, %v114
  %120 = vst.msk [vmem:[#allocation2 + $0x8] sm:$0xff] %vm118, %v115
  %121 = vst.msk [vmem:[#allocation2 + $0x10] sm:$0xff] %vm118, %v116
  %122 = vst.msk [vmem:[#allocation2 + $0x18] sm:$0xff] %vm118, %v117
  // Predicated region
  $region18: #{teinformer_forward.36} parent=0 // pred_check
    %p123 = pneg %p15
  $region19: #{teinformer_forward.36} parent=0 // pred_check_branch
    %125 = sbr.rel (%p123) target = $region21
  $region20: #{teinformer_forward.36} parent=0 // pred_region
    %v126 = vld [vmem:[#allocation2] sm:$0xff]
    %v127 = vld [vmem:[#allocation2 + $0x8] sm:$0xff]
    %v128 = vld [vmem:[#allocation2 + $0x10] sm:$0xff]
    %v129 = vld [vmem:[#allocation2 + $0x18] sm:$0xff]
    %v130 = vld [vmem:[%s2] sm:$0x1]
    %v132 = vlaneseq
    %v133 = vshrl.u32 %v132, 7
    %v134 = vsub.s32 0, %v133
    %v135 = vrot.slane %v130, %v134
    %v137 = vadd.f32 %v126, %v135
    %v138 = vadd.f32 %v127, %v135
    %v139 = vadd.f32 %v128, %v135
    %v140 = vadd.f32 %v129, %v135
    %v141 = vpack.c.bf16 %v138, %v137
    %v142 = vpack.c.bf16 %v140, %v139
    %v145 = vunpack.c.l.b16 %v141
    %v146 = vunpack.c.h.b16 %v141
    %v147 = vunpack.c.l.b16 %v142
    %v148 = vunpack.c.h.b16 %v142
    %v149 = vpack.c.b16 %v145, %v145
    %v150 = vpack.c.b16 %v146, %v146
    %v151 = vpack.c.b16 %v147, %v147
    %v152 = vpack.c.b16 %v148, %v148
    %vm157 = vcmask 781312
    %158 = vst.msk [vmem:[%s3] sm:$0xf] %vm157, %v149
    %159 = vst.msk [vmem:[%s3 + $0x4] sm:$0xf] %vm157, %v150
    %160 = vst.msk [vmem:[%s3 + $0x8] sm:$0xf] %vm157, %v151
    %161 = vst.msk [vmem:[%s3 + $0xc] sm:$0xf] %vm157, %v152
  $region21: #{teinformer_forward.36} parent=0 // pred_fallthru
    _
  // Predicated region
  $region22: #{teinformer_forward.36} parent=0 // pred_check
    _
  $region23: #{teinformer_forward.36} parent=0 // pred_check_branch
    %163 = sbr.rel (0) target = $region25
  $region24: #{teinformer_forward.36} parent=0 // pred_region
    _
  $region25: #{teinformer_forward.36} parent=0 // pred_fallthru
    _
  // Predicated region
  $region26: #{teinformer_forward.36} parent=0 // pred_check
    _
  $region27: #{teinformer_forward.36} parent=0 // pred_check_branch
    %165 = sbr.rel (0) target = $region29
  $region28: #{teinformer_forward.36} parent=0 // pred_region
    _
  $region29: #{teinformer_forward.36} parent=0 // pred_fallthru
    _

// kernel: teinformer_forward.37
$region0: #{teinformer_forward.37}
  #allocation0 [shape = 'u32[]', space=smem, size = 0x4, offset = 0x4, fixed_abs, tag = 'smem constant byte address 0x4 - core index']
  #allocation1 [shape = 'u32[144,128]{1,0:T(1,128)}', space=vmem, size = 0x12000, scoped, tag = 'internal scratch']
  %s0 = inlined_call_operand.vmem [shape: bf16[2,16,96], index: 0, kind: input, shape index: {}]
  %s1 = inlined_call_operand.vmem [shape: bf16[2,15,32], index: 1, kind: input, shape index: {}]
  %s2 = inlined_call_operand.vmem [shape: f32[2,16,4], index: 2, kind: output, shape index: {}]
  %s3 = sld [smem:[#allocation0]]
  $region41: #{teinformer_forward.37} parent=0
    _
  %s5 = ssub.s32 1, %s3
  %s6 = scalar_select 0, %s5, %s3
  loop: start=0, step=1, limit=4
  $region2: #{teinformer_forward.37} parent=0 // loop_pre_header
    _
  $region3: #{teinformer_forward.37} parent=0 // loop_header
    %s8 = sphi 0, %s12
    %p9 = scmp.ge.s32.totalorder %s8, 4
    %s18 = sphi 0, %s20
    %s21 = sphi 0, %s18
    %s22 = sphi 0, %s21
    %s38 = sphi 0, %s22
    %s44 = sphi 0, %s46
    %s47 = sphi 0, %s44
    %s48 = sphi 0, %s47
    %s64 = sphi 0, %s48
    %s70 = sphi 0, %s72
    %s73 = sphi 0, %s70
    %s74 = sphi 0, %s73
    %s90 = sphi 0, %s74
  $region4: #{teinformer_forward.37} parent=0 // loop_header_branch
    %11 = sbr.rel (%p9) target = $region8
  $region5: #{teinformer_forward.37} parent=0 // loop_body
    %s13 = ssub.s32 %s8, 1
    %s14 = ssub.s32 %s8, 2
    %s15 = sadd.s32 %s8, 1
    %s16 = ssub.s32 %s8, %s15
    %p17 = scmp.eq.s32.totalorder %s16, 0
    %s19 = sadd.s32 %s18, 1
    %s20 = scalar_select %p17, %s18, %s19
    %p23 = pneg %p17
    %p24 = scmp.eq.s32.totalorder %s8, 1
    %p25 = por %p23, %p24
    %p26 = scmp.ne.s32.totalorder %s18, %s21
    %p27 = scmp.eq.s32.totalorder %s8, 0
    %p28 = por %p26, %p27
    %p29 = scmp.ne.s32.totalorder %s18, %s21
    %p30 = scmp.eq.s32.totalorder %s13, 1
    %p31 = por %p29, %p30
    %p32 = scmp.ne.s32.totalorder %s21, %s22
    %p33 = scmp.eq.s32.totalorder %s13, 0
    %p34 = por %p32, %p33
    %p35 = scmp.ne.s32.totalorder %s21, %s22
    %p36 = scmp.eq.s32.totalorder %s14, 1
    %p37 = por %p35, %p36
    %p39 = scmp.ne.s32.totalorder %s22, %s38
    %p40 = scmp.eq.s32.totalorder %s14, 0
    %p41 = por %p39, %p40
    %s42 = ssub.s32 %s8, %s15
    %p43 = scmp.eq.s32.totalorder %s42, 0
    %s45 = sadd.s32 %s44, 1
    %s46 = scalar_select %p43, %s44, %s45
    %p49 = pneg %p43
    %p50 = scmp.eq.s32.totalorder %s8, 1
    %p51 = por %p49, %p50
    %p52 = scmp.ne.s32.totalorder %s44, %s47
    %p53 = scmp.eq.s32.totalorder %s8, 0
    %p54 = por %p52, %p53
    %p55 = scmp.ne.s32.totalorder %s44, %s47
    %p56 = scmp.eq.s32.totalorder %s13, 1
    %p57 = por %p55, %p56
    %p58 = scmp.ne.s32.totalorder %s47, %s48
    %p59 = scmp.eq.s32.totalorder %s13, 0
    %p60 = por %p58, %p59
    %p61 = scmp.ne.s32.totalorder %s47, %s48
    %p62 = scmp.eq.s32.totalorder %s14, 1
    %p63 = por %p61, %p62
    %p65 = scmp.ne.s32.totalorder %s48, %s64
    %p66 = scmp.eq.s32.totalorder %s14, 0
    %p67 = por %p65, %p66
    %s68 = ssub.s32 %s8, %s15
    %p69 = scmp.eq.s32.totalorder %s68, 0
    %s71 = sadd.s32 %s70, 1
    %s72 = scalar_select %p69, %s70, %s71
    %p75 = pneg %p69
    %p76 = scmp.eq.s32.totalorder %s8, 1
    %p77 = por %p75, %p76
    %p78 = scmp.ne.s32.totalorder %s70, %s73
    %p79 = scmp.eq.s32.totalorder %s8, 0
    %p80 = por %p78, %p79
    %p81 = scmp.ne.s32.totalorder %s70, %s73
    %p82 = scmp.eq.s32.totalorder %s13, 1
    %p83 = por %p81, %p82
    %p84 = scmp.ne.s32.totalorder %s73, %s74
    %p85 = scmp.eq.s32.totalorder %s13, 0
    %p86 = por %p84, %p85
    %p87 = scmp.ne.s32.totalorder %s73, %s74
    %p88 = scmp.eq.s32.totalorder %s14, 1
    %p89 = por %p87, %p88
    %p91 = scmp.ne.s32.totalorder %s74, %s90
    %p92 = scmp.eq.s32.totalorder %s14, 0
    %p93 = por %p91, %p92
    %p94 = scmp.le.s32.totalorder 1, %s8
    %p95 = scmp.lt.s32.totalorder %s8, 3
    %p96 = pnand %p94, %p95
    %p97 = pneg %p96
    // Predicated region
    $region9: #{teinformer_forward.37} parent=5 // pred_check
      _
    $region10: #{teinformer_forward.37} parent=5 // pred_check_branch
      %99 = sbr.rel (%p96) target = $region12
    $region11: #{teinformer_forward.37} parent=5 // pred_region
      %s100 = ssub.s32 %s8, 1
    $region12: #{teinformer_forward.37} parent=5 // pred_fallthru
      _
    %p101 = scmp.lt.s32.totalorder %s8, 2
    // Predicated region
    $region13: #{teinformer_forward.37} parent=5 // pred_check
      %p102 = pneg %p101
    $region14: #{teinformer_forward.37} parent=5 // pred_check_branch
      %104 = sbr.rel (%p102) target = $region16
    $region15: #{teinformer_forward.37} parent=5 // pred_region
      // Predicated region
      $region17: #{teinformer_forward.37} parent=15 // pred_check
        %p105 = pneg %p28
      $region18: #{teinformer_forward.37} parent=15 // pred_check_branch
        %107 = sbr.rel (%p105) target = $region20
      $region19: #{teinformer_forward.37} parent=15 // pred_region
        %p108 = scmp.lt.s32.totalorder %s8, 1
        %s109 = scalar_select %p108, %s8, 1
        %s110 = smul.addr %s109, 2
        %s111 = smul.addr %s110, 4
        %s112 = scalar_lea.vmem %s0, %s111
      $region20: #{teinformer_forward.37} parent=15 // pred_fallthru
        _
      // Predicated region
      $region21: #{teinformer_forward.37} parent=15 // pred_check
        %p113 = pneg %p54
      $region22: #{teinformer_forward.37} parent=15 // pred_check_branch
        %115 = sbr.rel (%p113) target = $region24
      $region23: #{teinformer_forward.37} parent=15 // pred_region
        %p116 = scmp.lt.s32.totalorder %s8, 1
        %s117 = scalar_select %p116, %s8, 1
        %s118 = smul.addr %s117, 2
        %s119 = smul.addr %s118, 4
        %s120 = scalar_lea.vmem %s1, %s119
      $region24: #{teinformer_forward.37} parent=15 // pred_fallthru
        _
    $region16: #{teinformer_forward.37} parent=5 // pred_fallthru
      _
    %p121 = scmp.le.s32.totalorder 1, %s8
    %p122 = scmp.lt.s32.totalorder %s8, 3
    %p123 = pnand %p121, %p122
    %p124 = pneg %p123
    // Predicated region
    $region25: #{teinformer_forward.37} parent=5 // pred_check
      _
    $region26: #{teinformer_forward.37} parent=5 // pred_check_branch
      %126 = sbr.rel (%p123) target = $region28
    $region27: #{teinformer_forward.37} parent=5 // pred_region
      %s127 = ssub.s32 %s8, 1
      %p128 = scmp.lt.s32.totalorder %s13, 1
      %s129 = scalar_select %p128, %s13, 1
      %s130 = smul.addr %s129, 2
      %s131 = smul.addr %s130, 4
      %s132 = scalar_lea.vmem %s0, %s131
      %p133 = pneg %p34
      %p134 = pneg %p31
      %p135 = scmp.lt.s32.totalorder %s13, 1
      %s136 = scalar_select %p135, %s13, 1
      %s137 = smul.addr %s136, 2
      %s138 = smul.addr %s137, 4
      %s139 = scalar_lea.vmem %s1, %s138
      %p140 = pneg %p60
      %p141 = pneg %p57
      %p142 = pneg %p86
      %p143 = pneg %p83
      %p144 = scmp.lt.s32.totalorder %s13, 1
      %s145 = scalar_select %p144, %s13, 1
      %s146 = smul.addr %s145, 2
      %s147 = smul.addr %s146, 8
      %s148 = scalar_lea.vmem %s2, %s147
      %p149 = scmp.lt.s32.totalorder %s13, 1
      %s150 = scalar_select %p149, %s13, 1
      %s151 = smul.addr %s150, 2
      %s152 = smul.addr %s151, 4
      %s153 = scalar_lea.vmem %s0, %s152
      %p154 = scmp.lt.s32.totalorder %s13, 1
      %s155 = scalar_select %p154, %s13, 1
      %s156 = smul.addr %s155, 2
      %s157 = smul.addr %s156, 4
      %s158 = scalar_lea.vmem %s1, %s157
      %p159 = scmp.lt.s32.totalorder %s13, 1
      %s160 = scalar_select %p159, %s13, 1
      %s161 = smul.addr %s160, 2
      %s162 = smul.addr %s161, 8
      %s163 = scalar_lea.vmem %s2, %s162
      %v165 = vld [vmem:[%s153] sm:$0xf]
      %v166 = vld [vmem:[%s153 + $0x4] sm:$0xf]
      %v167 = vld [vmem:[%s158] sm:$0xf]
      %v168 = vld [vmem:[%s158 + $0x4] sm:$0xf]
      %v171 = vunpack.c.l.b16 %v165
      %v172 = vunpack.c.l.b16 %v166
      %v173 = vpack.c.b16 %v172, %v171
      %v176 = vunpack.c.l.b16 %v167
      %v177 = vunpack.c.l.b16 %v168
      %v178 = vpack.c.b16 %v177, %v176
      %vm179 = vcmask 64512
      %v181 = vsel %vm179, %v173, 0
      %v184 = vsel %vm179, %v178, 0
      %186 = vmatprep.subr.bf16.mxu0 0
      %187 = vmatpush1.bf16.xpose.msra.mxu0 %v184
      %188 = vmatprep.subr.bf16.mxu0 0
      %189 = vmatpush1.bf16.xpose.msra.mxu0 0
      %190 = vmatprep.subr.bf16.mxu0 0
      %191 = vmatpush1.bf16.xpose.msra.mxu0 0
      %192 = vmatprep.subr.bf16.mxu0 0
      %193 = vmatpush1.bf16.xpose.msra.mxu0 0
      %194 = vmatprep.subr.bf16.mxu0 0
      %195 = vmatpush1.bf16.xpose.msra.mxu0 0
      %196 = vmatprep.subr.bf16.mxu0 0
      %197 = vmatpush1.bf16.xpose.msra.mxu0 0
      %198 = vmatprep.subr.bf16.mxu0 0
      %199 = vmatpush1.bf16.xpose.msra.mxu0 0
      %200 = vmatprep.subr.bf16.mxu0 0
      %201 = vmatpush1.bf16.xpose.msra.mxu0 0
      %202 = vmatprep.subr.bf16.mxu0 0
      %203 = vmatpush1.bf16.xpose.msra.mxu0 0
      %204 = vmatprep.subr.bf16.mxu0 0
      %205 = vmatpush1.bf16.xpose.msra.mxu0 0
      %206 = vmatprep.subr.bf16.mxu0 0
      %207 = vmatpush1.bf16.xpose.msra.mxu0 0
      %208 = vmatprep.subr.bf16.mxu0 0
      %209 = vmatpush1.bf16.xpose.msra.mxu0 0
      %210 = vmatprep.subr.bf16.mxu0 0
      %211 = vmatpush1.bf16.xpose.msra.mxu0 0
      %212 = vmatprep.subr.bf16.mxu0 0
      %213 = vmatpush1.bf16.xpose.msra.mxu0 0
      %214 = vmatprep.subr.bf16.mxu0 0
      %215 = vmatpush1.bf16.xpose.msra.mxu0 0
      %216 = vmatprep.subr.bf16.mxu0 0
      %217 = vmatpush1.bf16.xpose.msra.mxu0 0
      %218 = vmatprep.mubr.bf16.mxu0 0
      %219 = vmatmul.mubr.bf16.gmra.mrb[0].mxu0 %v181
      %v220 = vpop.f32.mrb[0].mxu0
      %v221 = vadd.f32 0.0, %v220
      %v222 = vpop.f32.mrb[0].mxu0
      %v223 = vpop.f32.mrb[0].mxu0
      %v224 = vadd.f32 0.0, %v223
      %v225 = vpop.f32.mrb[0].mxu0
      %226 = vdwg.mxu0
      %vm227 = vcmask 121856
      %v228 = vsel %vm227, %v221, -inf
      %229 = vmax.xlane.f32.xlu0 %v228
      %v230 = vpop.xlane.xlu0 %229
      %v231 = vsel %vm227, %v224, -inf
      %232 = vmax.xlane.f32.xlu0 %v231
      %v233 = vpop.xlane.xlu0 %232
      %v234 = vsel %vm227, %v221, 0.0
      %235 = vadd.xlane.f32.xlu0 %v234
      %v236 = vpop.xlane.xlu0 %235
      %v237 = vsel %vm227, %v224, 0.0
      %238 = vadd.xlane.f32.xlu0 %v237
      %v239 = vpop.xlane.xlu0 %238
      %v240 = vmul.f32 %v236, 0.0625
      %v241 = vmul.f32 %v239, 0.0625
      %v242 = vsub.f32 %v230, %v240
      %v243 = vsub.f32 %v233, %v241
      %vm244 = vcmask 7168
      %245 = vst.msk [vmem:[%s163] sm:$0xff] %vm244, %v242
      %246 = vst.msk [vmem:[%s163 + $0x8] sm:$0xff] %vm244, %v243
      %v247 = vld [vmem:[%s153] sm:$0xf]
      %v248 = vld [vmem:[%s153 + $0x4] sm:$0xf]
      %v249 = vld [vmem:[%s158] sm:$0xf]
      %v250 = vld [vmem:[%s158 + $0x4] sm:$0xf]
      %v253 = vunpack.c.l.b16 %v247
      %v254 = vunpack.c.l.b16 %v248
      %v255 = vpack.c.b16 %v254, %v253
      %256 = vrot.lane.b32.xlu0 %v255, 120
      %v257 = vpop.permute.xlu0 %256
      %v260 = vunpack.c.l.b16 %v249
      %v261 = vunpack.c.l.b16 %v250
      %v262 = vpack.c.b16 %v261, %v260
      %263 = vrot.lane.b32.xlu0 %v262, 120
      %v264 = vpop.permute.xlu0 %263
      %v266 = vsel %vm179, %v257, 0
      %v269 = vsel %vm179, %v264, 0
      %271 = vmatprep.subr.bf16.mxu0 0
      %272 = vmatpush1.bf16.xpose.msra.mxu0 %v269
      %273 = vmatprep.subr.bf16.mxu0 0
      %274 = vmatpush1.bf16.xpose.msra.mxu0 0
      %275 = vmatprep.subr.bf16.mxu0 0
      %276 = vmatpush1.bf16.xpose.msra.mxu0 0
      %277 = vmatprep.subr.bf16.mxu0 0
      %278 = vmatpush1.bf16.xpose.msra.mxu0 0
      %279 = vmatprep.subr.bf16.mxu0 0
      %280 = vmatpush1.bf16.xpose.msra.mxu0 0
      %281 = vmatprep.subr.bf16.mxu0 0
      %282 = vmatpush1.bf16.xpose.msra.mxu0 0
      %283 = vmatprep.subr.bf16.mxu0 0
      %284 = vmatpush1.bf16.xpose.msra.mxu0 0
      %285 = vmatprep.subr.bf16.mxu0 0
      %286 = vmatpush1.bf16.xpose.msra.mxu0 0
      %287 = vmatprep.subr.bf16.mxu0 0
      %288 = vmatpush1.bf16.xpose.msra.mxu0 0
      %289 = vmatprep.subr.bf16.mxu0 0
      %290 = vmatpush1.bf16.xpose.msra.mxu0 0
      %291 = vmatprep.subr.bf16.mxu0 0
      %292 = vmatpush1.bf16.xpose.msra.mxu0 0
      %293 = vmatprep.subr.bf16.mxu0 0
      %294 = vmatpush1.bf16.xpose.msra.mxu0 0
      %295 = vmatprep.subr.bf16.mxu0 0
      %296 = vmatpush1.bf16.xpose.msra.mxu0 0
      %297 = vmatprep.subr.bf16.mxu0 0
      %298 = vmatpush1.bf16.xpose.msra.mxu0 0
      %299 = vmatprep.subr.bf16.mxu0 0
      %300 = vmatpush1.bf16.xpose.msra.mxu0 0
      %301 = vmatprep.subr.bf16.mxu0 0
      %302 = vmatpush1.bf16.xpose.msra.mxu0 0
      %303 = vmatprep.mubr.bf16.mxu0 0
      %304 = vmatmul.mubr.bf16.gmra.mrb[0].mxu0 %v266
      %v305 = vpop.f32.mrb[0].mxu0
      %v306 = vadd.f32 0.0, %v305
      %v307 = vpop.f32.mrb[0].mxu0
      %v308 = vpop.f32.mrb[0].mxu0
      %v309 = vadd.f32 0.0, %v308
      %v310 = vpop.f32.mrb[0].mxu0
      %311 = vdwg.mxu0
      %v312 = vsel %vm227, %v306, -inf
      %313 = vmax.xlane.f32.xlu0 %v312
      %v314 = vpop.xlane.xlu0 %313
      %v315 = vsel %vm227, %v309, -inf
      %316 = vmax.xlane.f32.xlu0 %v315
      %v317 = vpop.xlane.xlu0 %316
      %v318 = vsel %vm227, %v306, 0.0
      %319 = vadd.xlane.f32.xlu0 %v318
      %v320 = vpop.xlane.xlu0 %319
      %v321 = vsel %vm227, %v309, 0.0
      %322 = vadd.xlane.f32.xlu0 %v321
      %v323 = vpop.xlane.xlu0 %322
      %v324 = vmul.f32 %v320, 0.0625
      %v325 = vmul.f32 %v323, 0.0625
      %v326 = vsub.f32 %v314, %v324
      %v327 = vsub.f32 %v317, %v325
      %vm328 = vcmask 15368
      %329 = vst.msk [vmem:[%s163] sm:$0xff] %vm328, %v326
      %330 = vst.msk [vmem:[%s163 + $0x8] sm:$0xff] %vm328, %v327
      %v331 = vld [vmem:[%s153] sm:$0xf]
      %v332 = vld [vmem:[%s153 + $0x4] sm:$0xf]
      %v333 = vld [vmem:[%s158] sm:$0xf]
      %v334 = vld [vmem:[%s158 + $0x4] sm:$0xf]
      %v337 = vunpack.c.l.b16 %v331
      %v338 = vunpack.c.l.b16 %v332
      %v339 = vpack.c.b16 %v338, %v337
      %340 = vrot.lane.b32.xlu0 %v339, 112
      %v341 = vpop.permute.xlu0 %340
      %v344 = vunpack.c.l.b16 %v333
      %v345 = vunpack.c.l.b16 %v334
      %v346 = vpack.c.b16 %v345, %v344
      %347 = vrot.lane.b32.xlu0 %v346, 112
      %v348 = vpop.permute.xlu0 %347
      %v350 = vsel %vm179, %v341, 0
      %v353 = vsel %vm179, %v348, 0
      %355 = vmatprep.subr.bf16.mxu0 0
      %356 = vmatpush1.bf16.xpose.msra.mxu0 %v353
      %357 = vmatprep.subr.bf16.mxu0 0
      %358 = vmatpush1.bf16.xpose.msra.mxu0 0
      %359 = vmatprep.subr.bf16.mxu0 0
      %360 = vmatpush1.bf16.xpose.msra.mxu0 0
      %361 = vmatprep.subr.bf16.mxu0 0
      %362 = vmatpush1.bf16.xpose.msra.mxu0 0
      %363 = vmatprep.subr.bf16.mxu0 0
      %364 = vmatpush1.bf16.xpose.msra.mxu0 0
      %365 = vmatprep.subr.bf16.mxu0 0
      %366 = vmatpush1.bf16.xpose.msra.mxu0 0
      %367 = vmatprep.subr.bf16.mxu0 0
      %368 = vmatpush1.bf16.xpose.msra.mxu0 0
      %369 = vmatprep.subr.bf16.mxu0 0
      %370 = vmatpush1.bf16.xpose.msra.mxu0 0
      %371 = vmatprep.subr.bf16.mxu0 0
      %372 = vmatpush1.bf16.xpose.msra.mxu0 0
      %373 = vmatprep.subr.bf16.mxu0 0
      %374 = vmatpush1.bf16.xpose.msra.mxu0 0
      %375 = vmatprep.subr.bf16.mxu0 0
      %376 = vmatpush1.bf16.xpose.msra.mxu0 0
      %377 = vmatprep.subr.bf16.mxu0 0
      %378 = vmatpush1.bf16.xpose.msra.mxu0 0
      %379 = vmatprep.subr.bf16.mxu0 0
      %380 = vmatpush1.bf16.xpose.msra.mxu0 0
      %381 = vmatprep.subr.bf16.mxu0 0
      %382 = vmatpush1.bf16.xpose.msra.mxu0 0
      %383 = vmatprep.subr.bf16.mxu0 0
      %384 = vmatpush1.bf16.xpose.msra.mxu0 0
      %385 = vmatprep.subr.bf16.mxu0 0
      %386 = vmatpush1.bf16.xpose.msra.mxu0 0
      %387 = vmatprep.mubr.bf16.mxu0 0
      %388 = vmatmul.mubr.bf16.gmra.mrb[0].mxu0 %v350
      %v389 = vpop.f32.mrb[0].mxu0
      %v390 = vadd.f32 0.0, %v389
      %v391 = vpop.f32.mrb[0].mxu0
      %v392 = vpop.f32.mrb[0].mxu0
      %v393 = vadd.f32 0.0, %v392
      %v394 = vpop.f32.mrb[0].mxu0
      %395 = vdwg.mxu0
      %v396 = vsel %vm227, %v390, -inf
      %397 = vmax.xlane.f32.xlu0 %v396
      %v398 = vpop.xlane.xlu0 %397
      %v399 = vsel %vm227, %v393, -inf
      %400 = vmax.xlane.f32.xlu0 %v399
      %v401 = vpop.xlane.xlu0 %400
      %v402 = vsel %vm227, %v390, 0.0
      %403 = vadd.xlane.f32.xlu0 %v402
      %v404 = vpop.xlane.xlu0 %403
      %v405 = vsel %vm227, %v393, 0.0
      %406 = vadd.xlane.f32.xlu0 %v405
      %v407 = vpop.xlane.xlu0 %406
      %v408 = vmul.f32 %v404, 0.0625
      %v409 = vmul.f32 %v407, 0.0625
      %v410 = vsub.f32 %v398, %v408
      %v411 = vsub.f32 %v401, %v409
      %vm412 = vcmask 23568
      %413 = vst.msk [vmem:[%s163] sm:$0xff] %vm412, %v410
      %414 = vst.msk [vmem:[%s163 + $0x8] sm:$0xff] %vm412, %v411
      %v415 = vld [vmem:[%s153] sm:$0xf]
      %v416 = vld [vmem:[%s153 + $0x4] sm:$0xf]
      %v417 = vld [vmem:[%s158] sm:$0xf]
      %v418 = vld [vmem:[%s158 + $0x4] sm:$0xf]
      %v421 = vunpack.c.l.b16 %v415
      %v422 = vunpack.c.l.b16 %v416
      %v423 = vpack.c.b16 %v422, %v421
      %424 = vrot.lane.b32.xlu0 %v423, 104
      %v425 = vpop.permute.xlu0 %424
      %v428 = vunpack.c.l.b16 %v417
      %v429 = vunpack.c.l.b16 %v418
      %v430 = vpack.c.b16 %v429, %v428
      %431 = vrot.lane.b32.xlu0 %v430, 104
      %v432 = vpop.permute.xlu0 %431
      %v434 = vsel %vm179, %v425, 0
      %v437 = vsel %vm179, %v432, 0
      %439 = vmatprep.subr.bf16.mxu0 0
      %440 = vmatpush1.bf16.xpose.msra.mxu0 %v437
      %441 = vmatprep.subr.bf16.mxu0 0
      %442 = vmatpush1.bf16.xpose.msra.mxu0 0
      %443 = vmatprep.subr.bf16.mxu0 0
      %444 = vmatpush1.bf16.xpose.msra.mxu0 0
      %445 = vmatprep.subr.bf16.mxu0 0
      %446 = vmatpush1.bf16.xpose.msra.mxu0 0
      %447 = vmatprep.subr.bf16.mxu0 0
      %448 = vmatpush1.bf16.xpose.msra.mxu0 0
      %449 = vmatprep.subr.bf16.mxu0 0
      %450 = vmatpush1.bf16.xpose.msra.mxu0 0
      %451 = vmatprep.subr.bf16.mxu0 0
      %452 = vmatpush1.bf16.xpose.msra.mxu0 0
      %453 = vmatprep.subr.bf16.mxu0 0
      %454 = vmatpush1.bf16.xpose.msra.mxu0 0
      %455 = vmatprep.subr.bf16.mxu0 0
      %456 = vmatpush1.bf16.xpose.msra.mxu0 0
      %457 = vmatprep.subr.bf16.mxu0 0
      %458 = vmatpush1.bf16.xpose.msra.mxu0 0
      %459 = vmatprep.subr.bf16.mxu0 0
      %460 = vmatpush1.bf16.xpose.msra.mxu0 0
      %461 = vmatprep.subr.bf16.mxu0 0
      %462 = vmatpush1.bf16.xpose.msra.mxu0 0
      %463 = vmatprep.subr.bf16.mxu0 0
      %464 = vmatpush1.bf16.xpose.msra.mxu0 0
      %465 = vmatprep.subr.bf16.mxu0 0
      %466 = vmatpush1.bf16.xpose.msra.mxu0 0
      %467 = vmatprep.subr.bf16.mxu0 0
      %468 = vmatpush1.bf16.xpose.msra.mxu0 0
      %469 = vmatprep.subr.bf16.mxu0 0
      %470 = vmatpush1.bf16.xpose.msra.mxu0 0
      %471 = vmatprep.mubr.bf16.mxu0 0
      %472 = vmatmul.mubr.bf16.gmra.mrb[0].mxu0 %v434
      %v473 = vpop.f32.mrb[0].mxu0
      %v474 = vadd.f32 0.0, %v473
      %v475 = vpop.f32.mrb[0].mxu0
      %v476 = vpop.f32.mrb[0].mxu0
      %v477 = vadd.f32 0.0, %v476
      %v478 = vpop.f32.mrb[0].mxu0
      %479 = vdwg.mxu0
      %v480 = vsel %vm227, %v474, -inf
      %481 = vmax.xlane.f32.xlu0 %v480
      %v482 = vpop.xlane.xlu0 %481
      %v483 = vsel %vm227, %v477, -inf
      %484 = vmax.xlane.f32.xlu0 %v483
      %v485 = vpop.xlane.xlu0 %484
      %v486 = vsel %vm227, %v474, 0.0
      %487 = vadd.xlane.f32.xlu0 %v486
      %v488 = vpop.xlane.xlu0 %487
      %v489 = vsel %vm227, %v477, 0.0
      %490 = vadd.xlane.f32.xlu0 %v489
      %v491 = vpop.xlane.xlu0 %490
      %v492 = vmul.f32 %v488, 0.0625
      %v493 = vmul.f32 %v491, 0.0625
      %v494 = vsub.f32 %v482, %v492
      %v495 = vsub.f32 %v485, %v493
      %vm496 = vcmask 31768
      %497 = vst.msk [vmem:[%s163] sm:$0xff] %vm496, %v494
      %498 = vst.msk [vmem:[%s163 + $0x8] sm:$0xff] %vm496, %v495
      %p499 = scmp.lt.s32.totalorder %s13, 1
      %s500 = scalar_select %p499, %s13, 1
      %s501 = smul.addr %s500, 2
      %s502 = smul.addr %s501, 8
      %s503 = scalar_lea.vmem %s2, %s502
      // Predicated region
      $region29: #{teinformer_forward.37} parent=27 // pred_check
        %p504 = pneg %p83
      $region30: #{teinformer_forward.37} parent=27 // pred_check_branch
        %506 = sbr.rel (%p504) target = $region32
      $region31: #{teinformer_forward.37} parent=27 // pred_region
        _
      $region32: #{teinformer_forward.37} parent=27 // pred_fallthru
        _
    $region28: #{teinformer_forward.37} parent=5 // pred_fallthru
      _
    %p507 = scmp.le.s32.totalorder 2, %s8
    // Predicated region
    $region33: #{teinformer_forward.37} parent=5 // pred_check
      %p508 = pneg %p507
    $region34: #{teinformer_forward.37} parent=5 // pred_check_branch
      %510 = sbr.rel (%p508) target = $region36
    $region35: #{teinformer_forward.37} parent=5 // pred_region
      %s511 = ssub.s32 %s8, 2
      // Predicated region
      $region37: #{teinformer_forward.37} parent=35 // pred_check
        %p512 = pneg %p89
      $region38: #{teinformer_forward.37} parent=35 // pred_check_branch
        %514 = sbr.rel (%p512) target = $region40
      $region39: #{teinformer_forward.37} parent=35 // pred_region
        %p515 = scmp.lt.s32.totalorder %s14, 1
        %s516 = scalar_select %p515, %s14, 1
        %s517 = smul.addr %s516, 2
        %s518 = smul.addr %s517, 8
        %s519 = scalar_lea.vmem %s2, %s518
      $region40: #{teinformer_forward.37} parent=35 // pred_fallthru
        _
    $region36: #{teinformer_forward.37} parent=5 // pred_fallthru
      _
  $region6: #{teinformer_forward.37} parent=0 // loop_footer
    %s12 = sadd.s32 1, %s8
  $region7: #{teinformer_forward.37} parent=0 // loop_footer_branch
    %7 = sbr.rel target = $region3
  $region8: #{teinformer_forward.37} parent=0 // loop_exit
    _

// kernel: teinformer_forward.38
$region0: #{teinformer_forward.38}
  #allocation0 [shape = 'u32[]', space=smem, size = 0x4, offset = 0x4, fixed_abs, tag = 'smem constant byte address 0x4 - core index']
  #allocation1 [shape = 'u32[144,128]{1,0:T(1,128)}', space=vmem, size = 0x12000, scoped, tag = 'internal scratch']
  %s0 = inlined_call_operand.vmem [shape: bf16[2,15,32], index: 0, kind: input, shape index: {}]
  %s1 = inlined_call_operand.vmem [shape: bf16[2,16,96], index: 1, kind: input, shape index: {}]
  %s2 = inlined_call_operand.vmem [shape: bf16[2,15,32], index: 2, kind: output, shape index: {}]
  %s3 = sld [smem:[#allocation0]]
  $region41: #{teinformer_forward.38} parent=0
    _
  %s5 = ssub.s32 1, %s3
  %s6 = scalar_select 0, %s5, %s3
  loop: start=0, step=1, limit=4
  $region2: #{teinformer_forward.38} parent=0 // loop_pre_header
    _
  $region3: #{teinformer_forward.38} parent=0 // loop_header
    %s8 = sphi 0, %s12
    %p9 = scmp.ge.s32.totalorder %s8, 4
    %s18 = sphi 0, %s20
    %s21 = sphi 0, %s18
    %s22 = sphi 0, %s21
    %s38 = sphi 0, %s22
    %s44 = sphi 0, %s46
    %s47 = sphi 0, %s44
    %s48 = sphi 0, %s47
    %s64 = sphi 0, %s48
    %s70 = sphi 0, %s72
    %s73 = sphi 0, %s70
    %s74 = sphi 0, %s73
    %s90 = sphi 0, %s74
  $region4: #{teinformer_forward.38} parent=0 // loop_header_branch
    %11 = sbr.rel (%p9) target = $region8
  $region5: #{teinformer_forward.38} parent=0 // loop_body
    %s13 = ssub.s32 %s8, 1
    %s14 = ssub.s32 %s8, 2
    %s15 = sadd.s32 %s8, 1
    %s16 = ssub.s32 %s8, %s15
    %p17 = scmp.eq.s32.totalorder %s16, 0
    %s19 = sadd.s32 %s18, 1
    %s20 = scalar_select %p17, %s18, %s19
    %p23 = pneg %p17
    %p24 = scmp.eq.s32.totalorder %s8, 1
    %p25 = por %p23, %p24
    %p26 = scmp.ne.s32.totalorder %s18, %s21
    %p27 = scmp.eq.s32.totalorder %s8, 0
    %p28 = por %p26, %p27
    %p29 = scmp.ne.s32.totalorder %s18, %s21
    %p30 = scmp.eq.s32.totalorder %s13, 1
    %p31 = por %p29, %p30
    %p32 = scmp.ne.s32.totalorder %s21, %s22
    %p33 = scmp.eq.s32.totalorder %s13, 0
    %p34 = por %p32, %p33
    %p35 = scmp.ne.s32.totalorder %s21, %s22
    %p36 = scmp.eq.s32.totalorder %s14, 1
    %p37 = por %p35, %p36
    %p39 = scmp.ne.s32.totalorder %s22, %s38
    %p40 = scmp.eq.s32.totalorder %s14, 0
    %p41 = por %p39, %p40
    %s42 = ssub.s32 %s8, %s15
    %p43 = scmp.eq.s32.totalorder %s42, 0
    %s45 = sadd.s32 %s44, 1
    %s46 = scalar_select %p43, %s44, %s45
    %p49 = pneg %p43
    %p50 = scmp.eq.s32.totalorder %s8, 1
    %p51 = por %p49, %p50
    %p52 = scmp.ne.s32.totalorder %s44, %s47
    %p53 = scmp.eq.s32.totalorder %s8, 0
    %p54 = por %p52, %p53
    %p55 = scmp.ne.s32.totalorder %s44, %s47
    %p56 = scmp.eq.s32.totalorder %s13, 1
    %p57 = por %p55, %p56
    %p58 = scmp.ne.s32.totalorder %s47, %s48
    %p59 = scmp.eq.s32.totalorder %s13, 0
    %p60 = por %p58, %p59
    %p61 = scmp.ne.s32.totalorder %s47, %s48
    %p62 = scmp.eq.s32.totalorder %s14, 1
    %p63 = por %p61, %p62
    %p65 = scmp.ne.s32.totalorder %s48, %s64
    %p66 = scmp.eq.s32.totalorder %s14, 0
    %p67 = por %p65, %p66
    %s68 = ssub.s32 %s8, %s15
    %p69 = scmp.eq.s32.totalorder %s68, 0
    %s71 = sadd.s32 %s70, 1
    %s72 = scalar_select %p69, %s70, %s71
    %p75 = pneg %p69
    %p76 = scmp.eq.s32.totalorder %s8, 1
    %p77 = por %p75, %p76
    %p78 = scmp.ne.s32.totalorder %s70, %s73
    %p79 = scmp.eq.s32.totalorder %s8, 0
    %p80 = por %p78, %p79
    %p81 = scmp.ne.s32.totalorder %s70, %s73
    %p82 = scmp.eq.s32.totalorder %s13, 1
    %p83 = por %p81, %p82
    %p84 = scmp.ne.s32.totalorder %s73, %s74
    %p85 = scmp.eq.s32.totalorder %s13, 0
    %p86 = por %p84, %p85
    %p87 = scmp.ne.s32.totalorder %s73, %s74
    %p88 = scmp.eq.s32.totalorder %s14, 1
    %p89 = por %p87, %p88
    %p91 = scmp.ne.s32.totalorder %s74, %s90
    %p92 = scmp.eq.s32.totalorder %s14, 0
    %p93 = por %p91, %p92
    %p94 = scmp.le.s32.totalorder 1, %s8
    %p95 = scmp.lt.s32.totalorder %s8, 3
    %p96 = pnand %p94, %p95
    %p97 = pneg %p96
    // Predicated region
    $region9: #{teinformer_forward.38} parent=5 // pred_check
      _
    $region10: #{teinformer_forward.38} parent=5 // pred_check_branch
      %99 = sbr.rel (%p96) target = $region12
    $region11: #{teinformer_forward.38} parent=5 // pred_region
      %s100 = ssub.s32 %s8, 1
    $region12: #{teinformer_forward.38} parent=5 // pred_fallthru
      _
    %p101 = scmp.lt.s32.totalorder %s8, 2
    // Predicated region
    $region13: #{teinformer_forward.38} parent=5 // pred_check
      %p102 = pneg %p101
    $region14: #{teinformer_forward.38} parent=5 // pred_check_branch
      %104 = sbr.rel (%p102) target = $region16
    $region15: #{teinformer_forward.38} parent=5 // pred_region
      // Predicated region
      $region17: #{teinformer_forward.38} parent=15 // pred_check
        %p105 = pneg %p28
      $region18: #{teinformer_forward.38} parent=15 // pred_check_branch
        %107 = sbr.rel (%p105) target = $region20
      $region19: #{teinformer_forward.38} parent=15 // pred_region
        %p108 = scmp.lt.s32.totalorder %s8, 1
        %s109 = scalar_select %p108, %s8, 1
        %s110 = smul.addr %s109, 2
        %s111 = smul.addr %s110, 4
        %s112 = scalar_lea.vmem %s0, %s111
      $region20: #{teinformer_forward.38} parent=15 // pred_fallthru
        _
      // Predicated region
      $region21: #{teinformer_forward.38} parent=15 // pred_check
        %p113 = pneg %p54
      $region22: #{teinformer_forward.38} parent=15 // pred_check_branch
        %115 = sbr.rel (%p113) target = $region24
      $region23: #{teinformer_forward.38} parent=15 // pred_region
        %p116 = scmp.lt.s32.totalorder %s8, 1
        %s117 = scalar_select %p116, %s8, 1
        %s118 = smul.addr %s117, 2
        %s119 = smul.addr %s118, 4
        %s120 = scalar_lea.vmem %s1, %s119
      $region24: #{teinformer_forward.38} parent=15 // pred_fallthru
        _
    $region16: #{teinformer_forward.38} parent=5 // pred_fallthru
      _
    %p121 = scmp.le.s32.totalorder 1, %s8
    %p122 = scmp.lt.s32.totalorder %s8, 3
    %p123 = pnand %p121, %p122
    %p124 = pneg %p123
    // Predicated region
    $region25: #{teinformer_forward.38} parent=5 // pred_check
      _
    $region26: #{teinformer_forward.38} parent=5 // pred_check_branch
      %126 = sbr.rel (%p123) target = $region28
    $region27: #{teinformer_forward.38} parent=5 // pred_region
      %s127 = ssub.s32 %s8, 1
      %p128 = scmp.lt.s32.totalorder %s13, 1
      %s129 = scalar_select %p128, %s13, 1
      %s130 = smul.addr %s129, 2
      %s131 = smul.addr %s130, 4
      %s132 = scalar_lea.vmem %s0, %s131
      %p133 = pneg %p34
      %p134 = pneg %p31
      %p135 = scmp.lt.s32.totalorder %s13, 1
      %s136 = scalar_select %p135, %s13, 1
      %s137 = smul.addr %s136, 2
      %s138 = smul.addr %s137, 4
      %s139 = scalar_lea.vmem %s1, %s138
      %p140 = pneg %p60
      %p141 = pneg %p57
      %p142 = pneg %p86
      %p143 = pneg %p83
      %p144 = scmp.lt.s32.totalorder %s13, 1
      %s145 = scalar_select %p144, %s13, 1
      %s146 = smul.addr %s145, 2
      %s147 = smul.addr %s146, 4
      %s148 = scalar_lea.vmem %s2, %s147
      %p149 = scmp.lt.s32.totalorder %s13, 1
      %s150 = scalar_select %p149, %s13, 1
      %s151 = smul.addr %s150, 2
      %s152 = smul.addr %s151, 4
      %s153 = scalar_lea.vmem %s0, %s152
      %p154 = scmp.lt.s32.totalorder %s13, 1
      %s155 = scalar_select %p154, %s13, 1
      %s156 = smul.addr %s155, 2
      %s157 = smul.addr %s156, 4
      %s158 = scalar_lea.vmem %s1, %s157
      %p159 = scmp.lt.s32.totalorder %s13, 1
      %s160 = scalar_select %p159, %s13, 1
      %s161 = smul.addr %s160, 2
      %s162 = smul.addr %s161, 4
      %s163 = scalar_lea.vmem %s2, %s162
      %v165 = vld [vmem:[%s153] sm:$0xf]
      %v166 = vld [vmem:[%s153 + $0x4] sm:$0xf]
      %v167 = vld [vmem:[%s158] sm:$0xf]
      %v168 = vld [vmem:[%s158 + $0x4] sm:$0xf]
      %v171 = vunpack.c.l.b16 %v165
      %v172 = vunpack.c.l.b16 %v166
      %v173 = vpack.c.b16 %v172, %v171
      %v176 = vunpack.c.l.b16 %v167
      %v177 = vunpack.c.l.b16 %v168
      %v178 = vpack.c.b16 %v177, %v176
      %179 = vrot.lane.b32.xlu0 %v178, 96
      %v180 = vpop.permute.xlu0 %179
      %vm181 = vcmask 64512
      %v183 = vsel %vm181, %v173, 0
      %v186 = vsel %vm181, %v180, 0
      %188 = vmatprep.subr.bf16.mxu0 0
      %189 = vmatpush1.bf16.xpose.msra.mxu0 %v186
      %190 = vmatprep.subr.bf16.mxu0 0
      %191 = vmatpush1.bf16.xpose.msra.mxu0 0
      %192 = vmatprep.subr.bf16.mxu0 0
      %193 = vmatpush1.bf16.xpose.msra.mxu0 0
      %194 = vmatprep.subr.bf16.mxu0 0
      %195 = vmatpush1.bf16.xpose.msra.mxu0 0
      %196 = vmatprep.subr.bf16.mxu0 0
      %197 = vmatpush1.bf16.xpose.msra.mxu0 0
      %198 = vmatprep.subr.bf16.mxu0 0
      %199 = vmatpush1.bf16.xpose.msra.mxu0 0
      %200 = vmatprep.subr.bf16.mxu0 0
      %201 = vmatpush1.bf16.xpose.msra.mxu0 0
      %202 = vmatprep.subr.bf16.mxu0 0
      %203 = vmatpush1.bf16.xpose.msra.mxu0 0
      %204 = vmatprep.subr.bf16.mxu0 0
      %205 = vmatpush1.bf16.xpose.msra.mxu0 0
      %206 = vmatprep.subr.bf16.mxu0 0
      %207 = vmatpush1.bf16.xpose.msra.mxu0 0
      %208 = vmatprep.subr.bf16.mxu0 0
      %209 = vmatpush1.bf16.xpose.msra.mxu0 0
      %210 = vmatprep.subr.bf16.mxu0 0
      %211 = vmatpush1.bf16.xpose.msra.mxu0 0
      %212 = vmatprep.subr.bf16.mxu0 0
      %213 = vmatpush1.bf16.xpose.msra.mxu0 0
      %214 = vmatprep.subr.bf16.mxu0 0
      %215 = vmatpush1.bf16.xpose.msra.mxu0 0
      %216 = vmatprep.subr.bf16.mxu0 0
      %217 = vmatpush1.bf16.xpose.msra.mxu0 0
      %218 = vmatprep.subr.bf16.mxu0 0
      %219 = vmatpush1.bf16.xpose.msra.mxu0 0
      %220 = vmatprep.mubr.bf16.mxu0 0
      %221 = vmatmul.mubr.bf16.gmra.mrb[0].mxu0 %v183
      %v222 = vpop.f32.mrb[0].mxu0
      %v223 = vadd.f32 0.0, %v222
      %v224 = vpop.f32.mrb[0].mxu0
      %v225 = vpop.f32.mrb[0].mxu0
      %v226 = vadd.f32 0.0, %v225
      %v227 = vpop.f32.mrb[0].mxu0
      %228 = vdwg.mxu0
      %v229 = vmul.f32 %v223, 0.35355338
      %v230 = vmul.f32 %v226, 0.35355338
      %vm231 = vcmask 130048
      %v232 = vsel %vm231, %v229, -inf
      %233 = vmax.xlane.f32.xlu0 %v232
      %v234 = vpop.xlane.xlu0 %233
      %vm235 = vcmask 129024
      %v236 = vsel %vm235, %v230, -inf
      %237 = vmax.xlane.f32.xlu0 %v236
      %v238 = vpop.xlane.xlu0 %237
      %v239 = vsub.f32 %v229, %v234
      %v240 = vsub.f32 %v230, %v238
      %v241 = vmul.f32 %v239, 1.442695
      %v242 = vpow.pop %v241
      %v243 = vmul.f32 %v240, 1.442695
      %v244 = vpow.pop %v243
      %v245 = vsel %vm231, %v242, 0.0
      %246 = vadd.xlane.f32.xlu0 %v245
      %v247 = vpop.xlane.xlu0 %246
      %v248 = vsel %vm235, %v244, 0.0
      %249 = vadd.xlane.f32.xlu0 %v248
      %v250 = vpop.xlane.xlu0 %249
      %v251 = vrcp.pop %v247
      %v252 = vrcp.pop %v250
      %v253 = vmul.f32 %v242, %v251
      %v254 = vmul.f32 %v244, %v252
      %v255 = vpack.c.bf16 %v254, %v253
      %256 = vrot.lane.b32.xlu0 %v178, 64
      %v257 = vpop.permute.xlu0 %256
      %v260 = vsel %vm231, %v255, 0
      %262 = vmatprep.subr.bf16.mxu0 0
      %263 = vmatpush1.bf16.msra.mxu0 %v257
      %264 = vmatprep.subr.bf16.mxu0 0
      %265 = vmatpush1.bf16.msra.mxu0 0
      %266 = vmatprep.subr.bf16.mxu0 0
      %267 = vmatpush1.bf16.msra.mxu0 0
      %268 = vmatprep.subr.bf16.mxu0 0
      %269 = vmatpush1.bf16.msra.mxu0 0
      %270 = vmatprep.subr.bf16.mxu0 0
      %271 = vmatpush1.bf16.msra.mxu0 0
      %272 = vmatprep.subr.bf16.mxu0 0
      %273 = vmatpush1.bf16.msra.mxu0 0
      %274 = vmatprep.subr.bf16.mxu0 0
      %275 = vmatpush1.bf16.msra.mxu0 0
      %276 = vmatprep.subr.bf16.mxu0 0
      %277 = vmatpush1.bf16.msra.mxu0 0
      %278 = vmatprep.subr.bf16.mxu0 0
      %279 = vmatpush1.bf16.msra.mxu0 0
      %280 = vmatprep.subr.bf16.mxu0 0
      %281 = vmatpush1.bf16.msra.mxu0 0
      %282 = vmatprep.subr.bf16.mxu0 0
      %283 = vmatpush1.bf16.msra.mxu0 0
      %284 = vmatprep.subr.bf16.mxu0 0
      %285 = vmatpush1.bf16.msra.mxu0 0
      %286 = vmatprep.subr.bf16.mxu0 0
      %287 = vmatpush1.bf16.msra.mxu0 0
      %288 = vmatprep.subr.bf16.mxu0 0
      %289 = vmatpush1.bf16.msra.mxu0 0
      %290 = vmatprep.subr.bf16.mxu0 0
      %291 = vmatpush1.bf16.msra.mxu0 0
      %292 = vmatprep.subr.bf16.mxu0 0
      %293 = vmatpush1.bf16.msra.mxu0 0
      %294 = vmatprep.mubr.bf16.mxu0 0
      %295 = vmatmul.mubr.bf16.gmra.mrb[0].mxu0 %v260
      %v296 = vpop.f32.mrb[0].mxu0
      %v297 = vadd.f32 0.0, %v296
      %v298 = vpop.f32.mrb[0].mxu0
      %v299 = vpop.f32.mrb[0].mxu0
      %v300 = vadd.f32 0.0, %v299
      %v301 = vpop.f32.mrb[0].mxu0
      %302 = vdwg.mxu0
      %v303 = vpack.c.bf16 %v300, %v297
      %v305 = vunpack.c.l.b16 %v303
      %v306 = vunpack.c.h.b16 %v303
      %v307 = vpack.c.b16 %v305, %v305
      %v308 = vpack.c.b16 %v306, %v306
      %vm311 = vcmask 60416
      %312 = vst.msk [vmem:[%s163] sm:$0xf] %vm311, %v307
      %vm313 = vcmask 60416
      %vm314 = vsmask.f32 3328
      %vm315 = vmand %vm313, %vm314
      %v316 = vld [vmem:[%s163 + $0x4] sm:$0xf]
      %v317 = vsel %vm315, %v308, %v316
      %318 = vst [vmem:[%s163 + $0x4] sm:$0xf] %v317
      %v319 = vld [vmem:[%s153] sm:$0xf]
      %v320 = vld [vmem:[%s153 + $0x4] sm:$0xf]
      %v321 = vld [vmem:[%s158] sm:$0xf]
      %v322 = vld [vmem:[%s158 + $0x4] sm:$0xf]
      %v325 = vunpack.c.l.b16 %v319
      %v326 = vunpack.c.l.b16 %v320
      %v327 = vpack.c.b16 %v326, %v325
      %328 = vrot.lane.b32.xlu0 %v327, 120
      %v329 = vpop.permute.xlu0 %328
      %v332 = vunpack.c.l.b16 %v321
      %v333 = vunpack.c.l.b16 %v322
      %v334 = vpack.c.b16 %v333, %v332
      %335 = vrot.lane.b32.xlu0 %v334, 88
      %v336 = vpop.permute.xlu0 %335
      %v338 = vsel %vm181, %v329, 0
      %v341 = vsel %vm181, %v336, 0
      %343 = vmatprep.subr.bf16.mxu0 0
      %344 = vmatpush1.bf16.xpose.msra.mxu0 %v341
      %345 = vmatprep.subr.bf16.mxu0 0
      %346 = vmatpush1.bf16.xpose.msra.mxu0 0
      %347 = vmatprep.subr.bf16.mxu0 0
      %348 = vmatpush1.bf16.xpose.msra.mxu0 0
      %349 = vmatprep.subr.bf16.mxu0 0
      %350 = vmatpush1.bf16.xpose.msra.mxu0 0
      %351 = vmatprep.subr.bf16.mxu0 0
      %352 = vmatpush1.bf16.xpose.msra.mxu0 0
      %353 = vmatprep.subr.bf16.mxu0 0
      %354 = vmatpush1.bf16.xpose.msra.mxu0 0
      %355 = vmatprep.subr.bf16.mxu0 0
      %356 = vmatpush1.bf16.xpose.msra.mxu0 0
      %357 = vmatprep.subr.bf16.mxu0 0
      %358 = vmatpush1.bf16.xpose.msra.mxu0 0
      %359 = vmatprep.subr.bf16.mxu0 0
      %360 = vmatpush1.bf16.xpose.msra.mxu0 0
      %361 = vmatprep.subr.bf16.mxu0 0
      %362 = vmatpush1.bf16.xpose.msra.mxu0 0
      %363 = vmatprep.subr.bf16.mxu0 0
      %364 = vmatpush1.bf16.xpose.msra.mxu0 0
      %365 = vmatprep.subr.bf16.mxu0 0
      %366 = vmatpush1.bf16.xpose.msra.mxu0 0
      %367 = vmatprep.subr.bf16.mxu0 0
      %368 = vmatpush1.bf16.xpose.msra.mxu0 0
      %369 = vmatprep.subr.bf16.mxu0 0
      %370 = vmatpush1.bf16.xpose.msra.mxu0 0
      %371 = vmatprep.subr.bf16.mxu0 0
      %372 = vmatpush1.bf16.xpose.msra.mxu0 0
      %373 = vmatprep.subr.bf16.mxu0 0
      %374 = vmatpush1.bf16.xpose.msra.mxu0 0
      %375 = vmatprep.mubr.bf16.mxu0 0
      %376 = vmatmul.mubr.bf16.gmra.mrb[0].mxu0 %v338
      %v377 = vpop.f32.mrb[0].mxu0
      %v378 = vadd.f32 0.0, %v377
      %v379 = vpop.f32.mrb[0].mxu0
      %v380 = vpop.f32.mrb[0].mxu0
      %v381 = vadd.f32 0.0, %v380
      %v382 = vpop.f32.mrb[0].mxu0
      %383 = vdwg.mxu0
      %v384 = vmul.f32 %v378, 0.35355338
      %v385 = vmul.f32 %v381, 0.35355338
      %v386 = vsel %vm231, %v384, -inf
      %387 = vmax.xlane.f32.xlu0 %v386
      %v388 = vpop.xlane.xlu0 %387
      %v389 = vsel %vm235, %v385, -inf
      %390 = vmax.xlane.f32.xlu0 %v389
      %v391 = vpop.xlane.xlu0 %390
      %v392 = vsub.f32 %v384, %v388
      %v393 = vsub.f32 %v385, %v391
      %v394 = vmul.f32 %v392, 1.442695
      %v395 = vpow.pop %v394
      %v396 = vmul.f32 %v393, 1.442695
      %v397 = vpow.pop %v396
      %v398 = vsel %vm231, %v395, 0.0
      %399 = vadd.xlane.f32.xlu0 %v398
      %v400 = vpop.xlane.xlu0 %399
      %v401 = vsel %vm235, %v397, 0.0
      %402 = vadd.xlane.f32.xlu0 %v401
      %v403 = vpop.xlane.xlu0 %402
      %v404 = vrcp.pop %v400
      %v405 = vrcp.pop %v403
      %v406 = vmul.f32 %v395, %v404
      %v407 = vmul.f32 %v397, %v405
      %v408 = vpack.c.bf16 %v407, %v406
      %409 = vrot.lane.b32.xlu0 %v334, 56
      %v410 = vpop.permute.xlu0 %409
      %v413 = vsel %vm231, %v408, 0
      %415 = vmatprep.subr.bf16.mxu0 0
      %416 = vmatpush1.bf16.msra.mxu0 %v410
      %417 = vmatprep.subr.bf16.mxu0 0
      %418 = vmatpush1.bf16.msra.mxu0 0
      %419 = vmatprep.subr.bf16.mxu0 0
      %420 = vmatpush1.bf16.msra.mxu0 0
      %421 = vmatprep.subr.bf16.mxu0 0
      %422 = vmatpush1.bf16.msra.mxu0 0
      %423 = vmatprep.subr.bf16.mxu0 0
      %424 = vmatpush1.bf16.msra.mxu0 0
      %425 = vmatprep.subr.bf16.mxu0 0
      %426 = vmatpush1.bf16.msra.mxu0 0
      %427 = vmatprep.subr.bf16.mxu0 0
      %428 = vmatpush1.bf16.msra.mxu0 0
      %429 = vmatprep.subr.bf16.mxu0 0
      %430 = vmatpush1.bf16.msra.mxu0 0
      %431 = vmatprep.subr.bf16.mxu0 0
      %432 = vmatpush1.bf16.msra.mxu0 0
      %433 = vmatprep.subr.bf16.mxu0 0
      %434 = vmatpush1.bf16.msra.mxu0 0
      %435 = vmatprep.subr.bf16.mxu0 0
      %436 = vmatpush1.bf16.msra.mxu0 0
      %437 = vmatprep.subr.bf16.mxu0 0
      %438 = vmatpush1.bf16.msra.mxu0 0
      %439 = vmatprep.subr.bf16.mxu0 0
      %440 = vmatpush1.bf16.msra.mxu0 0
      %441 = vmatprep.subr.bf16.mxu0 0
      %442 = vmatpush1.bf16.msra.mxu0 0
      %443 = vmatprep.subr.bf16.mxu0 0
      %444 = vmatpush1.bf16.msra.mxu0 0
      %445 = vmatprep.subr.bf16.mxu0 0
      %446 = vmatpush1.bf16.msra.mxu0 0
      %447 = vmatprep.mubr.bf16.mxu0 0
      %448 = vmatmul.mubr.bf16.gmra.mrb[0].mxu0 %v413
      %v449 = vpop.f32.mrb[0].mxu0
      %v450 = vadd.f32 0.0, %v449
      %v451 = vpop.f32.mrb[0].mxu0
      %v452 = vpop.f32.mrb[0].mxu0
      %v453 = vadd.f32 0.0, %v452
      %v454 = vpop.f32.mrb[0].mxu0
      %455 = vdwg.mxu0
      %v456 = vpack.c.bf16 %v453, %v450
      %v458 = vunpack.c.l.b16 %v456
      %v459 = vunpack.c.h.b16 %v456
      %v460 = vpack.c.b16 %v458, %v458
      %v461 = vpack.c.b16 %v459, %v459
      %462 = vrot.lane.b32.xlu0 %v460, 8
      %v463 = vpop.permute.xlu0 %462
      %464 = vrot.lane.b32.xlu0 %v461, 8
      %v465 = vpop.permute.xlu0 %464
      %vm468 = vcmask 126016
      %469 = vst.msk [vmem:[%s163] sm:$0xf] %vm468, %v463
      %vm470 = vcmask 126016
      %vm471 = vmand %vm470, %vm314
      %v472 = vld [vmem:[%s163 + $0x4] sm:$0xf]
      %v473 = vsel %vm471, %v465, %v472
      %474 = vst [vmem:[%s163 + $0x4] sm:$0xf] %v473
      %v475 = vld [vmem:[%s153] sm:$0xf]
      %v476 = vld [vmem:[%s153 + $0x4] sm:$0xf]
      %v477 = vld [vmem:[%s158] sm:$0xf]
      %v478 = vld [vmem:[%s158 + $0x4] sm:$0xf]
      %v481 = vunpack.c.l.b16 %v475
      %v482 = vunpack.c.l.b16 %v476
      %v483 = vpack.c.b16 %v482, %v481
      %484 = vrot.lane.b32.xlu0 %v483, 112
      %v485 = vpop.permute.xlu0 %484
      %v488 = vunpack.c.l.b16 %v477
      %v489 = vunpack.c.l.b16 %v478
      %v490 = vpack.c.b16 %v489, %v488
      %491 = vrot.lane.b32.xlu0 %v490, 80
      %v492 = vpop.permute.xlu0 %491
      %v494 = vsel %vm181, %v485, 0
      %v497 = vsel %vm181, %v492, 0
      %499 = vmatprep.subr.bf16.mxu0 0
      %500 = vmatpush1.bf16.xpose.msra.mxu0 %v497
      %501 = vmatprep.subr.bf16.mxu0 0
      %502 = vmatpush1.bf16.xpose.msra.mxu0 0
      %503 = vmatprep.subr.bf16.mxu0 0
      %504 = vmatpush1.bf16.xpose.msra.mxu0 0
      %505 = vmatprep.subr.bf16.mxu0 0
      %506 = vmatpush1.bf16.xpose.msra.mxu0 0
      %507 = vmatprep.subr.bf16.mxu0 0
      %508 = vmatpush1.bf16.xpose.msra.mxu0 0
      %509 = vmatprep.subr.bf16.mxu0 0
      %510 = vmatpush1.bf16.xpose.msra.mxu0 0
      %511 = vmatprep.subr.bf16.mxu0 0
      %512 = vmatpush1.bf16.xpose.msra.mxu0 0
      %513 = vmatprep.subr.bf16.mxu0 0
      %514 = vmatpush1.bf16.xpose.msra.mxu0 0
      %515 = vmatprep.subr.bf16.mxu0 0
      %516 = vmatpush1.bf16.xpose.msra.mxu0 0
      %517 = vmatprep.subr.bf16.mxu0 0
      %518 = vmatpush1.bf16.xpose.msra.mxu0 0
      %519 = vmatprep.subr.bf16.mxu0 0
      %520 = vmatpush1.bf16.xpose.msra.mxu0 0
      %521 = vmatprep.subr.bf16.mxu0 0
      %522 = vmatpush1.bf16.xpose.msra.mxu0 0
      %523 = vmatprep.subr.bf16.mxu0 0
      %524 = vmatpush1.bf16.xpose.msra.mxu0 0
      %525 = vmatprep.subr.bf16.mxu0 0
      %526 = vmatpush1.bf16.xpose.msra.mxu0 0
      %527 = vmatprep.subr.bf16.mxu0 0
      %528 = vmatpush1.bf16.xpose.msra.mxu0 0
      %529 = vmatprep.subr.bf16.mxu0 0
      %530 = vmatpush1.bf16.xpose.msra.mxu0 0
      %531 = vmatprep.mubr.bf16.mxu0 0
      %532 = vmatmul.mubr.bf16.gmra.mrb[0].mxu0 %v494
      %v533 = vpop.f32.mrb[0].mxu0
      %v534 = vadd.f32 0.0, %v533
      %v535 = vpop.f32.mrb[0].mxu0
      %v536 = vpop.f32.mrb[0].mxu0
      %v537 = vadd.f32 0.0, %v536
      %v538 = vpop.f32.mrb[0].mxu0
      %539 = vdwg.mxu0
      %v540 = vmul.f32 %v534, 0.35355338
      %v541 = vmul.f32 %v537, 0.35355338
      %v542 = vsel %vm231, %v540, -inf
      %543 = vmax.xlane.f32.xlu0 %v542
      %v544 = vpop.xlane.xlu0 %543
      %v545 = vsel %vm235, %v541, -inf
      %546 = vmax.xlane.f32.xlu0 %v545
      %v547 = vpop.xlane.xlu0 %546
      %v548 = vsub.f32 %v540, %v544
      %v549 = vsub.f32 %v541, %v547
      %v550 = vmul.f32 %v548, 1.442695
      %v551 = vpow.pop %v550
      %v552 = vmul.f32 %v549, 1.442695
      %v553 = vpow.pop %v552
      %v554 = vsel %vm231, %v551, 0.0
      %555 = vadd.xlane.f32.xlu0 %v554
      %v556 = vpop.xlane.xlu0 %555
      %v557 = vsel %vm235, %v553, 0.0
      %558 = vadd.xlane.f32.xlu0 %v557
      %v559 = vpop.xlane.xlu0 %558
      %v560 = vrcp.pop %v556
      %v561 = vrcp.pop %v559
      %v562 = vmul.f32 %v551, %v560
      %v563 = vmul.f32 %v553, %v561
      %v564 = vpack.c.bf16 %v563, %v562
      %565 = vrot.lane.b32.xlu0 %v490, 48
      %v566 = vpop.permute.xlu0 %565
      %v569 = vsel %vm231, %v564, 0
      %571 = vmatprep.subr.bf16.mxu0 0
      %572 = vmatpush1.bf16.msra.mxu0 %v566
      %573 = vmatprep.subr.bf16.mxu0 0
      %574 = vmatpush1.bf16.msra.mxu0 0
      %575 = vmatprep.subr.bf16.mxu0 0
      %576 = vmatpush1.bf16.msra.mxu0 0
      %577 = vmatprep.subr.bf16.mxu0 0
      %578 = vmatpush1.bf16.msra.mxu0 0
      %579 = vmatprep.subr.bf16.mxu0 0
      %580 = vmatpush1.bf16.msra.mxu0 0
      %581 = vmatprep.subr.bf16.mxu0 0
      %582 = vmatpush1.bf16.msra.mxu0 0
      %583 = vmatprep.subr.bf16.mxu0 0
      %584 = vmatpush1.bf16.msra.mxu0 0
      %585 = vmatprep.subr.bf16.mxu0 0
      %586 = vmatpush1.bf16.msra.mxu0 0
      %587 = vmatprep.subr.bf16.mxu0 0
      %588 = vmatpush1.bf16.msra.mxu0 0
      %589 = vmatprep.subr.bf16.mxu0 0
      %590 = vmatpush1.bf16.msra.mxu0 0
      %591 = vmatprep.subr.bf16.mxu0 0
      %592 = vmatpush1.bf16.msra.mxu0 0
      %593 = vmatprep.subr.bf16.mxu0 0
      %594 = vmatpush1.bf16.msra.mxu0 0
      %595 = vmatprep.subr.bf16.mxu0 0
      %596 = vmatpush1.bf16.msra.mxu0 0
      %597 = vmatprep.subr.bf16.mxu0 0
      %598 = vmatpush1.bf16.msra.mxu0 0
      %599 = vmatprep.subr.bf16.mxu0 0
      %600 = vmatpush1.bf16.msra.mxu0 0
      %601 = vmatprep.subr.bf16.mxu0 0
      %602 = vmatpush1.bf16.msra.mxu0 0
      %603 = vmatprep.mubr.bf16.mxu0 0
      %604 = vmatmul.mubr.bf16.gmra.mrb[0].mxu0 %v569
      %v605 = vpop.f32.mrb[0].mxu0
      %v606 = vadd.f32 0.0, %v605
      %v607 = vpop.f32.mrb[0].mxu0
      %v608 = vpop.f32.mrb[0].mxu0
      %v609 = vadd.f32 0.0, %v608
      %v610 = vpop.f32.mrb[0].mxu0
      %611 = vdwg.mxu0
      %v612 = vpack.c.bf16 %v609, %v606
      %v614 = vunpack.c.l.b16 %v612
      %v615 = vunpack.c.h.b16 %v612
      %v616 = vpack.c.b16 %v614, %v614
      %v617 = vpack.c.b16 %v615, %v615
      %618 = vrot.lane.b32.xlu0 %v616, 16
      %v619 = vpop.permute.xlu0 %618
      %620 = vrot.lane.b32.xlu0 %v617, 16
      %v621 = vpop.permute.xlu0 %620
      %vm624 = vcmask 191616
      %625 = vst.msk [vmem:[%s163] sm:$0xf] %vm624, %v619
      %vm626 = vcmask 191616
      %vm627 = vmand %vm626, %vm314
      %v628 = vld [vmem:[%s163 + $0x4] sm:$0xf]
      %v629 = vsel %vm627, %v621, %v628
      %630 = vst [vmem:[%s163 + $0x4] sm:$0xf] %v629
      %v631 = vld [vmem:[%s153] sm:$0xf]
      %v632 = vld [vmem:[%s153 + $0x4] sm:$0xf]
      %v633 = vld [vmem:[%s158] sm:$0xf]
      %v634 = vld [vmem:[%s158 + $0x4] sm:$0xf]
      %v637 = vunpack.c.l.b16 %v631
      %v638 = vunpack.c.l.b16 %v632
      %v639 = vpack.c.b16 %v638, %v637
      %640 = vrot.lane.b32.xlu0 %v639, 104
      %v641 = vpop.permute.xlu0 %640
      %v644 = vunpack.c.l.b16 %v633
      %v645 = vunpack.c.l.b16 %v634
      %v646 = vpack.c.b16 %v645, %v644
      %647 = vrot.lane.b32.xlu0 %v646, 72
      %v648 = vpop.permute.xlu0 %647
      %v650 = vsel %vm181, %v641, 0
      %v653 = vsel %vm181, %v648, 0
      %655 = vmatprep.subr.bf16.mxu0 0
      %656 = vmatpush1.bf16.xpose.msra.mxu0 %v653
      %657 = vmatprep.subr.bf16.mxu0 0
      %658 = vmatpush1.bf16.xpose.msra.mxu0 0
      %659 = vmatprep.subr.bf16.mxu0 0
      %660 = vmatpush1.bf16.xpose.msra.mxu0 0
      %661 = vmatprep.subr.bf16.mxu0 0
      %662 = vmatpush1.bf16.xpose.msra.mxu0 0
      %663 = vmatprep.subr.bf16.mxu0 0
      %664 = vmatpush1.bf16.xpose.msra.mxu0 0
      %665 = vmatprep.subr.bf16.mxu0 0
      %666 = vmatpush1.bf16.xpose.msra.mxu0 0
      %667 = vmatprep.subr.bf16.mxu0 0
      %668 = vmatpush1.bf16.xpose.msra.mxu0 0
      %669 = vmatprep.subr.bf16.mxu0 0
      %670 = vmatpush1.bf16.xpose.msra.mxu0 0
      %671 = vmatprep.subr.bf16.mxu0 0
      %672 = vmatpush1.bf16.xpose.msra.mxu0 0
      %673 = vmatprep.subr.bf16.mxu0 0
      %674 = vmatpush1.bf16.xpose.msra.mxu0 0
      %675 = vmatprep.subr.bf16.mxu0 0
      %676 = vmatpush1.bf16.xpose.msra.mxu0 0
      %677 = vmatprep.subr.bf16.mxu0 0
      %678 = vmatpush1.bf16.xpose.msra.mxu0 0
      %679 = vmatprep.subr.bf16.mxu0 0
      %680 = vmatpush1.bf16.xpose.msra.mxu0 0
      %681 = vmatprep.subr.bf16.mxu0 0
      %682 = vmatpush1.bf16.xpose.msra.mxu0 0
      %683 = vmatprep.subr.bf16.mxu0 0
      %684 = vmatpush1.bf16.xpose.msra.mxu0 0
      %685 = vmatprep.subr.bf16.mxu0 0
      %686 = vmatpush1.bf16.xpose.msra.mxu0 0
      %687 = vmatprep.mubr.bf16.mxu0 0
      %688 = vmatmul.mubr.bf16.gmra.mrb[0].mxu0 %v650
      %v689 = vpop.f32.mrb[0].mxu0
      %v690 = vadd.f32 0.0, %v689
      %v691 = vpop.f32.mrb[0].mxu0
      %v692 = vpop.f32.mrb[0].mxu0
      %v693 = vadd.f32 0.0, %v692
      %v694 = vpop.f32.mrb[0].mxu0
      %695 = vdwg.mxu0
      %v696 = vmul.f32 %v690, 0.35355338
      %v697 = vmul.f32 %v693, 0.35355338
      %v698 = vsel %vm231, %v696, -inf
      %699 = vmax.xlane.f32.xlu0 %v698
      %v700 = vpop.xlane.xlu0 %699
      %v701 = vsel %vm235, %v697, -inf
      %702 = vmax.xlane.f32.xlu0 %v701
      %v703 = vpop.xlane.xlu0 %702
      %v704 = vsub.f32 %v696, %v700
      %v705 = vsub.f32 %v697, %v703
      %v706 = vmul.f32 %v704, 1.442695
      %v707 = vpow.pop %v706
      %v708 = vmul.f32 %v705, 1.442695
      %v709 = vpow.pop %v708
      %v710 = vsel %vm231, %v707, 0.0
      %711 = vadd.xlane.f32.xlu0 %v710
      %v712 = vpop.xlane.xlu0 %711
      %v713 = vsel %vm235, %v709, 0.0
      %714 = vadd.xlane.f32.xlu0 %v713
      %v715 = vpop.xlane.xlu0 %714
      %v716 = vrcp.pop %v712
      %v717 = vrcp.pop %v715
      %v718 = vmul.f32 %v707, %v716
      %v719 = vmul.f32 %v709, %v717
      %v720 = vpack.c.bf16 %v719, %v718
      %721 = vrot.lane.b32.xlu0 %v646, 40
      %v722 = vpop.permute.xlu0 %721
      %v725 = vsel %vm231, %v720, 0
      %727 = vmatprep.subr.bf16.mxu0 0
      %728 = vmatpush1.bf16.msra.mxu0 %v722
      %729 = vmatprep.subr.bf16.mxu0 0
      %730 = vmatpush1.bf16.msra.mxu0 0
      %731 = vmatprep.subr.bf16.mxu0 0
      %732 = vmatpush1.bf16.msra.mxu0 0
      %733 = vmatprep.subr.bf16.mxu0 0
      %734 = vmatpush1.bf16.msra.mxu0 0
      %735 = vmatprep.subr.bf16.mxu0 0
      %736 = vmatpush1.bf16.msra.mxu0 0
      %737 = vmatprep.subr.bf16.mxu0 0
      %738 = vmatpush1.bf16.msra.mxu0 0
      %739 = vmatprep.subr.bf16.mxu0 0
      %740 = vmatpush1.bf16.msra.mxu0 0
      %741 = vmatprep.subr.bf16.mxu0 0
      %742 = vmatpush1.bf16.msra.mxu0 0
      %743 = vmatprep.subr.bf16.mxu0 0
      %744 = vmatpush1.bf16.msra.mxu0 0
      %745 = vmatprep.subr.bf16.mxu0 0
      %746 = vmatpush1.bf16.msra.mxu0 0
      %747 = vmatprep.subr.bf16.mxu0 0
      %748 = vmatpush1.bf16.msra.mxu0 0
      %749 = vmatprep.subr.bf16.mxu0 0
      %750 = vmatpush1.bf16.msra.mxu0 0
      %751 = vmatprep.subr.bf16.mxu0 0
      %752 = vmatpush1.bf16.msra.mxu0 0
      %753 = vmatprep.subr.bf16.mxu0 0
      %754 = vmatpush1.bf16.msra.mxu0 0
      %755 = vmatprep.subr.bf16.mxu0 0
      %756 = vmatpush1.bf16.msra.mxu0 0
      %757 = vmatprep.subr.bf16.mxu0 0
      %758 = vmatpush1.bf16.msra.mxu0 0
      %759 = vmatprep.mubr.bf16.mxu0 0
      %760 = vmatmul.mubr.bf16.gmra.mrb[0].mxu0 %v725
      %v761 = vpop.f32.mrb[0].mxu0
      %v762 = vadd.f32 0.0, %v761
      %v763 = vpop.f32.mrb[0].mxu0
      %v764 = vpop.f32.mrb[0].mxu0
      %v765 = vadd.f32 0.0, %v764
      %v766 = vpop.f32.mrb[0].mxu0
      %767 = vdwg.mxu0
      %v768 = vpack.c.bf16 %v765, %v762
      %v770 = vunpack.c.l.b16 %v768
      %v771 = vunpack.c.h.b16 %v768
      %v772 = vpack.c.b16 %v770, %v770
      %v773 = vpack.c.b16 %v771, %v771
      %774 = vrot.lane.b32.xlu0 %v772, 24
      %v775 = vpop.permute.xlu0 %774
      %776 = vrot.lane.b32.xlu0 %v773, 24
      %v777 = vpop.permute.xlu0 %776
      %vm780 = vcmask 257216
      %781 = vst.msk [vmem:[%s163] sm:$0xf] %vm780, %v775
      %vm782 = vcmask 257216
      %vm783 = vmand %vm782, %vm314
      %v784 = vld [vmem:[%s163 + $0x4] sm:$0xf]
      %v785 = vsel %vm783, %v777, %v784
      %786 = vst [vmem:[%s163 + $0x4] sm:$0xf] %v785
      %p787 = scmp.lt.s32.totalorder %s13, 1
      %s788 = scalar_select %p787, %s13, 1
      %s789 = smul.addr %s788, 2
      %s790 = smul.addr %s789, 4
      %s791 = scalar_lea.vmem %s2, %s790
      // Predicated region
      $region29: #{teinformer_forward.38} parent=27 // pred_check
        %p792 = pneg %p83
      $region30: #{teinformer_forward.38} parent=27 // pred_check_branch
        %794 = sbr.rel (%p792) target = $region32
      $region31: #{teinformer_forward.38} parent=27 // pred_region
        _
      $region32: #{teinformer_forward.38} parent=27 // pred_fallthru
        _
    $region28: #{teinformer_forward.38} parent=5 // pred_fallthru
      _
    %p795 = scmp.le.s32.totalorder 2, %s8
    // Predicated region
    $region33: #{teinformer_forward.38} parent=5 // pred_check
      %p796 = pneg %p795
    $region34: #{teinformer_forward.38} parent=5 // pred_check_branch
      %798 = sbr.rel (%p796) target = $region36
    $region35: #{teinformer_forward.38} parent=5 // pred_region
      %s799 = ssub.s32 %s8, 2
      // Predicated region
      $region37: #{teinformer_forward.38} parent=35 // pred_check
        %p800 = pneg %p89
      $region38: #{teinformer_forward.38} parent=35 // pred_check_branch
        %802 = sbr.rel (%p800) target = $region40
      $region39: #{teinformer_forward.38} parent=35 // pred_region
        %p803 = scmp.lt.s32.totalorder %s14, 1
        %s804 = scalar_select %p803, %s14, 1
        %s805 = smul.addr %s804, 2
        %s806 = smul.addr %s805, 4
        %s807 = scalar_lea.vmem %s2, %s806
      $region40: #{teinformer_forward.38} parent=35 // pred_fallthru
        _
    $region36: #{teinformer_forward.38} parent=5 // pred_fallthru
      _
  $region6: #{teinformer_forward.38} parent=0 // loop_footer
    %s12 = sadd.s32 1, %s8
  $region7: #{teinformer_forward.38} parent=0 // loop_footer_branch
    %7 = sbr.rel target = $region3
  $region8: #{teinformer_forward.38} parent=0 // loop_exit
    _

// kernel: teinformer_forward.39
$region0: #{teinformer_forward.39}
  #allocation0 [shape = 'u32[]', space=smem, size = 0x4, offset = 0x4, fixed_abs, tag = 'smem constant byte address 0x4 - core index']
  #allocation1 [shape = 'u32[144,128]{1,0:T(1,128)}', space=vmem, size = 0x12000, scoped, tag = 'internal scratch']
  #allocation2 [shape = 'f32[32,32]{1,0:T(8,128)}', space=vmem, size = 0x4000, scoped, tag = 'scratch operand']
  %s0 = inlined_call_operand.vmem [shape: bf16[32,32], index: 0, kind: input, shape index: {}]
  %s1 = inlined_call_operand.vmem [shape: bf16[32,32], index: 1, kind: input, shape index: {}]
  %s2 = inlined_call_operand.vmem [shape: f32[1,32], index: 2, kind: input, shape index: {}]
  %s3 = inlined_call_operand.vmem [shape: f32[32,32], index: 3, kind: output, shape index: {}]
  %s4 = sld [smem:[#allocation0]]
  $region30: #{teinformer_forward.39} parent=0
    _
  %s6 = ssub.s32 1, %s4
  %s7 = scalar_select 0, %s6, %s4
  // Predicated region
  $region2: #{teinformer_forward.39} parent=0 // pred_check
    _
  $region3: #{teinformer_forward.39} parent=0 // pred_check_branch
    %9 = sbr.rel (0) target = $region5
  $region4: #{teinformer_forward.39} parent=0 // pred_region
    _
  $region5: #{teinformer_forward.39} parent=0 // pred_fallthru
    _
  // Predicated region
  $region6: #{teinformer_forward.39} parent=0 // pred_check
    _
  $region7: #{teinformer_forward.39} parent=0 // pred_check_branch
    %11 = sbr.rel (0) target = $region9
  $region8: #{teinformer_forward.39} parent=0 // pred_region
    _
  $region9: #{teinformer_forward.39} parent=0 // pred_fallthru
    _
  // Predicated region
  $region10: #{teinformer_forward.39} parent=0 // pred_check
    _
  $region11: #{teinformer_forward.39} parent=0 // pred_check_branch
    %13 = sbr.rel (0) target = $region13
  $region12: #{teinformer_forward.39} parent=0 // pred_region
    _
  $region13: #{teinformer_forward.39} parent=0 // pred_fallthru
    _
  %p15 = scmp.eq.s32.totalorder 0, 0
  // Predicated region
  $region14: #{teinformer_forward.39} parent=0 // pred_check
    %p16 = pneg %p15
  $region15: #{teinformer_forward.39} parent=0 // pred_check_branch
    %18 = sbr.rel (%p16) target = $region17
  $region16: #{teinformer_forward.39} parent=0 // pred_region
    %vm19 = vcmask 261120
    %20 = vst.msk [vmem:[#allocation2] sm:$0xff] %vm19, 0.0
    %21 = vst.msk [vmem:[#allocation2 + $0x8] sm:$0xff] %vm19, 0.0
    %22 = vst.msk [vmem:[#allocation2 + $0x10] sm:$0xff] %vm19, 0.0
    %23 = vst.msk [vmem:[#allocation2 + $0x18] sm:$0xff] %vm19, 0.0
  $region17: #{teinformer_forward.39} parent=0 // pred_fallthru
    _
  %v24 = vld [vmem:[#allocation2] sm:$0xff]
  %v25 = vld [vmem:[#allocation2 + $0x8] sm:$0xff]
  %v26 = vld [vmem:[#allocation2 + $0x10] sm:$0xff]
  %v27 = vld [vmem:[#allocation2 + $0x18] sm:$0xff]
  %v28 = vld [vmem:[%s0] sm:$0xf]
  %v29 = vld [vmem:[%s0 + $0x4] sm:$0xf]
  %v30 = vld [vmem:[%s0 + $0x8] sm:$0xf]
  %v31 = vld [vmem:[%s0 + $0xc] sm:$0xf]
  %v32 = vld [vmem:[%s1] sm:$0xf]
  %v33 = vld [vmem:[%s1 + $0x4] sm:$0xf]
  %v34 = vld [vmem:[%s1 + $0x8] sm:$0xf]
  %v35 = vld [vmem:[%s1 + $0xc] sm:$0xf]
  %v40 = vunpack.c.l.b16 %v28
  %v41 = vunpack.c.l.b16 %v29
  %v42 = vunpack.c.l.b16 %v30
  %v43 = vunpack.c.l.b16 %v31
  %v44 = vpack.c.b16 %v41, %v40
  %v45 = vpack.c.b16 %v43, %v42
  %v50 = vunpack.c.l.b16 %v32
  %v51 = vunpack.c.l.b16 %v33
  %v52 = vunpack.c.l.b16 %v34
  %v53 = vunpack.c.l.b16 %v35
  %v54 = vpack.c.b16 %v51, %v50
  %v55 = vpack.c.b16 %v53, %v52
  %vm58 = vcmask 261120
  %v60 = vsel %vm58, %v44, 0
  %v63 = vsel %vm58, %v45, 0
  %65 = vmatprep.subr.bf16.mxu0 0
  %66 = vmatpush1.bf16.msra.mxu0 %v54
  %67 = vmatprep.subr.bf16.mxu0 0
  %68 = vmatpush1.bf16.msra.mxu0 %v55
  %69 = vmatprep.subr.bf16.mxu0 0
  %70 = vmatpush1.bf16.msra.mxu0 0
  %71 = vmatprep.subr.bf16.mxu0 0
  %72 = vmatpush1.bf16.msra.mxu0 0
  %73 = vmatprep.subr.bf16.mxu0 0
  %74 = vmatpush1.bf16.msra.mxu0 0
  %75 = vmatprep.subr.bf16.mxu0 0
  %76 = vmatpush1.bf16.msra.mxu0 0
  %77 = vmatprep.subr.bf16.mxu0 0
  %78 = vmatpush1.bf16.msra.mxu0 0
  %79 = vmatprep.subr.bf16.mxu0 0
  %80 = vmatpush1.bf16.msra.mxu0 0
  %81 = vmatprep.subr.bf16.mxu0 0
  %82 = vmatpush1.bf16.msra.mxu0 0
  %83 = vmatprep.subr.bf16.mxu0 0
  %84 = vmatpush1.bf16.msra.mxu0 0
  %85 = vmatprep.subr.bf16.mxu0 0
  %86 = vmatpush1.bf16.msra.mxu0 0
  %87 = vmatprep.subr.bf16.mxu0 0
  %88 = vmatpush1.bf16.msra.mxu0 0
  %89 = vmatprep.subr.bf16.mxu0 0
  %90 = vmatpush1.bf16.msra.mxu0 0
  %91 = vmatprep.subr.bf16.mxu0 0
  %92 = vmatpush1.bf16.msra.mxu0 0
  %93 = vmatprep.subr.bf16.mxu0 0
  %94 = vmatpush1.bf16.msra.mxu0 0
  %95 = vmatprep.subr.bf16.mxu0 0
  %96 = vmatpush1.bf16.msra.mxu0 0
  %97 = vmatprep.mubr.bf16.mxu0 0
  %98 = vmatmul.mubr.bf16.gmra.mrb[0].mxu0 %v60
  %v99 = vpop.f32.mrb[0].mxu0
  %v100 = vadd.f32 0.0, %v99
  %v101 = vpop.f32.mrb[0].mxu0
  %v102 = vpop.f32.mrb[0].mxu0
  %v103 = vadd.f32 0.0, %v102
  %v104 = vpop.f32.mrb[0].mxu0
  %105 = vmatprep.mubr.bf16.mxu0 0
  %106 = vmatmul.mubr.bf16.gmra.mrb[0].mxu0 %v63
  %v107 = vpop.f32.mrb[0].mxu0
  %v108 = vadd.f32 0.0, %v107
  %v109 = vpop.f32.mrb[0].mxu0
  %v110 = vpop.f32.mrb[0].mxu0
  %v111 = vadd.f32 0.0, %v110
  %v112 = vpop.f32.mrb[0].mxu0
  %113 = vdwg.mxu0
  %v114 = vadd.f32 %v24, %v100
  %v115 = vadd.f32 %v25, %v103
  %v116 = vadd.f32 %v26, %v108
  %v117 = vadd.f32 %v27, %v111
  %118 = vst.msk [vmem:[#allocation2] sm:$0xff] %vm58, %v114
  %119 = vst.msk [vmem:[#allocation2 + $0x8] sm:$0xff] %vm58, %v115
  %120 = vst.msk [vmem:[#allocation2 + $0x10] sm:$0xff] %vm58, %v116
  %121 = vst.msk [vmem:[#allocation2 + $0x18] sm:$0xff] %vm58, %v117
  // Predicated region
  $region18: #{teinformer_forward.39} parent=0 // pred_check
    %p122 = pneg %p15
  $region19: #{teinformer_forward.39} parent=0 // pred_check_branch
    %124 = sbr.rel (%p122) target = $region21
  $region20: #{teinformer_forward.39} parent=0 // pred_region
    %v125 = vld [vmem:[#allocation2] sm:$0xff]
    %v126 = vld [vmem:[#allocation2 + $0x8] sm:$0xff]
    %v127 = vld [vmem:[#allocation2 + $0x10] sm:$0xff]
    %v128 = vld [vmem:[#allocation2 + $0x18] sm:$0xff]
    %v129 = vld [vmem:[%s2] sm:$0x1]
    %v131 = vlaneseq
    %v132 = vshrl.u32 %v131, 7
    %v133 = vsub.s32 0, %v132
    %v134 = vrot.slane %v129, %v133
    %v136 = vadd.f32 %v125, %v134
    %v137 = vadd.f32 %v126, %v134
    %v138 = vadd.f32 %v127, %v134
    %v139 = vadd.f32 %v128, %v134
    %140 = vst.msk [vmem:[%s3] sm:$0xff] %vm58, %v136
    %141 = vst.msk [vmem:[%s3 + $0x8] sm:$0xff] %vm58, %v137
    %142 = vst.msk [vmem:[%s3 + $0x10] sm:$0xff] %vm58, %v138
    %143 = vst.msk [vmem:[%s3 + $0x18] sm:$0xff] %vm58, %v139
  $region21: #{teinformer_forward.39} parent=0 // pred_fallthru
    _
  // Predicated region
  $region22: #{teinformer_forward.39} parent=0 // pred_check
    _
  $region23: #{teinformer_forward.39} parent=0 // pred_check_branch
    %145 = sbr.rel (0) target = $region25
  $region24: #{teinformer_forward.39} parent=0 // pred_region
    _
  $region25: #{teinformer_forward.39} parent=0 // pred_fallthru
    _
  // Predicated region
  $region26: #{teinformer_forward.39} parent=0 // pred_check
    _
  $region27: #{teinformer_forward.39} parent=0 // pred_check_branch
    %147 = sbr.rel (0) target = $region29
  $region28: #{teinformer_forward.39} parent=0 // pred_region
    _
  $region29: #{teinformer_forward.39} parent=0 // pred_fallthru
    _

// kernel: teinformer_forward.40
$region0: #{teinformer_forward.40}
  #allocation0 [shape = 'u32[]', space=smem, size = 0x4, offset = 0x4, fixed_abs, tag = 'smem constant byte address 0x4 - core index']
  #allocation1 [shape = 'u32[144,128]{1,0:T(1,128)}', space=vmem, size = 0x12000, scoped, tag = 'internal scratch']
  %s0 = inlined_call_operand.vmem [shape: bf16[32,32], index: 0, kind: input, shape index: {}]
  %s1 = inlined_call_operand.vmem [shape: f32[32,32], index: 1, kind: input, shape index: {}]
  %s2 = inlined_call_operand.vmem [shape: f32[1,32], index: 2, kind: input, shape index: {}]
  %s3 = inlined_call_operand.vmem [shape: f32[1,32], index: 3, kind: input, shape index: {}]
  %s4 = inlined_call_operand.vmem [shape: bf16[32,32], index: 4, kind: output, shape index: {}]
  %s5 = sld [smem:[#allocation0]]
  $region26: #{teinformer_forward.40} parent=0
    _
  %s7 = ssub.s32 1, %s5
  %s8 = scalar_select 0, %s7, %s5
  // Predicated region
  $region2: #{teinformer_forward.40} parent=0 // pred_check
    _
  $region3: #{teinformer_forward.40} parent=0 // pred_check_branch
    %10 = sbr.rel (0) target = $region5
  $region4: #{teinformer_forward.40} parent=0 // pred_region
    _
  $region5: #{teinformer_forward.40} parent=0 // pred_fallthru
    _
  // Predicated region
  $region6: #{teinformer_forward.40} parent=0 // pred_check
    _
  $region7: #{teinformer_forward.40} parent=0 // pred_check_branch
    %12 = sbr.rel (0) target = $region9
  $region8: #{teinformer_forward.40} parent=0 // pred_region
    _
  $region9: #{teinformer_forward.40} parent=0 // pred_fallthru
    _
  // Predicated region
  $region10: #{teinformer_forward.40} parent=0 // pred_check
    _
  $region11: #{teinformer_forward.40} parent=0 // pred_check_branch
    %14 = sbr.rel (0) target = $region13
  $region12: #{teinformer_forward.40} parent=0 // pred_region
    _
  $region13: #{teinformer_forward.40} parent=0 // pred_fallthru
    _
  // Predicated region
  $region14: #{teinformer_forward.40} parent=0 // pred_check
    _
  $region15: #{teinformer_forward.40} parent=0 // pred_check_branch
    %16 = sbr.rel (0) target = $region17
  $region16: #{teinformer_forward.40} parent=0 // pred_region
    _
  $region17: #{teinformer_forward.40} parent=0 // pred_fallthru
    _
  %v17 = vld [vmem:[%s0] sm:$0xf]
  %v18 = vld [vmem:[%s0 + $0x4] sm:$0xf]
  %v19 = vld [vmem:[%s0 + $0x8] sm:$0xf]
  %v20 = vld [vmem:[%s0 + $0xc] sm:$0xf]
  %v21 = vunpack.c.l.bf16 %v17
  %v22 = vunpack.c.l.bf16 %v18
  %v23 = vunpack.c.l.bf16 %v19
  %v24 = vunpack.c.l.bf16 %v20
  %v25 = vld [vmem:[%s1] sm:$0xff]
  %v26 = vld [vmem:[%s1 + $0x8] sm:$0xff]
  %v27 = vld [vmem:[%s1 + $0x10] sm:$0xff]
  %v28 = vld [vmem:[%s1 + $0x18] sm:$0xff]
  %v29 = vadd.f32 %v21, %v25
  %v30 = vadd.f32 %v22, %v26
  %v31 = vadd.f32 %v23, %v27
  %v32 = vadd.f32 %v24, %v28
  %vm33 = vcmask 261120
  %v34 = vsel %vm33, %v29, 0.0
  %35 = vadd.xlane.f32.xlu0 %v34
  %v36 = vpop.xlane.xlu0 %35
  %v37 = vsel %vm33, %v30, 0.0
  %38 = vadd.xlane.f32.xlu0 %v37
  %v39 = vpop.xlane.xlu0 %38
  %v40 = vsel %vm33, %v31, 0.0
  %41 = vadd.xlane.f32.xlu0 %v40
  %v42 = vpop.xlane.xlu0 %41
  %v43 = vsel %vm33, %v32, 0.0
  %44 = vadd.xlane.f32.xlu0 %v43
  %v45 = vpop.xlane.xlu0 %44
  %v46 = vrcp.pop 32.0
  %v47 = vmul.f32 %v36, %v46
  %v48 = vmul.f32 %v39, %v46
  %v49 = vmul.f32 %v42, %v46
  %v50 = vmul.f32 %v45, %v46
  %v51 = vsub.f32 %v29, %v47
  %v52 = vsub.f32 %v30, %v48
  %v53 = vsub.f32 %v31, %v49
  %v54 = vsub.f32 %v32, %v50
  %v55 = vmul.f32 %v51, %v51
  %v56 = vmul.f32 %v52, %v52
  %v57 = vmul.f32 %v53, %v53
  %v58 = vmul.f32 %v54, %v54
  %v59 = vsel %vm33, %v55, 0.0
  %60 = vadd.xlane.f32.xlu0 %v59
  %v61 = vpop.xlane.xlu0 %60
  %v62 = vsel %vm33, %v56, 0.0
  %63 = vadd.xlane.f32.xlu0 %v62
  %v64 = vpop.xlane.xlu0 %63
  %v65 = vsel %vm33, %v57, 0.0
  %66 = vadd.xlane.f32.xlu0 %v65
  %v67 = vpop.xlane.xlu0 %66
  %v68 = vsel %vm33, %v58, 0.0
  %69 = vadd.xlane.f32.xlu0 %v68
  %v70 = vpop.xlane.xlu0 %69
  %v71 = vmul.f32 %v61, %v46
  %v72 = vmul.f32 %v64, %v46
  %v73 = vmul.f32 %v67, %v46
  %v74 = vmul.f32 %v70, %v46
  %v75 = vadd.f32 %v71, 1e-05
  %v76 = vadd.f32 %v72, 1e-05
  %v77 = vadd.f32 %v73, 1e-05
  %v78 = vadd.f32 %v74, 1e-05
  %v79 = vrsqrt.pop %v75
  %v80 = vrsqrt.pop %v76
  %v81 = vrsqrt.pop %v77
  %v82 = vrsqrt.pop %v78
  %v83 = vmul.f32 %v51, %v79
  %v84 = vmul.f32 %v52, %v80
  %v85 = vmul.f32 %v53, %v81
  %v86 = vmul.f32 %v54, %v82
  %v87 = vld [vmem:[%s2] sm:$0x1]
  %v89 = vlaneseq
  %v90 = vshrl.u32 %v89, 7
  %v91 = vsub.s32 0, %v90
  %v92 = vrot.slane %v87, %v91
  %v94 = vmul.f32 %v83, %v92
  %v95 = vmul.f32 %v84, %v92
  %v96 = vmul.f32 %v85, %v92
  %v97 = vmul.f32 %v86, %v92
  %v98 = vld [vmem:[%s3] sm:$0x1]
  %v100 = vlaneseq
  %v101 = vshrl.u32 %v100, 7
  %v102 = vsub.s32 0, %v101
  %v103 = vrot.slane %v98, %v102
  %v105 = vadd.f32 %v94, %v103
  %v106 = vadd.f32 %v95, %v103
  %v107 = vadd.f32 %v96, %v103
  %v108 = vadd.f32 %v97, %v103
  %v109 = vpack.c.bf16 %v106, %v105
  %v110 = vpack.c.bf16 %v108, %v107
  %v113 = vunpack.c.l.b16 %v109
  %v114 = vunpack.c.h.b16 %v109
  %v115 = vunpack.c.l.b16 %v110
  %v116 = vunpack.c.h.b16 %v110
  %v117 = vpack.c.b16 %v113, %v113
  %v118 = vpack.c.b16 %v114, %v114
  %v119 = vpack.c.b16 %v115, %v115
  %v120 = vpack.c.b16 %v116, %v116
  %vm125 = vcmask 257024
  %126 = vst.msk [vmem:[%s4] sm:$0xf] %vm125, %v117
  %127 = vst.msk [vmem:[%s4 + $0x4] sm:$0xf] %vm125, %v118
  %128 = vst.msk [vmem:[%s4 + $0x8] sm:$0xf] %vm125, %v119
  %129 = vst.msk [vmem:[%s4 + $0xc] sm:$0xf] %vm125, %v120
  // Predicated region
  $region18: #{teinformer_forward.40} parent=0 // pred_check
    _
  $region19: #{teinformer_forward.40} parent=0 // pred_check_branch
    %131 = sbr.rel (0) target = $region21
  $region20: #{teinformer_forward.40} parent=0 // pred_region
    _
  $region21: #{teinformer_forward.40} parent=0 // pred_fallthru
    _
  // Predicated region
  $region22: #{teinformer_forward.40} parent=0 // pred_check
    _
  $region23: #{teinformer_forward.40} parent=0 // pred_check_branch
    %133 = sbr.rel (0) target = $region25
  $region24: #{teinformer_forward.40} parent=0 // pred_region
    _
  $region25: #{teinformer_forward.40} parent=0 // pred_fallthru
    _

// kernel: teinformer_forward.41
$region0: #{teinformer_forward.41}
  #allocation0 [shape = 'u32[]', space=smem, size = 0x4, offset = 0x4, fixed_abs, tag = 'smem constant byte address 0x4 - core index']
  #allocation1 [shape = 'u32[144,128]{1,0:T(1,128)}', space=vmem, size = 0x12000, scoped, tag = 'internal scratch']
  #allocation2 [shape = 'f32[32,32]{1,0:T(8,128)}', space=vmem, size = 0x4000, scoped, tag = 'scratch operand']
  %s0 = inlined_call_operand.vmem [shape: bf16[32,32], index: 0, kind: input, shape index: {}]
  %s1 = inlined_call_operand.vmem [shape: bf16[32,32], index: 1, kind: input, shape index: {}]
  %s2 = inlined_call_operand.vmem [shape: f32[1,32], index: 2, kind: input, shape index: {}]
  %s3 = inlined_call_operand.vmem [shape: bf16[32,32], index: 3, kind: output, shape index: {}]
  %s4 = sld [smem:[#allocation0]]
  $region30: #{teinformer_forward.41} parent=0
    _
  %s6 = ssub.s32 1, %s4
  %s7 = scalar_select 0, %s6, %s4
  // Predicated region
  $region2: #{teinformer_forward.41} parent=0 // pred_check
    _
  $region3: #{teinformer_forward.41} parent=0 // pred_check_branch
    %9 = sbr.rel (0) target = $region5
  $region4: #{teinformer_forward.41} parent=0 // pred_region
    _
  $region5: #{teinformer_forward.41} parent=0 // pred_fallthru
    _
  // Predicated region
  $region6: #{teinformer_forward.41} parent=0 // pred_check
    _
  $region7: #{teinformer_forward.41} parent=0 // pred_check_branch
    %11 = sbr.rel (0) target = $region9
  $region8: #{teinformer_forward.41} parent=0 // pred_region
    _
  $region9: #{teinformer_forward.41} parent=0 // pred_fallthru
    _
  // Predicated region
  $region10: #{teinformer_forward.41} parent=0 // pred_check
    _
  $region11: #{teinformer_forward.41} parent=0 // pred_check_branch
    %13 = sbr.rel (0) target = $region13
  $region12: #{teinformer_forward.41} parent=0 // pred_region
    _
  $region13: #{teinformer_forward.41} parent=0 // pred_fallthru
    _
  %p15 = scmp.eq.s32.totalorder 0, 0
  // Predicated region
  $region14: #{teinformer_forward.41} parent=0 // pred_check
    %p16 = pneg %p15
  $region15: #{teinformer_forward.41} parent=0 // pred_check_branch
    %18 = sbr.rel (%p16) target = $region17
  $region16: #{teinformer_forward.41} parent=0 // pred_region
    %vm19 = vcmask 261120
    %20 = vst.msk [vmem:[#allocation2] sm:$0xff] %vm19, 0.0
    %21 = vst.msk [vmem:[#allocation2 + $0x8] sm:$0xff] %vm19, 0.0
    %22 = vst.msk [vmem:[#allocation2 + $0x10] sm:$0xff] %vm19, 0.0
    %23 = vst.msk [vmem:[#allocation2 + $0x18] sm:$0xff] %vm19, 0.0
  $region17: #{teinformer_forward.41} parent=0 // pred_fallthru
    _
  %v24 = vld [vmem:[#allocation2] sm:$0xff]
  %v25 = vld [vmem:[#allocation2 + $0x8] sm:$0xff]
  %v26 = vld [vmem:[#allocation2 + $0x10] sm:$0xff]
  %v27 = vld [vmem:[#allocation2 + $0x18] sm:$0xff]
  %v28 = vld [vmem:[%s0] sm:$0xf]
  %v29 = vld [vmem:[%s0 + $0x4] sm:$0xf]
  %v30 = vld [vmem:[%s0 + $0x8] sm:$0xf]
  %v31 = vld [vmem:[%s0 + $0xc] sm:$0xf]
  %v32 = vld [vmem:[%s1] sm:$0xf]
  %v33 = vld [vmem:[%s1 + $0x4] sm:$0xf]
  %v34 = vld [vmem:[%s1 + $0x8] sm:$0xf]
  %v35 = vld [vmem:[%s1 + $0xc] sm:$0xf]
  %v40 = vunpack.c.l.b16 %v28
  %v41 = vunpack.c.l.b16 %v29
  %v42 = vunpack.c.l.b16 %v30
  %v43 = vunpack.c.l.b16 %v31
  %v44 = vpack.c.b16 %v41, %v40
  %v45 = vpack.c.b16 %v43, %v42
  %v50 = vunpack.c.l.b16 %v32
  %v51 = vunpack.c.l.b16 %v33
  %v52 = vunpack.c.l.b16 %v34
  %v53 = vunpack.c.l.b16 %v35
  %v54 = vpack.c.b16 %v51, %v50
  %v55 = vpack.c.b16 %v53, %v52
  %vm58 = vcmask 261120
  %v60 = vsel %vm58, %v44, 0
  %v63 = vsel %vm58, %v45, 0
  %65 = vmatprep.subr.bf16.mxu0 0
  %66 = vmatpush1.bf16.msra.mxu0 %v54
  %67 = vmatprep.subr.bf16.mxu0 0
  %68 = vmatpush1.bf16.msra.mxu0 %v55
  %69 = vmatprep.subr.bf16.mxu0 0
  %70 = vmatpush1.bf16.msra.mxu0 0
  %71 = vmatprep.subr.bf16.mxu0 0
  %72 = vmatpush1.bf16.msra.mxu0 0
  %73 = vmatprep.subr.bf16.mxu0 0
  %74 = vmatpush1.bf16.msra.mxu0 0
  %75 = vmatprep.subr.bf16.mxu0 0
  %76 = vmatpush1.bf16.msra.mxu0 0
  %77 = vmatprep.subr.bf16.mxu0 0
  %78 = vmatpush1.bf16.msra.mxu0 0
  %79 = vmatprep.subr.bf16.mxu0 0
  %80 = vmatpush1.bf16.msra.mxu0 0
  %81 = vmatprep.subr.bf16.mxu0 0
  %82 = vmatpush1.bf16.msra.mxu0 0
  %83 = vmatprep.subr.bf16.mxu0 0
  %84 = vmatpush1.bf16.msra.mxu0 0
  %85 = vmatprep.subr.bf16.mxu0 0
  %86 = vmatpush1.bf16.msra.mxu0 0
  %87 = vmatprep.subr.bf16.mxu0 0
  %88 = vmatpush1.bf16.msra.mxu0 0
  %89 = vmatprep.subr.bf16.mxu0 0
  %90 = vmatpush1.bf16.msra.mxu0 0
  %91 = vmatprep.subr.bf16.mxu0 0
  %92 = vmatpush1.bf16.msra.mxu0 0
  %93 = vmatprep.subr.bf16.mxu0 0
  %94 = vmatpush1.bf16.msra.mxu0 0
  %95 = vmatprep.subr.bf16.mxu0 0
  %96 = vmatpush1.bf16.msra.mxu0 0
  %97 = vmatprep.mubr.bf16.mxu0 0
  %98 = vmatmul.mubr.bf16.gmra.mrb[0].mxu0 %v60
  %v99 = vpop.f32.mrb[0].mxu0
  %v100 = vadd.f32 0.0, %v99
  %v101 = vpop.f32.mrb[0].mxu0
  %v102 = vpop.f32.mrb[0].mxu0
  %v103 = vadd.f32 0.0, %v102
  %v104 = vpop.f32.mrb[0].mxu0
  %105 = vmatprep.mubr.bf16.mxu0 0
  %106 = vmatmul.mubr.bf16.gmra.mrb[0].mxu0 %v63
  %v107 = vpop.f32.mrb[0].mxu0
  %v108 = vadd.f32 0.0, %v107
  %v109 = vpop.f32.mrb[0].mxu0
  %v110 = vpop.f32.mrb[0].mxu0
  %v111 = vadd.f32 0.0, %v110
  %v112 = vpop.f32.mrb[0].mxu0
  %113 = vdwg.mxu0
  %v114 = vadd.f32 %v24, %v100
  %v115 = vadd.f32 %v25, %v103
  %v116 = vadd.f32 %v26, %v108
  %v117 = vadd.f32 %v27, %v111
  %118 = vst.msk [vmem:[#allocation2] sm:$0xff] %vm58, %v114
  %119 = vst.msk [vmem:[#allocation2 + $0x8] sm:$0xff] %vm58, %v115
  %120 = vst.msk [vmem:[#allocation2 + $0x10] sm:$0xff] %vm58, %v116
  %121 = vst.msk [vmem:[#allocation2 + $0x18] sm:$0xff] %vm58, %v117
  // Predicated region
  $region18: #{teinformer_forward.41} parent=0 // pred_check
    %p122 = pneg %p15
  $region19: #{teinformer_forward.41} parent=0 // pred_check_branch
    %124 = sbr.rel (%p122) target = $region21
  $region20: #{teinformer_forward.41} parent=0 // pred_region
    %v125 = vld [vmem:[#allocation2] sm:$0xff]
    %v126 = vld [vmem:[#allocation2 + $0x8] sm:$0xff]
    %v127 = vld [vmem:[#allocation2 + $0x10] sm:$0xff]
    %v128 = vld [vmem:[#allocation2 + $0x18] sm:$0xff]
    %v129 = vld [vmem:[%s2] sm:$0x1]
    %v131 = vlaneseq
    %v132 = vshrl.u32 %v131, 7
    %v133 = vsub.s32 0, %v132
    %v134 = vrot.slane %v129, %v133
    %v136 = vadd.f32 %v125, %v134
    %v137 = vadd.f32 %v126, %v134
    %v138 = vadd.f32 %v127, %v134
    %v139 = vadd.f32 %v128, %v134
    %v140 = vmul.f32 %v136, 0.70710677
    %v141 = vmul.f32 %v137, 0.70710677
    %v142 = vmul.f32 %v138, 0.70710677
    %v143 = vmul.f32 %v139, 0.70710677
    %v144 = vand.u32 2147483647, %v140
    %v145 = vand.u32 2147483647, %v141
    %v146 = vand.u32 2147483647, %v142
    %v147 = vand.u32 2147483647, %v143
    %v148 = vmul.f32 %v144, 0.3275911
    %v149 = vmul.f32 %v145, 0.3275911
    %v150 = vmul.f32 %v146, 0.3275911
    %v151 = vmul.f32 %v147, 0.3275911
    %v152 = vadd.f32 %v148, 1.0
    %v153 = vadd.f32 %v149, 1.0
    %v154 = vadd.f32 %v150, 1.0
    %v155 = vadd.f32 %v151, 1.0
    %v156 = vrcp.pop %v152
    %v157 = vmul.f32 1.0, %v156
    %v158 = vrcp.pop %v153
    %v159 = vmul.f32 1.0, %v158
    %v160 = vrcp.pop %v154
    %v161 = vmul.f32 1.0, %v160
    %v162 = vrcp.pop %v155
    %v163 = vmul.f32 1.0, %v162
    %v164 = vmul.f32 %v157, 1.0614054
    %v165 = vmul.f32 %v159, 1.0614054
    %v166 = vmul.f32 %v161, 1.0614054
    %v167 = vmul.f32 %v163, 1.0614054
    %v168 = vadd.f32 %v164, -1.4531521
    %v169 = vadd.f32 %v165, -1.4531521
    %v170 = vadd.f32 %v166, -1.4531521
    %v171 = vadd.f32 %v167, -1.4531521
    %v172 = vmul.f32 %v157, %v168
    %v173 = vmul.f32 %v159, %v169
    %v174 = vmul.f32 %v161, %v170
    %v175 = vmul.f32 %v163, %v171
    %v176 = vadd.f32 %v172, 1.4214138
    %v177 = vadd.f32 %v173, 1.4214138
    %v178 = vadd.f32 %v174, 1.4214138
    %v179 = vadd.f32 %v175, 1.4214138
    %v180 = vmul.f32 %v157, %v176
    %v181 = vmul.f32 %v159, %v177
    %v182 = vmul.f32 %v161, %v178
    %v183 = vmul.f32 %v163, %v179
    %v184 = vadd.f32 %v180, -0.28449672
    %v185 = vadd.f32 %v181, -0.28449672
    %v186 = vadd.f32 %v182, -0.28449672
    %v187 = vadd.f32 %v183, -0.28449672
    %v188 = vmul.f32 %v157, %v184
    %v189 = vmul.f32 %v159, %v185
    %v190 = vmul.f32 %v161, %v186
    %v191 = vmul.f32 %v163, %v187
    %v192 = vadd.f32 %v188, 0.2548296
    %v193 = vadd.f32 %v189, 0.2548296
    %v194 = vadd.f32 %v190, 0.2548296
    %v195 = vadd.f32 %v191, 0.2548296
    %v196 = vmul.f32 %v157, %v192
    %v197 = vmul.f32 %v159, %v193
    %v198 = vmul.f32 %v161, %v194
    %v199 = vmul.f32 %v163, %v195
    %v200 = vsub.f32 0.0, %v144
    %v201 = vsub.f32 0.0, %v145
    %v202 = vsub.f32 0.0, %v146
    %v203 = vsub.f32 0.0, %v147
    %v204 = vmul.f32 %v200, %v144
    %v205 = vmul.f32 %v201, %v145
    %v206 = vmul.f32 %v202, %v146
    %v207 = vmul.f32 %v203, %v147
    %v208 = vmul.f32 %v204, 1.442695
    %v209 = vpow.pop %v208
    %v210 = vmul.f32 %v205, 1.442695
    %v211 = vpow.pop %v210
    %v212 = vmul.f32 %v206, 1.442695
    %v213 = vpow.pop %v212
    %v214 = vmul.f32 %v207, 1.442695
    %v215 = vpow.pop %v214
    %v216 = vmul.f32 %v196, %v209
    %v217 = vmul.f32 %v197, %v211
    %v218 = vmul.f32 %v198, %v213
    %v219 = vmul.f32 %v199, %v215
    %v220 = vsub.f32 1.0, %v216
    %v221 = vsub.f32 1.0, %v217
    %v222 = vsub.f32 1.0, %v218
    %v223 = vsub.f32 1.0, %v219
    %vm224 = vcmp.ge.f32.partialorder %v140, 0.0
    %vm225 = vcmp.ge.f32.partialorder %v141, 0.0
    %vm226 = vcmp.ge.f32.partialorder %v142, 0.0
    %vm227 = vcmp.ge.f32.partialorder %v143, 0.0
    %v228 = vsub.f32 0.0, %v220
    %v229 = vsub.f32 0.0, %v221
    %v230 = vsub.f32 0.0, %v222
    %v231 = vsub.f32 0.0, %v223
    %v232 = vsel %vm224, %v220, %v228
    %v233 = vsel %vm225, %v221, %v229
    %v234 = vsel %vm226, %v222, %v230
    %v235 = vsel %vm227, %v223, %v231
    %v236 = vmul.f32 %v136, 0.5
    %v237 = vmul.f32 %v137, 0.5
    %v238 = vmul.f32 %v138, 0.5
    %v239 = vmul.f32 %v139, 0.5
    %v240 = vadd.f32 %v232, 1.0
    %v241 = vadd.f32 %v233, 1.0
    %v242 = vadd.f32 %v234, 1.0
    %v243 = vadd.f32 %v235, 1.0
    %v244 = vmul.f32 %v236, %v240
    %v245 = vmul.f32 %v237, %v241
    %v246 = vmul.f32 %v238, %v242
    %v247 = vmul.f32 %v239, %v243
    %v248 = vpack.c.bf16 %v245, %v244
    %v249 = vpack.c.bf16 %v247, %v246
    %v252 = vunpack.c.l.b16 %v248
    %v253 = vunpack.c.h.b16 %v248
    %v254 = vunpack.c.l.b16 %v249
    %v255 = vunpack.c.h.b16 %v249
    %v256 = vpack.c.b16 %v252, %v252
    %v257 = vpack.c.b16 %v253, %v253
    %v258 = vpack.c.b16 %v254, %v254
    %v259 = vpack.c.b16 %v255, %v255
    %vm264 = vcmask 257024
    %265 = vst.msk [vmem:[%s3] sm:$0xf] %vm264, %v256
    %266 = vst.msk [vmem:[%s3 + $0x4] sm:$0xf] %vm264, %v257
    %267 = vst.msk [vmem:[%s3 + $0x8] sm:$0xf] %vm264, %v258
    %268 = vst.msk [vmem:[%s3 + $0xc] sm:$0xf] %vm264, %v259
  $region21: #{teinformer_forward.41} parent=0 // pred_fallthru
    _
  // Predicated region
  $region22: #{teinformer_forward.41} parent=0 // pred_check
    _
  $region23: #{teinformer_forward.41} parent=0 // pred_check_branch
    %270 = sbr.rel (0) target = $region25
  $region24: #{teinformer_forward.41} parent=0 // pred_region
    _
  $region25: #{teinformer_forward.41} parent=0 // pred_fallthru
    _
  // Predicated region
  $region26: #{teinformer_forward.41} parent=0 // pred_check
    _
  $region27: #{teinformer_forward.41} parent=0 // pred_check_branch
    %272 = sbr.rel (0) target = $region29
  $region28: #{teinformer_forward.41} parent=0 // pred_region
    _
  $region29: #{teinformer_forward.41} parent=0 // pred_fallthru
    _

// kernel: teinformer_forward.44
$region0: #{teinformer_forward.44}
  #allocation0 [shape = 'u32[]', space=smem, size = 0x4, offset = 0x4, fixed_abs, tag = 'smem constant byte address 0x4 - core index']
  #allocation1 [shape = 'u32[144,128]{1,0:T(1,128)}', space=vmem, size = 0x12000, scoped, tag = 'internal scratch']
  #allocation2 [shape = 'f32[32,32]{1,0:T(8,128)}', space=vmem, size = 0x4000, scoped, tag = 'scratch operand']
  %s0 = inlined_call_operand.vmem [shape: bf16[32,96], index: 0, kind: input, shape index: {}]
  %s1 = inlined_call_operand.vmem [shape: bf16[96,32], index: 1, kind: input, shape index: {}]
  %s2 = inlined_call_operand.vmem [shape: f32[1,32], index: 2, kind: input, shape index: {}]
  %s3 = inlined_call_operand.vmem [shape: bf16[32,32], index: 3, kind: output, shape index: {}]
  %s4 = sld [smem:[#allocation0]]
  $region30: #{teinformer_forward.44} parent=0
    _
  %s6 = ssub.s32 1, %s4
  %s7 = scalar_select 0, %s6, %s4
  // Predicated region
  $region2: #{teinformer_forward.44} parent=0 // pred_check
    _
  $region3: #{teinformer_forward.44} parent=0 // pred_check_branch
    %9 = sbr.rel (0) target = $region5
  $region4: #{teinformer_forward.44} parent=0 // pred_region
    _
  $region5: #{teinformer_forward.44} parent=0 // pred_fallthru
    _
  // Predicated region
  $region6: #{teinformer_forward.44} parent=0 // pred_check
    _
  $region7: #{teinformer_forward.44} parent=0 // pred_check_branch
    %11 = sbr.rel (0) target = $region9
  $region8: #{teinformer_forward.44} parent=0 // pred_region
    _
  $region9: #{teinformer_forward.44} parent=0 // pred_fallthru
    _
  // Predicated region
  $region10: #{teinformer_forward.44} parent=0 // pred_check
    _
  $region11: #{teinformer_forward.44} parent=0 // pred_check_branch
    %13 = sbr.rel (0) target = $region13
  $region12: #{teinformer_forward.44} parent=0 // pred_region
    _
  $region13: #{teinformer_forward.44} parent=0 // pred_fallthru
    _
  %p15 = scmp.eq.s32.totalorder 0, 0
  // Predicated region
  $region14: #{teinformer_forward.44} parent=0 // pred_check
    %p16 = pneg %p15
  $region15: #{teinformer_forward.44} parent=0 // pred_check_branch
    %18 = sbr.rel (%p16) target = $region17
  $region16: #{teinformer_forward.44} parent=0 // pred_region
    %vm19 = vcmask 261120
    %20 = vst.msk [vmem:[#allocation2] sm:$0xff] %vm19, 0.0
    %21 = vst.msk [vmem:[#allocation2 + $0x8] sm:$0xff] %vm19, 0.0
    %22 = vst.msk [vmem:[#allocation2 + $0x10] sm:$0xff] %vm19, 0.0
    %23 = vst.msk [vmem:[#allocation2 + $0x18] sm:$0xff] %vm19, 0.0
  $region17: #{teinformer_forward.44} parent=0 // pred_fallthru
    _
  %v24 = vld [vmem:[#allocation2] sm:$0xff]
  %v25 = vld [vmem:[#allocation2 + $0x8] sm:$0xff]
  %v26 = vld [vmem:[#allocation2 + $0x10] sm:$0xff]
  %v27 = vld [vmem:[#allocation2 + $0x18] sm:$0xff]
  %v28 = vld [vmem:[%s0] sm:$0xf]
  %v29 = vld [vmem:[%s0 + $0x4] sm:$0xf]
  %v30 = vld [vmem:[%s0 + $0x8] sm:$0xf]
  %v31 = vld [vmem:[%s0 + $0xc] sm:$0xf]
  %v32 = vld [vmem:[%s1] sm:$0xf]
  %v33 = vld [vmem:[%s1 + $0x4] sm:$0xf]
  %v34 = vld [vmem:[%s1 + $0x8] sm:$0xf]
  %v35 = vld [vmem:[%s1 + $0xc] sm:$0xf]
  %v36 = vld [vmem:[%s1 + $0x10] sm:$0xf]
  %v37 = vld [vmem:[%s1 + $0x14] sm:$0xf]
  %v38 = vld [vmem:[%s1 + $0x18] sm:$0xf]
  %v39 = vld [vmem:[%s1 + $0x1c] sm:$0xf]
  %v40 = vld [vmem:[%s1 + $0x20] sm:$0xf]
  %v41 = vld [vmem:[%s1 + $0x24] sm:$0xf]
  %v42 = vld [vmem:[%s1 + $0x28] sm:$0xf]
  %v43 = vld [vmem:[%s1 + $0x2c] sm:$0xf]
  %v48 = vunpack.c.l.b16 %v28
  %v49 = vunpack.c.l.b16 %v29
  %v50 = vunpack.c.l.b16 %v30
  %v51 = vunpack.c.l.b16 %v31
  %v52 = vpack.c.b16 %v49, %v48
  %v53 = vpack.c.b16 %v51, %v50
  %v66 = vunpack.c.l.b16 %v32
  %v67 = vunpack.c.l.b16 %v33
  %v68 = vunpack.c.l.b16 %v34
  %v69 = vunpack.c.l.b16 %v35
  %v70 = vunpack.c.l.b16 %v36
  %v71 = vunpack.c.l.b16 %v37
  %v72 = vunpack.c.l.b16 %v38
  %v73 = vunpack.c.l.b16 %v39
  %v74 = vunpack.c.l.b16 %v40
  %v75 = vunpack.c.l.b16 %v41
  %v76 = vunpack.c.l.b16 %v42
  %v77 = vunpack.c.l.b16 %v43
  %v78 = vpack.c.b16 %v67, %v66
  %v79 = vpack.c.b16 %v69, %v68
  %v80 = vpack.c.b16 %v71, %v70
  %v81 = vpack.c.b16 %v73, %v72
  %v82 = vpack.c.b16 %v75, %v74
  %v83 = vpack.c.b16 %v77, %v76
  %vm90 = vcmask 785408
  %v92 = vsel %vm90, %v52, 0
  %v95 = vsel %vm90, %v53, 0
  %97 = vmatprep.subr.bf16.mxu0 0
  %98 = vmatpush1.bf16.msra.mxu0 %v78
  %99 = vmatprep.subr.bf16.mxu0 0
  %100 = vmatpush1.bf16.msra.mxu0 %v79
  %101 = vmatprep.subr.bf16.mxu0 0
  %102 = vmatpush1.bf16.msra.mxu0 %v80
  %103 = vmatprep.subr.bf16.mxu0 0
  %104 = vmatpush1.bf16.msra.mxu0 %v81
  %105 = vmatprep.subr.bf16.mxu0 0
  %106 = vmatpush1.bf16.msra.mxu0 %v82
  %107 = vmatprep.subr.bf16.mxu0 0
  %108 = vmatpush1.bf16.msra.mxu0 %v83
  %109 = vmatprep.subr.bf16.mxu0 0
  %110 = vmatpush1.bf16.msra.mxu0 0
  %111 = vmatprep.subr.bf16.mxu0 0
  %112 = vmatpush1.bf16.msra.mxu0 0
  %113 = vmatprep.subr.bf16.mxu0 0
  %114 = vmatpush1.bf16.msra.mxu0 0
  %115 = vmatprep.subr.bf16.mxu0 0
  %116 = vmatpush1.bf16.msra.mxu0 0
  %117 = vmatprep.subr.bf16.mxu0 0
  %118 = vmatpush1.bf16.msra.mxu0 0
  %119 = vmatprep.subr.bf16.mxu0 0
  %120 = vmatpush1.bf16.msra.mxu0 0
  %121 = vmatprep.subr.bf16.mxu0 0
  %122 = vmatpush1.bf16.msra.mxu0 0
  %123 = vmatprep.subr.bf16.mxu0 0
  %124 = vmatpush1.bf16.msra.mxu0 0
  %125 = vmatprep.subr.bf16.mxu0 0
  %126 = vmatpush1.bf16.msra.mxu0 0
  %127 = vmatprep.subr.bf16.mxu0 0
  %128 = vmatpush1.bf16.msra.mxu0 0
  %129 = vmatprep.mubr.bf16.mxu0 0
  %130 = vmatmul.mubr.bf16.gmra.mrb[0].mxu0 %v92
  %v131 = vpop.f32.mrb[0].mxu0
  %v132 = vadd.f32 0.0, %v131
  %v133 = vpop.f32.mrb[0].mxu0
  %v134 = vpop.f32.mrb[0].mxu0
  %v135 = vadd.f32 0.0, %v134
  %v136 = vpop.f32.mrb[0].mxu0
  %137 = vmatprep.mubr.bf16.mxu0 0
  %138 = vmatmul.mubr.bf16.gmra.mrb[0].mxu0 %v95
  %v139 = vpop.f32.mrb[0].mxu0
  %v140 = vadd.f32 0.0, %v139
  %v141 = vpop.f32.mrb[0].mxu0
  %v142 = vpop.f32.mrb[0].mxu0
  %v143 = vadd.f32 0.0, %v142
  %v144 = vpop.f32.mrb[0].mxu0
  %145 = vdwg.mxu0
  %v146 = vadd.f32 %v24, %v132
  %v147 = vadd.f32 %v25, %v135
  %v148 = vadd.f32 %v26, %v140
  %v149 = vadd.f32 %v27, %v143
  %vm150 = vcmask 261120
  %151 = vst.msk [vmem:[#allocation2] sm:$0xff] %vm150, %v146
  %152 = vst.msk [vmem:[#allocation2 + $0x8] sm:$0xff] %vm150, %v147
  %153 = vst.msk [vmem:[#allocation2 + $0x10] sm:$0xff] %vm150, %v148
  %154 = vst.msk [vmem:[#allocation2 + $0x18] sm:$0xff] %vm150, %v149
  // Predicated region
  $region18: #{teinformer_forward.44} parent=0 // pred_check
    %p155 = pneg %p15
  $region19: #{teinformer_forward.44} parent=0 // pred_check_branch
    %157 = sbr.rel (%p155) target = $region21
  $region20: #{teinformer_forward.44} parent=0 // pred_region
    %v158 = vld [vmem:[#allocation2] sm:$0xff]
    %v159 = vld [vmem:[#allocation2 + $0x8] sm:$0xff]
    %v160 = vld [vmem:[#allocation2 + $0x10] sm:$0xff]
    %v161 = vld [vmem:[#allocation2 + $0x18] sm:$0xff]
    %v162 = vld [vmem:[%s2] sm:$0x1]
    %v164 = vlaneseq
    %v165 = vshrl.u32 %v164, 7
    %v166 = vsub.s32 0, %v165
    %v167 = vrot.slane %v162, %v166
    %v169 = vadd.f32 %v158, %v167
    %v170 = vadd.f32 %v159, %v167
    %v171 = vadd.f32 %v160, %v167
    %v172 = vadd.f32 %v161, %v167
    %vm173 = vcmp.gt.f32.partialorder %v169, 0.0
    %vm174 = vcmp.gt.f32.partialorder %v170, 0.0
    %vm175 = vcmp.gt.f32.partialorder %v171, 0.0
    %vm176 = vcmp.gt.f32.partialorder %v172, 0.0
    %v177 = vmul.f32 %v169, 1.442695
    %v178 = vpow.pop %v177
    %v179 = vmul.f32 %v170, 1.442695
    %v180 = vpow.pop %v179
    %v181 = vmul.f32 %v171, 1.442695
    %v182 = vpow.pop %v181
    %v183 = vmul.f32 %v172, 1.442695
    %v184 = vpow.pop %v183
    %v185 = vsub.f32 %v178, 1.0
    %v186 = vsub.f32 %v180, 1.0
    %v187 = vsub.f32 %v182, 1.0
    %v188 = vsub.f32 %v184, 1.0
    %v189 = vsel %vm173, %v169, %v185
    %v190 = vsel %vm174, %v170, %v186
    %v191 = vsel %vm175, %v171, %v187
    %v192 = vsel %vm176, %v172, %v188
    %v193 = vpack.c.bf16 %v190, %v189
    %v194 = vpack.c.bf16 %v192, %v191
    %v197 = vunpack.c.l.b16 %v193
    %v198 = vunpack.c.h.b16 %v193
    %v199 = vunpack.c.l.b16 %v194
    %v200 = vunpack.c.h.b16 %v194
    %v201 = vpack.c.b16 %v197, %v197
    %v202 = vpack.c.b16 %v198, %v198
    %v203 = vpack.c.b16 %v199, %v199
    %v204 = vpack.c.b16 %v200, %v200
    %vm209 = vcmask 257024
    %210 = vst.msk [vmem:[%s3] sm:$0xf] %vm209, %v201
    %211 = vst.msk [vmem:[%s3 + $0x4] sm:$0xf] %vm209, %v202
    %212 = vst.msk [vmem:[%s3 + $0x8] sm:$0xf] %vm209, %v203
    %213 = vst.msk [vmem:[%s3 + $0xc] sm:$0xf] %vm209, %v204
  $region21: #{teinformer_forward.44} parent=0 // pred_fallthru
    _
  // Predicated region
  $region22: #{teinformer_forward.44} parent=0 // pred_check
    _
  $region23: #{teinformer_forward.44} parent=0 // pred_check_branch
    %215 = sbr.rel (0) target = $region25
  $region24: #{teinformer_forward.44} parent=0 // pred_region
    _
  $region25: #{teinformer_forward.44} parent=0 // pred_fallthru
    _
  // Predicated region
  $region26: #{teinformer_forward.44} parent=0 // pred_check
    _
  $region27: #{teinformer_forward.44} parent=0 // pred_check_branch
    %217 = sbr.rel (0) target = $region29
  $region28: #{teinformer_forward.44} parent=0 // pred_region
    _
  $region29: #{teinformer_forward.44} parent=0 // pred_fallthru
    _

// kernel: teinformer_forward.45
$region0: #{teinformer_forward.45}
  #allocation0 [shape = 'u32[]', space=smem, size = 0x4, offset = 0x4, fixed_abs, tag = 'smem constant byte address 0x4 - core index']
  #allocation1 [shape = 'u32[144,128]{1,0:T(1,128)}', space=vmem, size = 0x12000, scoped, tag = 'internal scratch']
  #allocation2 [shape = 'f32[16,96]{1,0:T(8,128)}', space=vmem, size = 0x2000, scoped, tag = 'scratch operand']
  %s0 = inlined_call_operand.vmem [shape: bf16[16,32], index: 0, kind: input, shape index: {}]
  %s1 = inlined_call_operand.vmem [shape: bf16[32,96], index: 1, kind: input, shape index: {}]
  %s2 = inlined_call_operand.vmem [shape: f32[1,96], index: 2, kind: input, shape index: {}]
  %s3 = inlined_call_operand.vmem [shape: bf16[16,96], index: 3, kind: output, shape index: {}]
  %s4 = sld [smem:[#allocation0]]
  $region30: #{teinformer_forward.45} parent=0
    _
  %s6 = ssub.s32 1, %s4
  %s7 = scalar_select 0, %s6, %s4
  // Predicated region
  $region2: #{teinformer_forward.45} parent=0 // pred_check
    _
  $region3: #{teinformer_forward.45} parent=0 // pred_check_branch
    %9 = sbr.rel (0) target = $region5
  $region4: #{teinformer_forward.45} parent=0 // pred_region
    _
  $region5: #{teinformer_forward.45} parent=0 // pred_fallthru
    _
  // Predicated region
  $region6: #{teinformer_forward.45} parent=0 // pred_check
    _
  $region7: #{teinformer_forward.45} parent=0 // pred_check_branch
    %11 = sbr.rel (0) target = $region9
  $region8: #{teinformer_forward.45} parent=0 // pred_region
    _
  $region9: #{teinformer_forward.45} parent=0 // pred_fallthru
    _
  // Predicated region
  $region10: #{teinformer_forward.45} parent=0 // pred_check
    _
  $region11: #{teinformer_forward.45} parent=0 // pred_check_branch
    %13 = sbr.rel (0) target = $region13
  $region12: #{teinformer_forward.45} parent=0 // pred_region
    _
  $region13: #{teinformer_forward.45} parent=0 // pred_fallthru
    _
  %p15 = scmp.eq.s32.totalorder 0, 0
  // Predicated region
  $region14: #{teinformer_forward.45} parent=0 // pred_check
    %p16 = pneg %p15
  $region15: #{teinformer_forward.45} parent=0 // pred_check_branch
    %18 = sbr.rel (%p16) target = $region17
  $region16: #{teinformer_forward.45} parent=0 // pred_region
    %vm19 = vcmask 785408
    %20 = vst.msk [vmem:[#allocation2] sm:$0xff] %vm19, 0.0
    %21 = vst.msk [vmem:[#allocation2 + $0x8] sm:$0xff] %vm19, 0.0
  $region17: #{teinformer_forward.45} parent=0 // pred_fallthru
    _
  %v22 = vld [vmem:[#allocation2] sm:$0xff]
  %v23 = vld [vmem:[#allocation2 + $0x8] sm:$0xff]
  %v24 = vld [vmem:[%s0] sm:$0xf]
  %v25 = vld [vmem:[%s0 + $0x4] sm:$0xf]
  %v26 = vld [vmem:[%s1] sm:$0xf]
  %v27 = vld [vmem:[%s1 + $0x4] sm:$0xf]
  %v28 = vld [vmem:[%s1 + $0x8] sm:$0xf]
  %v29 = vld [vmem:[%s1 + $0xc] sm:$0xf]
  %v32 = vunpack.c.l.b16 %v24
  %v33 = vunpack.c.l.b16 %v25
  %v34 = vpack.c.b16 %v33, %v32
  %v39 = vunpack.c.l.b16 %v26
  %v40 = vunpack.c.l.b16 %v27
  %v41 = vunpack.c.l.b16 %v28
  %v42 = vunpack.c.l.b16 %v29
  %v43 = vpack.c.b16 %v40, %v39
  %v44 = vpack.c.b16 %v42, %v41
  %vm47 = vcmask 261120
  %v49 = vsel %vm47, %v34, 0
  %51 = vmatprep.subr.bf16.mxu0 0
  %52 = vmatpush1.bf16.msra.mxu0 %v43
  %53 = vmatprep.subr.bf16.mxu0 0
  %54 = vmatpush1.bf16.msra.mxu0 %v44
  %55 = vmatprep.subr.bf16.mxu0 0
  %56 = vmatpush1.bf16.msra.mxu0 0
  %57 = vmatprep.subr.bf16.mxu0 0
  %58 = vmatpush1.bf16.msra.mxu0 0
  %59 = vmatprep.subr.bf16.mxu0 0
  %60 = vmatpush1.bf16.msra.mxu0 0
  %61 = vmatprep.subr.bf16.mxu0 0
  %62 = vmatpush1.bf16.msra.mxu0 0
  %63 = vmatprep.subr.bf16.mxu0 0
  %64 = vmatpush1.bf16.msra.mxu0 0
  %65 = vmatprep.subr.bf16.mxu0 0
  %66 = vmatpush1.bf16.msra.mxu0 0
  %67 = vmatprep.subr.bf16.mxu0 0
  %68 = vmatpush1.bf16.msra.mxu0 0
  %69 = vmatprep.subr.bf16.mxu0 0
  %70 = vmatpush1.bf16.msra.mxu0 0
  %71 = vmatprep.subr.bf16.mxu0 0
  %72 = vmatpush1.bf16.msra.mxu0 0
  %73 = vmatprep.subr.bf16.mxu0 0
  %74 = vmatpush1.bf16.msra.mxu0 0
  %75 = vmatprep.subr.bf16.mxu0 0
  %76 = vmatpush1.bf16.msra.mxu0 0
  %77 = vmatprep.subr.bf16.mxu0 0
  %78 = vmatpush1.bf16.msra.mxu0 0
  %79 = vmatprep.subr.bf16.mxu0 0
  %80 = vmatpush1.bf16.msra.mxu0 0
  %81 = vmatprep.subr.bf16.mxu0 0
  %82 = vmatpush1.bf16.msra.mxu0 0
  %83 = vmatprep.mubr.bf16.mxu0 0
  %84 = vmatmul.mubr.bf16.gmra.mrb[0].mxu0 %v49
  %v85 = vpop.f32.mrb[0].mxu0
  %v86 = vadd.f32 0.0, %v85
  %v87 = vpop.f32.mrb[0].mxu0
  %v88 = vpop.f32.mrb[0].mxu0
  %v89 = vadd.f32 0.0, %v88
  %v90 = vpop.f32.mrb[0].mxu0
  %91 = vdwg.mxu0
  %v92 = vadd.f32 %v22, %v86
  %v93 = vadd.f32 %v23, %v89
  %vm94 = vcmask 785408
  %95 = vst.msk [vmem:[#allocation2] sm:$0xff] %vm94, %v92
  %96 = vst.msk [vmem:[#allocation2 + $0x8] sm:$0xff] %vm94, %v93
  // Predicated region
  $region18: #{teinformer_forward.45} parent=0 // pred_check
    %p97 = pneg %p15
  $region19: #{teinformer_forward.45} parent=0 // pred_check_branch
    %99 = sbr.rel (%p97) target = $region21
  $region20: #{teinformer_forward.45} parent=0 // pred_region
    %v100 = vld [vmem:[#allocation2] sm:$0xff]
    %v101 = vld [vmem:[#allocation2 + $0x8] sm:$0xff]
    %v102 = vld [vmem:[%s2] sm:$0x1]
    %v104 = vlaneseq
    %v105 = vshrl.u32 %v104, 7
    %v106 = vsub.s32 0, %v105
    %v107 = vrot.slane %v102, %v106
    %v109 = vadd.f32 %v100, %v107
    %v110 = vadd.f32 %v101, %v107
    %v111 = vpack.c.bf16 %v110, %v109
    %v113 = vunpack.c.l.b16 %v111
    %v114 = vunpack.c.h.b16 %v111
    %v115 = vpack.c.b16 %v113, %v113
    %v116 = vpack.c.b16 %v114, %v114
    %vm119 = vcmask 781312
    %120 = vst.msk [vmem:[%s3] sm:$0xf] %vm119, %v115
    %121 = vst.msk [vmem:[%s3 + $0x4] sm:$0xf] %vm119, %v116
  $region21: #{teinformer_forward.45} parent=0 // pred_fallthru
    _
  // Predicated region
  $region22: #{teinformer_forward.45} parent=0 // pred_check
    _
  $region23: #{teinformer_forward.45} parent=0 // pred_check_branch
    %123 = sbr.rel (0) target = $region25
  $region24: #{teinformer_forward.45} parent=0 // pred_region
    _
  $region25: #{teinformer_forward.45} parent=0 // pred_fallthru
    _
  // Predicated region
  $region26: #{teinformer_forward.45} parent=0 // pred_check
    _
  $region27: #{teinformer_forward.45} parent=0 // pred_check_branch
    %125 = sbr.rel (0) target = $region29
  $region28: #{teinformer_forward.45} parent=0 // pred_region
    _
  $region29: #{teinformer_forward.45} parent=0 // pred_fallthru
    _

// kernel: teinformer_forward.46
$region0: #{teinformer_forward.46}
  #allocation0 [shape = 'u32[]', space=smem, size = 0x4, offset = 0x4, fixed_abs, tag = 'smem constant byte address 0x4 - core index']
  #allocation1 [shape = 'u32[144,128]{1,0:T(1,128)}', space=vmem, size = 0x12000, scoped, tag = 'internal scratch']
  %s0 = inlined_call_operand.vmem [shape: bf16[2,8,96], index: 0, kind: input, shape index: {}]
  %s1 = inlined_call_operand.vmem [shape: f32[2,8,4], index: 1, kind: output, shape index: {}]
  %s2 = sld [smem:[#allocation0]]
  $region37: #{teinformer_forward.46} parent=0
    _
  %s4 = ssub.s32 1, %s2
  %s5 = scalar_select 0, %s4, %s2
  loop: start=0, step=1, limit=4
  $region2: #{teinformer_forward.46} parent=0 // loop_pre_header
    _
  $region3: #{teinformer_forward.46} parent=0 // loop_header
    %s7 = sphi 0, %s11
    %p8 = scmp.ge.s32.totalorder %s7, 4
    %s17 = sphi 0, %s19
    %s20 = sphi 0, %s17
    %s21 = sphi 0, %s20
    %s37 = sphi 0, %s21
    %s43 = sphi 0, %s45
    %s46 = sphi 0, %s43
    %s47 = sphi 0, %s46
    %s63 = sphi 0, %s47
  $region4: #{teinformer_forward.46} parent=0 // loop_header_branch
    %10 = sbr.rel (%p8) target = $region8
  $region5: #{teinformer_forward.46} parent=0 // loop_body
    %s12 = ssub.s32 %s7, 1
    %s13 = ssub.s32 %s7, 2
    %s14 = sadd.s32 %s7, 1
    %s15 = ssub.s32 %s7, %s14
    %p16 = scmp.eq.s32.totalorder %s15, 0
    %s18 = sadd.s32 %s17, 1
    %s19 = scalar_select %p16, %s17, %s18
    %p22 = pneg %p16
    %p23 = scmp.eq.s32.totalorder %s7, 1
    %p24 = por %p22, %p23
    %p25 = scmp.ne.s32.totalorder %s17, %s20
    %p26 = scmp.eq.s32.totalorder %s7, 0
    %p27 = por %p25, %p26
    %p28 = scmp.ne.s32.totalorder %s17, %s20
    %p29 = scmp.eq.s32.totalorder %s12, 1
    %p30 = por %p28, %p29
    %p31 = scmp.ne.s32.totalorder %s20, %s21
    %p32 = scmp.eq.s32.totalorder %s12, 0
    %p33 = por %p31, %p32
    %p34 = scmp.ne.s32.totalorder %s20, %s21
    %p35 = scmp.eq.s32.totalorder %s13, 1
    %p36 = por %p34, %p35
    %p38 = scmp.ne.s32.totalorder %s21, %s37
    %p39 = scmp.eq.s32.totalorder %s13, 0
    %p40 = por %p38, %p39
    %s41 = ssub.s32 %s7, %s14
    %p42 = scmp.eq.s32.totalorder %s41, 0
    %s44 = sadd.s32 %s43, 1
    %s45 = scalar_select %p42, %s43, %s44
    %p48 = pneg %p42
    %p49 = scmp.eq.s32.totalorder %s7, 1
    %p50 = por %p48, %p49
    %p51 = scmp.ne.s32.totalorder %s43, %s46
    %p52 = scmp.eq.s32.totalorder %s7, 0
    %p53 = por %p51, %p52
    %p54 = scmp.ne.s32.totalorder %s43, %s46
    %p55 = scmp.eq.s32.totalorder %s12, 1
    %p56 = por %p54, %p55
    %p57 = scmp.ne.s32.totalorder %s46, %s47
    %p58 = scmp.eq.s32.totalorder %s12, 0
    %p59 = por %p57, %p58
    %p60 = scmp.ne.s32.totalorder %s46, %s47
    %p61 = scmp.eq.s32.totalorder %s13, 1
    %p62 = por %p60, %p61
    %p64 = scmp.ne.s32.totalorder %s47, %s63
    %p65 = scmp.eq.s32.totalorder %s13, 0
    %p66 = por %p64, %p65
    %p67 = scmp.le.s32.totalorder 1, %s7
    %p68 = scmp.lt.s32.totalorder %s7, 3
    %p69 = pnand %p67, %p68
    %p70 = pneg %p69
    // Predicated region
    $region9: #{teinformer_forward.46} parent=5 // pred_check
      _
    $region10: #{teinformer_forward.46} parent=5 // pred_check_branch
      %72 = sbr.rel (%p69) target = $region12
    $region11: #{teinformer_forward.46} parent=5 // pred_region
      %s73 = ssub.s32 %s7, 1
    $region12: #{teinformer_forward.46} parent=5 // pred_fallthru
      _
    %p74 = scmp.lt.s32.totalorder %s7, 2
    // Predicated region
    $region13: #{teinformer_forward.46} parent=5 // pred_check
      %p75 = pneg %p74
    $region14: #{teinformer_forward.46} parent=5 // pred_check_branch
      %77 = sbr.rel (%p75) target = $region16
    $region15: #{teinformer_forward.46} parent=5 // pred_region
      // Predicated region
      $region17: #{teinformer_forward.46} parent=15 // pred_check
        %p78 = pneg %p27
      $region18: #{teinformer_forward.46} parent=15 // pred_check_branch
        %80 = sbr.rel (%p78) target = $region20
      $region19: #{teinformer_forward.46} parent=15 // pred_region
        %p81 = scmp.lt.s32.totalorder %s7, 1
        %s82 = scalar_select %p81, %s7, 1
        %s83 = smul.addr %s82, 4
        %s84 = scalar_lea.vmem %s0, %s83
      $region20: #{teinformer_forward.46} parent=15 // pred_fallthru
        _
    $region16: #{teinformer_forward.46} parent=5 // pred_fallthru
      _
    %p85 = scmp.le.s32.totalorder 1, %s7
    %p86 = scmp.lt.s32.totalorder %s7, 3
    %p87 = pnand %p85, %p86
    %p88 = pneg %p87
    // Predicated region
    $region21: #{teinformer_forward.46} parent=5 // pred_check
      _
    $region22: #{teinformer_forward.46} parent=5 // pred_check_branch
      %90 = sbr.rel (%p87) target = $region24
    $region23: #{teinformer_forward.46} parent=5 // pred_region
      %s91 = ssub.s32 %s7, 1
      %p92 = scmp.lt.s32.totalorder %s12, 1
      %s93 = scalar_select %p92, %s12, 1
      %s94 = smul.addr %s93, 4
      %s95 = scalar_lea.vmem %s0, %s94
      %p96 = pneg %p33
      %p97 = pneg %p30
      %p98 = pneg %p59
      %p99 = pneg %p56
      %p100 = scmp.lt.s32.totalorder %s12, 1
      %s101 = scalar_select %p100, %s12, 1
      %s102 = smul.addr %s101, 8
      %s103 = scalar_lea.vmem %s1, %s102
      %p104 = scmp.lt.s32.totalorder %s12, 1
      %s105 = scalar_select %p104, %s12, 1
      %s106 = smul.addr %s105, 4
      %s107 = scalar_lea.vmem %s0, %s106
      %p108 = scmp.lt.s32.totalorder %s12, 1
      %s109 = scalar_select %p108, %s12, 1
      %s110 = smul.addr %s109, 8
      %s111 = scalar_lea.vmem %s1, %s110
      %v113 = vld [vmem:[%s107] sm:$0xf]
      %v115 = vunpack.c.l.b16 %v113
      %v116 = vpack.c.b16 %v115, %v115
      %117 = vrot.lane.b32.xlu0 %v116, 96
      %v118 = vpop.permute.xlu0 %117
      %vm119 = vcmask 64512
      %v121 = vsel %vm119, %v113, 0
      %v124 = vsel %vm119, %v118, 0
      %126 = vmatprep.subr.bf16.mxu0 0
      %127 = vmatpush1.bf16.xpose.msra.mxu0 %v124
      %128 = vmatprep.subr.bf16.mxu0 0
      %129 = vmatpush1.bf16.xpose.msra.mxu0 0
      %130 = vmatprep.subr.bf16.mxu0 0
      %131 = vmatpush1.bf16.xpose.msra.mxu0 0
      %132 = vmatprep.subr.bf16.mxu0 0
      %133 = vmatpush1.bf16.xpose.msra.mxu0 0
      %134 = vmatprep.subr.bf16.mxu0 0
      %135 = vmatpush1.bf16.xpose.msra.mxu0 0
      %136 = vmatprep.subr.bf16.mxu0 0
      %137 = vmatpush1.bf16.xpose.msra.mxu0 0
      %138 = vmatprep.subr.bf16.mxu0 0
      %139 = vmatpush1.bf16.xpose.msra.mxu0 0
      %140 = vmatprep.subr.bf16.mxu0 0
      %141 = vmatpush1.bf16.xpose.msra.mxu0 0
      %142 = vmatprep.subr.bf16.mxu0 0
      %143 = vmatpush1.bf16.xpose.msra.mxu0 0
      %144 = vmatprep.subr.bf16.mxu0 0
      %145 = vmatpush1.bf16.xpose.msra.mxu0 0
      %146 = vmatprep.subr.bf16.mxu0 0
      %147 = vmatpush1.bf16.xpose.msra.mxu0 0
      %148 = vmatprep.subr.bf16.mxu0 0
      %149 = vmatpush1.bf16.xpose.msra.mxu0 0
      %150 = vmatprep.subr.bf16.mxu0 0
      %151 = vmatpush1.bf16.xpose.msra.mxu0 0
      %152 = vmatprep.subr.bf16.mxu0 0
      %153 = vmatpush1.bf16.xpose.msra.mxu0 0
      %154 = vmatprep.subr.bf16.mxu0 0
      %155 = vmatpush1.bf16.xpose.msra.mxu0 0
      %156 = vmatprep.subr.bf16.mxu0 0
      %157 = vmatpush1.bf16.xpose.msra.mxu0 0
      %158 = vmatprep.mubr.bf16.mxu0 0
      %159 = vmatmul.mubr.bf16.gmra.mrb[0].mxu0 %v121
      %v160 = vpop.f32.mrb[0].mxu0
      %v161 = vadd.f32 0.0, %v160
      %v162 = vpop.f32.mrb[0].mxu0
      %v163 = vpop.f32.mrb[0].mxu0
      %v164 = vpop.f32.mrb[0].mxu0
      %165 = vdwg.mxu0
      %v166 = vsel %vm119, %v161, -inf
      %167 = vmax.xlane.f32.xlu0 %v166
      %v168 = vpop.xlane.xlu0 %167
      %v169 = vsel %vm119, %v161, 0.0
      %170 = vadd.xlane.f32.xlu0 %v169
      %v171 = vpop.xlane.xlu0 %170
      %v172 = vmul.f32 %v171, 0.125
      %v173 = vsub.f32 %v168, %v172
      %vm174 = vcmask 7168
      %175 = vst.msk [vmem:[%s111] sm:$0xff] %vm174, %v173
      %v176 = vld [vmem:[%s107] sm:$0xf]
      %v178 = vunpack.c.l.b16 %v176
      %v179 = vpack.c.b16 %v178, %v178
      %180 = vrot.lane.b32.xlu0 %v179, 120
      %v181 = vpop.permute.xlu0 %180
      %182 = vrot.lane.b32.xlu0 %v179, 88
      %v183 = vpop.permute.xlu0 %182
      %v185 = vsel %vm119, %v181, 0
      %v188 = vsel %vm119, %v183, 0
      %190 = vmatprep.subr.bf16.mxu0 0
      %191 = vmatpush1.bf16.xpose.msra.mxu0 %v188
      %192 = vmatprep.subr.bf16.mxu0 0
      %193 = vmatpush1.bf16.xpose.msra.mxu0 0
      %194 = vmatprep.subr.bf16.mxu0 0
      %195 = vmatpush1.bf16.xpose.msra.mxu0 0
      %196 = vmatprep.subr.bf16.mxu0 0
      %197 = vmatpush1.bf16.xpose.msra.mxu0 0
      %198 = vmatprep.subr.bf16.mxu0 0
      %199 = vmatpush1.bf16.xpose.msra.mxu0 0
      %200 = vmatprep.subr.bf16.mxu0 0
      %201 = vmatpush1.bf16.xpose.msra.mxu0 0
      %202 = vmatprep.subr.bf16.mxu0 0
      %203 = vmatpush1.bf16.xpose.msra.mxu0 0
      %204 = vmatprep.subr.bf16.mxu0 0
      %205 = vmatpush1.bf16.xpose.msra.mxu0 0
      %206 = vmatprep.subr.bf16.mxu0 0
      %207 = vmatpush1.bf16.xpose.msra.mxu0 0
      %208 = vmatprep.subr.bf16.mxu0 0
      %209 = vmatpush1.bf16.xpose.msra.mxu0 0
      %210 = vmatprep.subr.bf16.mxu0 0
      %211 = vmatpush1.bf16.xpose.msra.mxu0 0
      %212 = vmatprep.subr.bf16.mxu0 0
      %213 = vmatpush1.bf16.xpose.msra.mxu0 0
      %214 = vmatprep.subr.bf16.mxu0 0
      %215 = vmatpush1.bf16.xpose.msra.mxu0 0
      %216 = vmatprep.subr.bf16.mxu0 0
      %217 = vmatpush1.bf16.xpose.msra.mxu0 0
      %218 = vmatprep.subr.bf16.mxu0 0
      %219 = vmatpush1.bf16.xpose.msra.mxu0 0
      %220 = vmatprep.subr.bf16.mxu0 0
      %221 = vmatpush1.bf16.xpose.msra.mxu0 0
      %222 = vmatprep.mubr.bf16.mxu0 0
      %223 = vmatmul.mubr.bf16.gmra.mrb[0].mxu0 %v185
      %v224 = vpop.f32.mrb[0].mxu0
      %v225 = vadd.f32 0.0, %v224
      %v226 = vpop.f32.mrb[0].mxu0
      %v227 = vpop.f32.mrb[0].mxu0
      %v228 = vpop.f32.mrb[0].mxu0
      %229 = vdwg.mxu0
      %v230 = vsel %vm119, %v225, -inf
      %231 = vmax.xlane.f32.xlu0 %v230
      %v232 = vpop.xlane.xlu0 %231
      %v233 = vsel %vm119, %v225, 0.0
      %234 = vadd.xlane.f32.xlu0 %v233
      %v235 = vpop.xlane.xlu0 %234
      %v236 = vmul.f32 %v235, 0.125
      %v237 = vsub.f32 %v232, %v236
      %vm238 = vcmask 15368
      %239 = vst.msk [vmem:[%s111] sm:$0xff] %vm238, %v237
      %v240 = vld [vmem:[%s107] sm:$0xf]
      %v242 = vunpack.c.l.b16 %v240
      %v243 = vpack.c.b16 %v242, %v242
      %244 = vrot.lane.b32.xlu0 %v243, 112
      %v245 = vpop.permute.xlu0 %244
      %246 = vrot.lane.b32.xlu0 %v243, 80
      %v247 = vpop.permute.xlu0 %246
      %v249 = vsel %vm119, %v245, 0
      %v252 = vsel %vm119, %v247, 0
      %254 = vmatprep.subr.bf16.mxu0 0
      %255 = vmatpush1.bf16.xpose.msra.mxu0 %v252
      %256 = vmatprep.subr.bf16.mxu0 0
      %257 = vmatpush1.bf16.xpose.msra.mxu0 0
      %258 = vmatprep.subr.bf16.mxu0 0
      %259 = vmatpush1.bf16.xpose.msra.mxu0 0
      %260 = vmatprep.subr.bf16.mxu0 0
      %261 = vmatpush1.bf16.xpose.msra.mxu0 0
      %262 = vmatprep.subr.bf16.mxu0 0
      %263 = vmatpush1.bf16.xpose.msra.mxu0 0
      %264 = vmatprep.subr.bf16.mxu0 0
      %265 = vmatpush1.bf16.xpose.msra.mxu0 0
      %266 = vmatprep.subr.bf16.mxu0 0
      %267 = vmatpush1.bf16.xpose.msra.mxu0 0
      %268 = vmatprep.subr.bf16.mxu0 0
      %269 = vmatpush1.bf16.xpose.msra.mxu0 0
      %270 = vmatprep.subr.bf16.mxu0 0
      %271 = vmatpush1.bf16.xpose.msra.mxu0 0
      %272 = vmatprep.subr.bf16.mxu0 0
      %273 = vmatpush1.bf16.xpose.msra.mxu0 0
      %274 = vmatprep.subr.bf16.mxu0 0
      %275 = vmatpush1.bf16.xpose.msra.mxu0 0
      %276 = vmatprep.subr.bf16.mxu0 0
      %277 = vmatpush1.bf16.xpose.msra.mxu0 0
      %278 = vmatprep.subr.bf16.mxu0 0
      %279 = vmatpush1.bf16.xpose.msra.mxu0 0
      %280 = vmatprep.subr.bf16.mxu0 0
      %281 = vmatpush1.bf16.xpose.msra.mxu0 0
      %282 = vmatprep.subr.bf16.mxu0 0
      %283 = vmatpush1.bf16.xpose.msra.mxu0 0
      %284 = vmatprep.subr.bf16.mxu0 0
      %285 = vmatpush1.bf16.xpose.msra.mxu0 0
      %286 = vmatprep.mubr.bf16.mxu0 0
      %287 = vmatmul.mubr.bf16.gmra.mrb[0].mxu0 %v249
      %v288 = vpop.f32.mrb[0].mxu0
      %v289 = vadd.f32 0.0, %v288
      %v290 = vpop.f32.mrb[0].mxu0
      %v291 = vpop.f32.mrb[0].mxu0
      %v292 = vpop.f32.mrb[0].mxu0
      %293 = vdwg.mxu0
      %v294 = vsel %vm119, %v289, -inf
      %295 = vmax.xlane.f32.xlu0 %v294
      %v296 = vpop.xlane.xlu0 %295
      %v297 = vsel %vm119, %v289, 0.0
      %298 = vadd.xlane.f32.xlu0 %v297
      %v299 = vpop.xlane.xlu0 %298
      %v300 = vmul.f32 %v299, 0.125
      %v301 = vsub.f32 %v296, %v300
      %vm302 = vcmask 23568
      %303 = vst.msk [vmem:[%s111] sm:$0xff] %vm302, %v301
      %v304 = vld [vmem:[%s107] sm:$0xf]
      %v306 = vunpack.c.l.b16 %v304
      %v307 = vpack.c.b16 %v306, %v306
      %308 = vrot.lane.b32.xlu0 %v307, 104
      %v309 = vpop.permute.xlu0 %308
      %310 = vrot.lane.b32.xlu0 %v307, 72
      %v311 = vpop.permute.xlu0 %310
      %v313 = vsel %vm119, %v309, 0
      %v316 = vsel %vm119, %v311, 0
      %318 = vmatprep.subr.bf16.mxu0 0
      %319 = vmatpush1.bf16.xpose.msra.mxu0 %v316
      %320 = vmatprep.subr.bf16.mxu0 0
      %321 = vmatpush1.bf16.xpose.msra.mxu0 0
      %322 = vmatprep.subr.bf16.mxu0 0
      %323 = vmatpush1.bf16.xpose.msra.mxu0 0
      %324 = vmatprep.subr.bf16.mxu0 0
      %325 = vmatpush1.bf16.xpose.msra.mxu0 0
      %326 = vmatprep.subr.bf16.mxu0 0
      %327 = vmatpush1.bf16.xpose.msra.mxu0 0
      %328 = vmatprep.subr.bf16.mxu0 0
      %329 = vmatpush1.bf16.xpose.msra.mxu0 0
      %330 = vmatprep.subr.bf16.mxu0 0
      %331 = vmatpush1.bf16.xpose.msra.mxu0 0
      %332 = vmatprep.subr.bf16.mxu0 0
      %333 = vmatpush1.bf16.xpose.msra.mxu0 0
      %334 = vmatprep.subr.bf16.mxu0 0
      %335 = vmatpush1.bf16.xpose.msra.mxu0 0
      %336 = vmatprep.subr.bf16.mxu0 0
      %337 = vmatpush1.bf16.xpose.msra.mxu0 0
      %338 = vmatprep.subr.bf16.mxu0 0
      %339 = vmatpush1.bf16.xpose.msra.mxu0 0
      %340 = vmatprep.subr.bf16.mxu0 0
      %341 = vmatpush1.bf16.xpose.msra.mxu0 0
      %342 = vmatprep.subr.bf16.mxu0 0
      %343 = vmatpush1.bf16.xpose.msra.mxu0 0
      %344 = vmatprep.subr.bf16.mxu0 0
      %345 = vmatpush1.bf16.xpose.msra.mxu0 0
      %346 = vmatprep.subr.bf16.mxu0 0
      %347 = vmatpush1.bf16.xpose.msra.mxu0 0
      %348 = vmatprep.subr.bf16.mxu0 0
      %349 = vmatpush1.bf16.xpose.msra.mxu0 0
      %350 = vmatprep.mubr.bf16.mxu0 0
      %351 = vmatmul.mubr.bf16.gmra.mrb[0].mxu0 %v313
      %v352 = vpop.f32.mrb[0].mxu0
      %v353 = vadd.f32 0.0, %v352
      %v354 = vpop.f32.mrb[0].mxu0
      %v355 = vpop.f32.mrb[0].mxu0
      %v356 = vpop.f32.mrb[0].mxu0
      %357 = vdwg.mxu0
      %v358 = vsel %vm119, %v353, -inf
      %359 = vmax.xlane.f32.xlu0 %v358
      %v360 = vpop.xlane.xlu0 %359
      %v361 = vsel %vm119, %v353, 0.0
      %362 = vadd.xlane.f32.xlu0 %v361
      %v363 = vpop.xlane.xlu0 %362
      %v364 = vmul.f32 %v363, 0.125
      %v365 = vsub.f32 %v360, %v364
      %vm366 = vcmask 31768
      %367 = vst.msk [vmem:[%s111] sm:$0xff] %vm366, %v365
      %p368 = scmp.lt.s32.totalorder %s12, 1
      %s369 = scalar_select %p368, %s12, 1
      %s370 = smul.addr %s369, 8
      %s371 = scalar_lea.vmem %s1, %s370
      // Predicated region
      $region25: #{teinformer_forward.46} parent=23 // pred_check
        %p372 = pneg %p56
      $region26: #{teinformer_forward.46} parent=23 // pred_check_branch
        %374 = sbr.rel (%p372) target = $region28
      $region27: #{teinformer_forward.46} parent=23 // pred_region
        _
      $region28: #{teinformer_forward.46} parent=23 // pred_fallthru
        _
    $region24: #{teinformer_forward.46} parent=5 // pred_fallthru
      _
    %p375 = scmp.le.s32.totalorder 2, %s7
    // Predicated region
    $region29: #{teinformer_forward.46} parent=5 // pred_check
      %p376 = pneg %p375
    $region30: #{teinformer_forward.46} parent=5 // pred_check_branch
      %378 = sbr.rel (%p376) target = $region32
    $region31: #{teinformer_forward.46} parent=5 // pred_region
      %s379 = ssub.s32 %s7, 2
      // Predicated region
      $region33: #{teinformer_forward.46} parent=31 // pred_check
        %p380 = pneg %p62
      $region34: #{teinformer_forward.46} parent=31 // pred_check_branch
        %382 = sbr.rel (%p380) target = $region36
      $region35: #{teinformer_forward.46} parent=31 // pred_region
        %p383 = scmp.lt.s32.totalorder %s13, 1
        %s384 = scalar_select %p383, %s13, 1
        %s385 = smul.addr %s384, 8
        %s386 = scalar_lea.vmem %s1, %s385
      $region36: #{teinformer_forward.46} parent=31 // pred_fallthru
        _
    $region32: #{teinformer_forward.46} parent=5 // pred_fallthru
      _
  $region6: #{teinformer_forward.46} parent=0 // loop_footer
    %s11 = sadd.s32 1, %s7
  $region7: #{teinformer_forward.46} parent=0 // loop_footer_branch
    %6 = sbr.rel target = $region3
  $region8: #{teinformer_forward.46} parent=0 // loop_exit
    _

// kernel: teinformer_forward.47
$region0: #{teinformer_forward.47}
  #allocation0 [shape = 'u32[]', space=smem, size = 0x4, offset = 0x4, fixed_abs, tag = 'smem constant byte address 0x4 - core index']
  #allocation1 [shape = 'u32[144,128]{1,0:T(1,128)}', space=vmem, size = 0x12000, scoped, tag = 'internal scratch']
  %s0 = inlined_call_operand.vmem [shape: bf16[2,8,32], index: 0, kind: input, shape index: {}]
  %s1 = inlined_call_operand.vmem [shape: bf16[2,8,96], index: 1, kind: input, shape index: {}]
  %s2 = inlined_call_operand.vmem [shape: bf16[2,8,32], index: 2, kind: output, shape index: {}]
  %s3 = sld [smem:[#allocation0]]
  $region41: #{teinformer_forward.47} parent=0
    _
  %s5 = ssub.s32 1, %s3
  %s6 = scalar_select 0, %s5, %s3
  loop: start=0, step=1, limit=4
  $region2: #{teinformer_forward.47} parent=0 // loop_pre_header
    _
  $region3: #{teinformer_forward.47} parent=0 // loop_header
    %s8 = sphi 0, %s12
    %p9 = scmp.ge.s32.totalorder %s8, 4
    %s18 = sphi 0, %s20
    %s21 = sphi 0, %s18
    %s22 = sphi 0, %s21
    %s38 = sphi 0, %s22
    %s44 = sphi 0, %s46
    %s47 = sphi 0, %s44
    %s48 = sphi 0, %s47
    %s64 = sphi 0, %s48
    %s70 = sphi 0, %s72
    %s73 = sphi 0, %s70
    %s74 = sphi 0, %s73
    %s90 = sphi 0, %s74
  $region4: #{teinformer_forward.47} parent=0 // loop_header_branch
    %11 = sbr.rel (%p9) target = $region8
  $region5: #{teinformer_forward.47} parent=0 // loop_body
    %s13 = ssub.s32 %s8, 1
    %s14 = ssub.s32 %s8, 2
    %s15 = sadd.s32 %s8, 1
    %s16 = ssub.s32 %s8, %s15
    %p17 = scmp.eq.s32.totalorder %s16, 0
    %s19 = sadd.s32 %s18, 1
    %s20 = scalar_select %p17, %s18, %s19
    %p23 = pneg %p17
    %p24 = scmp.eq.s32.totalorder %s8, 1
    %p25 = por %p23, %p24
    %p26 = scmp.ne.s32.totalorder %s18, %s21
    %p27 = scmp.eq.s32.totalorder %s8, 0
    %p28 = por %p26, %p27
    %p29 = scmp.ne.s32.totalorder %s18, %s21
    %p30 = scmp.eq.s32.totalorder %s13, 1
    %p31 = por %p29, %p30
    %p32 = scmp.ne.s32.totalorder %s21, %s22
    %p33 = scmp.eq.s32.totalorder %s13, 0
    %p34 = por %p32, %p33
    %p35 = scmp.ne.s32.totalorder %s21, %s22
    %p36 = scmp.eq.s32.totalorder %s14, 1
    %p37 = por %p35, %p36
    %p39 = scmp.ne.s32.totalorder %s22, %s38
    %p40 = scmp.eq.s32.totalorder %s14, 0
    %p41 = por %p39, %p40
    %s42 = ssub.s32 %s8, %s15
    %p43 = scmp.eq.s32.totalorder %s42, 0
    %s45 = sadd.s32 %s44, 1
    %s46 = scalar_select %p43, %s44, %s45
    %p49 = pneg %p43
    %p50 = scmp.eq.s32.totalorder %s8, 1
    %p51 = por %p49, %p50
    %p52 = scmp.ne.s32.totalorder %s44, %s47
    %p53 = scmp.eq.s32.totalorder %s8, 0
    %p54 = por %p52, %p53
    %p55 = scmp.ne.s32.totalorder %s44, %s47
    %p56 = scmp.eq.s32.totalorder %s13, 1
    %p57 = por %p55, %p56
    %p58 = scmp.ne.s32.totalorder %s47, %s48
    %p59 = scmp.eq.s32.totalorder %s13, 0
    %p60 = por %p58, %p59
    %p61 = scmp.ne.s32.totalorder %s47, %s48
    %p62 = scmp.eq.s32.totalorder %s14, 1
    %p63 = por %p61, %p62
    %p65 = scmp.ne.s32.totalorder %s48, %s64
    %p66 = scmp.eq.s32.totalorder %s14, 0
    %p67 = por %p65, %p66
    %s68 = ssub.s32 %s8, %s15
    %p69 = scmp.eq.s32.totalorder %s68, 0
    %s71 = sadd.s32 %s70, 1
    %s72 = scalar_select %p69, %s70, %s71
    %p75 = pneg %p69
    %p76 = scmp.eq.s32.totalorder %s8, 1
    %p77 = por %p75, %p76
    %p78 = scmp.ne.s32.totalorder %s70, %s73
    %p79 = scmp.eq.s32.totalorder %s8, 0
    %p80 = por %p78, %p79
    %p81 = scmp.ne.s32.totalorder %s70, %s73
    %p82 = scmp.eq.s32.totalorder %s13, 1
    %p83 = por %p81, %p82
    %p84 = scmp.ne.s32.totalorder %s73, %s74
    %p85 = scmp.eq.s32.totalorder %s13, 0
    %p86 = por %p84, %p85
    %p87 = scmp.ne.s32.totalorder %s73, %s74
    %p88 = scmp.eq.s32.totalorder %s14, 1
    %p89 = por %p87, %p88
    %p91 = scmp.ne.s32.totalorder %s74, %s90
    %p92 = scmp.eq.s32.totalorder %s14, 0
    %p93 = por %p91, %p92
    %p94 = scmp.le.s32.totalorder 1, %s8
    %p95 = scmp.lt.s32.totalorder %s8, 3
    %p96 = pnand %p94, %p95
    %p97 = pneg %p96
    // Predicated region
    $region9: #{teinformer_forward.47} parent=5 // pred_check
      _
    $region10: #{teinformer_forward.47} parent=5 // pred_check_branch
      %99 = sbr.rel (%p96) target = $region12
    $region11: #{teinformer_forward.47} parent=5 // pred_region
      %s100 = ssub.s32 %s8, 1
    $region12: #{teinformer_forward.47} parent=5 // pred_fallthru
      _
    %p101 = scmp.lt.s32.totalorder %s8, 2
    // Predicated region
    $region13: #{teinformer_forward.47} parent=5 // pred_check
      %p102 = pneg %p101
    $region14: #{teinformer_forward.47} parent=5 // pred_check_branch
      %104 = sbr.rel (%p102) target = $region16
    $region15: #{teinformer_forward.47} parent=5 // pred_region
      // Predicated region
      $region17: #{teinformer_forward.47} parent=15 // pred_check
        %p105 = pneg %p28
      $region18: #{teinformer_forward.47} parent=15 // pred_check_branch
        %107 = sbr.rel (%p105) target = $region20
      $region19: #{teinformer_forward.47} parent=15 // pred_region
        %p108 = scmp.lt.s32.totalorder %s8, 1
        %s109 = scalar_select %p108, %s8, 1
        %s110 = smul.addr %s109, 4
        %s111 = scalar_lea.vmem %s0, %s110
      $region20: #{teinformer_forward.47} parent=15 // pred_fallthru
        _
      // Predicated region
      $region21: #{teinformer_forward.47} parent=15 // pred_check
        %p112 = pneg %p54
      $region22: #{teinformer_forward.47} parent=15 // pred_check_branch
        %114 = sbr.rel (%p112) target = $region24
      $region23: #{teinformer_forward.47} parent=15 // pred_region
        %p115 = scmp.lt.s32.totalorder %s8, 1
        %s116 = scalar_select %p115, %s8, 1
        %s117 = smul.addr %s116, 4
        %s118 = scalar_lea.vmem %s1, %s117
      $region24: #{teinformer_forward.47} parent=15 // pred_fallthru
        _
    $region16: #{teinformer_forward.47} parent=5 // pred_fallthru
      _
    %p119 = scmp.le.s32.totalorder 1, %s8
    %p120 = scmp.lt.s32.totalorder %s8, 3
    %p121 = pnand %p119, %p120
    %p122 = pneg %p121
    // Predicated region
    $region25: #{teinformer_forward.47} parent=5 // pred_check
      _
    $region26: #{teinformer_forward.47} parent=5 // pred_check_branch
      %124 = sbr.rel (%p121) target = $region28
    $region27: #{teinformer_forward.47} parent=5 // pred_region
      %s125 = ssub.s32 %s8, 1
      %p126 = scmp.lt.s32.totalorder %s13, 1
      %s127 = scalar_select %p126, %s13, 1
      %s128 = smul.addr %s127, 4
      %s129 = scalar_lea.vmem %s0, %s128
      %p130 = pneg %p34
      %p131 = pneg %p31
      %p132 = scmp.lt.s32.totalorder %s13, 1
      %s133 = scalar_select %p132, %s13, 1
      %s134 = smul.addr %s133, 4
      %s135 = scalar_lea.vmem %s1, %s134
      %p136 = pneg %p60
      %p137 = pneg %p57
      %p138 = pneg %p86
      %p139 = pneg %p83
      %p140 = scmp.lt.s32.totalorder %s13, 1
      %s141 = scalar_select %p140, %s13, 1
      %s142 = smul.addr %s141, 4
      %s143 = scalar_lea.vmem %s2, %s142
      %p144 = scmp.lt.s32.totalorder %s13, 1
      %s145 = scalar_select %p144, %s13, 1
      %s146 = smul.addr %s145, 4
      %s147 = scalar_lea.vmem %s0, %s146
      %p148 = scmp.lt.s32.totalorder %s13, 1
      %s149 = scalar_select %p148, %s13, 1
      %s150 = smul.addr %s149, 4
      %s151 = scalar_lea.vmem %s1, %s150
      %p152 = scmp.lt.s32.totalorder %s13, 1
      %s153 = scalar_select %p152, %s13, 1
      %s154 = smul.addr %s153, 4
      %s155 = scalar_lea.vmem %s2, %s154
      %v157 = vld [vmem:[%s147] sm:$0xf]
      %v158 = vld [vmem:[%s151] sm:$0xf]
      %v160 = vunpack.c.l.b16 %v158
      %v161 = vpack.c.b16 %v160, %v160
      %162 = vrot.lane.b32.xlu0 %v161, 96
      %v163 = vpop.permute.xlu0 %162
      %vm164 = vcmask 64512
      %v166 = vsel %vm164, %v157, 0
      %v169 = vsel %vm164, %v163, 0
      %171 = vmatprep.subr.bf16.mxu0 0
      %172 = vmatpush1.bf16.xpose.msra.mxu0 %v169
      %173 = vmatprep.subr.bf16.mxu0 0
      %174 = vmatpush1.bf16.xpose.msra.mxu0 0
      %175 = vmatprep.subr.bf16.mxu0 0
      %176 = vmatpush1.bf16.xpose.msra.mxu0 0
      %177 = vmatprep.subr.bf16.mxu0 0
      %178 = vmatpush1.bf16.xpose.msra.mxu0 0
      %179 = vmatprep.subr.bf16.mxu0 0
      %180 = vmatpush1.bf16.xpose.msra.mxu0 0
      %181 = vmatprep.subr.bf16.mxu0 0
      %182 = vmatpush1.bf16.xpose.msra.mxu0 0
      %183 = vmatprep.subr.bf16.mxu0 0
      %184 = vmatpush1.bf16.xpose.msra.mxu0 0
      %185 = vmatprep.subr.bf16.mxu0 0
      %186 = vmatpush1.bf16.xpose.msra.mxu0 0
      %187 = vmatprep.subr.bf16.mxu0 0
      %188 = vmatpush1.bf16.xpose.msra.mxu0 0
      %189 = vmatprep.subr.bf16.mxu0 0
      %190 = vmatpush1.bf16.xpose.msra.mxu0 0
      %191 = vmatprep.subr.bf16.mxu0 0
      %192 = vmatpush1.bf16.xpose.msra.mxu0 0
      %193 = vmatprep.subr.bf16.mxu0 0
      %194 = vmatpush1.bf16.xpose.msra.mxu0 0
      %195 = vmatprep.subr.bf16.mxu0 0
      %196 = vmatpush1.bf16.xpose.msra.mxu0 0
      %197 = vmatprep.subr.bf16.mxu0 0
      %198 = vmatpush1.bf16.xpose.msra.mxu0 0
      %199 = vmatprep.subr.bf16.mxu0 0
      %200 = vmatpush1.bf16.xpose.msra.mxu0 0
      %201 = vmatprep.subr.bf16.mxu0 0
      %202 = vmatpush1.bf16.xpose.msra.mxu0 0
      %203 = vmatprep.mubr.bf16.mxu0 0
      %204 = vmatmul.mubr.bf16.gmra.mrb[0].mxu0 %v166
      %v205 = vpop.f32.mrb[0].mxu0
      %v206 = vadd.f32 0.0, %v205
      %v207 = vpop.f32.mrb[0].mxu0
      %v208 = vpop.f32.mrb[0].mxu0
      %v209 = vpop.f32.mrb[0].mxu0
      %210 = vdwg.mxu0
      %v211 = vmul.f32 %v206, 0.35355338
      %v212 = vsel %vm164, %v211, -inf
      %213 = vmax.xlane.f32.xlu0 %v212
      %v214 = vpop.xlane.xlu0 %213
      %v215 = vsub.f32 %v211, %v214
      %v216 = vmul.f32 %v215, 1.442695
      %v217 = vpow.pop %v216
      %v218 = vsel %vm164, %v217, 0.0
      %219 = vadd.xlane.f32.xlu0 %v218
      %v220 = vpop.xlane.xlu0 %219
      %v221 = vrcp.pop %v220
      %v222 = vmul.f32 %v217, %v221
      %v223 = vpack.c.bf16 %v222, %v222
      %224 = vrot.lane.b32.xlu0 %v161, 64
      %v225 = vpop.permute.xlu0 %224
      %v227 = vsel %vm164, %v223, 0
      %vm229 = vcmask 1043456
      %v231 = vsel %vm229, %v225, 0
      %233 = vmatprep.subr.bf16.mxu0 0
      %234 = vmatpush1.bf16.msra.mxu0 %v231
      %235 = vmatprep.subr.bf16.mxu0 0
      %236 = vmatpush1.bf16.msra.mxu0 0
      %237 = vmatprep.subr.bf16.mxu0 0
      %238 = vmatpush1.bf16.msra.mxu0 0
      %239 = vmatprep.subr.bf16.mxu0 0
      %240 = vmatpush1.bf16.msra.mxu0 0
      %241 = vmatprep.subr.bf16.mxu0 0
      %242 = vmatpush1.bf16.msra.mxu0 0
      %243 = vmatprep.subr.bf16.mxu0 0
      %244 = vmatpush1.bf16.msra.mxu0 0
      %245 = vmatprep.subr.bf16.mxu0 0
      %246 = vmatpush1.bf16.msra.mxu0 0
      %247 = vmatprep.subr.bf16.mxu0 0
      %248 = vmatpush1.bf16.msra.mxu0 0
      %249 = vmatprep.subr.bf16.mxu0 0
      %250 = vmatpush1.bf16.msra.mxu0 0
      %251 = vmatprep.subr.bf16.mxu0 0
      %252 = vmatpush1.bf16.msra.mxu0 0
      %253 = vmatprep.subr.bf16.mxu0 0
      %254 = vmatpush1.bf16.msra.mxu0 0
      %255 = vmatprep.subr.bf16.mxu0 0
      %256 = vmatpush1.bf16.msra.mxu0 0
      %257 = vmatprep.subr.bf16.mxu0 0
      %258 = vmatpush1.bf16.msra.mxu0 0
      %259 = vmatprep.subr.bf16.mxu0 0
      %260 = vmatpush1.bf16.msra.mxu0 0
      %261 = vmatprep.subr.bf16.mxu0 0
      %262 = vmatpush1.bf16.msra.mxu0 0
      %263 = vmatprep.subr.bf16.mxu0 0
      %264 = vmatpush1.bf16.msra.mxu0 0
      %265 = vmatprep.mubr.bf16.mxu0 0
      %266 = vmatmul.mubr.bf16.gmra.mrb[0].mxu0 %v227
      %v267 = vpop.f32.mrb[0].mxu0
      %v268 = vadd.f32 0.0, %v267
      %v269 = vpop.f32.mrb[0].mxu0
      %v270 = vpop.f32.mrb[0].mxu0
      %v271 = vpop.f32.mrb[0].mxu0
      %272 = vdwg.mxu0
      %v273 = vpack.c.bf16 %v268, %v268
      %vm274 = vcmask 60416
      %275 = vst.msk [vmem:[%s155] sm:$0xf] %vm274, %v273
      %v276 = vld [vmem:[%s147] sm:$0xf]
      %v277 = vld [vmem:[%s151] sm:$0xf]
      %v279 = vunpack.c.l.b16 %v276
      %v280 = vpack.c.b16 %v279, %v279
      %281 = vrot.lane.b32.xlu0 %v280, 120
      %v282 = vpop.permute.xlu0 %281
      %v284 = vunpack.c.l.b16 %v277
      %v285 = vpack.c.b16 %v284, %v284
      %286 = vrot.lane.b32.xlu0 %v285, 88
      %v287 = vpop.permute.xlu0 %286
      %v289 = vsel %vm164, %v282, 0
      %v292 = vsel %vm164, %v287, 0
      %294 = vmatprep.subr.bf16.mxu0 0
      %295 = vmatpush1.bf16.xpose.msra.mxu0 %v292
      %296 = vmatprep.subr.bf16.mxu0 0
      %297 = vmatpush1.bf16.xpose.msra.mxu0 0
      %298 = vmatprep.subr.bf16.mxu0 0
      %299 = vmatpush1.bf16.xpose.msra.mxu0 0
      %300 = vmatprep.subr.bf16.mxu0 0
      %301 = vmatpush1.bf16.xpose.msra.mxu0 0
      %302 = vmatprep.subr.bf16.mxu0 0
      %303 = vmatpush1.bf16.xpose.msra.mxu0 0
      %304 = vmatprep.subr.bf16.mxu0 0
      %305 = vmatpush1.bf16.xpose.msra.mxu0 0
      %306 = vmatprep.subr.bf16.mxu0 0
      %307 = vmatpush1.bf16.xpose.msra.mxu0 0
      %308 = vmatprep.subr.bf16.mxu0 0
      %309 = vmatpush1.bf16.xpose.msra.mxu0 0
      %310 = vmatprep.subr.bf16.mxu0 0
      %311 = vmatpush1.bf16.xpose.msra.mxu0 0
      %312 = vmatprep.subr.bf16.mxu0 0
      %313 = vmatpush1.bf16.xpose.msra.mxu0 0
      %314 = vmatprep.subr.bf16.mxu0 0
      %315 = vmatpush1.bf16.xpose.msra.mxu0 0
      %316 = vmatprep.subr.bf16.mxu0 0
      %317 = vmatpush1.bf16.xpose.msra.mxu0 0
      %318 = vmatprep.subr.bf16.mxu0 0
      %319 = vmatpush1.bf16.xpose.msra.mxu0 0
      %320 = vmatprep.subr.bf16.mxu0 0
      %321 = vmatpush1.bf16.xpose.msra.mxu0 0
      %322 = vmatprep.subr.bf16.mxu0 0
      %323 = vmatpush1.bf16.xpose.msra.mxu0 0
      %324 = vmatprep.subr.bf16.mxu0 0
      %325 = vmatpush1.bf16.xpose.msra.mxu0 0
      %326 = vmatprep.mubr.bf16.mxu0 0
      %327 = vmatmul.mubr.bf16.gmra.mrb[0].mxu0 %v289
      %v328 = vpop.f32.mrb[0].mxu0
      %v329 = vadd.f32 0.0, %v328
      %v330 = vpop.f32.mrb[0].mxu0
      %v331 = vpop.f32.mrb[0].mxu0
      %v332 = vpop.f32.mrb[0].mxu0
      %333 = vdwg.mxu0
      %v334 = vmul.f32 %v329, 0.35355338
      %v335 = vsel %vm164, %v334, -inf
      %336 = vmax.xlane.f32.xlu0 %v335
      %v337 = vpop.xlane.xlu0 %336
      %v338 = vsub.f32 %v334, %v337
      %v339 = vmul.f32 %v338, 1.442695
      %v340 = vpow.pop %v339
      %v341 = vsel %vm164, %v340, 0.0
      %342 = vadd.xlane.f32.xlu0 %v341
      %v343 = vpop.xlane.xlu0 %342
      %v344 = vrcp.pop %v343
      %v345 = vmul.f32 %v340, %v344
      %v346 = vpack.c.bf16 %v345, %v345
      %347 = vrot.lane.b32.xlu0 %v285, 56
      %v348 = vpop.permute.xlu0 %347
      %v350 = vsel %vm164, %v346, 0
      %v353 = vsel %vm229, %v348, 0
      %355 = vmatprep.subr.bf16.mxu0 0
      %356 = vmatpush1.bf16.msra.mxu0 %v353
      %357 = vmatprep.subr.bf16.mxu0 0
      %358 = vmatpush1.bf16.msra.mxu0 0
      %359 = vmatprep.subr.bf16.mxu0 0
      %360 = vmatpush1.bf16.msra.mxu0 0
      %361 = vmatprep.subr.bf16.mxu0 0
      %362 = vmatpush1.bf16.msra.mxu0 0
      %363 = vmatprep.subr.bf16.mxu0 0
      %364 = vmatpush1.bf16.msra.mxu0 0
      %365 = vmatprep.subr.bf16.mxu0 0
      %366 = vmatpush1.bf16.msra.mxu0 0
      %367 = vmatprep.subr.bf16.mxu0 0
      %368 = vmatpush1.bf16.msra.mxu0 0
      %369 = vmatprep.subr.bf16.mxu0 0
      %370 = vmatpush1.bf16.msra.mxu0 0
      %371 = vmatprep.subr.bf16.mxu0 0
      %372 = vmatpush1.bf16.msra.mxu0 0
      %373 = vmatprep.subr.bf16.mxu0 0
      %374 = vmatpush1.bf16.msra.mxu0 0
      %375 = vmatprep.subr.bf16.mxu0 0
      %376 = vmatpush1.bf16.msra.mxu0 0
      %377 = vmatprep.subr.bf16.mxu0 0
      %378 = vmatpush1.bf16.msra.mxu0 0
      %379 = vmatprep.subr.bf16.mxu0 0
      %380 = vmatpush1.bf16.msra.mxu0 0
      %381 = vmatprep.subr.bf16.mxu0 0
      %382 = vmatpush1.bf16.msra.mxu0 0
      %383 = vmatprep.subr.bf16.mxu0 0
      %384 = vmatpush1.bf16.msra.mxu0 0
      %385 = vmatprep.subr.bf16.mxu0 0
      %386 = vmatpush1.bf16.msra.mxu0 0
      %387 = vmatprep.mubr.bf16.mxu0 0
      %388 = vmatmul.mubr.bf16.gmra.mrb[0].mxu0 %v350
      %v389 = vpop.f32.mrb[0].mxu0
      %v390 = vadd.f32 0.0, %v389
      %v391 = vpop.f32.mrb[0].mxu0
      %v392 = vpop.f32.mrb[0].mxu0
      %v393 = vpop.f32.mrb[0].mxu0
      %394 = vdwg.mxu0
      %v395 = vpack.c.bf16 %v390, %v390
      %v397 = vunpack.c.l.b16 %v395
      %v398 = vpack.c.b16 %v397, %v397
      %399 = vrot.lane.b32.xlu0 %v398, 8
      %v400 = vpop.permute.xlu0 %399
      %vm402 = vcmask 126016
      %403 = vst.msk [vmem:[%s155] sm:$0xf] %vm402, %v400
      %v404 = vld [vmem:[%s147] sm:$0xf]
      %v405 = vld [vmem:[%s151] sm:$0xf]
      %v407 = vunpack.c.l.b16 %v404
      %v408 = vpack.c.b16 %v407, %v407
      %409 = vrot.lane.b32.xlu0 %v408, 112
      %v410 = vpop.permute.xlu0 %409
      %v412 = vunpack.c.l.b16 %v405
      %v413 = vpack.c.b16 %v412, %v412
      %414 = vrot.lane.b32.xlu0 %v413, 80
      %v415 = vpop.permute.xlu0 %414
      %v417 = vsel %vm164, %v410, 0
      %v420 = vsel %vm164, %v415, 0
      %422 = vmatprep.subr.bf16.mxu0 0
      %423 = vmatpush1.bf16.xpose.msra.mxu0 %v420
      %424 = vmatprep.subr.bf16.mxu0 0
      %425 = vmatpush1.bf16.xpose.msra.mxu0 0
      %426 = vmatprep.subr.bf16.mxu0 0
      %427 = vmatpush1.bf16.xpose.msra.mxu0 0
      %428 = vmatprep.subr.bf16.mxu0 0
      %429 = vmatpush1.bf16.xpose.msra.mxu0 0
      %430 = vmatprep.subr.bf16.mxu0 0
      %431 = vmatpush1.bf16.xpose.msra.mxu0 0
      %432 = vmatprep.subr.bf16.mxu0 0
      %433 = vmatpush1.bf16.xpose.msra.mxu0 0
      %434 = vmatprep.subr.bf16.mxu0 0
      %435 = vmatpush1.bf16.xpose.msra.mxu0 0
      %436 = vmatprep.subr.bf16.mxu0 0
      %437 = vmatpush1.bf16.xpose.msra.mxu0 0
      %438 = vmatprep.subr.bf16.mxu0 0
      %439 = vmatpush1.bf16.xpose.msra.mxu0 0
      %440 = vmatprep.subr.bf16.mxu0 0
      %441 = vmatpush1.bf16.xpose.msra.mxu0 0
      %442 = vmatprep.subr.bf16.mxu0 0
      %443 = vmatpush1.bf16.xpose.msra.mxu0 0
      %444 = vmatprep.subr.bf16.mxu0 0
      %445 = vmatpush1.bf16.xpose.msra.mxu0 0
      %446 = vmatprep.subr.bf16.mxu0 0
      %447 = vmatpush1.bf16.xpose.msra.mxu0 0
      %448 = vmatprep.subr.bf16.mxu0 0
      %449 = vmatpush1.bf16.xpose.msra.mxu0 0
      %450 = vmatprep.subr.bf16.mxu0 0
      %451 = vmatpush1.bf16.xpose.msra.mxu0 0
      %452 = vmatprep.subr.bf16.mxu0 0
      %453 = vmatpush1.bf16.xpose.msra.mxu0 0
      %454 = vmatprep.mubr.bf16.mxu0 0
      %455 = vmatmul.mubr.bf16.gmra.mrb[0].mxu0 %v417
      %v456 = vpop.f32.mrb[0].mxu0
      %v457 = vadd.f32 0.0, %v456
      %v458 = vpop.f32.mrb[0].mxu0
      %v459 = vpop.f32.mrb[0].mxu0
      %v460 = vpop.f32.mrb[0].mxu0
      %461 = vdwg.mxu0
      %v462 = vmul.f32 %v457, 0.35355338
      %v463 = vsel %vm164, %v462, -inf
      %464 = vmax.xlane.f32.xlu0 %v463
      %v465 = vpop.xlane.xlu0 %464
      %v466 = vsub.f32 %v462, %v465
      %v467 = vmul.f32 %v466, 1.442695
      %v468 = vpow.pop %v467
      %v469 = vsel %vm164, %v468, 0.0
      %470 = vadd.xlane.f32.xlu0 %v469
      %v471 = vpop.xlane.xlu0 %470
      %v472 = vrcp.pop %v471
      %v473 = vmul.f32 %v468, %v472
      %v474 = vpack.c.bf16 %v473, %v473
      %475 = vrot.lane.b32.xlu0 %v413, 48
      %v476 = vpop.permute.xlu0 %475
      %v478 = vsel %vm164, %v474, 0
      %v481 = vsel %vm229, %v476, 0
      %483 = vmatprep.subr.bf16.mxu0 0
      %484 = vmatpush1.bf16.msra.mxu0 %v481
      %485 = vmatprep.subr.bf16.mxu0 0
      %486 = vmatpush1.bf16.msra.mxu0 0
      %487 = vmatprep.subr.bf16.mxu0 0
      %488 = vmatpush1.bf16.msra.mxu0 0
      %489 = vmatprep.subr.bf16.mxu0 0
      %490 = vmatpush1.bf16.msra.mxu0 0
      %491 = vmatprep.subr.bf16.mxu0 0
      %492 = vmatpush1.bf16.msra.mxu0 0
      %493 = vmatprep.subr.bf16.mxu0 0
      %494 = vmatpush1.bf16.msra.mxu0 0
      %495 = vmatprep.subr.bf16.mxu0 0
      %496 = vmatpush1.bf16.msra.mxu0 0
      %497 = vmatprep.subr.bf16.mxu0 0
      %498 = vmatpush1.bf16.msra.mxu0 0
      %499 = vmatprep.subr.bf16.mxu0 0
      %500 = vmatpush1.bf16.msra.mxu0 0
      %501 = vmatprep.subr.bf16.mxu0 0
      %502 = vmatpush1.bf16.msra.mxu0 0
      %503 = vmatprep.subr.bf16.mxu0 0
      %504 = vmatpush1.bf16.msra.mxu0 0
      %505 = vmatprep.subr.bf16.mxu0 0
      %506 = vmatpush1.bf16.msra.mxu0 0
      %507 = vmatprep.subr.bf16.mxu0 0
      %508 = vmatpush1.bf16.msra.mxu0 0
      %509 = vmatprep.subr.bf16.mxu0 0
      %510 = vmatpush1.bf16.msra.mxu0 0
      %511 = vmatprep.subr.bf16.mxu0 0
      %512 = vmatpush1.bf16.msra.mxu0 0
      %513 = vmatprep.subr.bf16.mxu0 0
      %514 = vmatpush1.bf16.msra.mxu0 0
      %515 = vmatprep.mubr.bf16.mxu0 0
      %516 = vmatmul.mubr.bf16.gmra.mrb[0].mxu0 %v478
      %v517 = vpop.f32.mrb[0].mxu0
      %v518 = vadd.f32 0.0, %v517
      %v519 = vpop.f32.mrb[0].mxu0
      %v520 = vpop.f32.mrb[0].mxu0
      %v521 = vpop.f32.mrb[0].mxu0
      %522 = vdwg.mxu0
      %v523 = vpack.c.bf16 %v518, %v518
      %v525 = vunpack.c.l.b16 %v523
      %v526 = vpack.c.b16 %v525, %v525
      %527 = vrot.lane.b32.xlu0 %v526, 16
      %v528 = vpop.permute.xlu0 %527
      %vm530 = vcmask 191616
      %531 = vst.msk [vmem:[%s155] sm:$0xf] %vm530, %v528
      %v532 = vld [vmem:[%s147] sm:$0xf]
      %v533 = vld [vmem:[%s151] sm:$0xf]
      %v535 = vunpack.c.l.b16 %v532
      %v536 = vpack.c.b16 %v535, %v535
      %537 = vrot.lane.b32.xlu0 %v536, 104
      %v538 = vpop.permute.xlu0 %537
      %v540 = vunpack.c.l.b16 %v533
      %v541 = vpack.c.b16 %v540, %v540
      %542 = vrot.lane.b32.xlu0 %v541, 72
      %v543 = vpop.permute.xlu0 %542
      %v545 = vsel %vm164, %v538, 0
      %v548 = vsel %vm164, %v543, 0
      %550 = vmatprep.subr.bf16.mxu0 0
      %551 = vmatpush1.bf16.xpose.msra.mxu0 %v548
      %552 = vmatprep.subr.bf16.mxu0 0
      %553 = vmatpush1.bf16.xpose.msra.mxu0 0
      %554 = vmatprep.subr.bf16.mxu0 0
      %555 = vmatpush1.bf16.xpose.msra.mxu0 0
      %556 = vmatprep.subr.bf16.mxu0 0
      %557 = vmatpush1.bf16.xpose.msra.mxu0 0
      %558 = vmatprep.subr.bf16.mxu0 0
      %559 = vmatpush1.bf16.xpose.msra.mxu0 0
      %560 = vmatprep.subr.bf16.mxu0 0
      %561 = vmatpush1.bf16.xpose.msra.mxu0 0
      %562 = vmatprep.subr.bf16.mxu0 0
      %563 = vmatpush1.bf16.xpose.msra.mxu0 0
      %564 = vmatprep.subr.bf16.mxu0 0
      %565 = vmatpush1.bf16.xpose.msra.mxu0 0
      %566 = vmatprep.subr.bf16.mxu0 0
      %567 = vmatpush1.bf16.xpose.msra.mxu0 0
      %568 = vmatprep.subr.bf16.mxu0 0
      %569 = vmatpush1.bf16.xpose.msra.mxu0 0
      %570 = vmatprep.subr.bf16.mxu0 0
      %571 = vmatpush1.bf16.xpose.msra.mxu0 0
      %572 = vmatprep.subr.bf16.mxu0 0
      %573 = vmatpush1.bf16.xpose.msra.mxu0 0
      %574 = vmatprep.subr.bf16.mxu0 0
      %575 = vmatpush1.bf16.xpose.msra.mxu0 0
      %576 = vmatprep.subr.bf16.mxu0 0
      %577 = vmatpush1.bf16.xpose.msra.mxu0 0
      %578 = vmatprep.subr.bf16.mxu0 0
      %579 = vmatpush1.bf16.xpose.msra.mxu0 0
      %580 = vmatprep.subr.bf16.mxu0 0
      %581 = vmatpush1.bf16.xpose.msra.mxu0 0
      %582 = vmatprep.mubr.bf16.mxu0 0
      %583 = vmatmul.mubr.bf16.gmra.mrb[0].mxu0 %v545
      %v584 = vpop.f32.mrb[0].mxu0
      %v585 = vadd.f32 0.0, %v584
      %v586 = vpop.f32.mrb[0].mxu0
      %v587 = vpop.f32.mrb[0].mxu0
      %v588 = vpop.f32.mrb[0].mxu0
      %589 = vdwg.mxu0
      %v590 = vmul.f32 %v585, 0.35355338
      %v591 = vsel %vm164, %v590, -inf
      %592 = vmax.xlane.f32.xlu0 %v591
      %v593 = vpop.xlane.xlu0 %592
      %v594 = vsub.f32 %v590, %v593
      %v595 = vmul.f32 %v594, 1.442695
      %v596 = vpow.pop %v595
      %v597 = vsel %vm164, %v596, 0.0
      %598 = vadd.xlane.f32.xlu0 %v597
      %v599 = vpop.xlane.xlu0 %598
      %v600 = vrcp.pop %v599
      %v601 = vmul.f32 %v596, %v600
      %v602 = vpack.c.bf16 %v601, %v601
      %603 = vrot.lane.b32.xlu0 %v541, 40
      %v604 = vpop.permute.xlu0 %603
      %v606 = vsel %vm164, %v602, 0
      %v609 = vsel %vm229, %v604, 0
      %611 = vmatprep.subr.bf16.mxu0 0
      %612 = vmatpush1.bf16.msra.mxu0 %v609
      %613 = vmatprep.subr.bf16.mxu0 0
      %614 = vmatpush1.bf16.msra.mxu0 0
      %615 = vmatprep.subr.bf16.mxu0 0
      %616 = vmatpush1.bf16.msra.mxu0 0
      %617 = vmatprep.subr.bf16.mxu0 0
      %618 = vmatpush1.bf16.msra.mxu0 0
      %619 = vmatprep.subr.bf16.mxu0 0
      %620 = vmatpush1.bf16.msra.mxu0 0
      %621 = vmatprep.subr.bf16.mxu0 0
      %622 = vmatpush1.bf16.msra.mxu0 0
      %623 = vmatprep.subr.bf16.mxu0 0
      %624 = vmatpush1.bf16.msra.mxu0 0
      %625 = vmatprep.subr.bf16.mxu0 0
      %626 = vmatpush1.bf16.msra.mxu0 0
      %627 = vmatprep.subr.bf16.mxu0 0
      %628 = vmatpush1.bf16.msra.mxu0 0
      %629 = vmatprep.subr.bf16.mxu0 0
      %630 = vmatpush1.bf16.msra.mxu0 0
      %631 = vmatprep.subr.bf16.mxu0 0
      %632 = vmatpush1.bf16.msra.mxu0 0
      %633 = vmatprep.subr.bf16.mxu0 0
      %634 = vmatpush1.bf16.msra.mxu0 0
      %635 = vmatprep.subr.bf16.mxu0 0
      %636 = vmatpush1.bf16.msra.mxu0 0
      %637 = vmatprep.subr.bf16.mxu0 0
      %638 = vmatpush1.bf16.msra.mxu0 0
      %639 = vmatprep.subr.bf16.mxu0 0
      %640 = vmatpush1.bf16.msra.mxu0 0
      %641 = vmatprep.subr.bf16.mxu0 0
      %642 = vmatpush1.bf16.msra.mxu0 0
      %643 = vmatprep.mubr.bf16.mxu0 0
      %644 = vmatmul.mubr.bf16.gmra.mrb[0].mxu0 %v606
      %v645 = vpop.f32.mrb[0].mxu0
      %v646 = vadd.f32 0.0, %v645
      %v647 = vpop.f32.mrb[0].mxu0
      %v648 = vpop.f32.mrb[0].mxu0
      %v649 = vpop.f32.mrb[0].mxu0
      %650 = vdwg.mxu0
      %v651 = vpack.c.bf16 %v646, %v646
      %v653 = vunpack.c.l.b16 %v651
      %v654 = vpack.c.b16 %v653, %v653
      %655 = vrot.lane.b32.xlu0 %v654, 24
      %v656 = vpop.permute.xlu0 %655
      %vm658 = vcmask 257216
      %659 = vst.msk [vmem:[%s155] sm:$0xf] %vm658, %v656
      %p660 = scmp.lt.s32.totalorder %s13, 1
      %s661 = scalar_select %p660, %s13, 1
      %s662 = smul.addr %s661, 4
      %s663 = scalar_lea.vmem %s2, %s662
      // Predicated region
      $region29: #{teinformer_forward.47} parent=27 // pred_check
        %p664 = pneg %p83
      $region30: #{teinformer_forward.47} parent=27 // pred_check_branch
        %666 = sbr.rel (%p664) target = $region32
      $region31: #{teinformer_forward.47} parent=27 // pred_region
        _
      $region32: #{teinformer_forward.47} parent=27 // pred_fallthru
        _
    $region28: #{teinformer_forward.47} parent=5 // pred_fallthru
      _
    %p667 = scmp.le.s32.totalorder 2, %s8
    // Predicated region
    $region33: #{teinformer_forward.47} parent=5 // pred_check
      %p668 = pneg %p667
    $region34: #{teinformer_forward.47} parent=5 // pred_check_branch
      %670 = sbr.rel (%p668) target = $region36
    $region35: #{teinformer_forward.47} parent=5 // pred_region
      %s671 = ssub.s32 %s8, 2
      // Predicated region
      $region37: #{teinformer_forward.47} parent=35 // pred_check
        %p672 = pneg %p89
      $region38: #{teinformer_forward.47} parent=35 // pred_check_branch
        %674 = sbr.rel (%p672) target = $region40
      $region39: #{teinformer_forward.47} parent=35 // pred_region
        %p675 = scmp.lt.s32.totalorder %s14, 1
        %s676 = scalar_select %p675, %s14, 1
        %s677 = smul.addr %s676, 4
        %s678 = scalar_lea.vmem %s2, %s677
      $region40: #{teinformer_forward.47} parent=35 // pred_fallthru
        _
    $region36: #{teinformer_forward.47} parent=5 // pred_fallthru
      _
  $region6: #{teinformer_forward.47} parent=0 // loop_footer
    %s12 = sadd.s32 1, %s8
  $region7: #{teinformer_forward.47} parent=0 // loop_footer_branch
    %7 = sbr.rel target = $region3
  $region8: #{teinformer_forward.47} parent=0 // loop_exit
    _

// kernel: teinformer_forward.48
$region0: #{teinformer_forward.48}
  #allocation0 [shape = 'u32[]', space=smem, size = 0x4, offset = 0x4, fixed_abs, tag = 'smem constant byte address 0x4 - core index']
  #allocation1 [shape = 'u32[144,128]{1,0:T(1,128)}', space=vmem, size = 0x12000, scoped, tag = 'internal scratch']
  #allocation2 [shape = 'f32[16,32]{1,0:T(8,128)}', space=vmem, size = 0x2000, scoped, tag = 'scratch operand']
  %s0 = inlined_call_operand.vmem [shape: bf16[16,32], index: 0, kind: input, shape index: {}]
  %s1 = inlined_call_operand.vmem [shape: bf16[32,32], index: 1, kind: input, shape index: {}]
  %s2 = inlined_call_operand.vmem [shape: f32[1,32], index: 2, kind: input, shape index: {}]
  %s3 = inlined_call_operand.vmem [shape: f32[16,32], index: 3, kind: output, shape index: {}]
  %s4 = sld [smem:[#allocation0]]
  $region30: #{teinformer_forward.48} parent=0
    _
  %s6 = ssub.s32 1, %s4
  %s7 = scalar_select 0, %s6, %s4
  // Predicated region
  $region2: #{teinformer_forward.48} parent=0 // pred_check
    _
  $region3: #{teinformer_forward.48} parent=0 // pred_check_branch
    %9 = sbr.rel (0) target = $region5
  $region4: #{teinformer_forward.48} parent=0 // pred_region
    _
  $region5: #{teinformer_forward.48} parent=0 // pred_fallthru
    _
  // Predicated region
  $region6: #{teinformer_forward.48} parent=0 // pred_check
    _
  $region7: #{teinformer_forward.48} parent=0 // pred_check_branch
    %11 = sbr.rel (0) target = $region9
  $region8: #{teinformer_forward.48} parent=0 // pred_region
    _
  $region9: #{teinformer_forward.48} parent=0 // pred_fallthru
    _
  // Predicated region
  $region10: #{teinformer_forward.48} parent=0 // pred_check
    _
  $region11: #{teinformer_forward.48} parent=0 // pred_check_branch
    %13 = sbr.rel (0) target = $region13
  $region12: #{teinformer_forward.48} parent=0 // pred_region
    _
  $region13: #{teinformer_forward.48} parent=0 // pred_fallthru
    _
  %p15 = scmp.eq.s32.totalorder 0, 0
  // Predicated region
  $region14: #{teinformer_forward.48} parent=0 // pred_check
    %p16 = pneg %p15
  $region15: #{teinformer_forward.48} parent=0 // pred_check_branch
    %18 = sbr.rel (%p16) target = $region17
  $region16: #{teinformer_forward.48} parent=0 // pred_region
    %vm19 = vcmask 261120
    %20 = vst.msk [vmem:[#allocation2] sm:$0xff] %vm19, 0.0
    %21 = vst.msk [vmem:[#allocation2 + $0x8] sm:$0xff] %vm19, 0.0
  $region17: #{teinformer_forward.48} parent=0 // pred_fallthru
    _
  %v22 = vld [vmem:[#allocation2] sm:$0xff]
  %v23 = vld [vmem:[#allocation2 + $0x8] sm:$0xff]
  %v24 = vld [vmem:[%s0] sm:$0xf]
  %v25 = vld [vmem:[%s0 + $0x4] sm:$0xf]
  %v26 = vld [vmem:[%s1] sm:$0xf]
  %v27 = vld [vmem:[%s1 + $0x4] sm:$0xf]
  %v28 = vld [vmem:[%s1 + $0x8] sm:$0xf]
  %v29 = vld [vmem:[%s1 + $0xc] sm:$0xf]
  %v32 = vunpack.c.l.b16 %v24
  %v33 = vunpack.c.l.b16 %v25
  %v34 = vpack.c.b16 %v33, %v32
  %v39 = vunpack.c.l.b16 %v26
  %v40 = vunpack.c.l.b16 %v27
  %v41 = vunpack.c.l.b16 %v28
  %v42 = vunpack.c.l.b16 %v29
  %v43 = vpack.c.b16 %v40, %v39
  %v44 = vpack.c.b16 %v42, %v41
  %vm47 = vcmask 261120
  %v49 = vsel %vm47, %v34, 0
  %51 = vmatprep.subr.bf16.mxu0 0
  %52 = vmatpush1.bf16.msra.mxu0 %v43
  %53 = vmatprep.subr.bf16.mxu0 0
  %54 = vmatpush1.bf16.msra.mxu0 %v44
  %55 = vmatprep.subr.bf16.mxu0 0
  %56 = vmatpush1.bf16.msra.mxu0 0
  %57 = vmatprep.subr.bf16.mxu0 0
  %58 = vmatpush1.bf16.msra.mxu0 0
  %59 = vmatprep.subr.bf16.mxu0 0
  %60 = vmatpush1.bf16.msra.mxu0 0
  %61 = vmatprep.subr.bf16.mxu0 0
  %62 = vmatpush1.bf16.msra.mxu0 0
  %63 = vmatprep.subr.bf16.mxu0 0
  %64 = vmatpush1.bf16.msra.mxu0 0
  %65 = vmatprep.subr.bf16.mxu0 0
  %66 = vmatpush1.bf16.msra.mxu0 0
  %67 = vmatprep.subr.bf16.mxu0 0
  %68 = vmatpush1.bf16.msra.mxu0 0
  %69 = vmatprep.subr.bf16.mxu0 0
  %70 = vmatpush1.bf16.msra.mxu0 0
  %71 = vmatprep.subr.bf16.mxu0 0
  %72 = vmatpush1.bf16.msra.mxu0 0
  %73 = vmatprep.subr.bf16.mxu0 0
  %74 = vmatpush1.bf16.msra.mxu0 0
  %75 = vmatprep.subr.bf16.mxu0 0
  %76 = vmatpush1.bf16.msra.mxu0 0
  %77 = vmatprep.subr.bf16.mxu0 0
  %78 = vmatpush1.bf16.msra.mxu0 0
  %79 = vmatprep.subr.bf16.mxu0 0
  %80 = vmatpush1.bf16.msra.mxu0 0
  %81 = vmatprep.subr.bf16.mxu0 0
  %82 = vmatpush1.bf16.msra.mxu0 0
  %83 = vmatprep.mubr.bf16.mxu0 0
  %84 = vmatmul.mubr.bf16.gmra.mrb[0].mxu0 %v49
  %v85 = vpop.f32.mrb[0].mxu0
  %v86 = vadd.f32 0.0, %v85
  %v87 = vpop.f32.mrb[0].mxu0
  %v88 = vpop.f32.mrb[0].mxu0
  %v89 = vadd.f32 0.0, %v88
  %v90 = vpop.f32.mrb[0].mxu0
  %91 = vdwg.mxu0
  %v92 = vadd.f32 %v22, %v86
  %v93 = vadd.f32 %v23, %v89
  %94 = vst.msk [vmem:[#allocation2] sm:$0xff] %vm47, %v92
  %95 = vst.msk [vmem:[#allocation2 + $0x8] sm:$0xff] %vm47, %v93
  // Predicated region
  $region18: #{teinformer_forward.48} parent=0 // pred_check
    %p96 = pneg %p15
  $region19: #{teinformer_forward.48} parent=0 // pred_check_branch
    %98 = sbr.rel (%p96) target = $region21
  $region20: #{teinformer_forward.48} parent=0 // pred_region
    %v99 = vld [vmem:[#allocation2] sm:$0xff]
    %v100 = vld [vmem:[#allocation2 + $0x8] sm:$0xff]
    %v101 = vld [vmem:[%s2] sm:$0x1]
    %v103 = vlaneseq
    %v104 = vshrl.u32 %v103, 7
    %v105 = vsub.s32 0, %v104
    %v106 = vrot.slane %v101, %v105
    %v108 = vadd.f32 %v99, %v106
    %v109 = vadd.f32 %v100, %v106
    %110 = vst.msk [vmem:[%s3] sm:$0xff] %vm47, %v108
    %111 = vst.msk [vmem:[%s3 + $0x8] sm:$0xff] %vm47, %v109
  $region21: #{teinformer_forward.48} parent=0 // pred_fallthru
    _
  // Predicated region
  $region22: #{teinformer_forward.48} parent=0 // pred_check
    _
  $region23: #{teinformer_forward.48} parent=0 // pred_check_branch
    %113 = sbr.rel (0) target = $region25
  $region24: #{teinformer_forward.48} parent=0 // pred_region
    _
  $region25: #{teinformer_forward.48} parent=0 // pred_fallthru
    _
  // Predicated region
  $region26: #{teinformer_forward.48} parent=0 // pred_check
    _
  $region27: #{teinformer_forward.48} parent=0 // pred_check_branch
    %115 = sbr.rel (0) target = $region29
  $region28: #{teinformer_forward.48} parent=0 // pred_region
    _
  $region29: #{teinformer_forward.48} parent=0 // pred_fallthru
    _

// kernel: teinformer_forward.49
$region0: #{teinformer_forward.49}
  #allocation0 [shape = 'u32[]', space=smem, size = 0x4, offset = 0x4, fixed_abs, tag = 'smem constant byte address 0x4 - core index']
  #allocation1 [shape = 'u32[144,128]{1,0:T(1,128)}', space=vmem, size = 0x12000, scoped, tag = 'internal scratch']
  %s0 = inlined_call_operand.vmem [shape: bf16[16,32], index: 0, kind: input, shape index: {}]
  %s1 = inlined_call_operand.vmem [shape: f32[16,32], index: 1, kind: input, shape index: {}]
  %s2 = inlined_call_operand.vmem [shape: f32[1,32], index: 2, kind: input, shape index: {}]
  %s3 = inlined_call_operand.vmem [shape: f32[1,32], index: 3, kind: input, shape index: {}]
  %s4 = inlined_call_operand.vmem [shape: bf16[16,32], index: 4, kind: output, shape index: {}]
  %s5 = sld [smem:[#allocation0]]
  $region26: #{teinformer_forward.49} parent=0
    _
  %s7 = ssub.s32 1, %s5
  %s8 = scalar_select 0, %s7, %s5
  // Predicated region
  $region2: #{teinformer_forward.49} parent=0 // pred_check
    _
  $region3: #{teinformer_forward.49} parent=0 // pred_check_branch
    %10 = sbr.rel (0) target = $region5
  $region4: #{teinformer_forward.49} parent=0 // pred_region
    _
  $region5: #{teinformer_forward.49} parent=0 // pred_fallthru
    _
  // Predicated region
  $region6: #{teinformer_forward.49} parent=0 // pred_check
    _
  $region7: #{teinformer_forward.49} parent=0 // pred_check_branch
    %12 = sbr.rel (0) target = $region9
  $region8: #{teinformer_forward.49} parent=0 // pred_region
    _
  $region9: #{teinformer_forward.49} parent=0 // pred_fallthru
    _
  // Predicated region
  $region10: #{teinformer_forward.49} parent=0 // pred_check
    _
  $region11: #{teinformer_forward.49} parent=0 // pred_check_branch
    %14 = sbr.rel (0) target = $region13
  $region12: #{teinformer_forward.49} parent=0 // pred_region
    _
  $region13: #{teinformer_forward.49} parent=0 // pred_fallthru
    _
  // Predicated region
  $region14: #{teinformer_forward.49} parent=0 // pred_check
    _
  $region15: #{teinformer_forward.49} parent=0 // pred_check_branch
    %16 = sbr.rel (0) target = $region17
  $region16: #{teinformer_forward.49} parent=0 // pred_region
    _
  $region17: #{teinformer_forward.49} parent=0 // pred_fallthru
    _
  %v17 = vld [vmem:[%s0] sm:$0xf]
  %v18 = vld [vmem:[%s0 + $0x4] sm:$0xf]
  %v19 = vunpack.c.l.bf16 %v17
  %v20 = vunpack.c.l.bf16 %v18
  %v21 = vld [vmem:[%s1] sm:$0xff]
  %v22 = vld [vmem:[%s1 + $0x8] sm:$0xff]
  %v23 = vadd.f32 %v19, %v21
  %v24 = vadd.f32 %v20, %v22
  %vm25 = vcmask 261120
  %v26 = vsel %vm25, %v23, 0.0
  %27 = vadd.xlane.f32.xlu0 %v26
  %v28 = vpop.xlane.xlu0 %27
  %v29 = vsel %vm25, %v24, 0.0
  %30 = vadd.xlane.f32.xlu0 %v29
  %v31 = vpop.xlane.xlu0 %30
  %v32 = vrcp.pop 32.0
  %v33 = vmul.f32 %v28, %v32
  %v34 = vmul.f32 %v31, %v32
  %v35 = vsub.f32 %v23, %v33
  %v36 = vsub.f32 %v24, %v34
  %v37 = vmul.f32 %v35, %v35
  %v38 = vmul.f32 %v36, %v36
  %v39 = vsel %vm25, %v37, 0.0
  %40 = vadd.xlane.f32.xlu0 %v39
  %v41 = vpop.xlane.xlu0 %40
  %v42 = vsel %vm25, %v38, 0.0
  %43 = vadd.xlane.f32.xlu0 %v42
  %v44 = vpop.xlane.xlu0 %43
  %v45 = vmul.f32 %v41, %v32
  %v46 = vmul.f32 %v44, %v32
  %v47 = vadd.f32 %v45, 1e-05
  %v48 = vadd.f32 %v46, 1e-05
  %v49 = vrsqrt.pop %v47
  %v50 = vrsqrt.pop %v48
  %v51 = vmul.f32 %v35, %v49
  %v52 = vmul.f32 %v36, %v50
  %v53 = vld [vmem:[%s2] sm:$0x1]
  %v55 = vlaneseq
  %v56 = vshrl.u32 %v55, 7
  %v57 = vsub.s32 0, %v56
  %v58 = vrot.slane %v53, %v57
  %v60 = vmul.f32 %v51, %v58
  %v61 = vmul.f32 %v52, %v58
  %v62 = vld [vmem:[%s3] sm:$0x1]
  %v64 = vlaneseq
  %v65 = vshrl.u32 %v64, 7
  %v66 = vsub.s32 0, %v65
  %v67 = vrot.slane %v62, %v66
  %v69 = vadd.f32 %v60, %v67
  %v70 = vadd.f32 %v61, %v67
  %v71 = vpack.c.bf16 %v70, %v69
  %v73 = vunpack.c.l.b16 %v71
  %v74 = vunpack.c.h.b16 %v71
  %v75 = vpack.c.b16 %v73, %v73
  %v76 = vpack.c.b16 %v74, %v74
  %vm79 = vcmask 257024
  %80 = vst.msk [vmem:[%s4] sm:$0xf] %vm79, %v75
  %81 = vst.msk [vmem:[%s4 + $0x4] sm:$0xf] %vm79, %v76
  // Predicated region
  $region18: #{teinformer_forward.49} parent=0 // pred_check
    _
  $region19: #{teinformer_forward.49} parent=0 // pred_check_branch
    %83 = sbr.rel (0) target = $region21
  $region20: #{teinformer_forward.49} parent=0 // pred_region
    _
  $region21: #{teinformer_forward.49} parent=0 // pred_fallthru
    _
  // Predicated region
  $region22: #{teinformer_forward.49} parent=0 // pred_check
    _
  $region23: #{teinformer_forward.49} parent=0 // pred_check_branch
    %85 = sbr.rel (0) target = $region25
  $region24: #{teinformer_forward.49} parent=0 // pred_region
    _
  $region25: #{teinformer_forward.49} parent=0 // pred_fallthru
    _

// kernel: teinformer_forward.53
$region0: #{teinformer_forward.53}
  #allocation0 [shape = 'u32[]', space=smem, size = 0x4, offset = 0x4, fixed_abs, tag = 'smem constant byte address 0x4 - core index']
  #allocation1 [shape = 'u32[144,128]{1,0:T(1,128)}', space=vmem, size = 0x12000, scoped, tag = 'internal scratch']
  %s0 = inlined_call_operand.vmem [shape: bf16[16,32], index: 0, kind: input, shape index: {}]
  %s1 = inlined_call_operand.vmem [shape: f32[1,32], index: 1, kind: input, shape index: {}]
  %s2 = inlined_call_operand.vmem [shape: f32[1,32], index: 2, kind: input, shape index: {}]
  %s3 = inlined_call_operand.vmem [shape: bf16[16,32], index: 3, kind: output, shape index: {}]
  %s4 = sld [smem:[#allocation0]]
  $region22: #{teinformer_forward.53} parent=0
    _
  %s6 = ssub.s32 1, %s4
  %s7 = scalar_select 0, %s6, %s4
  // Predicated region
  $region2: #{teinformer_forward.53} parent=0 // pred_check
    _
  $region3: #{teinformer_forward.53} parent=0 // pred_check_branch
    %9 = sbr.rel (0) target = $region5
  $region4: #{teinformer_forward.53} parent=0 // pred_region
    _
  $region5: #{teinformer_forward.53} parent=0 // pred_fallthru
    _
  // Predicated region
  $region6: #{teinformer_forward.53} parent=0 // pred_check
    _
  $region7: #{teinformer_forward.53} parent=0 // pred_check_branch
    %11 = sbr.rel (0) target = $region9
  $region8: #{teinformer_forward.53} parent=0 // pred_region
    _
  $region9: #{teinformer_forward.53} parent=0 // pred_fallthru
    _
  // Predicated region
  $region10: #{teinformer_forward.53} parent=0 // pred_check
    _
  $region11: #{teinformer_forward.53} parent=0 // pred_check_branch
    %13 = sbr.rel (0) target = $region13
  $region12: #{teinformer_forward.53} parent=0 // pred_region
    _
  $region13: #{teinformer_forward.53} parent=0 // pred_fallthru
    _
  %v14 = vld [vmem:[%s0] sm:$0xf]
  %v15 = vld [vmem:[%s0 + $0x4] sm:$0xf]
  %v16 = vunpack.c.l.bf16 %v14
  %v17 = vunpack.c.l.bf16 %v15
  %vm18 = vcmask 261120
  %v19 = vsel %vm18, %v16, 0.0
  %20 = vadd.xlane.f32.xlu0 %v19
  %v21 = vpop.xlane.xlu0 %20
  %v22 = vsel %vm18, %v17, 0.0
  %23 = vadd.xlane.f32.xlu0 %v22
  %v24 = vpop.xlane.xlu0 %23
  %v25 = vrcp.pop 32.0
  %v26 = vmul.f32 %v21, %v25
  %v27 = vmul.f32 %v24, %v25
  %v28 = vsub.f32 %v16, %v26
  %v29 = vsub.f32 %v17, %v27
  %v30 = vmul.f32 %v28, %v28
  %v31 = vmul.f32 %v29, %v29
  %v32 = vsel %vm18, %v30, 0.0
  %33 = vadd.xlane.f32.xlu0 %v32
  %v34 = vpop.xlane.xlu0 %33
  %v35 = vsel %vm18, %v31, 0.0
  %36 = vadd.xlane.f32.xlu0 %v35
  %v37 = vpop.xlane.xlu0 %36
  %v38 = vmul.f32 %v34, %v25
  %v39 = vmul.f32 %v37, %v25
  %v40 = vadd.f32 %v38, 1e-05
  %v41 = vadd.f32 %v39, 1e-05
  %v42 = vrsqrt.pop %v40
  %v43 = vrsqrt.pop %v41
  %v44 = vmul.f32 %v28, %v42
  %v45 = vmul.f32 %v29, %v43
  %v46 = vld [vmem:[%s1] sm:$0x1]
  %v48 = vlaneseq
  %v49 = vshrl.u32 %v48, 7
  %v50 = vsub.s32 0, %v49
  %v51 = vrot.slane %v46, %v50
  %v53 = vmul.f32 %v44, %v51
  %v54 = vmul.f32 %v45, %v51
  %v55 = vld [vmem:[%s2] sm:$0x1]
  %v57 = vlaneseq
  %v58 = vshrl.u32 %v57, 7
  %v59 = vsub.s32 0, %v58
  %v60 = vrot.slane %v55, %v59
  %v62 = vadd.f32 %v53, %v60
  %v63 = vadd.f32 %v54, %v60
  %v64 = vpack.c.bf16 %v63, %v62
  %v66 = vunpack.c.l.b16 %v64
  %v67 = vunpack.c.h.b16 %v64
  %v68 = vpack.c.b16 %v66, %v66
  %v69 = vpack.c.b16 %v67, %v67
  %vm72 = vcmask 257024
  %73 = vst.msk [vmem:[%s3] sm:$0xf] %vm72, %v68
  %74 = vst.msk [vmem:[%s3 + $0x4] sm:$0xf] %vm72, %v69
  // Predicated region
  $region14: #{teinformer_forward.53} parent=0 // pred_check
    _
  $region15: #{teinformer_forward.53} parent=0 // pred_check_branch
    %76 = sbr.rel (0) target = $region17
  $region16: #{teinformer_forward.53} parent=0 // pred_region
    _
  $region17: #{teinformer_forward.53} parent=0 // pred_fallthru
    _
  // Predicated region
  $region18: #{teinformer_forward.53} parent=0 // pred_check
    _
  $region19: #{teinformer_forward.53} parent=0 // pred_check_branch
    %78 = sbr.rel (0) target = $region21
  $region20: #{teinformer_forward.53} parent=0 // pred_region
    _
  $region21: #{teinformer_forward.53} parent=0 // pred_fallthru
    _

// kernel: teinformer_forward.50
$region0: #{teinformer_forward.50}
  #allocation0 [shape = 'u32[]', space=smem, size = 0x4, offset = 0x4, fixed_abs, tag = 'smem constant byte address 0x4 - core index']
  #allocation1 [shape = 'u32[144,128]{1,0:T(1,128)}', space=vmem, size = 0x12000, scoped, tag = 'internal scratch']
  #allocation2 [shape = 'f32[16,32]{1,0:T(8,128)}', space=vmem, size = 0x2000, scoped, tag = 'scratch operand']
  %s0 = inlined_call_operand.vmem [shape: bf16[16,32], index: 0, kind: input, shape index: {}]
  %s1 = inlined_call_operand.vmem [shape: bf16[32,32], index: 1, kind: input, shape index: {}]
  %s2 = inlined_call_operand.vmem [shape: f32[1,32], index: 2, kind: input, shape index: {}]
  %s3 = inlined_call_operand.vmem [shape: bf16[16,32], index: 3, kind: output, shape index: {}]
  %s4 = sld [smem:[#allocation0]]
  $region30: #{teinformer_forward.50} parent=0
    _
  %s6 = ssub.s32 1, %s4
  %s7 = scalar_select 0, %s6, %s4
  // Predicated region
  $region2: #{teinformer_forward.50} parent=0 // pred_check
    _
  $region3: #{teinformer_forward.50} parent=0 // pred_check_branch
    %9 = sbr.rel (0) target = $region5
  $region4: #{teinformer_forward.50} parent=0 // pred_region
    _
  $region5: #{teinformer_forward.50} parent=0 // pred_fallthru
    _
  // Predicated region
  $region6: #{teinformer_forward.50} parent=0 // pred_check
    _
  $region7: #{teinformer_forward.50} parent=0 // pred_check_branch
    %11 = sbr.rel (0) target = $region9
  $region8: #{teinformer_forward.50} parent=0 // pred_region
    _
  $region9: #{teinformer_forward.50} parent=0 // pred_fallthru
    _
  // Predicated region
  $region10: #{teinformer_forward.50} parent=0 // pred_check
    _
  $region11: #{teinformer_forward.50} parent=0 // pred_check_branch
    %13 = sbr.rel (0) target = $region13
  $region12: #{teinformer_forward.50} parent=0 // pred_region
    _
  $region13: #{teinformer_forward.50} parent=0 // pred_fallthru
    _
  %p15 = scmp.eq.s32.totalorder 0, 0
  // Predicated region
  $region14: #{teinformer_forward.50} parent=0 // pred_check
    %p16 = pneg %p15
  $region15: #{teinformer_forward.50} parent=0 // pred_check_branch
    %18 = sbr.rel (%p16) target = $region17
  $region16: #{teinformer_forward.50} parent=0 // pred_region
    %vm19 = vcmask 261120
    %20 = vst.msk [vmem:[#allocation2] sm:$0xff] %vm19, 0.0
    %21 = vst.msk [vmem:[#allocation2 + $0x8] sm:$0xff] %vm19, 0.0
  $region17: #{teinformer_forward.50} parent=0 // pred_fallthru
    _
  %v22 = vld [vmem:[#allocation2] sm:$0xff]
  %v23 = vld [vmem:[#allocation2 + $0x8] sm:$0xff]
  %v24 = vld [vmem:[%s0] sm:$0xf]
  %v25 = vld [vmem:[%s0 + $0x4] sm:$0xf]
  %v26 = vld [vmem:[%s1] sm:$0xf]
  %v27 = vld [vmem:[%s1 + $0x4] sm:$0xf]
  %v28 = vld [vmem:[%s1 + $0x8] sm:$0xf]
  %v29 = vld [vmem:[%s1 + $0xc] sm:$0xf]
  %v32 = vunpack.c.l.b16 %v24
  %v33 = vunpack.c.l.b16 %v25
  %v34 = vpack.c.b16 %v33, %v32
  %v39 = vunpack.c.l.b16 %v26
  %v40 = vunpack.c.l.b16 %v27
  %v41 = vunpack.c.l.b16 %v28
  %v42 = vunpack.c.l.b16 %v29
  %v43 = vpack.c.b16 %v40, %v39
  %v44 = vpack.c.b16 %v42, %v41
  %vm47 = vcmask 261120
  %v49 = vsel %vm47, %v34, 0
  %51 = vmatprep.subr.bf16.mxu0 0
  %52 = vmatpush1.bf16.msra.mxu0 %v43
  %53 = vmatprep.subr.bf16.mxu0 0
  %54 = vmatpush1.bf16.msra.mxu0 %v44
  %55 = vmatprep.subr.bf16.mxu0 0
  %56 = vmatpush1.bf16.msra.mxu0 0
  %57 = vmatprep.subr.bf16.mxu0 0
  %58 = vmatpush1.bf16.msra.mxu0 0
  %59 = vmatprep.subr.bf16.mxu0 0
  %60 = vmatpush1.bf16.msra.mxu0 0
  %61 = vmatprep.subr.bf16.mxu0 0
  %62 = vmatpush1.bf16.msra.mxu0 0
  %63 = vmatprep.subr.bf16.mxu0 0
  %64 = vmatpush1.bf16.msra.mxu0 0
  %65 = vmatprep.subr.bf16.mxu0 0
  %66 = vmatpush1.bf16.msra.mxu0 0
  %67 = vmatprep.subr.bf16.mxu0 0
  %68 = vmatpush1.bf16.msra.mxu0 0
  %69 = vmatprep.subr.bf16.mxu0 0
  %70 = vmatpush1.bf16.msra.mxu0 0
  %71 = vmatprep.subr.bf16.mxu0 0
  %72 = vmatpush1.bf16.msra.mxu0 0
  %73 = vmatprep.subr.bf16.mxu0 0
  %74 = vmatpush1.bf16.msra.mxu0 0
  %75 = vmatprep.subr.bf16.mxu0 0
  %76 = vmatpush1.bf16.msra.mxu0 0
  %77 = vmatprep.subr.bf16.mxu0 0
  %78 = vmatpush1.bf16.msra.mxu0 0
  %79 = vmatprep.subr.bf16.mxu0 0
  %80 = vmatpush1.bf16.msra.mxu0 0
  %81 = vmatprep.subr.bf16.mxu0 0
  %82 = vmatpush1.bf16.msra.mxu0 0
  %83 = vmatprep.mubr.bf16.mxu0 0
  %84 = vmatmul.mubr.bf16.gmra.mrb[0].mxu0 %v49
  %v85 = vpop.f32.mrb[0].mxu0
  %v86 = vadd.f32 0.0, %v85
  %v87 = vpop.f32.mrb[0].mxu0
  %v88 = vpop.f32.mrb[0].mxu0
  %v89 = vadd.f32 0.0, %v88
  %v90 = vpop.f32.mrb[0].mxu0
  %91 = vdwg.mxu0
  %v92 = vadd.f32 %v22, %v86
  %v93 = vadd.f32 %v23, %v89
  %94 = vst.msk [vmem:[#allocation2] sm:$0xff] %vm47, %v92
  %95 = vst.msk [vmem:[#allocation2 + $0x8] sm:$0xff] %vm47, %v93
  // Predicated region
  $region18: #{teinformer_forward.50} parent=0 // pred_check
    %p96 = pneg %p15
  $region19: #{teinformer_forward.50} parent=0 // pred_check_branch
    %98 = sbr.rel (%p96) target = $region21
  $region20: #{teinformer_forward.50} parent=0 // pred_region
    %v99 = vld [vmem:[#allocation2] sm:$0xff]
    %v100 = vld [vmem:[#allocation2 + $0x8] sm:$0xff]
    %v101 = vld [vmem:[%s2] sm:$0x1]
    %v103 = vlaneseq
    %v104 = vshrl.u32 %v103, 7
    %v105 = vsub.s32 0, %v104
    %v106 = vrot.slane %v101, %v105
    %v108 = vadd.f32 %v99, %v106
    %v109 = vadd.f32 %v100, %v106
    %v110 = vmul.f32 %v108, 0.70710677
    %v111 = vmul.f32 %v109, 0.70710677
    %v112 = vand.u32 2147483647, %v110
    %v113 = vand.u32 2147483647, %v111
    %v114 = vmul.f32 %v112, 0.3275911
    %v115 = vmul.f32 %v113, 0.3275911
    %v116 = vadd.f32 %v114, 1.0
    %v117 = vadd.f32 %v115, 1.0
    %v118 = vrcp.pop %v116
    %v119 = vmul.f32 1.0, %v118
    %v120 = vrcp.pop %v117
    %v121 = vmul.f32 1.0, %v120
    %v122 = vmul.f32 %v119, 1.0614054
    %v123 = vmul.f32 %v121, 1.0614054
    %v124 = vadd.f32 %v122, -1.4531521
    %v125 = vadd.f32 %v123, -1.4531521
    %v126 = vmul.f32 %v119, %v124
    %v127 = vmul.f32 %v121, %v125
    %v128 = vadd.f32 %v126, 1.4214138
    %v129 = vadd.f32 %v127, 1.4214138
    %v130 = vmul.f32 %v119, %v128
    %v131 = vmul.f32 %v121, %v129
    %v132 = vadd.f32 %v130, -0.28449672
    %v133 = vadd.f32 %v131, -0.28449672
    %v134 = vmul.f32 %v119, %v132
    %v135 = vmul.f32 %v121, %v133
    %v136 = vadd.f32 %v134, 0.2548296
    %v137 = vadd.f32 %v135, 0.2548296
    %v138 = vmul.f32 %v119, %v136
    %v139 = vmul.f32 %v121, %v137
    %v140 = vsub.f32 0.0, %v112
    %v141 = vsub.f32 0.0, %v113
    %v142 = vmul.f32 %v140, %v112
    %v143 = vmul.f32 %v141, %v113
    %v144 = vmul.f32 %v142, 1.442695
    %v145 = vpow.pop %v144
    %v146 = vmul.f32 %v143, 1.442695
    %v147 = vpow.pop %v146
    %v148 = vmul.f32 %v138, %v145
    %v149 = vmul.f32 %v139, %v147
    %v150 = vsub.f32 1.0, %v148
    %v151 = vsub.f32 1.0, %v149
    %vm152 = vcmp.ge.f32.partialorder %v110, 0.0
    %vm153 = vcmp.ge.f32.partialorder %v111, 0.0
    %v154 = vsub.f32 0.0, %v150
    %v155 = vsub.f32 0.0, %v151
    %v156 = vsel %vm152, %v150, %v154
    %v157 = vsel %vm153, %v151, %v155
    %v158 = vmul.f32 %v108, 0.5
    %v159 = vmul.f32 %v109, 0.5
    %v160 = vadd.f32 %v156, 1.0
    %v161 = vadd.f32 %v157, 1.0
    %v162 = vmul.f32 %v158, %v160
    %v163 = vmul.f32 %v159, %v161
    %v164 = vpack.c.bf16 %v163, %v162
    %v166 = vunpack.c.l.b16 %v164
    %v167 = vunpack.c.h.b16 %v164
    %v168 = vpack.c.b16 %v166, %v166
    %v169 = vpack.c.b16 %v167, %v167
    %vm172 = vcmask 257024
    %173 = vst.msk [vmem:[%s3] sm:$0xf] %vm172, %v168
    %174 = vst.msk [vmem:[%s3 + $0x4] sm:$0xf] %vm172, %v169
  $region21: #{teinformer_forward.50} parent=0 // pred_fallthru
    _
  // Predicated region
  $region22: #{teinformer_forward.50} parent=0 // pred_check
    _
  $region23: #{teinformer_forward.50} parent=0 // pred_check_branch
    %176 = sbr.rel (0) target = $region25
  $region24: #{teinformer_forward.50} parent=0 // pred_region
    _
  $region25: #{teinformer_forward.50} parent=0 // pred_fallthru
    _
  // Predicated region
  $region26: #{teinformer_forward.50} parent=0 // pred_check
    _
  $region27: #{teinformer_forward.50} parent=0 // pred_check_branch
    %178 = sbr.rel (0) target = $region29
  $region28: #{teinformer_forward.50} parent=0 // pred_region
    _
  $region29: #{teinformer_forward.50} parent=0 // pred_fallthru
    _

// kernel: teinformer_forward.61
$region0: #{teinformer_forward.61}
  #allocation0 [shape = 'u32[]', space=smem, size = 0x4, offset = 0x4, fixed_abs, tag = 'smem constant byte address 0x4 - core index']
  #allocation1 [shape = 'u32[144,128]{1,0:T(1,128)}', space=vmem, size = 0x12000, scoped, tag = 'internal scratch']
  #allocation2 [shape = 'f32[16,64]{1,0:T(8,128)}', space=vmem, size = 0x2000, scoped, tag = 'scratch operand']
  %s0 = inlined_call_operand.vmem [shape: bf16[16,32], index: 0, kind: input, shape index: {}]
  %s1 = inlined_call_operand.vmem [shape: bf16[32,64], index: 1, kind: input, shape index: {}]
  %s2 = inlined_call_operand.vmem [shape: f32[1,64], index: 2, kind: input, shape index: {}]
  %s3 = inlined_call_operand.vmem [shape: bf16[16,64], index: 3, kind: output, shape index: {}]
  %s4 = sld [smem:[#allocation0]]
  $region30: #{teinformer_forward.61} parent=0
    _
  %s6 = ssub.s32 1, %s4
  %s7 = scalar_select 0, %s6, %s4
  // Predicated region
  $region2: #{teinformer_forward.61} parent=0 // pred_check
    _
  $region3: #{teinformer_forward.61} parent=0 // pred_check_branch
    %9 = sbr.rel (0) target = $region5
  $region4: #{teinformer_forward.61} parent=0 // pred_region
    _
  $region5: #{teinformer_forward.61} parent=0 // pred_fallthru
    _
  // Predicated region
  $region6: #{teinformer_forward.61} parent=0 // pred_check
    _
  $region7: #{teinformer_forward.61} parent=0 // pred_check_branch
    %11 = sbr.rel (0) target = $region9
  $region8: #{teinformer_forward.61} parent=0 // pred_region
    _
  $region9: #{teinformer_forward.61} parent=0 // pred_fallthru
    _
  // Predicated region
  $region10: #{teinformer_forward.61} parent=0 // pred_check
    _
  $region11: #{teinformer_forward.61} parent=0 // pred_check_branch
    %13 = sbr.rel (0) target = $region13
  $region12: #{teinformer_forward.61} parent=0 // pred_region
    _
  $region13: #{teinformer_forward.61} parent=0 // pred_fallthru
    _
  %p15 = scmp.eq.s32.totalorder 0, 0
  // Predicated region
  $region14: #{teinformer_forward.61} parent=0 // pred_check
    %p16 = pneg %p15
  $region15: #{teinformer_forward.61} parent=0 // pred_check_branch
    %18 = sbr.rel (%p16) target = $region17
  $region16: #{teinformer_forward.61} parent=0 // pred_region
    %vm19 = vcmask 523264
    %20 = vst.msk [vmem:[#allocation2] sm:$0xff] %vm19, 0.0
    %21 = vst.msk [vmem:[#allocation2 + $0x8] sm:$0xff] %vm19, 0.0
  $region17: #{teinformer_forward.61} parent=0 // pred_fallthru
    _
  %v22 = vld [vmem:[#allocation2] sm:$0xff]
  %v23 = vld [vmem:[#allocation2 + $0x8] sm:$0xff]
  %v24 = vld [vmem:[%s0] sm:$0xf]
  %v25 = vld [vmem:[%s0 + $0x4] sm:$0xf]
  %v26 = vld [vmem:[%s1] sm:$0xf]
  %v27 = vld [vmem:[%s1 + $0x4] sm:$0xf]
  %v28 = vld [vmem:[%s1 + $0x8] sm:$0xf]
  %v29 = vld [vmem:[%s1 + $0xc] sm:$0xf]
  %v32 = vunpack.c.l.b16 %v24
  %v33 = vunpack.c.l.b16 %v25
  %v34 = vpack.c.b16 %v33, %v32
  %v39 = vunpack.c.l.b16 %v26
  %v40 = vunpack.c.l.b16 %v27
  %v41 = vunpack.c.l.b16 %v28
  %v42 = vunpack.c.l.b16 %v29
  %v43 = vpack.c.b16 %v40, %v39
  %v44 = vpack.c.b16 %v42, %v41
  %vm47 = vcmask 261120
  %v49 = vsel %vm47, %v34, 0
  %51 = vmatprep.subr.bf16.mxu0 0
  %52 = vmatpush1.bf16.msra.mxu0 %v43
  %53 = vmatprep.subr.bf16.mxu0 0
  %54 = vmatpush1.bf16.msra.mxu0 %v44
  %55 = vmatprep.subr.bf16.mxu0 0
  %56 = vmatpush1.bf16.msra.mxu0 0
  %57 = vmatprep.subr.bf16.mxu0 0
  %58 = vmatpush1.bf16.msra.mxu0 0
  %59 = vmatprep.subr.bf16.mxu0 0
  %60 = vmatpush1.bf16.msra.mxu0 0
  %61 = vmatprep.subr.bf16.mxu0 0
  %62 = vmatpush1.bf16.msra.mxu0 0
  %63 = vmatprep.subr.bf16.mxu0 0
  %64 = vmatpush1.bf16.msra.mxu0 0
  %65 = vmatprep.subr.bf16.mxu0 0
  %66 = vmatpush1.bf16.msra.mxu0 0
  %67 = vmatprep.subr.bf16.mxu0 0
  %68 = vmatpush1.bf16.msra.mxu0 0
  %69 = vmatprep.subr.bf16.mxu0 0
  %70 = vmatpush1.bf16.msra.mxu0 0
  %71 = vmatprep.subr.bf16.mxu0 0
  %72 = vmatpush1.bf16.msra.mxu0 0
  %73 = vmatprep.subr.bf16.mxu0 0
  %74 = vmatpush1.bf16.msra.mxu0 0
  %75 = vmatprep.subr.bf16.mxu0 0
  %76 = vmatpush1.bf16.msra.mxu0 0
  %77 = vmatprep.subr.bf16.mxu0 0
  %78 = vmatpush1.bf16.msra.mxu0 0
  %79 = vmatprep.subr.bf16.mxu0 0
  %80 = vmatpush1.bf16.msra.mxu0 0
  %81 = vmatprep.subr.bf16.mxu0 0
  %82 = vmatpush1.bf16.msra.mxu0 0
  %83 = vmatprep.mubr.bf16.mxu0 0
  %84 = vmatmul.mubr.bf16.gmra.mrb[0].mxu0 %v49
  %v85 = vpop.f32.mrb[0].mxu0
  %v86 = vadd.f32 0.0, %v85
  %v87 = vpop.f32.mrb[0].mxu0
  %v88 = vpop.f32.mrb[0].mxu0
  %v89 = vadd.f32 0.0, %v88
  %v90 = vpop.f32.mrb[0].mxu0
  %91 = vdwg.mxu0
  %v92 = vadd.f32 %v22, %v86
  %v93 = vadd.f32 %v23, %v89
  %vm94 = vcmask 523264
  %95 = vst.msk [vmem:[#allocation2] sm:$0xff] %vm94, %v92
  %96 = vst.msk [vmem:[#allocation2 + $0x8] sm:$0xff] %vm94, %v93
  // Predicated region
  $region18: #{teinformer_forward.61} parent=0 // pred_check
    %p97 = pneg %p15
  $region19: #{teinformer_forward.61} parent=0 // pred_check_branch
    %99 = sbr.rel (%p97) target = $region21
  $region20: #{teinformer_forward.61} parent=0 // pred_region
    %v100 = vld [vmem:[#allocation2] sm:$0xff]
    %v101 = vld [vmem:[#allocation2 + $0x8] sm:$0xff]
    %v102 = vld [vmem:[%s2] sm:$0x1]
    %v104 = vlaneseq
    %v105 = vshrl.u32 %v104, 7
    %v106 = vsub.s32 0, %v105
    %v107 = vrot.slane %v102, %v106
    %v109 = vadd.f32 %v100, %v107
    %v110 = vadd.f32 %v101, %v107
    %v111 = vpack.c.bf16 %v110, %v109
    %v113 = vunpack.c.l.b16 %v111
    %v114 = vunpack.c.h.b16 %v111
    %v115 = vpack.c.b16 %v113, %v113
    %v116 = vpack.c.b16 %v114, %v114
    %vm119 = vcmask 519168
    %120 = vst.msk [vmem:[%s3] sm:$0xf] %vm119, %v115
    %121 = vst.msk [vmem:[%s3 + $0x4] sm:$0xf] %vm119, %v116
  $region21: #{teinformer_forward.61} parent=0 // pred_fallthru
    _
  // Predicated region
  $region22: #{teinformer_forward.61} parent=0 // pred_check
    _
  $region23: #{teinformer_forward.61} parent=0 // pred_check_branch
    %123 = sbr.rel (0) target = $region25
  $region24: #{teinformer_forward.61} parent=0 // pred_region
    _
  $region25: #{teinformer_forward.61} parent=0 // pred_fallthru
    _
  // Predicated region
  $region26: #{teinformer_forward.61} parent=0 // pred_check
    _
  $region27: #{teinformer_forward.61} parent=0 // pred_check_branch
    %125 = sbr.rel (0) target = $region29
  $region28: #{teinformer_forward.61} parent=0 // pred_region
    _
  $region29: #{teinformer_forward.61} parent=0 // pred_fallthru
    _

// kernel: teinformer_forward.57
$region0: #{teinformer_forward.57}
  #allocation0 [shape = 'u32[]', space=smem, size = 0x4, offset = 0x4, fixed_abs, tag = 'smem constant byte address 0x4 - core index']
  #allocation1 [shape = 'u32[144,128]{1,0:T(1,128)}', space=vmem, size = 0x12000, scoped, tag = 'internal scratch']
  %s0 = inlined_call_operand.vmem [shape: s32[2,15,4], index: 0, kind: input, shape index: {}]
  %s1 = inlined_call_operand.vmem [shape: bf16[2,15,32], index: 1, kind: input, shape index: {}]
  %s2 = inlined_call_operand.vmem [shape: bf16[2,16,96], index: 2, kind: input, shape index: {}]
  %s3 = inlined_call_operand.vmem [shape: bf16[2,15,32], index: 3, kind: output, shape index: {}]
  %s4 = sld [smem:[#allocation0]]
  $region45: #{teinformer_forward.57} parent=0
    _
  %s6 = ssub.s32 1, %s4
  %s7 = scalar_select 0, %s6, %s4
  loop: start=0, step=1, limit=4
  $region2: #{teinformer_forward.57} parent=0 // loop_pre_header
    _
  $region3: #{teinformer_forward.57} parent=0 // loop_header
    %s9 = sphi 0, %s13
    %p10 = scmp.ge.s32.totalorder %s9, 4
    %s19 = sphi 0, %s21
    %s22 = sphi 0, %s19
    %s23 = sphi 0, %s22
    %s39 = sphi 0, %s23
    %s45 = sphi 0, %s47
    %s48 = sphi 0, %s45
    %s49 = sphi 0, %s48
    %s65 = sphi 0, %s49
    %s71 = sphi 0, %s73
    %s74 = sphi 0, %s71
    %s75 = sphi 0, %s74
    %s91 = sphi 0, %s75
    %s97 = sphi 0, %s99
    %s100 = sphi 0, %s97
    %s101 = sphi 0, %s100
    %s117 = sphi 0, %s101
  $region4: #{teinformer_forward.57} parent=0 // loop_header_branch
    %12 = sbr.rel (%p10) target = $region8
  $region5: #{teinformer_forward.57} parent=0 // loop_body
    %s14 = ssub.s32 %s9, 1
    %s15 = ssub.s32 %s9, 2
    %s16 = sadd.s32 %s9, 1
    %s17 = ssub.s32 %s9, %s16
    %p18 = scmp.eq.s32.totalorder %s17, 0
    %s20 = sadd.s32 %s19, 1
    %s21 = scalar_select %p18, %s19, %s20
    %p24 = pneg %p18
    %p25 = scmp.eq.s32.totalorder %s9, 1
    %p26 = por %p24, %p25
    %p27 = scmp.ne.s32.totalorder %s19, %s22
    %p28 = scmp.eq.s32.totalorder %s9, 0
    %p29 = por %p27, %p28
    %p30 = scmp.ne.s32.totalorder %s19, %s22
    %p31 = scmp.eq.s32.totalorder %s14, 1
    %p32 = por %p30, %p31
    %p33 = scmp.ne.s32.totalorder %s22, %s23
    %p34 = scmp.eq.s32.totalorder %s14, 0
    %p35 = por %p33, %p34
    %p36 = scmp.ne.s32.totalorder %s22, %s23
    %p37 = scmp.eq.s32.totalorder %s15, 1
    %p38 = por %p36, %p37
    %p40 = scmp.ne.s32.totalorder %s23, %s39
    %p41 = scmp.eq.s32.totalorder %s15, 0
    %p42 = por %p40, %p41
    %s43 = ssub.s32 %s9, %s16
    %p44 = scmp.eq.s32.totalorder %s43, 0
    %s46 = sadd.s32 %s45, 1
    %s47 = scalar_select %p44, %s45, %s46
    %p50 = pneg %p44
    %p51 = scmp.eq.s32.totalorder %s9, 1
    %p52 = por %p50, %p51
    %p53 = scmp.ne.s32.totalorder %s45, %s48
    %p54 = scmp.eq.s32.totalorder %s9, 0
    %p55 = por %p53, %p54
    %p56 = scmp.ne.s32.totalorder %s45, %s48
    %p57 = scmp.eq.s32.totalorder %s14, 1
    %p58 = por %p56, %p57
    %p59 = scmp.ne.s32.totalorder %s48, %s49
    %p60 = scmp.eq.s32.totalorder %s14, 0
    %p61 = por %p59, %p60
    %p62 = scmp.ne.s32.totalorder %s48, %s49
    %p63 = scmp.eq.s32.totalorder %s15, 1
    %p64 = por %p62, %p63
    %p66 = scmp.ne.s32.totalorder %s49, %s65
    %p67 = scmp.eq.s32.totalorder %s15, 0
    %p68 = por %p66, %p67
    %s69 = ssub.s32 %s9, %s16
    %p70 = scmp.eq.s32.totalorder %s69, 0
    %s72 = sadd.s32 %s71, 1
    %s73 = scalar_select %p70, %s71, %s72
    %p76 = pneg %p70
    %p77 = scmp.eq.s32.totalorder %s9, 1
    %p78 = por %p76, %p77
    %p79 = scmp.ne.s32.totalorder %s71, %s74
    %p80 = scmp.eq.s32.totalorder %s9, 0
    %p81 = por %p79, %p80
    %p82 = scmp.ne.s32.totalorder %s71, %s74
    %p83 = scmp.eq.s32.totalorder %s14, 1
    %p84 = por %p82, %p83
    %p85 = scmp.ne.s32.totalorder %s74, %s75
    %p86 = scmp.eq.s32.totalorder %s14, 0
    %p87 = por %p85, %p86
    %p88 = scmp.ne.s32.totalorder %s74, %s75
    %p89 = scmp.eq.s32.totalorder %s15, 1
    %p90 = por %p88, %p89
    %p92 = scmp.ne.s32.totalorder %s75, %s91
    %p93 = scmp.eq.s32.totalorder %s15, 0
    %p94 = por %p92, %p93
    %s95 = ssub.s32 %s9, %s16
    %p96 = scmp.eq.s32.totalorder %s95, 0
    %s98 = sadd.s32 %s97, 1
    %s99 = scalar_select %p96, %s97, %s98
    %p102 = pneg %p96
    %p103 = scmp.eq.s32.totalorder %s9, 1
    %p104 = por %p102, %p103
    %p105 = scmp.ne.s32.totalorder %s97, %s100
    %p106 = scmp.eq.s32.totalorder %s9, 0
    %p107 = por %p105, %p106
    %p108 = scmp.ne.s32.totalorder %s97, %s100
    %p109 = scmp.eq.s32.totalorder %s14, 1
    %p110 = por %p108, %p109
    %p111 = scmp.ne.s32.totalorder %s100, %s101
    %p112 = scmp.eq.s32.totalorder %s14, 0
    %p113 = por %p111, %p112
    %p114 = scmp.ne.s32.totalorder %s100, %s101
    %p115 = scmp.eq.s32.totalorder %s15, 1
    %p116 = por %p114, %p115
    %p118 = scmp.ne.s32.totalorder %s101, %s117
    %p119 = scmp.eq.s32.totalorder %s15, 0
    %p120 = por %p118, %p119
    %p121 = scmp.le.s32.totalorder 1, %s9
    %p122 = scmp.lt.s32.totalorder %s9, 3
    %p123 = pnand %p121, %p122
    %p124 = pneg %p123
    // Predicated region
    $region9: #{teinformer_forward.57} parent=5 // pred_check
      _
    $region10: #{teinformer_forward.57} parent=5 // pred_check_branch
      %126 = sbr.rel (%p123) target = $region12
    $region11: #{teinformer_forward.57} parent=5 // pred_region
      %s127 = ssub.s32 %s9, 1
    $region12: #{teinformer_forward.57} parent=5 // pred_fallthru
      _
    %p128 = scmp.lt.s32.totalorder %s9, 2
    // Predicated region
    $region13: #{teinformer_forward.57} parent=5 // pred_check
      %p129 = pneg %p128
    $region14: #{teinformer_forward.57} parent=5 // pred_check_branch
      %131 = sbr.rel (%p129) target = $region16
    $region15: #{teinformer_forward.57} parent=5 // pred_region
      // Predicated region
      $region17: #{teinformer_forward.57} parent=15 // pred_check
        %p132 = pneg %p29
      $region18: #{teinformer_forward.57} parent=15 // pred_check_branch
        %134 = sbr.rel (%p132) target = $region20
      $region19: #{teinformer_forward.57} parent=15 // pred_region
        %p135 = scmp.lt.s32.totalorder %s9, 1
        %s136 = scalar_select %p135, %s9, 1
        %s137 = smul.addr %s136, 2
        %s138 = smul.addr %s137, 8
        %s139 = scalar_lea.vmem %s0, %s138
      $region20: #{teinformer_forward.57} parent=15 // pred_fallthru
        _
      // Predicated region
      $region21: #{teinformer_forward.57} parent=15 // pred_check
        %p140 = pneg %p55
      $region22: #{teinformer_forward.57} parent=15 // pred_check_branch
        %142 = sbr.rel (%p140) target = $region24
      $region23: #{teinformer_forward.57} parent=15 // pred_region
        %p143 = scmp.lt.s32.totalorder %s9, 1
        %s144 = scalar_select %p143, %s9, 1
        %s145 = smul.addr %s144, 2
        %s146 = smul.addr %s145, 4
        %s147 = scalar_lea.vmem %s1, %s146
      $region24: #{teinformer_forward.57} parent=15 // pred_fallthru
        _
      // Predicated region
      $region25: #{teinformer_forward.57} parent=15 // pred_check
        %p148 = pneg %p81
      $region26: #{teinformer_forward.57} parent=15 // pred_check_branch
        %150 = sbr.rel (%p148) target = $region28
      $region27: #{teinformer_forward.57} parent=15 // pred_region
        %p151 = scmp.lt.s32.totalorder %s9, 1
        %s152 = scalar_select %p151, %s9, 1
        %s153 = smul.addr %s152, 2
        %s154 = smul.addr %s153, 4
        %s155 = scalar_lea.vmem %s2, %s154
      $region28: #{teinformer_forward.57} parent=15 // pred_fallthru
        _
    $region16: #{teinformer_forward.57} parent=5 // pred_fallthru
      _
    %p156 = scmp.le.s32.totalorder 1, %s9
    %p157 = scmp.lt.s32.totalorder %s9, 3
    %p158 = pnand %p156, %p157
    %p159 = pneg %p158
    // Predicated region
    $region29: #{teinformer_forward.57} parent=5 // pred_check
      _
    $region30: #{teinformer_forward.57} parent=5 // pred_check_branch
      %161 = sbr.rel (%p158) target = $region32
    $region31: #{teinformer_forward.57} parent=5 // pred_region
      %s162 = ssub.s32 %s9, 1
      %p163 = scmp.lt.s32.totalorder %s14, 1
      %s164 = scalar_select %p163, %s14, 1
      %s165 = smul.addr %s164, 2
      %s166 = smul.addr %s165, 8
      %s167 = scalar_lea.vmem %s0, %s166
      %p168 = pneg %p35
      %p169 = pneg %p32
      %p170 = scmp.lt.s32.totalorder %s14, 1
      %s171 = scalar_select %p170, %s14, 1
      %s172 = smul.addr %s171, 2
      %s173 = smul.addr %s172, 4
      %s174 = scalar_lea.vmem %s1, %s173
      %p175 = pneg %p61
      %p176 = pneg %p58
      %p177 = scmp.lt.s32.totalorder %s14, 1
      %s178 = scalar_select %p177, %s14, 1
      %s179 = smul.addr %s178, 2
      %s180 = smul.addr %s179, 4
      %s181 = scalar_lea.vmem %s2, %s180
      %p182 = pneg %p87
      %p183 = pneg %p84
      %p184 = pneg %p113
      %p185 = pneg %p110
      %p186 = scmp.lt.s32.totalorder %s14, 1
      %s187 = scalar_select %p186, %s14, 1
      %s188 = smul.addr %s187, 2
      %s189 = smul.addr %s188, 4
      %s190 = scalar_lea.vmem %s3, %s189
      %p191 = scmp.lt.s32.totalorder %s14, 1
      %s192 = scalar_select %p191, %s14, 1
      %s193 = smul.addr %s192, 2
      %s194 = smul.addr %s193, 8
      %s195 = scalar_lea.vmem %s0, %s194
      %p196 = scmp.lt.s32.totalorder %s14, 1
      %s197 = scalar_select %p196, %s14, 1
      %s198 = smul.addr %s197, 2
      %s199 = smul.addr %s198, 4
      %s200 = scalar_lea.vmem %s1, %s199
      %p201 = scmp.lt.s32.totalorder %s14, 1
      %s202 = scalar_select %p201, %s14, 1
      %s203 = smul.addr %s202, 2
      %s204 = smul.addr %s203, 4
      %s205 = scalar_lea.vmem %s2, %s204
      %p206 = scmp.lt.s32.totalorder %s14, 1
      %s207 = scalar_select %p206, %s14, 1
      %s208 = smul.addr %s207, 2
      %s209 = smul.addr %s208, 4
      %s210 = scalar_lea.vmem %s3, %s209
      %v212 = vld [vmem:[%s200] sm:$0xf]
      %v213 = vld [vmem:[%s200 + $0x4] sm:$0xf]
      %v214 = vld [vmem:[%s205] sm:$0xf]
      %v215 = vld [vmem:[%s205 + $0x4] sm:$0xf]
      %v216 = vld [vmem:[%s195] sm:$0xff]
      %v217 = vld [vmem:[%s195 + $0x8] sm:$0x7f]
      %v220 = vunpack.c.l.b16 %v212
      %v221 = vunpack.c.l.b16 %v213
      %v222 = vpack.c.b16 %v221, %v220
      %v225 = vunpack.c.l.b16 %v214
      %v226 = vunpack.c.l.b16 %v215
      %v227 = vpack.c.b16 %v226, %v225
      %228 = vrot.lane.b32.xlu0 %v227, 96
      %v229 = vpop.permute.xlu0 %228
      %vm230 = vcmask 64512
      %v232 = vsel %vm230, %v222, 0
      %v235 = vsel %vm230, %v229, 0
      %237 = vmatprep.subr.bf16.mxu0 0
      %238 = vmatpush1.bf16.xpose.msra.mxu0 %v235
      %239 = vmatprep.subr.bf16.mxu0 0
      %240 = vmatpush1.bf16.xpose.msra.mxu0 0
      %241 = vmatprep.subr.bf16.mxu0 0
      %242 = vmatpush1.bf16.xpose.msra.mxu0 0
      %243 = vmatprep.subr.bf16.mxu0 0
      %244 = vmatpush1.bf16.xpose.msra.mxu0 0
      %245 = vmatprep.subr.bf16.mxu0 0
      %246 = vmatpush1.bf16.xpose.msra.mxu0 0
      %247 = vmatprep.subr.bf16.mxu0 0
      %248 = vmatpush1.bf16.xpose.msra.mxu0 0
      %249 = vmatprep.subr.bf16.mxu0 0
      %250 = vmatpush1.bf16.xpose.msra.mxu0 0
      %251 = vmatprep.subr.bf16.mxu0 0
      %252 = vmatpush1.bf16.xpose.msra.mxu0 0
      %253 = vmatprep.subr.bf16.mxu0 0
      %254 = vmatpush1.bf16.xpose.msra.mxu0 0
      %255 = vmatprep.subr.bf16.mxu0 0
      %256 = vmatpush1.bf16.xpose.msra.mxu0 0
      %257 = vmatprep.subr.bf16.mxu0 0
      %258 = vmatpush1.bf16.xpose.msra.mxu0 0
      %259 = vmatprep.subr.bf16.mxu0 0
      %260 = vmatpush1.bf16.xpose.msra.mxu0 0
      %261 = vmatprep.subr.bf16.mxu0 0
      %262 = vmatpush1.bf16.xpose.msra.mxu0 0
      %263 = vmatprep.subr.bf16.mxu0 0
      %264 = vmatpush1.bf16.xpose.msra.mxu0 0
      %265 = vmatprep.subr.bf16.mxu0 0
      %266 = vmatpush1.bf16.xpose.msra.mxu0 0
      %267 = vmatprep.subr.bf16.mxu0 0
      %268 = vmatpush1.bf16.xpose.msra.mxu0 0
      %269 = vmatprep.mubr.bf16.mxu0 0
      %270 = vmatmul.mubr.bf16.gmra.mrb[0].mxu0 %v232
      %v271 = vpop.f32.mrb[0].mxu0
      %v272 = vadd.f32 0.0, %v271
      %v273 = vpop.f32.mrb[0].mxu0
      %v274 = vpop.f32.mrb[0].mxu0
      %v275 = vadd.f32 0.0, %v274
      %v276 = vpop.f32.mrb[0].mxu0
      %277 = vdwg.mxu0
      %v278 = vmul.f32 %v272, 0.35355338
      %v279 = vmul.f32 %v275, 0.35355338
      %v280 = vlaneseq
      %v281 = vand.u32 %v280, 127
      %282 = vset.pattern.permute.xlu0 0
      %283 = vperm.xlu0 %282, %v216
      %v284 = vpop.permute.xlu0 %283
      %285 = vset.pattern.permute.xlu0 0
      %286 = vperm.xlu0 %285, %v217
      %v287 = vpop.permute.xlu0 %286
      %vm288 = vcmp.le.s32.totalorder %v281, %v284
      %vm289 = vcmp.le.s32.totalorder %v281, %v287
      %v290 = vsel %vm288, %v278, -1e+30
      %v291 = vsel %vm289, %v279, -1e+30
      %vm292 = vcmask 130048
      %v293 = vsel %vm292, %v290, -inf
      %294 = vmax.xlane.f32.xlu0 %v293
      %v295 = vpop.xlane.xlu0 %294
      %vm296 = vcmask 129024
      %v297 = vsel %vm296, %v291, -inf
      %298 = vmax.xlane.f32.xlu0 %v297
      %v299 = vpop.xlane.xlu0 %298
      %v300 = vsub.f32 %v290, %v295
      %v301 = vsub.f32 %v291, %v299
      %v302 = vmul.f32 %v300, 1.442695
      %v303 = vpow.pop %v302
      %v304 = vmul.f32 %v301, 1.442695
      %v305 = vpow.pop %v304
      %v306 = vsel %vm292, %v303, 0.0
      %307 = vadd.xlane.f32.xlu0 %v306
      %v308 = vpop.xlane.xlu0 %307
      %v309 = vsel %vm296, %v305, 0.0
      %310 = vadd.xlane.f32.xlu0 %v309
      %v311 = vpop.xlane.xlu0 %310
      %v312 = vrcp.pop %v308
      %v313 = vrcp.pop %v311
      %v314 = vmul.f32 %v303, %v312
      %v315 = vmul.f32 %v305, %v313
      %v316 = vpack.c.bf16 %v315, %v314
      %317 = vrot.lane.b32.xlu0 %v227, 64
      %v318 = vpop.permute.xlu0 %317
      %v321 = vsel %vm292, %v316, 0
      %323 = vmatprep.subr.bf16.mxu0 0
      %324 = vmatpush1.bf16.msra.mxu0 %v318
      %325 = vmatprep.subr.bf16.mxu0 0
      %326 = vmatpush1.bf16.msra.mxu0 0
      %327 = vmatprep.subr.bf16.mxu0 0
      %328 = vmatpush1.bf16.msra.mxu0 0
      %329 = vmatprep.subr.bf16.mxu0 0
      %330 = vmatpush1.bf16.msra.mxu0 0
      %331 = vmatprep.subr.bf16.mxu0 0
      %332 = vmatpush1.bf16.msra.mxu0 0
      %333 = vmatprep.subr.bf16.mxu0 0
      %334 = vmatpush1.bf16.msra.mxu0 0
      %335 = vmatprep.subr.bf16.mxu0 0
      %336 = vmatpush1.bf16.msra.mxu0 0
      %337 = vmatprep.subr.bf16.mxu0 0
      %338 = vmatpush1.bf16.msra.mxu0 0
      %339 = vmatprep.subr.bf16.mxu0 0
      %340 = vmatpush1.bf16.msra.mxu0 0
      %341 = vmatprep.subr.bf16.mxu0 0
      %342 = vmatpush1.bf16.msra.mxu0 0
      %343 = vmatprep.subr.bf16.mxu0 0
      %344 = vmatpush1.bf16.msra.mxu0 0
      %345 = vmatprep.subr.bf16.mxu0 0
      %346 = vmatpush1.bf16.msra.mxu0 0
      %347 = vmatprep.subr.bf16.mxu0 0
      %348 = vmatpush1.bf16.msra.mxu0 0
      %349 = vmatprep.subr.bf16.mxu0 0
      %350 = vmatpush1.bf16.msra.mxu0 0
      %351 = vmatprep.subr.bf16.mxu0 0
      %352 = vmatpush1.bf16.msra.mxu0 0
      %353 = vmatprep.subr.bf16.mxu0 0
      %354 = vmatpush1.bf16.msra.mxu0 0
      %355 = vmatprep.mubr.bf16.mxu0 0
      %356 = vmatmul.mubr.bf16.gmra.mrb[0].mxu0 %v321
      %v357 = vpop.f32.mrb[0].mxu0
      %v358 = vadd.f32 0.0, %v357
      %v359 = vpop.f32.mrb[0].mxu0
      %v360 = vpop.f32.mrb[0].mxu0
      %v361 = vadd.f32 0.0, %v360
      %v362 = vpop.f32.mrb[0].mxu0
      %363 = vdwg.mxu0
      %v364 = vpack.c.bf16 %v361, %v358
      %v366 = vunpack.c.l.b16 %v364
      %v367 = vunpack.c.h.b16 %v364
      %v368 = vpack.c.b16 %v366, %v366
      %v369 = vpack.c.b16 %v367, %v367
      %vm372 = vcmask 60416
      %373 = vst.msk [vmem:[%s210] sm:$0xf] %vm372, %v368
      %vm374 = vcmask 60416
      %vm375 = vsmask.f32 3328
      %vm376 = vmand %vm374, %vm375
      %v377 = vld [vmem:[%s210 + $0x4] sm:$0xf]
      %v378 = vsel %vm376, %v369, %v377
      %379 = vst [vmem:[%s210 + $0x4] sm:$0xf] %v378
      %v380 = vld [vmem:[%s200] sm:$0xf]
      %v381 = vld [vmem:[%s200 + $0x4] sm:$0xf]
      %v382 = vld [vmem:[%s205] sm:$0xf]
      %v383 = vld [vmem:[%s205 + $0x4] sm:$0xf]
      %v384 = vld [vmem:[%s195] sm:$0xff]
      %v385 = vld [vmem:[%s195 + $0x8] sm:$0x7f]
      %v388 = vunpack.c.l.b16 %v380
      %v389 = vunpack.c.l.b16 %v381
      %v390 = vpack.c.b16 %v389, %v388
      %391 = vrot.lane.b32.xlu0 %v390, 120
      %v392 = vpop.permute.xlu0 %391
      %v395 = vunpack.c.l.b16 %v382
      %v396 = vunpack.c.l.b16 %v383
      %v397 = vpack.c.b16 %v396, %v395
      %398 = vrot.lane.b32.xlu0 %v397, 88
      %v399 = vpop.permute.xlu0 %398
      %v401 = vsel %vm230, %v392, 0
      %v404 = vsel %vm230, %v399, 0
      %406 = vmatprep.subr.bf16.mxu0 0
      %407 = vmatpush1.bf16.xpose.msra.mxu0 %v404
      %408 = vmatprep.subr.bf16.mxu0 0
      %409 = vmatpush1.bf16.xpose.msra.mxu0 0
      %410 = vmatprep.subr.bf16.mxu0 0
      %411 = vmatpush1.bf16.xpose.msra.mxu0 0
      %412 = vmatprep.subr.bf16.mxu0 0
      %413 = vmatpush1.bf16.xpose.msra.mxu0 0
      %414 = vmatprep.subr.bf16.mxu0 0
      %415 = vmatpush1.bf16.xpose.msra.mxu0 0
      %416 = vmatprep.subr.bf16.mxu0 0
      %417 = vmatpush1.bf16.xpose.msra.mxu0 0
      %418 = vmatprep.subr.bf16.mxu0 0
      %419 = vmatpush1.bf16.xpose.msra.mxu0 0
      %420 = vmatprep.subr.bf16.mxu0 0
      %421 = vmatpush1.bf16.xpose.msra.mxu0 0
      %422 = vmatprep.subr.bf16.mxu0 0
      %423 = vmatpush1.bf16.xpose.msra.mxu0 0
      %424 = vmatprep.subr.bf16.mxu0 0
      %425 = vmatpush1.bf16.xpose.msra.mxu0 0
      %426 = vmatprep.subr.bf16.mxu0 0
      %427 = vmatpush1.bf16.xpose.msra.mxu0 0
      %428 = vmatprep.subr.bf16.mxu0 0
      %429 = vmatpush1.bf16.xpose.msra.mxu0 0
      %430 = vmatprep.subr.bf16.mxu0 0
      %431 = vmatpush1.bf16.xpose.msra.mxu0 0
      %432 = vmatprep.subr.bf16.mxu0 0
      %433 = vmatpush1.bf16.xpose.msra.mxu0 0
      %434 = vmatprep.subr.bf16.mxu0 0
      %435 = vmatpush1.bf16.xpose.msra.mxu0 0
      %436 = vmatprep.subr.bf16.mxu0 0
      %437 = vmatpush1.bf16.xpose.msra.mxu0 0
      %438 = vmatprep.mubr.bf16.mxu0 0
      %439 = vmatmul.mubr.bf16.gmra.mrb[0].mxu0 %v401
      %v440 = vpop.f32.mrb[0].mxu0
      %v441 = vadd.f32 0.0, %v440
      %v442 = vpop.f32.mrb[0].mxu0
      %v443 = vpop.f32.mrb[0].mxu0
      %v444 = vadd.f32 0.0, %v443
      %v445 = vpop.f32.mrb[0].mxu0
      %446 = vdwg.mxu0
      %v447 = vmul.f32 %v441, 0.35355338
      %v448 = vmul.f32 %v444, 0.35355338
      %449 = vset.pattern.permute.xlu0 1
      %450 = vperm.xlu0 %449, %v384
      %v451 = vpop.permute.xlu0 %450
      %452 = vset.pattern.permute.xlu0 1
      %453 = vperm.xlu0 %452, %v385
      %v454 = vpop.permute.xlu0 %453
      %vm455 = vcmp.le.s32.totalorder %v281, %v451
      %vm456 = vcmp.le.s32.totalorder %v281, %v454
      %v457 = vsel %vm455, %v447, -1e+30
      %v458 = vsel %vm456, %v448, -1e+30
      %v459 = vsel %vm292, %v457, -inf
      %460 = vmax.xlane.f32.xlu0 %v459
      %v461 = vpop.xlane.xlu0 %460
      %v462 = vsel %vm296, %v458, -inf
      %463 = vmax.xlane.f32.xlu0 %v462
      %v464 = vpop.xlane.xlu0 %463
      %v465 = vsub.f32 %v457, %v461
      %v466 = vsub.f32 %v458, %v464
      %v467 = vmul.f32 %v465, 1.442695
      %v468 = vpow.pop %v467
      %v469 = vmul.f32 %v466, 1.442695
      %v470 = vpow.pop %v469
      %v471 = vsel %vm292, %v468, 0.0
      %472 = vadd.xlane.f32.xlu0 %v471
      %v473 = vpop.xlane.xlu0 %472
      %v474 = vsel %vm296, %v470, 0.0
      %475 = vadd.xlane.f32.xlu0 %v474
      %v476 = vpop.xlane.xlu0 %475
      %v477 = vrcp.pop %v473
      %v478 = vrcp.pop %v476
      %v479 = vmul.f32 %v468, %v477
      %v480 = vmul.f32 %v470, %v478
      %v481 = vpack.c.bf16 %v480, %v479
      %482 = vrot.lane.b32.xlu0 %v397, 56
      %v483 = vpop.permute.xlu0 %482
      %v486 = vsel %vm292, %v481, 0
      %488 = vmatprep.subr.bf16.mxu0 0
      %489 = vmatpush1.bf16.msra.mxu0 %v483
      %490 = vmatprep.subr.bf16.mxu0 0
      %491 = vmatpush1.bf16.msra.mxu0 0
      %492 = vmatprep.subr.bf16.mxu0 0
      %493 = vmatpush1.bf16.msra.mxu0 0
      %494 = vmatprep.subr.bf16.mxu0 0
      %495 = vmatpush1.bf16.msra.mxu0 0
      %496 = vmatprep.subr.bf16.mxu0 0
      %497 = vmatpush1.bf16.msra.mxu0 0
      %498 = vmatprep.subr.bf16.mxu0 0
      %499 = vmatpush1.bf16.msra.mxu0 0
      %500 = vmatprep.subr.bf16.mxu0 0
      %501 = vmatpush1.bf16.msra.mxu0 0
      %502 = vmatprep.subr.bf16.mxu0 0
      %503 = vmatpush1.bf16.msra.mxu0 0
      %504 = vmatprep.subr.bf16.mxu0 0
      %505 = vmatpush1.bf16.msra.mxu0 0
      %506 = vmatprep.subr.bf16.mxu0 0
      %507 = vmatpush1.bf16.msra.mxu0 0
      %508 = vmatprep.subr.bf16.mxu0 0
      %509 = vmatpush1.bf16.msra.mxu0 0
      %510 = vmatprep.subr.bf16.mxu0 0
      %511 = vmatpush1.bf16.msra.mxu0 0
      %512 = vmatprep.subr.bf16.mxu0 0
      %513 = vmatpush1.bf16.msra.mxu0 0
      %514 = vmatprep.subr.bf16.mxu0 0
      %515 = vmatpush1.bf16.msra.mxu0 0
      %516 = vmatprep.subr.bf16.mxu0 0
      %517 = vmatpush1.bf16.msra.mxu0 0
      %518 = vmatprep.subr.bf16.mxu0 0
      %519 = vmatpush1.bf16.msra.mxu0 0
      %520 = vmatprep.mubr.bf16.mxu0 0
      %521 = vmatmul.mubr.bf16.gmra.mrb[0].mxu0 %v486
      %v522 = vpop.f32.mrb[0].mxu0
      %v523 = vadd.f32 0.0, %v522
      %v524 = vpop.f32.mrb[0].mxu0
      %v525 = vpop.f32.mrb[0].mxu0
      %v526 = vadd.f32 0.0, %v525
      %v527 = vpop.f32.mrb[0].mxu0
      %528 = vdwg.mxu0
      %v529 = vpack.c.bf16 %v526, %v523
      %v531 = vunpack.c.l.b16 %v529
      %v532 = vunpack.c.h.b16 %v529
      %v533 = vpack.c.b16 %v531, %v531
      %v534 = vpack.c.b16 %v532, %v532
      %535 = vrot.lane.b32.xlu0 %v533, 8
      %v536 = vpop.permute.xlu0 %535
      %537 = vrot.lane.b32.xlu0 %v534, 8
      %v538 = vpop.permute.xlu0 %537
      %vm541 = vcmask 126016
      %542 = vst.msk [vmem:[%s210] sm:$0xf] %vm541, %v536
      %vm543 = vcmask 126016
      %vm544 = vmand %vm543, %vm375
      %v545 = vld [vmem:[%s210 + $0x4] sm:$0xf]
      %v546 = vsel %vm544, %v538, %v545
      %547 = vst [vmem:[%s210 + $0x4] sm:$0xf] %v546
      %v548 = vld [vmem:[%s200] sm:$0xf]
      %v549 = vld [vmem:[%s200 + $0x4] sm:$0xf]
      %v550 = vld [vmem:[%s205] sm:$0xf]
      %v551 = vld [vmem:[%s205 + $0x4] sm:$0xf]
      %v552 = vld [vmem:[%s195] sm:$0xff]
      %v553 = vld [vmem:[%s195 + $0x8] sm:$0x7f]
      %v556 = vunpack.c.l.b16 %v548
      %v557 = vunpack.c.l.b16 %v549
      %v558 = vpack.c.b16 %v557, %v556
      %559 = vrot.lane.b32.xlu0 %v558, 112
      %v560 = vpop.permute.xlu0 %559
      %v563 = vunpack.c.l.b16 %v550
      %v564 = vunpack.c.l.b16 %v551
      %v565 = vpack.c.b16 %v564, %v563
      %566 = vrot.lane.b32.xlu0 %v565, 80
      %v567 = vpop.permute.xlu0 %566
      %v569 = vsel %vm230, %v560, 0
      %v572 = vsel %vm230, %v567, 0
      %574 = vmatprep.subr.bf16.mxu0 0
      %575 = vmatpush1.bf16.xpose.msra.mxu0 %v572
      %576 = vmatprep.subr.bf16.mxu0 0
      %577 = vmatpush1.bf16.xpose.msra.mxu0 0
      %578 = vmatprep.subr.bf16.mxu0 0
      %579 = vmatpush1.bf16.xpose.msra.mxu0 0
      %580 = vmatprep.subr.bf16.mxu0 0
      %581 = vmatpush1.bf16.xpose.msra.mxu0 0
      %582 = vmatprep.subr.bf16.mxu0 0
      %583 = vmatpush1.bf16.xpose.msra.mxu0 0
      %584 = vmatprep.subr.bf16.mxu0 0
      %585 = vmatpush1.bf16.xpose.msra.mxu0 0
      %586 = vmatprep.subr.bf16.mxu0 0
      %587 = vmatpush1.bf16.xpose.msra.mxu0 0
      %588 = vmatprep.subr.bf16.mxu0 0
      %589 = vmatpush1.bf16.xpose.msra.mxu0 0
      %590 = vmatprep.subr.bf16.mxu0 0
      %591 = vmatpush1.bf16.xpose.msra.mxu0 0
      %592 = vmatprep.subr.bf16.mxu0 0
      %593 = vmatpush1.bf16.xpose.msra.mxu0 0
      %594 = vmatprep.subr.bf16.mxu0 0
      %595 = vmatpush1.bf16.xpose.msra.mxu0 0
      %596 = vmatprep.subr.bf16.mxu0 0
      %597 = vmatpush1.bf16.xpose.msra.mxu0 0
      %598 = vmatprep.subr.bf16.mxu0 0
      %599 = vmatpush1.bf16.xpose.msra.mxu0 0
      %600 = vmatprep.subr.bf16.mxu0 0
      %601 = vmatpush1.bf16.xpose.msra.mxu0 0
      %602 = vmatprep.subr.bf16.mxu0 0
      %603 = vmatpush1.bf16.xpose.msra.mxu0 0
      %604 = vmatprep.subr.bf16.mxu0 0
      %605 = vmatpush1.bf16.xpose.msra.mxu0 0
      %606 = vmatprep.mubr.bf16.mxu0 0
      %607 = vmatmul.mubr.bf16.gmra.mrb[0].mxu0 %v569
      %v608 = vpop.f32.mrb[0].mxu0
      %v609 = vadd.f32 0.0, %v608
      %v610 = vpop.f32.mrb[0].mxu0
      %v611 = vpop.f32.mrb[0].mxu0
      %v612 = vadd.f32 0.0, %v611
      %v613 = vpop.f32.mrb[0].mxu0
      %614 = vdwg.mxu0
      %v615 = vmul.f32 %v609, 0.35355338
      %v616 = vmul.f32 %v612, 0.35355338
      %617 = vset.pattern.permute.xlu0 2
      %618 = vperm.xlu0 %617, %v552
      %v619 = vpop.permute.xlu0 %618
      %620 = vset.pattern.permute.xlu0 2
      %621 = vperm.xlu0 %620, %v553
      %v622 = vpop.permute.xlu0 %621
      %vm623 = vcmp.le.s32.totalorder %v281, %v619
      %vm624 = vcmp.le.s32.totalorder %v281, %v622
      %v625 = vsel %vm623, %v615, -1e+30
      %v626 = vsel %vm624, %v616, -1e+30
      %v627 = vsel %vm292, %v625, -inf
      %628 = vmax.xlane.f32.xlu0 %v627
      %v629 = vpop.xlane.xlu0 %628
      %v630 = vsel %vm296, %v626, -inf
      %631 = vmax.xlane.f32.xlu0 %v630
      %v632 = vpop.xlane.xlu0 %631
      %v633 = vsub.f32 %v625, %v629
      %v634 = vsub.f32 %v626, %v632
      %v635 = vmul.f32 %v633, 1.442695
      %v636 = vpow.pop %v635
      %v637 = vmul.f32 %v634, 1.442695
      %v638 = vpow.pop %v637
      %v639 = vsel %vm292, %v636, 0.0
      %640 = vadd.xlane.f32.xlu0 %v639
      %v641 = vpop.xlane.xlu0 %640
      %v642 = vsel %vm296, %v638, 0.0
      %643 = vadd.xlane.f32.xlu0 %v642
      %v644 = vpop.xlane.xlu0 %643
      %v645 = vrcp.pop %v641
      %v646 = vrcp.pop %v644
      %v647 = vmul.f32 %v636, %v645
      %v648 = vmul.f32 %v638, %v646
      %v649 = vpack.c.bf16 %v648, %v647
      %650 = vrot.lane.b32.xlu0 %v565, 48
      %v651 = vpop.permute.xlu0 %650
      %v654 = vsel %vm292, %v649, 0
      %656 = vmatprep.subr.bf16.mxu0 0
      %657 = vmatpush1.bf16.msra.mxu0 %v651
      %658 = vmatprep.subr.bf16.mxu0 0
      %659 = vmatpush1.bf16.msra.mxu0 0
      %660 = vmatprep.subr.bf16.mxu0 0
      %661 = vmatpush1.bf16.msra.mxu0 0
      %662 = vmatprep.subr.bf16.mxu0 0
      %663 = vmatpush1.bf16.msra.mxu0 0
      %664 = vmatprep.subr.bf16.mxu0 0
      %665 = vmatpush1.bf16.msra.mxu0 0
      %666 = vmatprep.subr.bf16.mxu0 0
      %667 = vmatpush1.bf16.msra.mxu0 0
      %668 = vmatprep.subr.bf16.mxu0 0
      %669 = vmatpush1.bf16.msra.mxu0 0
      %670 = vmatprep.subr.bf16.mxu0 0
      %671 = vmatpush1.bf16.msra.mxu0 0
      %672 = vmatprep.subr.bf16.mxu0 0
      %673 = vmatpush1.bf16.msra.mxu0 0
      %674 = vmatprep.subr.bf16.mxu0 0
      %675 = vmatpush1.bf16.msra.mxu0 0
      %676 = vmatprep.subr.bf16.mxu0 0
      %677 = vmatpush1.bf16.msra.mxu0 0
      %678 = vmatprep.subr.bf16.mxu0 0
      %679 = vmatpush1.bf16.msra.mxu0 0
      %680 = vmatprep.subr.bf16.mxu0 0
      %681 = vmatpush1.bf16.msra.mxu0 0
      %682 = vmatprep.subr.bf16.mxu0 0
      %683 = vmatpush1.bf16.msra.mxu0 0
      %684 = vmatprep.subr.bf16.mxu0 0
      %685 = vmatpush1.bf16.msra.mxu0 0
      %686 = vmatprep.subr.bf16.mxu0 0
      %687 = vmatpush1.bf16.msra.mxu0 0
      %688 = vmatprep.mubr.bf16.mxu0 0
      %689 = vmatmul.mubr.bf16.gmra.mrb[0].mxu0 %v654
      %v690 = vpop.f32.mrb[0].mxu0
      %v691 = vadd.f32 0.0, %v690
      %v692 = vpop.f32.mrb[0].mxu0
      %v693 = vpop.f32.mrb[0].mxu0
      %v694 = vadd.f32 0.0, %v693
      %v695 = vpop.f32.mrb[0].mxu0
      %696 = vdwg.mxu0
      %v697 = vpack.c.bf16 %v694, %v691
      %v699 = vunpack.c.l.b16 %v697
      %v700 = vunpack.c.h.b16 %v697
      %v701 = vpack.c.b16 %v699, %v699
      %v702 = vpack.c.b16 %v700, %v700
      %703 = vrot.lane.b32.xlu0 %v701, 16
      %v704 = vpop.permute.xlu0 %703
      %705 = vrot.lane.b32.xlu0 %v702, 16
      %v706 = vpop.permute.xlu0 %705
      %vm709 = vcmask 191616
      %710 = vst.msk [vmem:[%s210] sm:$0xf] %vm709, %v704
      %vm711 = vcmask 191616
      %vm712 = vmand %vm711, %vm375
      %v713 = vld [vmem:[%s210 + $0x4] sm:$0xf]
      %v714 = vsel %vm712, %v706, %v713
      %715 = vst [vmem:[%s210 + $0x4] sm:$0xf] %v714
      %v716 = vld [vmem:[%s200] sm:$0xf]
      %v717 = vld [vmem:[%s200 + $0x4] sm:$0xf]
      %v718 = vld [vmem:[%s205] sm:$0xf]
      %v719 = vld [vmem:[%s205 + $0x4] sm:$0xf]
      %v720 = vld [vmem:[%s195] sm:$0xff]
      %v721 = vld [vmem:[%s195 + $0x8] sm:$0x7f]
      %v724 = vunpack.c.l.b16 %v716
      %v725 = vunpack.c.l.b16 %v717
      %v726 = vpack.c.b16 %v725, %v724
      %727 = vrot.lane.b32.xlu0 %v726, 104
      %v728 = vpop.permute.xlu0 %727
      %v731 = vunpack.c.l.b16 %v718
      %v732 = vunpack.c.l.b16 %v719
      %v733 = vpack.c.b16 %v732, %v731
      %734 = vrot.lane.b32.xlu0 %v733, 72
      %v735 = vpop.permute.xlu0 %734
      %v737 = vsel %vm230, %v728, 0
      %v740 = vsel %vm230, %v735, 0
      %742 = vmatprep.subr.bf16.mxu0 0
      %743 = vmatpush1.bf16.xpose.msra.mxu0 %v740
      %744 = vmatprep.subr.bf16.mxu0 0
      %745 = vmatpush1.bf16.xpose.msra.mxu0 0
      %746 = vmatprep.subr.bf16.mxu0 0
      %747 = vmatpush1.bf16.xpose.msra.mxu0 0
      %748 = vmatprep.subr.bf16.mxu0 0
      %749 = vmatpush1.bf16.xpose.msra.mxu0 0
      %750 = vmatprep.subr.bf16.mxu0 0
      %751 = vmatpush1.bf16.xpose.msra.mxu0 0
      %752 = vmatprep.subr.bf16.mxu0 0
      %753 = vmatpush1.bf16.xpose.msra.mxu0 0
      %754 = vmatprep.subr.bf16.mxu0 0
      %755 = vmatpush1.bf16.xpose.msra.mxu0 0
      %756 = vmatprep.subr.bf16.mxu0 0
      %757 = vmatpush1.bf16.xpose.msra.mxu0 0
      %758 = vmatprep.subr.bf16.mxu0 0
      %759 = vmatpush1.bf16.xpose.msra.mxu0 0
      %760 = vmatprep.subr.bf16.mxu0 0
      %761 = vmatpush1.bf16.xpose.msra.mxu0 0
      %762 = vmatprep.subr.bf16.mxu0 0
      %763 = vmatpush1.bf16.xpose.msra.mxu0 0
      %764 = vmatprep.subr.bf16.mxu0 0
      %765 = vmatpush1.bf16.xpose.msra.mxu0 0
      %766 = vmatprep.subr.bf16.mxu0 0
      %767 = vmatpush1.bf16.xpose.msra.mxu0 0
      %768 = vmatprep.subr.bf16.mxu0 0
      %769 = vmatpush1.bf16.xpose.msra.mxu0 0
      %770 = vmatprep.subr.bf16.mxu0 0
      %771 = vmatpush1.bf16.xpose.msra.mxu0 0
      %772 = vmatprep.subr.bf16.mxu0 0
      %773 = vmatpush1.bf16.xpose.msra.mxu0 0
      %774 = vmatprep.mubr.bf16.mxu0 0
      %775 = vmatmul.mubr.bf16.gmra.mrb[0].mxu0 %v737
      %v776 = vpop.f32.mrb[0].mxu0
      %v777 = vadd.f32 0.0, %v776
      %v778 = vpop.f32.mrb[0].mxu0
      %v779 = vpop.f32.mrb[0].mxu0
      %v780 = vadd.f32 0.0, %v779
      %v781 = vpop.f32.mrb[0].mxu0
      %782 = vdwg.mxu0
      %v783 = vmul.f32 %v777, 0.35355338
      %v784 = vmul.f32 %v780, 0.35355338
      %785 = vset.pattern.permute.xlu0 3
      %786 = vperm.xlu0 %785, %v720
      %v787 = vpop.permute.xlu0 %786
      %788 = vset.pattern.permute.xlu0 3
      %789 = vperm.xlu0 %788, %v721
      %v790 = vpop.permute.xlu0 %789
      %vm791 = vcmp.le.s32.totalorder %v281, %v787
      %vm792 = vcmp.le.s32.totalorder %v281, %v790
      %v793 = vsel %vm791, %v783, -1e+30
      %v794 = vsel %vm792, %v784, -1e+30
      %v795 = vsel %vm292, %v793, -inf
      %796 = vmax.xlane.f32.xlu0 %v795
      %v797 = vpop.xlane.xlu0 %796
      %v798 = vsel %vm296, %v794, -inf
      %799 = vmax.xlane.f32.xlu0 %v798
      %v800 = vpop.xlane.xlu0 %799
      %v801 = vsub.f32 %v793, %v797
      %v802 = vsub.f32 %v794, %v800
      %v803 = vmul.f32 %v801, 1.442695
      %v804 = vpow.pop %v803
      %v805 = vmul.f32 %v802, 1.442695
      %v806 = vpow.pop %v805
      %v807 = vsel %vm292, %v804, 0.0
      %808 = vadd.xlane.f32.xlu0 %v807
      %v809 = vpop.xlane.xlu0 %808
      %v810 = vsel %vm296, %v806, 0.0
      %811 = vadd.xlane.f32.xlu0 %v810
      %v812 = vpop.xlane.xlu0 %811
      %v813 = vrcp.pop %v809
      %v814 = vrcp.pop %v812
      %v815 = vmul.f32 %v804, %v813
      %v816 = vmul.f32 %v806, %v814
      %v817 = vpack.c.bf16 %v816, %v815
      %818 = vrot.lane.b32.xlu0 %v733, 40
      %v819 = vpop.permute.xlu0 %818
      %v822 = vsel %vm292, %v817, 0
      %824 = vmatprep.subr.bf16.mxu0 0
      %825 = vmatpush1.bf16.msra.mxu0 %v819
      %826 = vmatprep.subr.bf16.mxu0 0
      %827 = vmatpush1.bf16.msra.mxu0 0
      %828 = vmatprep.subr.bf16.mxu0 0
      %829 = vmatpush1.bf16.msra.mxu0 0
      %830 = vmatprep.subr.bf16.mxu0 0
      %831 = vmatpush1.bf16.msra.mxu0 0
      %832 = vmatprep.subr.bf16.mxu0 0
      %833 = vmatpush1.bf16.msra.mxu0 0
      %834 = vmatprep.subr.bf16.mxu0 0
      %835 = vmatpush1.bf16.msra.mxu0 0
      %836 = vmatprep.subr.bf16.mxu0 0
      %837 = vmatpush1.bf16.msra.mxu0 0
      %838 = vmatprep.subr.bf16.mxu0 0
      %839 = vmatpush1.bf16.msra.mxu0 0
      %840 = vmatprep.subr.bf16.mxu0 0
      %841 = vmatpush1.bf16.msra.mxu0 0
      %842 = vmatprep.subr.bf16.mxu0 0
      %843 = vmatpush1.bf16.msra.mxu0 0
      %844 = vmatprep.subr.bf16.mxu0 0
      %845 = vmatpush1.bf16.msra.mxu0 0
      %846 = vmatprep.subr.bf16.mxu0 0
      %847 = vmatpush1.bf16.msra.mxu0 0
      %848 = vmatprep.subr.bf16.mxu0 0
      %849 = vmatpush1.bf16.msra.mxu0 0
      %850 = vmatprep.subr.bf16.mxu0 0
      %851 = vmatpush1.bf16.msra.mxu0 0
      %852 = vmatprep.subr.bf16.mxu0 0
      %853 = vmatpush1.bf16.msra.mxu0 0
      %854 = vmatprep.subr.bf16.mxu0 0
      %855 = vmatpush1.bf16.msra.mxu0 0
      %856 = vmatprep.mubr.bf16.mxu0 0
      %857 = vmatmul.mubr.bf16.gmra.mrb[0].mxu0 %v822
      %v858 = vpop.f32.mrb[0].mxu0
      %v859 = vadd.f32 0.0, %v858
      %v860 = vpop.f32.mrb[0].mxu0
      %v861 = vpop.f32.mrb[0].mxu0
      %v862 = vadd.f32 0.0, %v861
      %v863 = vpop.f32.mrb[0].mxu0
      %864 = vdwg.mxu0
      %v865 = vpack.c.bf16 %v862, %v859
      %v867 = vunpack.c.l.b16 %v865
      %v868 = vunpack.c.h.b16 %v865
      %v869 = vpack.c.b16 %v867, %v867
      %v870 = vpack.c.b16 %v868, %v868
      %871 = vrot.lane.b32.xlu0 %v869, 24
      %v872 = vpop.permute.xlu0 %871
      %873 = vrot.lane.b32.xlu0 %v870, 24
      %v874 = vpop.permute.xlu0 %873
      %vm877 = vcmask 257216
      %878 = vst.msk [vmem:[%s210] sm:$0xf] %vm877, %v872
      %vm879 = vcmask 257216
      %vm880 = vmand %vm879, %vm375
      %v881 = vld [vmem:[%s210 + $0x4] sm:$0xf]
      %v882 = vsel %vm880, %v874, %v881
      %883 = vst [vmem:[%s210 + $0x4] sm:$0xf] %v882
      %p884 = scmp.lt.s32.totalorder %s14, 1
      %s885 = scalar_select %p884, %s14, 1
      %s886 = smul.addr %s885, 2
      %s887 = smul.addr %s886, 4
      %s888 = scalar_lea.vmem %s3, %s887
      // Predicated region
      $region33: #{teinformer_forward.57} parent=31 // pred_check
        %p889 = pneg %p110
      $region34: #{teinformer_forward.57} parent=31 // pred_check_branch
        %891 = sbr.rel (%p889) target = $region36
      $region35: #{teinformer_forward.57} parent=31 // pred_region
        _
      $region36: #{teinformer_forward.57} parent=31 // pred_fallthru
        _
    $region32: #{teinformer_forward.57} parent=5 // pred_fallthru
      _
    %p892 = scmp.le.s32.totalorder 2, %s9
    // Predicated region
    $region37: #{teinformer_forward.57} parent=5 // pred_check
      %p893 = pneg %p892
    $region38: #{teinformer_forward.57} parent=5 // pred_check_branch
      %895 = sbr.rel (%p893) target = $region40
    $region39: #{teinformer_forward.57} parent=5 // pred_region
      %s896 = ssub.s32 %s9, 2
      // Predicated region
      $region41: #{teinformer_forward.57} parent=39 // pred_check
        %p897 = pneg %p116
      $region42: #{teinformer_forward.57} parent=39 // pred_check_branch
        %899 = sbr.rel (%p897) target = $region44
      $region43: #{teinformer_forward.57} parent=39 // pred_region
        %p900 = scmp.lt.s32.totalorder %s15, 1
        %s901 = scalar_select %p900, %s15, 1
        %s902 = smul.addr %s901, 2
        %s903 = smul.addr %s902, 4
        %s904 = scalar_lea.vmem %s3, %s903
      $region44: #{teinformer_forward.57} parent=39 // pred_fallthru
        _
    $region40: #{teinformer_forward.57} parent=5 // pred_fallthru
      _
  $region6: #{teinformer_forward.57} parent=0 // loop_footer
    %s13 = sadd.s32 1, %s9
  $region7: #{teinformer_forward.57} parent=0 // loop_footer_branch
    %8 = sbr.rel target = $region3
  $region8: #{teinformer_forward.57} parent=0 // loop_exit
    _

// kernel: teinformer_forward.68
$region0: #{teinformer_forward.68}
  #allocation0 [shape = 'u32[]', space=smem, size = 0x4, offset = 0x4, fixed_abs, tag = 'smem constant byte address 0x4 - core index']
  #allocation1 [shape = 'u32[144,128]{1,0:T(1,128)}', space=vmem, size = 0x12000, scoped, tag = 'internal scratch']
  %s0 = inlined_call_operand.vmem [shape: bf16[32,32], index: 0, kind: input, shape index: {}]
  %s1 = inlined_call_operand.vmem [shape: f32[1,32], index: 1, kind: input, shape index: {}]
  %s2 = inlined_call_operand.vmem [shape: f32[1,32], index: 2, kind: input, shape index: {}]
  %s3 = inlined_call_operand.vmem [shape: bf16[32,32], index: 3, kind: output, shape index: {}]
  %s4 = sld [smem:[#allocation0]]
  $region22: #{teinformer_forward.68} parent=0
    _
  %s6 = ssub.s32 1, %s4
  %s7 = scalar_select 0, %s6, %s4
  // Predicated region
  $region2: #{teinformer_forward.68} parent=0 // pred_check
    _
  $region3: #{teinformer_forward.68} parent=0 // pred_check_branch
    %9 = sbr.rel (0) target = $region5
  $region4: #{teinformer_forward.68} parent=0 // pred_region
    _
  $region5: #{teinformer_forward.68} parent=0 // pred_fallthru
    _
  // Predicated region
  $region6: #{teinformer_forward.68} parent=0 // pred_check
    _
  $region7: #{teinformer_forward.68} parent=0 // pred_check_branch
    %11 = sbr.rel (0) target = $region9
  $region8: #{teinformer_forward.68} parent=0 // pred_region
    _
  $region9: #{teinformer_forward.68} parent=0 // pred_fallthru
    _
  // Predicated region
  $region10: #{teinformer_forward.68} parent=0 // pred_check
    _
  $region11: #{teinformer_forward.68} parent=0 // pred_check_branch
    %13 = sbr.rel (0) target = $region13
  $region12: #{teinformer_forward.68} parent=0 // pred_region
    _
  $region13: #{teinformer_forward.68} parent=0 // pred_fallthru
    _
  %v14 = vld [vmem:[%s0] sm:$0xf]
  %v15 = vld [vmem:[%s0 + $0x4] sm:$0xf]
  %v16 = vld [vmem:[%s0 + $0x8] sm:$0xf]
  %v17 = vld [vmem:[%s0 + $0xc] sm:$0xf]
  %v18 = vunpack.c.l.bf16 %v14
  %v19 = vunpack.c.l.bf16 %v15
  %v20 = vunpack.c.l.bf16 %v16
  %v21 = vunpack.c.l.bf16 %v17
  %vm22 = vcmask 261120
  %v23 = vsel %vm22, %v18, 0.0
  %24 = vadd.xlane.f32.xlu0 %v23
  %v25 = vpop.xlane.xlu0 %24
  %v26 = vsel %vm22, %v19, 0.0
  %27 = vadd.xlane.f32.xlu0 %v26
  %v28 = vpop.xlane.xlu0 %27
  %v29 = vsel %vm22, %v20, 0.0
  %30 = vadd.xlane.f32.xlu0 %v29
  %v31 = vpop.xlane.xlu0 %30
  %v32 = vsel %vm22, %v21, 0.0
  %33 = vadd.xlane.f32.xlu0 %v32
  %v34 = vpop.xlane.xlu0 %33
  %v35 = vrcp.pop 32.0
  %v36 = vmul.f32 %v25, %v35
  %v37 = vmul.f32 %v28, %v35
  %v38 = vmul.f32 %v31, %v35
  %v39 = vmul.f32 %v34, %v35
  %v40 = vsub.f32 %v18, %v36
  %v41 = vsub.f32 %v19, %v37
  %v42 = vsub.f32 %v20, %v38
  %v43 = vsub.f32 %v21, %v39
  %v44 = vmul.f32 %v40, %v40
  %v45 = vmul.f32 %v41, %v41
  %v46 = vmul.f32 %v42, %v42
  %v47 = vmul.f32 %v43, %v43
  %v48 = vsel %vm22, %v44, 0.0
  %49 = vadd.xlane.f32.xlu0 %v48
  %v50 = vpop.xlane.xlu0 %49
  %v51 = vsel %vm22, %v45, 0.0
  %52 = vadd.xlane.f32.xlu0 %v51
  %v53 = vpop.xlane.xlu0 %52
  %v54 = vsel %vm22, %v46, 0.0
  %55 = vadd.xlane.f32.xlu0 %v54
  %v56 = vpop.xlane.xlu0 %55
  %v57 = vsel %vm22, %v47, 0.0
  %58 = vadd.xlane.f32.xlu0 %v57
  %v59 = vpop.xlane.xlu0 %58
  %v60 = vmul.f32 %v50, %v35
  %v61 = vmul.f32 %v53, %v35
  %v62 = vmul.f32 %v56, %v35
  %v63 = vmul.f32 %v59, %v35
  %v64 = vadd.f32 %v60, 1e-05
  %v65 = vadd.f32 %v61, 1e-05
  %v66 = vadd.f32 %v62, 1e-05
  %v67 = vadd.f32 %v63, 1e-05
  %v68 = vrsqrt.pop %v64
  %v69 = vrsqrt.pop %v65
  %v70 = vrsqrt.pop %v66
  %v71 = vrsqrt.pop %v67
  %v72 = vmul.f32 %v40, %v68
  %v73 = vmul.f32 %v41, %v69
  %v74 = vmul.f32 %v42, %v70
  %v75 = vmul.f32 %v43, %v71
  %v76 = vld [vmem:[%s1] sm:$0x1]
  %v78 = vlaneseq
  %v79 = vshrl.u32 %v78, 7
  %v80 = vsub.s32 0, %v79
  %v81 = vrot.slane %v76, %v80
  %v83 = vmul.f32 %v72, %v81
  %v84 = vmul.f32 %v73, %v81
  %v85 = vmul.f32 %v74, %v81
  %v86 = vmul.f32 %v75, %v81
  %v87 = vld [vmem:[%s2] sm:$0x1]
  %v89 = vlaneseq
  %v90 = vshrl.u32 %v89, 7
  %v91 = vsub.s32 0, %v90
  %v92 = vrot.slane %v87, %v91
  %v94 = vadd.f32 %v83, %v92
  %v95 = vadd.f32 %v84, %v92
  %v96 = vadd.f32 %v85, %v92
  %v97 = vadd.f32 %v86, %v92
  %v98 = vpack.c.bf16 %v95, %v94
  %v99 = vpack.c.bf16 %v97, %v96
  %v102 = vunpack.c.l.b16 %v98
  %v103 = vunpack.c.h.b16 %v98
  %v104 = vunpack.c.l.b16 %v99
  %v105 = vunpack.c.h.b16 %v99
  %v106 = vpack.c.b16 %v102, %v102
  %v107 = vpack.c.b16 %v103, %v103
  %v108 = vpack.c.b16 %v104, %v104
  %v109 = vpack.c.b16 %v105, %v105
  %vm114 = vcmask 257024
  %115 = vst.msk [vmem:[%s3] sm:$0xf] %vm114, %v106
  %116 = vst.msk [vmem:[%s3 + $0x4] sm:$0xf] %vm114, %v107
  %117 = vst.msk [vmem:[%s3 + $0x8] sm:$0xf] %vm114, %v108
  %118 = vst.msk [vmem:[%s3 + $0xc] sm:$0xf] %vm114, %v109
  // Predicated region
  $region14: #{teinformer_forward.68} parent=0 // pred_check
    _
  $region15: #{teinformer_forward.68} parent=0 // pred_check_branch
    %120 = sbr.rel (0) target = $region17
  $region16: #{teinformer_forward.68} parent=0 // pred_region
    _
  $region17: #{teinformer_forward.68} parent=0 // pred_fallthru
    _
  // Predicated region
  $region18: #{teinformer_forward.68} parent=0 // pred_check
    _
  $region19: #{teinformer_forward.68} parent=0 // pred_check_branch
    %122 = sbr.rel (0) target = $region21
  $region20: #{teinformer_forward.68} parent=0 // pred_region
    _
  $region21: #{teinformer_forward.68} parent=0 // pred_fallthru
    _

// kernel: teinformer_forward.60
$region0: #{teinformer_forward.60}
  #allocation0 [shape = 'u32[]', space=smem, size = 0x4, offset = 0x4, fixed_abs, tag = 'smem constant byte address 0x4 - core index']
  #allocation1 [shape = 'u32[144,128]{1,0:T(1,128)}', space=vmem, size = 0x12000, scoped, tag = 'internal scratch']
  #allocation2 [shape = 'f32[32,32]{1,0:T(8,128)}', space=vmem, size = 0x4000, scoped, tag = 'scratch operand']
  %s0 = inlined_call_operand.vmem [shape: bf16[32,32], index: 0, kind: input, shape index: {}]
  %s1 = inlined_call_operand.vmem [shape: bf16[32,32], index: 1, kind: input, shape index: {}]
  %s2 = inlined_call_operand.vmem [shape: f32[1,32], index: 2, kind: input, shape index: {}]
  %s3 = inlined_call_operand.vmem [shape: bf16[32,32], index: 3, kind: output, shape index: {}]
  %s4 = sld [smem:[#allocation0]]
  $region30: #{teinformer_forward.60} parent=0
    _
  %s6 = ssub.s32 1, %s4
  %s7 = scalar_select 0, %s6, %s4
  // Predicated region
  $region2: #{teinformer_forward.60} parent=0 // pred_check
    _
  $region3: #{teinformer_forward.60} parent=0 // pred_check_branch
    %9 = sbr.rel (0) target = $region5
  $region4: #{teinformer_forward.60} parent=0 // pred_region
    _
  $region5: #{teinformer_forward.60} parent=0 // pred_fallthru
    _
  // Predicated region
  $region6: #{teinformer_forward.60} parent=0 // pred_check
    _
  $region7: #{teinformer_forward.60} parent=0 // pred_check_branch
    %11 = sbr.rel (0) target = $region9
  $region8: #{teinformer_forward.60} parent=0 // pred_region
    _
  $region9: #{teinformer_forward.60} parent=0 // pred_fallthru
    _
  // Predicated region
  $region10: #{teinformer_forward.60} parent=0 // pred_check
    _
  $region11: #{teinformer_forward.60} parent=0 // pred_check_branch
    %13 = sbr.rel (0) target = $region13
  $region12: #{teinformer_forward.60} parent=0 // pred_region
    _
  $region13: #{teinformer_forward.60} parent=0 // pred_fallthru
    _
  %p15 = scmp.eq.s32.totalorder 0, 0
  // Predicated region
  $region14: #{teinformer_forward.60} parent=0 // pred_check
    %p16 = pneg %p15
  $region15: #{teinformer_forward.60} parent=0 // pred_check_branch
    %18 = sbr.rel (%p16) target = $region17
  $region16: #{teinformer_forward.60} parent=0 // pred_region
    %vm19 = vcmask 261120
    %20 = vst.msk [vmem:[#allocation2] sm:$0xff] %vm19, 0.0
    %21 = vst.msk [vmem:[#allocation2 + $0x8] sm:$0xff] %vm19, 0.0
    %22 = vst.msk [vmem:[#allocation2 + $0x10] sm:$0xff] %vm19, 0.0
    %23 = vst.msk [vmem:[#allocation2 + $0x18] sm:$0xff] %vm19, 0.0
  $region17: #{teinformer_forward.60} parent=0 // pred_fallthru
    _
  %v24 = vld [vmem:[#allocation2] sm:$0xff]
  %v25 = vld [vmem:[#allocation2 + $0x8] sm:$0xff]
  %v26 = vld [vmem:[#allocation2 + $0x10] sm:$0xff]
  %v27 = vld [vmem:[#allocation2 + $0x18] sm:$0xff]
  %v28 = vld [vmem:[%s0] sm:$0xf]
  %v29 = vld [vmem:[%s0 + $0x4] sm:$0xf]
  %v30 = vld [vmem:[%s0 + $0x8] sm:$0xf]
  %v31 = vld [vmem:[%s0 + $0xc] sm:$0xf]
  %v32 = vld [vmem:[%s1] sm:$0xf]
  %v33 = vld [vmem:[%s1 + $0x4] sm:$0xf]
  %v34 = vld [vmem:[%s1 + $0x8] sm:$0xf]
  %v35 = vld [vmem:[%s1 + $0xc] sm:$0xf]
  %v40 = vunpack.c.l.b16 %v28
  %v41 = vunpack.c.l.b16 %v29
  %v42 = vunpack.c.l.b16 %v30
  %v43 = vunpack.c.l.b16 %v31
  %v44 = vpack.c.b16 %v41, %v40
  %v45 = vpack.c.b16 %v43, %v42
  %v50 = vunpack.c.l.b16 %v32
  %v51 = vunpack.c.l.b16 %v33
  %v52 = vunpack.c.l.b16 %v34
  %v53 = vunpack.c.l.b16 %v35
  %v54 = vpack.c.b16 %v51, %v50
  %v55 = vpack.c.b16 %v53, %v52
  %vm58 = vcmask 261120
  %v60 = vsel %vm58, %v44, 0
  %v63 = vsel %vm58, %v45, 0
  %65 = vmatprep.subr.bf16.mxu0 0
  %66 = vmatpush1.bf16.msra.mxu0 %v54
  %67 = vmatprep.subr.bf16.mxu0 0
  %68 = vmatpush1.bf16.msra.mxu0 %v55
  %69 = vmatprep.subr.bf16.mxu0 0
  %70 = vmatpush1.bf16.msra.mxu0 0
  %71 = vmatprep.subr.bf16.mxu0 0
  %72 = vmatpush1.bf16.msra.mxu0 0
  %73 = vmatprep.subr.bf16.mxu0 0
  %74 = vmatpush1.bf16.msra.mxu0 0
  %75 = vmatprep.subr.bf16.mxu0 0
  %76 = vmatpush1.bf16.msra.mxu0 0
  %77 = vmatprep.subr.bf16.mxu0 0
  %78 = vmatpush1.bf16.msra.mxu0 0
  %79 = vmatprep.subr.bf16.mxu0 0
  %80 = vmatpush1.bf16.msra.mxu0 0
  %81 = vmatprep.subr.bf16.mxu0 0
  %82 = vmatpush1.bf16.msra.mxu0 0
  %83 = vmatprep.subr.bf16.mxu0 0
  %84 = vmatpush1.bf16.msra.mxu0 0
  %85 = vmatprep.subr.bf16.mxu0 0
  %86 = vmatpush1.bf16.msra.mxu0 0
  %87 = vmatprep.subr.bf16.mxu0 0
  %88 = vmatpush1.bf16.msra.mxu0 0
  %89 = vmatprep.subr.bf16.mxu0 0
  %90 = vmatpush1.bf16.msra.mxu0 0
  %91 = vmatprep.subr.bf16.mxu0 0
  %92 = vmatpush1.bf16.msra.mxu0 0
  %93 = vmatprep.subr.bf16.mxu0 0
  %94 = vmatpush1.bf16.msra.mxu0 0
  %95 = vmatprep.subr.bf16.mxu0 0
  %96 = vmatpush1.bf16.msra.mxu0 0
  %97 = vmatprep.mubr.bf16.mxu0 0
  %98 = vmatmul.mubr.bf16.gmra.mrb[0].mxu0 %v60
  %v99 = vpop.f32.mrb[0].mxu0
  %v100 = vadd.f32 0.0, %v99
  %v101 = vpop.f32.mrb[0].mxu0
  %v102 = vpop.f32.mrb[0].mxu0
  %v103 = vadd.f32 0.0, %v102
  %v104 = vpop.f32.mrb[0].mxu0
  %105 = vmatprep.mubr.bf16.mxu0 0
  %106 = vmatmul.mubr.bf16.gmra.mrb[0].mxu0 %v63
  %v107 = vpop.f32.mrb[0].mxu0
  %v108 = vadd.f32 0.0, %v107
  %v109 = vpop.f32.mrb[0].mxu0
  %v110 = vpop.f32.mrb[0].mxu0
  %v111 = vadd.f32 0.0, %v110
  %v112 = vpop.f32.mrb[0].mxu0
  %113 = vdwg.mxu0
  %v114 = vadd.f32 %v24, %v100
  %v115 = vadd.f32 %v25, %v103
  %v116 = vadd.f32 %v26, %v108
  %v117 = vadd.f32 %v27, %v111
  %118 = vst.msk [vmem:[#allocation2] sm:$0xff] %vm58, %v114
  %119 = vst.msk [vmem:[#allocation2 + $0x8] sm:$0xff] %vm58, %v115
  %120 = vst.msk [vmem:[#allocation2 + $0x10] sm:$0xff] %vm58, %v116
  %121 = vst.msk [vmem:[#allocation2 + $0x18] sm:$0xff] %vm58, %v117
  // Predicated region
  $region18: #{teinformer_forward.60} parent=0 // pred_check
    %p122 = pneg %p15
  $region19: #{teinformer_forward.60} parent=0 // pred_check_branch
    %124 = sbr.rel (%p122) target = $region21
  $region20: #{teinformer_forward.60} parent=0 // pred_region
    %v125 = vld [vmem:[#allocation2] sm:$0xff]
    %v126 = vld [vmem:[#allocation2 + $0x8] sm:$0xff]
    %v127 = vld [vmem:[#allocation2 + $0x10] sm:$0xff]
    %v128 = vld [vmem:[#allocation2 + $0x18] sm:$0xff]
    %v129 = vld [vmem:[%s2] sm:$0x1]
    %v131 = vlaneseq
    %v132 = vshrl.u32 %v131, 7
    %v133 = vsub.s32 0, %v132
    %v134 = vrot.slane %v129, %v133
    %v136 = vadd.f32 %v125, %v134
    %v137 = vadd.f32 %v126, %v134
    %v138 = vadd.f32 %v127, %v134
    %v139 = vadd.f32 %v128, %v134
    %v140 = vpack.c.bf16 %v137, %v136
    %v141 = vpack.c.bf16 %v139, %v138
    %v144 = vunpack.c.l.b16 %v140
    %v145 = vunpack.c.h.b16 %v140
    %v146 = vunpack.c.l.b16 %v141
    %v147 = vunpack.c.h.b16 %v141
    %v148 = vpack.c.b16 %v144, %v144
    %v149 = vpack.c.b16 %v145, %v145
    %v150 = vpack.c.b16 %v146, %v146
    %v151 = vpack.c.b16 %v147, %v147
    %vm156 = vcmask 257024
    %157 = vst.msk [vmem:[%s3] sm:$0xf] %vm156, %v148
    %158 = vst.msk [vmem:[%s3 + $0x4] sm:$0xf] %vm156, %v149
    %159 = vst.msk [vmem:[%s3 + $0x8] sm:$0xf] %vm156, %v150
    %160 = vst.msk [vmem:[%s3 + $0xc] sm:$0xf] %vm156, %v151
  $region21: #{teinformer_forward.60} parent=0 // pred_fallthru
    _
  // Predicated region
  $region22: #{teinformer_forward.60} parent=0 // pred_check
    _
  $region23: #{teinformer_forward.60} parent=0 // pred_check_branch
    %162 = sbr.rel (0) target = $region25
  $region24: #{teinformer_forward.60} parent=0 // pred_region
    _
  $region25: #{teinformer_forward.60} parent=0 // pred_fallthru
    _
  // Predicated region
  $region26: #{teinformer_forward.60} parent=0 // pred_check
    _
  $region27: #{teinformer_forward.60} parent=0 // pred_check_branch
    %164 = sbr.rel (0) target = $region29
  $region28: #{teinformer_forward.60} parent=0 // pred_region
    _
  $region29: #{teinformer_forward.60} parent=0 // pred_fallthru
    _

// kernel: teinformer_forward.62
$region0: #{teinformer_forward.62}
  #allocation0 [shape = 'u32[]', space=smem, size = 0x4, offset = 0x4, fixed_abs, tag = 'smem constant byte address 0x4 - core index']
  #allocation1 [shape = 'u32[144,128]{1,0:T(1,128)}', space=vmem, size = 0x12000, scoped, tag = 'internal scratch']
  %s0 = inlined_call_operand.vmem [shape: bf16[2,16,32], index: 0, kind: input, shape index: {}]
  %s1 = inlined_call_operand.vmem [shape: bf16[2,8,64], index: 1, kind: input, shape index: {}]
  %s2 = inlined_call_operand.vmem [shape: bf16[2,16,32], index: 2, kind: output, shape index: {}]
  %s3 = sld [smem:[#allocation0]]
  $region41: #{teinformer_forward.62} parent=0
    _
  %s5 = ssub.s32 1, %s3
  %s6 = scalar_select 0, %s5, %s3
  loop: start=0, step=1, limit=4
  $region2: #{teinformer_forward.62} parent=0 // loop_pre_header
    _
  $region3: #{teinformer_forward.62} parent=0 // loop_header
    %s8 = sphi 0, %s12
    %p9 = scmp.ge.s32.totalorder %s8, 4
    %s18 = sphi 0, %s20
    %s21 = sphi 0, %s18
    %s22 = sphi 0, %s21
    %s38 = sphi 0, %s22
    %s44 = sphi 0, %s46
    %s47 = sphi 0, %s44
    %s48 = sphi 0, %s47
    %s64 = sphi 0, %s48
    %s70 = sphi 0, %s72
    %s73 = sphi 0, %s70
    %s74 = sphi 0, %s73
    %s90 = sphi 0, %s74
  $region4: #{teinformer_forward.62} parent=0 // loop_header_branch
    %11 = sbr.rel (%p9) target = $region8
  $region5: #{teinformer_forward.62} parent=0 // loop_body
    %s13 = ssub.s32 %s8, 1
    %s14 = ssub.s32 %s8, 2
    %s15 = sadd.s32 %s8, 1
    %s16 = ssub.s32 %s8, %s15
    %p17 = scmp.eq.s32.totalorder %s16, 0
    %s19 = sadd.s32 %s18, 1
    %s20 = scalar_select %p17, %s18, %s19
    %p23 = pneg %p17
    %p24 = scmp.eq.s32.totalorder %s8, 1
    %p25 = por %p23, %p24
    %p26 = scmp.ne.s32.totalorder %s18, %s21
    %p27 = scmp.eq.s32.totalorder %s8, 0
    %p28 = por %p26, %p27
    %p29 = scmp.ne.s32.totalorder %s18, %s21
    %p30 = scmp.eq.s32.totalorder %s13, 1
    %p31 = por %p29, %p30
    %p32 = scmp.ne.s32.totalorder %s21, %s22
    %p33 = scmp.eq.s32.totalorder %s13, 0
    %p34 = por %p32, %p33
    %p35 = scmp.ne.s32.totalorder %s21, %s22
    %p36 = scmp.eq.s32.totalorder %s14, 1
    %p37 = por %p35, %p36
    %p39 = scmp.ne.s32.totalorder %s22, %s38
    %p40 = scmp.eq.s32.totalorder %s14, 0
    %p41 = por %p39, %p40
    %s42 = ssub.s32 %s8, %s15
    %p43 = scmp.eq.s32.totalorder %s42, 0
    %s45 = sadd.s32 %s44, 1
    %s46 = scalar_select %p43, %s44, %s45
    %p49 = pneg %p43
    %p50 = scmp.eq.s32.totalorder %s8, 1
    %p51 = por %p49, %p50
    %p52 = scmp.ne.s32.totalorder %s44, %s47
    %p53 = scmp.eq.s32.totalorder %s8, 0
    %p54 = por %p52, %p53
    %p55 = scmp.ne.s32.totalorder %s44, %s47
    %p56 = scmp.eq.s32.totalorder %s13, 1
    %p57 = por %p55, %p56
    %p58 = scmp.ne.s32.totalorder %s47, %s48
    %p59 = scmp.eq.s32.totalorder %s13, 0
    %p60 = por %p58, %p59
    %p61 = scmp.ne.s32.totalorder %s47, %s48
    %p62 = scmp.eq.s32.totalorder %s14, 1
    %p63 = por %p61, %p62
    %p65 = scmp.ne.s32.totalorder %s48, %s64
    %p66 = scmp.eq.s32.totalorder %s14, 0
    %p67 = por %p65, %p66
    %s68 = ssub.s32 %s8, %s15
    %p69 = scmp.eq.s32.totalorder %s68, 0
    %s71 = sadd.s32 %s70, 1
    %s72 = scalar_select %p69, %s70, %s71
    %p75 = pneg %p69
    %p76 = scmp.eq.s32.totalorder %s8, 1
    %p77 = por %p75, %p76
    %p78 = scmp.ne.s32.totalorder %s70, %s73
    %p79 = scmp.eq.s32.totalorder %s8, 0
    %p80 = por %p78, %p79
    %p81 = scmp.ne.s32.totalorder %s70, %s73
    %p82 = scmp.eq.s32.totalorder %s13, 1
    %p83 = por %p81, %p82
    %p84 = scmp.ne.s32.totalorder %s73, %s74
    %p85 = scmp.eq.s32.totalorder %s13, 0
    %p86 = por %p84, %p85
    %p87 = scmp.ne.s32.totalorder %s73, %s74
    %p88 = scmp.eq.s32.totalorder %s14, 1
    %p89 = por %p87, %p88
    %p91 = scmp.ne.s32.totalorder %s74, %s90
    %p92 = scmp.eq.s32.totalorder %s14, 0
    %p93 = por %p91, %p92
    %p94 = scmp.le.s32.totalorder 1, %s8
    %p95 = scmp.lt.s32.totalorder %s8, 3
    %p96 = pnand %p94, %p95
    %p97 = pneg %p96
    // Predicated region
    $region9: #{teinformer_forward.62} parent=5 // pred_check
      _
    $region10: #{teinformer_forward.62} parent=5 // pred_check_branch
      %99 = sbr.rel (%p96) target = $region12
    $region11: #{teinformer_forward.62} parent=5 // pred_region
      %s100 = ssub.s32 %s8, 1
    $region12: #{teinformer_forward.62} parent=5 // pred_fallthru
      _
    %p101 = scmp.lt.s32.totalorder %s8, 2
    // Predicated region
    $region13: #{teinformer_forward.62} parent=5 // pred_check
      %p102 = pneg %p101
    $region14: #{teinformer_forward.62} parent=5 // pred_check_branch
      %104 = sbr.rel (%p102) target = $region16
    $region15: #{teinformer_forward.62} parent=5 // pred_region
      // Predicated region
      $region17: #{teinformer_forward.62} parent=15 // pred_check
        %p105 = pneg %p28
      $region18: #{teinformer_forward.62} parent=15 // pred_check_branch
        %107 = sbr.rel (%p105) target = $region20
      $region19: #{teinformer_forward.62} parent=15 // pred_region
        %p108 = scmp.lt.s32.totalorder %s8, 1
        %s109 = scalar_select %p108, %s8, 1
        %s110 = smul.addr %s109, 2
        %s111 = smul.addr %s110, 4
        %s112 = scalar_lea.vmem %s0, %s111
      $region20: #{teinformer_forward.62} parent=15 // pred_fallthru
        _
      // Predicated region
      $region21: #{teinformer_forward.62} parent=15 // pred_check
        %p113 = pneg %p54
      $region22: #{teinformer_forward.62} parent=15 // pred_check_branch
        %115 = sbr.rel (%p113) target = $region24
      $region23: #{teinformer_forward.62} parent=15 // pred_region
        %p116 = scmp.lt.s32.totalorder %s8, 1
        %s117 = scalar_select %p116, %s8, 1
        %s118 = smul.addr %s117, 4
        %s119 = scalar_lea.vmem %s1, %s118
      $region24: #{teinformer_forward.62} parent=15 // pred_fallthru
        _
    $region16: #{teinformer_forward.62} parent=5 // pred_fallthru
      _
    %p120 = scmp.le.s32.totalorder 1, %s8
    %p121 = scmp.lt.s32.totalorder %s8, 3
    %p122 = pnand %p120, %p121
    %p123 = pneg %p122
    // Predicated region
    $region25: #{teinformer_forward.62} parent=5 // pred_check
      _
    $region26: #{teinformer_forward.62} parent=5 // pred_check_branch
      %125 = sbr.rel (%p122) target = $region28
    $region27: #{teinformer_forward.62} parent=5 // pred_region
      %s126 = ssub.s32 %s8, 1
      %p127 = scmp.lt.s32.totalorder %s13, 1
      %s128 = scalar_select %p127, %s13, 1
      %s129 = smul.addr %s128, 2
      %s130 = smul.addr %s129, 4
      %s131 = scalar_lea.vmem %s0, %s130
      %p132 = pneg %p34
      %p133 = pneg %p31
      %p134 = scmp.lt.s32.totalorder %s13, 1
      %s135 = scalar_select %p134, %s13, 1
      %s136 = smul.addr %s135, 4
      %s137 = scalar_lea.vmem %s1, %s136
      %p138 = pneg %p60
      %p139 = pneg %p57
      %p140 = pneg %p86
      %p141 = pneg %p83
      %p142 = scmp.lt.s32.totalorder %s13, 1
      %s143 = scalar_select %p142, %s13, 1
      %s144 = smul.addr %s143, 2
      %s145 = smul.addr %s144, 4
      %s146 = scalar_lea.vmem %s2, %s145
      %p147 = scmp.lt.s32.totalorder %s13, 1
      %s148 = scalar_select %p147, %s13, 1
      %s149 = smul.addr %s148, 2
      %s150 = smul.addr %s149, 4
      %s151 = scalar_lea.vmem %s0, %s150
      %p152 = scmp.lt.s32.totalorder %s13, 1
      %s153 = scalar_select %p152, %s13, 1
      %s154 = smul.addr %s153, 4
      %s155 = scalar_lea.vmem %s1, %s154
      %p156 = scmp.lt.s32.totalorder %s13, 1
      %s157 = scalar_select %p156, %s13, 1
      %s158 = smul.addr %s157, 2
      %s159 = smul.addr %s158, 4
      %s160 = scalar_lea.vmem %s2, %s159
      %v162 = vld [vmem:[%s151] sm:$0xf]
      %v163 = vld [vmem:[%s151 + $0x4] sm:$0xf]
      %v164 = vld [vmem:[%s155] sm:$0xf]
      %v167 = vunpack.c.l.b16 %v162
      %v168 = vunpack.c.l.b16 %v163
      %v169 = vpack.c.b16 %v168, %v167
      %vm170 = vcmask 64512
      %v172 = vsel %vm170, %v169, 0
      %v175 = vsel %vm170, %v164, 0
      %177 = vmatprep.subr.bf16.mxu0 0
      %178 = vmatpush1.bf16.xpose.msra.mxu0 %v175
      %179 = vmatprep.subr.bf16.mxu0 0
      %180 = vmatpush1.bf16.xpose.msra.mxu0 0
      %181 = vmatprep.subr.bf16.mxu0 0
      %182 = vmatpush1.bf16.xpose.msra.mxu0 0
      %183 = vmatprep.subr.bf16.mxu0 0
      %184 = vmatpush1.bf16.xpose.msra.mxu0 0
      %185 = vmatprep.subr.bf16.mxu0 0
      %186 = vmatpush1.bf16.xpose.msra.mxu0 0
      %187 = vmatprep.subr.bf16.mxu0 0
      %188 = vmatpush1.bf16.xpose.msra.mxu0 0
      %189 = vmatprep.subr.bf16.mxu0 0
      %190 = vmatpush1.bf16.xpose.msra.mxu0 0
      %191 = vmatprep.subr.bf16.mxu0 0
      %192 = vmatpush1.bf16.xpose.msra.mxu0 0
      %193 = vmatprep.subr.bf16.mxu0 0
      %194 = vmatpush1.bf16.xpose.msra.mxu0 0
      %195 = vmatprep.subr.bf16.mxu0 0
      %196 = vmatpush1.bf16.xpose.msra.mxu0 0
      %197 = vmatprep.subr.bf16.mxu0 0
      %198 = vmatpush1.bf16.xpose.msra.mxu0 0
      %199 = vmatprep.subr.bf16.mxu0 0
      %200 = vmatpush1.bf16.xpose.msra.mxu0 0
      %201 = vmatprep.subr.bf16.mxu0 0
      %202 = vmatpush1.bf16.xpose.msra.mxu0 0
      %203 = vmatprep.subr.bf16.mxu0 0
      %204 = vmatpush1.bf16.xpose.msra.mxu0 0
      %205 = vmatprep.subr.bf16.mxu0 0
      %206 = vmatpush1.bf16.xpose.msra.mxu0 0
      %207 = vmatprep.subr.bf16.mxu0 0
      %208 = vmatpush1.bf16.xpose.msra.mxu0 0
      %209 = vmatprep.mubr.bf16.mxu0 0
      %210 = vmatmul.mubr.bf16.gmra.mrb[0].mxu0 %v172
      %v211 = vpop.f32.mrb[0].mxu0
      %v212 = vadd.f32 0.0, %v211
      %v213 = vpop.f32.mrb[0].mxu0
      %v214 = vpop.f32.mrb[0].mxu0
      %v215 = vadd.f32 0.0, %v214
      %v216 = vpop.f32.mrb[0].mxu0
      %217 = vdwg.mxu0
      %v218 = vmul.f32 %v212, 0.35355338
      %v219 = vmul.f32 %v215, 0.35355338
      %v220 = vsel %vm170, %v218, -inf
      %221 = vmax.xlane.f32.xlu0 %v220
      %v222 = vpop.xlane.xlu0 %221
      %v223 = vsel %vm170, %v219, -inf
      %224 = vmax.xlane.f32.xlu0 %v223
      %v225 = vpop.xlane.xlu0 %224
      %v226 = vsub.f32 %v218, %v222
      %v227 = vsub.f32 %v219, %v225
      %v228 = vmul.f32 %v226, 1.442695
      %v229 = vpow.pop %v228
      %v230 = vmul.f32 %v227, 1.442695
      %v231 = vpow.pop %v230
      %v232 = vsel %vm170, %v229, 0.0
      %233 = vadd.xlane.f32.xlu0 %v232
      %v234 = vpop.xlane.xlu0 %233
      %v235 = vsel %vm170, %v231, 0.0
      %236 = vadd.xlane.f32.xlu0 %v235
      %v237 = vpop.xlane.xlu0 %236
      %v238 = vrcp.pop %v234
      %v239 = vrcp.pop %v237
      %v240 = vmul.f32 %v229, %v238
      %v241 = vmul.f32 %v231, %v239
      %v242 = vpack.c.bf16 %v241, %v240
      %v244 = vunpack.c.l.b16 %v164
      %v245 = vpack.c.b16 %v244, %v244
      %246 = vrot.lane.b32.xlu0 %v245, 96
      %v247 = vpop.permute.xlu0 %246
      %v249 = vsel %vm170, %v242, 0
      %vm251 = vcmask 1043456
      %v253 = vsel %vm251, %v247, 0
      %255 = vmatprep.subr.bf16.mxu0 0
      %256 = vmatpush1.bf16.msra.mxu0 %v253
      %257 = vmatprep.subr.bf16.mxu0 0
      %258 = vmatpush1.bf16.msra.mxu0 0
      %259 = vmatprep.subr.bf16.mxu0 0
      %260 = vmatpush1.bf16.msra.mxu0 0
      %261 = vmatprep.subr.bf16.mxu0 0
      %262 = vmatpush1.bf16.msra.mxu0 0
      %263 = vmatprep.subr.bf16.mxu0 0
      %264 = vmatpush1.bf16.msra.mxu0 0
      %265 = vmatprep.subr.bf16.mxu0 0
      %266 = vmatpush1.bf16.msra.mxu0 0
      %267 = vmatprep.subr.bf16.mxu0 0
      %268 = vmatpush1.bf16.msra.mxu0 0
      %269 = vmatprep.subr.bf16.mxu0 0
      %270 = vmatpush1.bf16.msra.mxu0 0
      %271 = vmatprep.subr.bf16.mxu0 0
      %272 = vmatpush1.bf16.msra.mxu0 0
      %273 = vmatprep.subr.bf16.mxu0 0
      %274 = vmatpush1.bf16.msra.mxu0 0
      %275 = vmatprep.subr.bf16.mxu0 0
      %276 = vmatpush1.bf16.msra.mxu0 0
      %277 = vmatprep.subr.bf16.mxu0 0
      %278 = vmatpush1.bf16.msra.mxu0 0
      %279 = vmatprep.subr.bf16.mxu0 0
      %280 = vmatpush1.bf16.msra.mxu0 0
      %281 = vmatprep.subr.bf16.mxu0 0
      %282 = vmatpush1.bf16.msra.mxu0 0
      %283 = vmatprep.subr.bf16.mxu0 0
      %284 = vmatpush1.bf16.msra.mxu0 0
      %285 = vmatprep.subr.bf16.mxu0 0
      %286 = vmatpush1.bf16.msra.mxu0 0
      %287 = vmatprep.mubr.bf16.mxu0 0
      %288 = vmatmul.mubr.bf16.gmra.mrb[0].mxu0 %v249
      %v289 = vpop.f32.mrb[0].mxu0
      %v290 = vadd.f32 0.0, %v289
      %v291 = vpop.f32.mrb[0].mxu0
      %v292 = vpop.f32.mrb[0].mxu0
      %v293 = vadd.f32 0.0, %v292
      %v294 = vpop.f32.mrb[0].mxu0
      %295 = vdwg.mxu0
      %v296 = vpack.c.bf16 %v293, %v290
      %v298 = vunpack.c.l.b16 %v296
      %v299 = vunpack.c.h.b16 %v296
      %v300 = vpack.c.b16 %v298, %v298
      %v301 = vpack.c.b16 %v299, %v299
      %vm304 = vcmask 60416
      %305 = vst.msk [vmem:[%s160] sm:$0xf] %vm304, %v300
      %306 = vst.msk [vmem:[%s160 + $0x4] sm:$0xf] %vm304, %v301
      %v307 = vld [vmem:[%s151] sm:$0xf]
      %v308 = vld [vmem:[%s151 + $0x4] sm:$0xf]
      %v309 = vld [vmem:[%s155] sm:$0xf]
      %v312 = vunpack.c.l.b16 %v307
      %v313 = vunpack.c.l.b16 %v308
      %v314 = vpack.c.b16 %v313, %v312
      %315 = vrot.lane.b32.xlu0 %v314, 120
      %v316 = vpop.permute.xlu0 %315
      %v318 = vunpack.c.l.b16 %v309
      %v319 = vpack.c.b16 %v318, %v318
      %320 = vrot.lane.b32.xlu0 %v319, 120
      %v321 = vpop.permute.xlu0 %320
      %v323 = vsel %vm170, %v316, 0
      %v326 = vsel %vm170, %v321, 0
      %328 = vmatprep.subr.bf16.mxu0 0
      %329 = vmatpush1.bf16.xpose.msra.mxu0 %v326
      %330 = vmatprep.subr.bf16.mxu0 0
      %331 = vmatpush1.bf16.xpose.msra.mxu0 0
      %332 = vmatprep.subr.bf16.mxu0 0
      %333 = vmatpush1.bf16.xpose.msra.mxu0 0
      %334 = vmatprep.subr.bf16.mxu0 0
      %335 = vmatpush1.bf16.xpose.msra.mxu0 0
      %336 = vmatprep.subr.bf16.mxu0 0
      %337 = vmatpush1.bf16.xpose.msra.mxu0 0
      %338 = vmatprep.subr.bf16.mxu0 0
      %339 = vmatpush1.bf16.xpose.msra.mxu0 0
      %340 = vmatprep.subr.bf16.mxu0 0
      %341 = vmatpush1.bf16.xpose.msra.mxu0 0
      %342 = vmatprep.subr.bf16.mxu0 0
      %343 = vmatpush1.bf16.xpose.msra.mxu0 0
      %344 = vmatprep.subr.bf16.mxu0 0
      %345 = vmatpush1.bf16.xpose.msra.mxu0 0
      %346 = vmatprep.subr.bf16.mxu0 0
      %347 = vmatpush1.bf16.xpose.msra.mxu0 0
      %348 = vmatprep.subr.bf16.mxu0 0
      %349 = vmatpush1.bf16.xpose.msra.mxu0 0
      %350 = vmatprep.subr.bf16.mxu0 0
      %351 = vmatpush1.bf16.xpose.msra.mxu0 0
      %352 = vmatprep.subr.bf16.mxu0 0
      %353 = vmatpush1.bf16.xpose.msra.mxu0 0
      %354 = vmatprep.subr.bf16.mxu0 0
      %355 = vmatpush1.bf16.xpose.msra.mxu0 0
      %356 = vmatprep.subr.bf16.mxu0 0
      %357 = vmatpush1.bf16.xpose.msra.mxu0 0
      %358 = vmatprep.subr.bf16.mxu0 0
      %359 = vmatpush1.bf16.xpose.msra.mxu0 0
      %360 = vmatprep.mubr.bf16.mxu0 0
      %361 = vmatmul.mubr.bf16.gmra.mrb[0].mxu0 %v323
      %v362 = vpop.f32.mrb[0].mxu0
      %v363 = vadd.f32 0.0, %v362
      %v364 = vpop.f32.mrb[0].mxu0
      %v365 = vpop.f32.mrb[0].mxu0
      %v366 = vadd.f32 0.0, %v365
      %v367 = vpop.f32.mrb[0].mxu0
      %368 = vdwg.mxu0
      %v369 = vmul.f32 %v363, 0.35355338
      %v370 = vmul.f32 %v366, 0.35355338
      %v371 = vsel %vm170, %v369, -inf
      %372 = vmax.xlane.f32.xlu0 %v371
      %v373 = vpop.xlane.xlu0 %372
      %v374 = vsel %vm170, %v370, -inf
      %375 = vmax.xlane.f32.xlu0 %v374
      %v376 = vpop.xlane.xlu0 %375
      %v377 = vsub.f32 %v369, %v373
      %v378 = vsub.f32 %v370, %v376
      %v379 = vmul.f32 %v377, 1.442695
      %v380 = vpow.pop %v379
      %v381 = vmul.f32 %v378, 1.442695
      %v382 = vpow.pop %v381
      %v383 = vsel %vm170, %v380, 0.0
      %384 = vadd.xlane.f32.xlu0 %v383
      %v385 = vpop.xlane.xlu0 %384
      %v386 = vsel %vm170, %v382, 0.0
      %387 = vadd.xlane.f32.xlu0 %v386
      %v388 = vpop.xlane.xlu0 %387
      %v389 = vrcp.pop %v385
      %v390 = vrcp.pop %v388
      %v391 = vmul.f32 %v380, %v389
      %v392 = vmul.f32 %v382, %v390
      %v393 = vpack.c.bf16 %v392, %v391
      %394 = vrot.lane.b32.xlu0 %v319, 88
      %v395 = vpop.permute.xlu0 %394
      %v397 = vsel %vm170, %v393, 0
      %v400 = vsel %vm251, %v395, 0
      %402 = vmatprep.subr.bf16.mxu0 0
      %403 = vmatpush1.bf16.msra.mxu0 %v400
      %404 = vmatprep.subr.bf16.mxu0 0
      %405 = vmatpush1.bf16.msra.mxu0 0
      %406 = vmatprep.subr.bf16.mxu0 0
      %407 = vmatpush1.bf16.msra.mxu0 0
      %408 = vmatprep.subr.bf16.mxu0 0
      %409 = vmatpush1.bf16.msra.mxu0 0
      %410 = vmatprep.subr.bf16.mxu0 0
      %411 = vmatpush1.bf16.msra.mxu0 0
      %412 = vmatprep.subr.bf16.mxu0 0
      %413 = vmatpush1.bf16.msra.mxu0 0
      %414 = vmatprep.subr.bf16.mxu0 0
      %415 = vmatpush1.bf16.msra.mxu0 0
      %416 = vmatprep.subr.bf16.mxu0 0
      %417 = vmatpush1.bf16.msra.mxu0 0
      %418 = vmatprep.subr.bf16.mxu0 0
      %419 = vmatpush1.bf16.msra.mxu0 0
      %420 = vmatprep.subr.bf16.mxu0 0
      %421 = vmatpush1.bf16.msra.mxu0 0
      %422 = vmatprep.subr.bf16.mxu0 0
      %423 = vmatpush1.bf16.msra.mxu0 0
      %424 = vmatprep.subr.bf16.mxu0 0
      %425 = vmatpush1.bf16.msra.mxu0 0
      %426 = vmatprep.subr.bf16.mxu0 0
      %427 = vmatpush1.bf16.msra.mxu0 0
      %428 = vmatprep.subr.bf16.mxu0 0
      %429 = vmatpush1.bf16.msra.mxu0 0
      %430 = vmatprep.subr.bf16.mxu0 0
      %431 = vmatpush1.bf16.msra.mxu0 0
      %432 = vmatprep.subr.bf16.mxu0 0
      %433 = vmatpush1.bf16.msra.mxu0 0
      %434 = vmatprep.mubr.bf16.mxu0 0
      %435 = vmatmul.mubr.bf16.gmra.mrb[0].mxu0 %v397
      %v436 = vpop.f32.mrb[0].mxu0
      %v437 = vadd.f32 0.0, %v436
      %v438 = vpop.f32.mrb[0].mxu0
      %v439 = vpop.f32.mrb[0].mxu0
      %v440 = vadd.f32 0.0, %v439
      %v441 = vpop.f32.mrb[0].mxu0
      %442 = vdwg.mxu0
      %v443 = vpack.c.bf16 %v440, %v437
      %v445 = vunpack.c.l.b16 %v443
      %v446 = vunpack.c.h.b16 %v443
      %v447 = vpack.c.b16 %v445, %v445
      %v448 = vpack.c.b16 %v446, %v446
      %449 = vrot.lane.b32.xlu0 %v447, 8
      %v450 = vpop.permute.xlu0 %449
      %451 = vrot.lane.b32.xlu0 %v448, 8
      %v452 = vpop.permute.xlu0 %451
      %vm455 = vcmask 126016
      %456 = vst.msk [vmem:[%s160] sm:$0xf] %vm455, %v450
      %457 = vst.msk [vmem:[%s160 + $0x4] sm:$0xf] %vm455, %v452
      %v458 = vld [vmem:[%s151] sm:$0xf]
      %v459 = vld [vmem:[%s151 + $0x4] sm:$0xf]
      %v460 = vld [vmem:[%s155] sm:$0xf]
      %v463 = vunpack.c.l.b16 %v458
      %v464 = vunpack.c.l.b16 %v459
      %v465 = vpack.c.b16 %v464, %v463
      %466 = vrot.lane.b32.xlu0 %v465, 112
      %v467 = vpop.permute.xlu0 %466
      %v469 = vunpack.c.l.b16 %v460
      %v470 = vpack.c.b16 %v469, %v469
      %471 = vrot.lane.b32.xlu0 %v470, 112
      %v472 = vpop.permute.xlu0 %471
      %v474 = vsel %vm170, %v467, 0
      %v477 = vsel %vm170, %v472, 0
      %479 = vmatprep.subr.bf16.mxu0 0
      %480 = vmatpush1.bf16.xpose.msra.mxu0 %v477
      %481 = vmatprep.subr.bf16.mxu0 0
      %482 = vmatpush1.bf16.xpose.msra.mxu0 0
      %483 = vmatprep.subr.bf16.mxu0 0
      %484 = vmatpush1.bf16.xpose.msra.mxu0 0
      %485 = vmatprep.subr.bf16.mxu0 0
      %486 = vmatpush1.bf16.xpose.msra.mxu0 0
      %487 = vmatprep.subr.bf16.mxu0 0
      %488 = vmatpush1.bf16.xpose.msra.mxu0 0
      %489 = vmatprep.subr.bf16.mxu0 0
      %490 = vmatpush1.bf16.xpose.msra.mxu0 0
      %491 = vmatprep.subr.bf16.mxu0 0
      %492 = vmatpush1.bf16.xpose.msra.mxu0 0
      %493 = vmatprep.subr.bf16.mxu0 0
      %494 = vmatpush1.bf16.xpose.msra.mxu0 0
      %495 = vmatprep.subr.bf16.mxu0 0
      %496 = vmatpush1.bf16.xpose.msra.mxu0 0
      %497 = vmatprep.subr.bf16.mxu0 0
      %498 = vmatpush1.bf16.xpose.msra.mxu0 0
      %499 = vmatprep.subr.bf16.mxu0 0
      %500 = vmatpush1.bf16.xpose.msra.mxu0 0
      %501 = vmatprep.subr.bf16.mxu0 0
      %502 = vmatpush1.bf16.xpose.msra.mxu0 0
      %503 = vmatprep.subr.bf16.mxu0 0
      %504 = vmatpush1.bf16.xpose.msra.mxu0 0
      %505 = vmatprep.subr.bf16.mxu0 0
      %506 = vmatpush1.bf16.xpose.msra.mxu0 0
      %507 = vmatprep.subr.bf16.mxu0 0
      %508 = vmatpush1.bf16.xpose.msra.mxu0 0
      %509 = vmatprep.subr.bf16.mxu0 0
      %510 = vmatpush1.bf16.xpose.msra.mxu0 0
      %511 = vmatprep.mubr.bf16.mxu0 0
      %512 = vmatmul.mubr.bf16.gmra.mrb[0].mxu0 %v474
      %v513 = vpop.f32.mrb[0].mxu0
      %v514 = vadd.f32 0.0, %v513
      %v515 = vpop.f32.mrb[0].mxu0
      %v516 = vpop.f32.mrb[0].mxu0
      %v517 = vadd.f32 0.0, %v516
      %v518 = vpop.f32.mrb[0].mxu0
      %519 = vdwg.mxu0
      %v520 = vmul.f32 %v514, 0.35355338
      %v521 = vmul.f32 %v517, 0.35355338
      %v522 = vsel %vm170, %v520, -inf
      %523 = vmax.xlane.f32.xlu0 %v522
      %v524 = vpop.xlane.xlu0 %523
      %v525 = vsel %vm170, %v521, -inf
      %526 = vmax.xlane.f32.xlu0 %v525
      %v527 = vpop.xlane.xlu0 %526
      %v528 = vsub.f32 %v520, %v524
      %v529 = vsub.f32 %v521, %v527
      %v530 = vmul.f32 %v528, 1.442695
      %v531 = vpow.pop %v530
      %v532 = vmul.f32 %v529, 1.442695
      %v533 = vpow.pop %v532
      %v534 = vsel %vm170, %v531, 0.0
      %535 = vadd.xlane.f32.xlu0 %v534
      %v536 = vpop.xlane.xlu0 %535
      %v537 = vsel %vm170, %v533, 0.0
      %538 = vadd.xlane.f32.xlu0 %v537
      %v539 = vpop.xlane.xlu0 %538
      %v540 = vrcp.pop %v536
      %v541 = vrcp.pop %v539
      %v542 = vmul.f32 %v531, %v540
      %v543 = vmul.f32 %v533, %v541
      %v544 = vpack.c.bf16 %v543, %v542
      %545 = vrot.lane.b32.xlu0 %v470, 80
      %v546 = vpop.permute.xlu0 %545
      %v548 = vsel %vm170, %v544, 0
      %v551 = vsel %vm251, %v546, 0
      %553 = vmatprep.subr.bf16.mxu0 0
      %554 = vmatpush1.bf16.msra.mxu0 %v551
      %555 = vmatprep.subr.bf16.mxu0 0
      %556 = vmatpush1.bf16.msra.mxu0 0
      %557 = vmatprep.subr.bf16.mxu0 0
      %558 = vmatpush1.bf16.msra.mxu0 0
      %559 = vmatprep.subr.bf16.mxu0 0
      %560 = vmatpush1.bf16.msra.mxu0 0
      %561 = vmatprep.subr.bf16.mxu0 0
      %562 = vmatpush1.bf16.msra.mxu0 0
      %563 = vmatprep.subr.bf16.mxu0 0
      %564 = vmatpush1.bf16.msra.mxu0 0
      %565 = vmatprep.subr.bf16.mxu0 0
      %566 = vmatpush1.bf16.msra.mxu0 0
      %567 = vmatprep.subr.bf16.mxu0 0
      %568 = vmatpush1.bf16.msra.mxu0 0
      %569 = vmatprep.subr.bf16.mxu0 0
      %570 = vmatpush1.bf16.msra.mxu0 0
      %571 = vmatprep.subr.bf16.mxu0 0
      %572 = vmatpush1.bf16.msra.mxu0 0
      %573 = vmatprep.subr.bf16.mxu0 0
      %574 = vmatpush1.bf16.msra.mxu0 0
      %575 = vmatprep.subr.bf16.mxu0 0
      %576 = vmatpush1.bf16.msra.mxu0 0
      %577 = vmatprep.subr.bf16.mxu0 0
      %578 = vmatpush1.bf16.msra.mxu0 0
      %579 = vmatprep.subr.bf16.mxu0 0
      %580 = vmatpush1.bf16.msra.mxu0 0
      %581 = vmatprep.subr.bf16.mxu0 0
      %582 = vmatpush1.bf16.msra.mxu0 0
      %583 = vmatprep.subr.bf16.mxu0 0
      %584 = vmatpush1.bf16.msra.mxu0 0
      %585 = vmatprep.mubr.bf16.mxu0 0
      %586 = vmatmul.mubr.bf16.gmra.mrb[0].mxu0 %v548
      %v587 = vpop.f32.mrb[0].mxu0
      %v588 = vadd.f32 0.0, %v587
      %v589 = vpop.f32.mrb[0].mxu0
      %v590 = vpop.f32.mrb[0].mxu0
      %v591 = vadd.f32 0.0, %v590
      %v592 = vpop.f32.mrb[0].mxu0
      %593 = vdwg.mxu0
      %v594 = vpack.c.bf16 %v591, %v588
      %v596 = vunpack.c.l.b16 %v594
      %v597 = vunpack.c.h.b16 %v594
      %v598 = vpack.c.b16 %v596, %v596
      %v599 = vpack.c.b16 %v597, %v597
      %600 = vrot.lane.b32.xlu0 %v598, 16
      %v601 = vpop.permute.xlu0 %600
      %602 = vrot.lane.b32.xlu0 %v599, 16
      %v603 = vpop.permute.xlu0 %602
      %vm606 = vcmask 191616
      %607 = vst.msk [vmem:[%s160] sm:$0xf] %vm606, %v601
      %608 = vst.msk [vmem:[%s160 + $0x4] sm:$0xf] %vm606, %v603
      %v609 = vld [vmem:[%s151] sm:$0xf]
      %v610 = vld [vmem:[%s151 + $0x4] sm:$0xf]
      %v611 = vld [vmem:[%s155] sm:$0xf]
      %v614 = vunpack.c.l.b16 %v609
      %v615 = vunpack.c.l.b16 %v610
      %v616 = vpack.c.b16 %v615, %v614
      %617 = vrot.lane.b32.xlu0 %v616, 104
      %v618 = vpop.permute.xlu0 %617
      %v620 = vunpack.c.l.b16 %v611
      %v621 = vpack.c.b16 %v620, %v620
      %622 = vrot.lane.b32.xlu0 %v621, 104
      %v623 = vpop.permute.xlu0 %622
      %v625 = vsel %vm170, %v618, 0
      %v628 = vsel %vm170, %v623, 0
      %630 = vmatprep.subr.bf16.mxu0 0
      %631 = vmatpush1.bf16.xpose.msra.mxu0 %v628
      %632 = vmatprep.subr.bf16.mxu0 0
      %633 = vmatpush1.bf16.xpose.msra.mxu0 0
      %634 = vmatprep.subr.bf16.mxu0 0
      %635 = vmatpush1.bf16.xpose.msra.mxu0 0
      %636 = vmatprep.subr.bf16.mxu0 0
      %637 = vmatpush1.bf16.xpose.msra.mxu0 0
      %638 = vmatprep.subr.bf16.mxu0 0
      %639 = vmatpush1.bf16.xpose.msra.mxu0 0
      %640 = vmatprep.subr.bf16.mxu0 0
      %641 = vmatpush1.bf16.xpose.msra.mxu0 0
      %642 = vmatprep.subr.bf16.mxu0 0
      %643 = vmatpush1.bf16.xpose.msra.mxu0 0
      %644 = vmatprep.subr.bf16.mxu0 0
      %645 = vmatpush1.bf16.xpose.msra.mxu0 0
      %646 = vmatprep.subr.bf16.mxu0 0
      %647 = vmatpush1.bf16.xpose.msra.mxu0 0
      %648 = vmatprep.subr.bf16.mxu0 0
      %649 = vmatpush1.bf16.xpose.msra.mxu0 0
      %650 = vmatprep.subr.bf16.mxu0 0
      %651 = vmatpush1.bf16.xpose.msra.mxu0 0
      %652 = vmatprep.subr.bf16.mxu0 0
      %653 = vmatpush1.bf16.xpose.msra.mxu0 0
      %654 = vmatprep.subr.bf16.mxu0 0
      %655 = vmatpush1.bf16.xpose.msra.mxu0 0
      %656 = vmatprep.subr.bf16.mxu0 0
      %657 = vmatpush1.bf16.xpose.msra.mxu0 0
      %658 = vmatprep.subr.bf16.mxu0 0
      %659 = vmatpush1.bf16.xpose.msra.mxu0 0
      %660 = vmatprep.subr.bf16.mxu0 0
      %661 = vmatpush1.bf16.xpose.msra.mxu0 0
      %662 = vmatprep.mubr.bf16.mxu0 0
      %663 = vmatmul.mubr.bf16.gmra.mrb[0].mxu0 %v625
      %v664 = vpop.f32.mrb[0].mxu0
      %v665 = vadd.f32 0.0, %v664
      %v666 = vpop.f32.mrb[0].mxu0
      %v667 = vpop.f32.mrb[0].mxu0
      %v668 = vadd.f32 0.0, %v667
      %v669 = vpop.f32.mrb[0].mxu0
      %670 = vdwg.mxu0
      %v671 = vmul.f32 %v665, 0.35355338
      %v672 = vmul.f32 %v668, 0.35355338
      %v673 = vsel %vm170, %v671, -inf
      %674 = vmax.xlane.f32.xlu0 %v673
      %v675 = vpop.xlane.xlu0 %674
      %v676 = vsel %vm170, %v672, -inf
      %677 = vmax.xlane.f32.xlu0 %v676
      %v678 = vpop.xlane.xlu0 %677
      %v679 = vsub.f32 %v671, %v675
      %v680 = vsub.f32 %v672, %v678
      %v681 = vmul.f32 %v679, 1.442695
      %v682 = vpow.pop %v681
      %v683 = vmul.f32 %v680, 1.442695
      %v684 = vpow.pop %v683
      %v685 = vsel %vm170, %v682, 0.0
      %686 = vadd.xlane.f32.xlu0 %v685
      %v687 = vpop.xlane.xlu0 %686
      %v688 = vsel %vm170, %v684, 0.0
      %689 = vadd.xlane.f32.xlu0 %v688
      %v690 = vpop.xlane.xlu0 %689
      %v691 = vrcp.pop %v687
      %v692 = vrcp.pop %v690
      %v693 = vmul.f32 %v682, %v691
      %v694 = vmul.f32 %v684, %v692
      %v695 = vpack.c.bf16 %v694, %v693
      %696 = vrot.lane.b32.xlu0 %v621, 72
      %v697 = vpop.permute.xlu0 %696
      %v699 = vsel %vm170, %v695, 0
      %v702 = vsel %vm251, %v697, 0
      %704 = vmatprep.subr.bf16.mxu0 0
      %705 = vmatpush1.bf16.msra.mxu0 %v702
      %706 = vmatprep.subr.bf16.mxu0 0
      %707 = vmatpush1.bf16.msra.mxu0 0
      %708 = vmatprep.subr.bf16.mxu0 0
      %709 = vmatpush1.bf16.msra.mxu0 0
      %710 = vmatprep.subr.bf16.mxu0 0
      %711 = vmatpush1.bf16.msra.mxu0 0
      %712 = vmatprep.subr.bf16.mxu0 0
      %713 = vmatpush1.bf16.msra.mxu0 0
      %714 = vmatprep.subr.bf16.mxu0 0
      %715 = vmatpush1.bf16.msra.mxu0 0
      %716 = vmatprep.subr.bf16.mxu0 0
      %717 = vmatpush1.bf16.msra.mxu0 0
      %718 = vmatprep.subr.bf16.mxu0 0
      %719 = vmatpush1.bf16.msra.mxu0 0
      %720 = vmatprep.subr.bf16.mxu0 0
      %721 = vmatpush1.bf16.msra.mxu0 0
      %722 = vmatprep.subr.bf16.mxu0 0
      %723 = vmatpush1.bf16.msra.mxu0 0
      %724 = vmatprep.subr.bf16.mxu0 0
      %725 = vmatpush1.bf16.msra.mxu0 0
      %726 = vmatprep.subr.bf16.mxu0 0
      %727 = vmatpush1.bf16.msra.mxu0 0
      %728 = vmatprep.subr.bf16.mxu0 0
      %729 = vmatpush1.bf16.msra.mxu0 0
      %730 = vmatprep.subr.bf16.mxu0 0
      %731 = vmatpush1.bf16.msra.mxu0 0
      %732 = vmatprep.subr.bf16.mxu0 0
      %733 = vmatpush1.bf16.msra.mxu0 0
      %734 = vmatprep.subr.bf16.mxu0 0
      %735 = vmatpush1.bf16.msra.mxu0 0
      %736 = vmatprep.mubr.bf16.mxu0 0
      %737 = vmatmul.mubr.bf16.gmra.mrb[0].mxu0 %v699
      %v738 = vpop.f32.mrb[0].mxu0
      %v739 = vadd.f32 0.0, %v738
      %v740 = vpop.f32.mrb[0].mxu0
      %v741 = vpop.f32.mrb[0].mxu0
      %v742 = vadd.f32 0.0, %v741
      %v743 = vpop.f32.mrb[0].mxu0
      %744 = vdwg.mxu0
      %v745 = vpack.c.bf16 %v742, %v739
      %v747 = vunpack.c.l.b16 %v745
      %v748 = vunpack.c.h.b16 %v745
      %v749 = vpack.c.b16 %v747, %v747
      %v750 = vpack.c.b16 %v748, %v748
      %751 = vrot.lane.b32.xlu0 %v749, 24
      %v752 = vpop.permute.xlu0 %751
      %753 = vrot.lane.b32.xlu0 %v750, 24
      %v754 = vpop.permute.xlu0 %753
      %vm757 = vcmask 257216
      %758 = vst.msk [vmem:[%s160] sm:$0xf] %vm757, %v752
      %759 = vst.msk [vmem:[%s160 + $0x4] sm:$0xf] %vm757, %v754
      %p760 = scmp.lt.s32.totalorder %s13, 1
      %s761 = scalar_select %p760, %s13, 1
      %s762 = smul.addr %s761, 2
      %s763 = smul.addr %s762, 4
      %s764 = scalar_lea.vmem %s2, %s763
      // Predicated region
      $region29: #{teinformer_forward.62} parent=27 // pred_check
        %p765 = pneg %p83
      $region30: #{teinformer_forward.62} parent=27 // pred_check_branch
        %767 = sbr.rel (%p765) target = $region32
      $region31: #{teinformer_forward.62} parent=27 // pred_region
        _
      $region32: #{teinformer_forward.62} parent=27 // pred_fallthru
        _
    $region28: #{teinformer_forward.62} parent=5 // pred_fallthru
      _
    %p768 = scmp.le.s32.totalorder 2, %s8
    // Predicated region
    $region33: #{teinformer_forward.62} parent=5 // pred_check
      %p769 = pneg %p768
    $region34: #{teinformer_forward.62} parent=5 // pred_check_branch
      %771 = sbr.rel (%p769) target = $region36
    $region35: #{teinformer_forward.62} parent=5 // pred_region
      %s772 = ssub.s32 %s8, 2
      // Predicated region
      $region37: #{teinformer_forward.62} parent=35 // pred_check
        %p773 = pneg %p89
      $region38: #{teinformer_forward.62} parent=35 // pred_check_branch
        %775 = sbr.rel (%p773) target = $region40
      $region39: #{teinformer_forward.62} parent=35 // pred_region
        %p776 = scmp.lt.s32.totalorder %s14, 1
        %s777 = scalar_select %p776, %s14, 1
        %s778 = smul.addr %s777, 2
        %s779 = smul.addr %s778, 4
        %s780 = scalar_lea.vmem %s2, %s779
      $region40: #{teinformer_forward.62} parent=35 // pred_fallthru
        _
    $region36: #{teinformer_forward.62} parent=5 // pred_fallthru
      _
  $region6: #{teinformer_forward.62} parent=0 // loop_footer
    %s12 = sadd.s32 1, %s8
  $region7: #{teinformer_forward.62} parent=0 // loop_footer_branch
    %7 = sbr.rel target = $region3
  $region8: #{teinformer_forward.62} parent=0 // loop_exit
    _

// kernel: teinformer_forward.69
$region0: #{teinformer_forward.69}
  #allocation0 [shape = 'u32[]', space=smem, size = 0x4, offset = 0x4, fixed_abs, tag = 'smem constant byte address 0x4 - core index']
  #allocation1 [shape = 'u32[144,128]{1,0:T(1,128)}', space=vmem, size = 0x12000, scoped, tag = 'internal scratch']
  #allocation2 [shape = 'f32[32,4]{1,0:T(8,128)}', space=vmem, size = 0x4000, scoped, tag = 'scratch operand']
  %s0 = inlined_call_operand.vmem [shape: bf16[32,32], index: 0, kind: input, shape index: {}]
  %s1 = inlined_call_operand.vmem [shape: bf16[32,4], index: 1, kind: input, shape index: {}]
  %s2 = inlined_call_operand.vmem [shape: f32[1,4], index: 2, kind: input, shape index: {}]
  %s3 = inlined_call_operand.vmem [shape: f32[32,4], index: 3, kind: output, shape index: {}]
  %s4 = sld [smem:[#allocation0]]
  $region30: #{teinformer_forward.69} parent=0
    _
  %s6 = ssub.s32 1, %s4
  %s7 = scalar_select 0, %s6, %s4
  // Predicated region
  $region2: #{teinformer_forward.69} parent=0 // pred_check
    _
  $region3: #{teinformer_forward.69} parent=0 // pred_check_branch
    %9 = sbr.rel (0) target = $region5
  $region4: #{teinformer_forward.69} parent=0 // pred_region
    _
  $region5: #{teinformer_forward.69} parent=0 // pred_fallthru
    _
  // Predicated region
  $region6: #{teinformer_forward.69} parent=0 // pred_check
    _
  $region7: #{teinformer_forward.69} parent=0 // pred_check_branch
    %11 = sbr.rel (0) target = $region9
  $region8: #{teinformer_forward.69} parent=0 // pred_region
    _
  $region9: #{teinformer_forward.69} parent=0 // pred_fallthru
    _
  // Predicated region
  $region10: #{teinformer_forward.69} parent=0 // pred_check
    _
  $region11: #{teinformer_forward.69} parent=0 // pred_check_branch
    %13 = sbr.rel (0) target = $region13
  $region12: #{teinformer_forward.69} parent=0 // pred_region
    _
  $region13: #{teinformer_forward.69} parent=0 // pred_fallthru
    _
  %p15 = scmp.eq.s32.totalorder 0, 0
  // Predicated region
  $region14: #{teinformer_forward.69} parent=0 // pred_check
    %p16 = pneg %p15
  $region15: #{teinformer_forward.69} parent=0 // pred_check_branch
    %18 = sbr.rel (%p16) target = $region17
  $region16: #{teinformer_forward.69} parent=0 // pred_region
    %vm19 = vcmask 31744
    %20 = vst.msk [vmem:[#allocation2] sm:$0xff] %vm19, 0.0
    %21 = vst.msk [vmem:[#allocation2 + $0x8] sm:$0xff] %vm19, 0.0
    %22 = vst.msk [vmem:[#allocation2 + $0x10] sm:$0xff] %vm19, 0.0
    %23 = vst.msk [vmem:[#allocation2 + $0x18] sm:$0xff] %vm19, 0.0
  $region17: #{teinformer_forward.69} parent=0 // pred_fallthru
    _
  %v24 = vld [vmem:[#allocation2] sm:$0xff]
  %v25 = vld [vmem:[#allocation2 + $0x8] sm:$0xff]
  %v26 = vld [vmem:[#allocation2 + $0x10] sm:$0xff]
  %v27 = vld [vmem:[#allocation2 + $0x18] sm:$0xff]
  %v28 = vld [vmem:[%s0] sm:$0xf]
  %v29 = vld [vmem:[%s0 + $0x4] sm:$0xf]
  %v30 = vld [vmem:[%s0 + $0x8] sm:$0xf]
  %v31 = vld [vmem:[%s0 + $0xc] sm:$0xf]
  %v32 = vld [vmem:[%s1] sm:$0xf]
  %v33 = vld [vmem:[%s1 + $0x4] sm:$0xf]
  %v34 = vld [vmem:[%s1 + $0x8] sm:$0xf]
  %v35 = vld [vmem:[%s1 + $0xc] sm:$0xf]
  %v40 = vunpack.c.l.b16 %v28
  %v41 = vunpack.c.l.b16 %v29
  %v42 = vunpack.c.l.b16 %v30
  %v43 = vunpack.c.l.b16 %v31
  %v44 = vpack.c.b16 %v41, %v40
  %v45 = vpack.c.b16 %v43, %v42
  %v50 = vunpack.c.l.b16 %v32
  %v51 = vunpack.c.l.b16 %v33
  %v52 = vunpack.c.l.b16 %v34
  %v53 = vunpack.c.l.b16 %v35
  %v54 = vpack.c.b16 %v51, %v50
  %v55 = vpack.c.b16 %v53, %v52
  %vm58 = vcmask 261120
  %v60 = vsel %vm58, %v44, 0
  %v63 = vsel %vm58, %v45, 0
  %65 = vmatprep.subr.bf16.mxu0 0
  %66 = vmatpush1.bf16.msra.mxu0 %v54
  %67 = vmatprep.subr.bf16.mxu0 0
  %68 = vmatpush1.bf16.msra.mxu0 %v55
  %69 = vmatprep.subr.bf16.mxu0 0
  %70 = vmatpush1.bf16.msra.mxu0 0
  %71 = vmatprep.subr.bf16.mxu0 0
  %72 = vmatpush1.bf16.msra.mxu0 0
  %73 = vmatprep.subr.bf16.mxu0 0
  %74 = vmatpush1.bf16.msra.mxu0 0
  %75 = vmatprep.subr.bf16.mxu0 0
  %76 = vmatpush1.bf16.msra.mxu0 0
  %77 = vmatprep.subr.bf16.mxu0 0
  %78 = vmatpush1.bf16.msra.mxu0 0
  %79 = vmatprep.subr.bf16.mxu0 0
  %80 = vmatpush1.bf16.msra.mxu0 0
  %81 = vmatprep.subr.bf16.mxu0 0
  %82 = vmatpush1.bf16.msra.mxu0 0
  %83 = vmatprep.subr.bf16.mxu0 0
  %84 = vmatpush1.bf16.msra.mxu0 0
  %85 = vmatprep.subr.bf16.mxu0 0
  %86 = vmatpush1.bf16.msra.mxu0 0
  %87 = vmatprep.subr.bf16.mxu0 0
  %88 = vmatpush1.bf16.msra.mxu0 0
  %89 = vmatprep.subr.bf16.mxu0 0
  %90 = vmatpush1.bf16.msra.mxu0 0
  %91 = vmatprep.subr.bf16.mxu0 0
  %92 = vmatpush1.bf16.msra.mxu0 0
  %93 = vmatprep.subr.bf16.mxu0 0
  %94 = vmatpush1.bf16.msra.mxu0 0
  %95 = vmatprep.subr.bf16.mxu0 0
  %96 = vmatpush1.bf16.msra.mxu0 0
  %97 = vmatprep.mubr.bf16.mxu0 0
  %98 = vmatmul.mubr.bf16.gmra.mrb[0].mxu0 %v60
  %v99 = vpop.f32.mrb[0].mxu0
  %v100 = vadd.f32 0.0, %v99
  %v101 = vpop.f32.mrb[0].mxu0
  %v102 = vpop.f32.mrb[0].mxu0
  %v103 = vadd.f32 0.0, %v102
  %v104 = vpop.f32.mrb[0].mxu0
  %105 = vmatprep.mubr.bf16.mxu0 0
  %106 = vmatmul.mubr.bf16.gmra.mrb[0].mxu0 %v63
  %v107 = vpop.f32.mrb[0].mxu0
  %v108 = vadd.f32 0.0, %v107
  %v109 = vpop.f32.mrb[0].mxu0
  %v110 = vpop.f32.mrb[0].mxu0
  %v111 = vadd.f32 0.0, %v110
  %v112 = vpop.f32.mrb[0].mxu0
  %113 = vdwg.mxu0
  %v114 = vadd.f32 %v24, %v100
  %v115 = vadd.f32 %v25, %v103
  %v116 = vadd.f32 %v26, %v108
  %v117 = vadd.f32 %v27, %v111
  %vm118 = vcmask 31744
  %119 = vst.msk [vmem:[#allocation2] sm:$0xff] %vm118, %v114
  %120 = vst.msk [vmem:[#allocation2 + $0x8] sm:$0xff] %vm118, %v115
  %121 = vst.msk [vmem:[#allocation2 + $0x10] sm:$0xff] %vm118, %v116
  %122 = vst.msk [vmem:[#allocation2 + $0x18] sm:$0xff] %vm118, %v117
  // Predicated region
  $region18: #{teinformer_forward.69} parent=0 // pred_check
    %p123 = pneg %p15
  $region19: #{teinformer_forward.69} parent=0 // pred_check_branch
    %125 = sbr.rel (%p123) target = $region21
  $region20: #{teinformer_forward.69} parent=0 // pred_region
    %v126 = vld [vmem:[#allocation2] sm:$0xff]
    %v127 = vld [vmem:[#allocation2 + $0x8] sm:$0xff]
    %v128 = vld [vmem:[#allocation2 + $0x10] sm:$0xff]
    %v129 = vld [vmem:[#allocation2 + $0x18] sm:$0xff]
    %v130 = vld [vmem:[%s2] sm:$0x1]
    %v132 = vlaneseq
    %v133 = vshrl.u32 %v132, 7
    %v134 = vsub.s32 0, %v133
    %v135 = vrot.slane %v130, %v134
    %v137 = vadd.f32 %v126, %v135
    %v138 = vadd.f32 %v127, %v135
    %v139 = vadd.f32 %v128, %v135
    %v140 = vadd.f32 %v129, %v135
    %141 = vst.msk [vmem:[%s3] sm:$0xff] %vm118, %v137
    %142 = vst.msk [vmem:[%s3 + $0x8] sm:$0xff] %vm118, %v138
    %143 = vst.msk [vmem:[%s3 + $0x10] sm:$0xff] %vm118, %v139
    %144 = vst.msk [vmem:[%s3 + $0x18] sm:$0xff] %vm118, %v140
  $region21: #{teinformer_forward.69} parent=0 // pred_fallthru
    _
  // Predicated region
  $region22: #{teinformer_forward.69} parent=0 // pred_check
    _
  $region23: #{teinformer_forward.69} parent=0 // pred_check_branch
    %146 = sbr.rel (0) target = $region25
  $region24: #{teinformer_forward.69} parent=0 // pred_region
    _
  $region25: #{teinformer_forward.69} parent=0 // pred_fallthru
    _
  // Predicated region
  $region26: #{teinformer_forward.69} parent=0 // pred_check
    _
  $region27: #{teinformer_forward.69} parent=0 // pred_check_branch
    %148 = sbr.rel (0) target = $region29
  $region28: #{teinformer_forward.69} parent=0 // pred_region
    _
  $region29: #{teinformer_forward.69} parent=0 // pred_fallthru
    _

</llo_original>
